<compile_context>
chip_gen: v6e
topology: v6e:2x2x1
jax: 0.10.0
libtpu: 0.0.40
codegen_flags: <defaults>
</compile_context>

<pallas_src>
import functools

import jax
import jax.numpy as jnp
from jax import lax
from jax.experimental import pallas as pl
from jax.experimental.pallas import tpu as pltpu

LANE = 128
SUBLANE = 8


def _round_up(v, m):
    return ((v + m - 1) // m) * m


def _pad_axis(a, target, axis):
    pad = target - a.shape[axis]
    if pad <= 0:
        return a
    widths = [(0, 0)] * a.ndim
    widths[axis] = (0, pad)
    return jnp.pad(a, widths)


# -----------------------------------------------------------------------------
# Fused Pallas kernel: the whole ResGnn stack in one invocation (no grid).
# -----------------------------------------------------------------------------
def _res_gnn_kernel(n_nodes,          # static: true (unpadded) node count
                    # --- SMEM scalars ---
                    eps_ref,          # [L]  (1 + eps) per layer
                    src_ref,          # [E]  int32 edge source indices
                    dst_ref,          # [E]  int32 edge destination indices
                    ea_ref,           # [E]  f32 edge attributes (edge_dim == 1)
                    # --- VMEM ---
                    x_in_ref,         # [Np, Cp] initial node features (padded)
                    we_ref,           # [L, 1, Cp] edge Linear weight (f32)
                    be_ref,           # [L, 1, Cp] edge Linear bias   (f32)
                    w1_ref,           # [L, Cp, Hp] MLP Linear1 weight (bf16)
                    b1_ref,           # [L, 1, Hp]
                    gamma_ref,        # [L, 1, Hp]
                    beta_ref,         # [L, 1, Hp]
                    w2_ref,           # [L, Hp, Op] MLP Linear2 weight (bf16)
                    b2_ref,           # [L, 1, Op]
                    out_ref,          # [Np, Op] running node state / final output
                    # --- scratch ---
                    aggr_ref):        # [Np, Cp] per-layer scatter-add accumulator
    num_layers = w1_ref.shape[0]
    n_edges = src_ref.shape[0]
    np_pad = out_ref.shape[0]
    inv_n = 1.0 / n_nodes

    # Row-validity mask: padded node rows must not contribute to BatchNorm stats.
    row_ids = lax.broadcasted_iota(jnp.int32, (np_pad, 1), 0)
    valid = (row_ids < n_nodes).astype(jnp.float32)

    # Seed the running node state.
    out_ref[...] = x_in_ref[...]

    # Layers fully unrolled at trace time: static weight slices, no grid overhead.
    for l in range(num_layers):
        we = we_ref[l]                                    # [1, Cp]
        be = be_ref[l]                                    # [1, Cp]

        aggr_ref[...] = jnp.zeros_like(aggr_ref)

        # Index-based gather + scatter-add over edges (no one-hots, no MXU).
        # TODO(synk): tile the edge axis + dst-sorted segment accumulation at
        #             large E; the sequential per-edge RMW is only ideal at
        #             small / moderate edge counts.
        @pl.loop(0, n_edges, unroll=n_edges <= 64)
        def _(e):
            s = src_ref[e]
            d = dst_ref[e]
            x_s = out_ref[pl.ds(s, 1), :]                 # gather source row [1,Cp]
            msg = jnp.maximum(x_s + ea_ref[e] * we + be, 0.0)
            aggr_ref[pl.ds(d, 1), :] = aggr_ref[pl.ds(d, 1), :] + msg

        x_cur = out_ref[...]
        h = aggr_ref[...] + eps_ref[l] * x_cur            # eps_ref holds (1 + eps)

        # MLP Linear1 on the MXU: bf16 operands, f32 accumulation.
        z1 = jnp.dot(h.astype(jnp.bfloat16), w1_ref[l],
                     preferred_element_type=jnp.float32) + b1_ref[l]

        # BatchNorm1d (training-mode batch stats): two-pass, padded rows masked,
        # divided by the true node count.
        mean = jnp.sum(z1 * valid, axis=0, keepdims=True) * inv_n
        diff = (z1 - mean) * valid
        var = jnp.sum(diff * diff, axis=0, keepdims=True) * inv_n
        z1n = (z1 - mean) * lax.rsqrt(var + 1e-5) * gamma_ref[l] + beta_ref[l]

        # ReLU + Linear2 (bf16 MXU) + outer ReLU.
        a1 = jnp.maximum(z1n, 0.0)
        z2 = jnp.dot(a1.astype(jnp.bfloat16), w2_ref[l],
                     preferred_element_type=jnp.float32) + b2_ref[l]
        y = jnp.maximum(z2, 0.0)

        # Residual composition: static layer index -> no runtime gate multiply.
        out_ref[...] = y if l == 0 else x_cur + y


# -----------------------------------------------------------------------------
# Parameter packing: stack per-layer params along a leading layer axis, zero-pad
# channel dims to the 128-lane width (padding is inert), store matmul weights in
# bf16 for the MXU.
# -----------------------------------------------------------------------------
def prepare_params(layer_params):
    in_c = layer_params[0]["w1_t"].shape[0]
    hid_c = layer_params[0]["w1_t"].shape[1]
    out_c = layer_params[0]["w2_t"].shape[1]
    cp, hp, op = (_round_up(d, LANE) for d in (in_c, hid_c, out_c))
    assert cp == op, "residual connections require in_channels == out_channels"

    def stack(name, pads, dtype=jnp.float32):
        arrs = []
        for p in layer_params:
            a = p[name]
            for axis, target in pads:
                a = _pad_axis(a, target, axis)
            arrs.append(a)
        return jnp.stack(arrs).astype(dtype)

    return {
        "one_plus_eps": (1.0 + jnp.concatenate(
            [p["eps"] for p in layer_params])).astype(jnp.float32),       # [L]
        "we_t": stack("we_t", [(1, cp)]),                                 # [L,1,Cp]
        "be": stack("be", [(1, cp)]),                                     # [L,1,Cp]
        "w1_t": stack("w1_t", [(0, cp), (1, hp)], jnp.bfloat16),          # [L,Cp,Hp]
        "b1": stack("b1", [(1, hp)]),                                     # [L,1,Hp]
        "gamma": stack("gamma", [(1, hp)]),                               # [L,1,Hp]
        "beta": stack("beta", [(1, hp)]),                                 # [L,1,Hp]
        "w2_t": stack("w2_t", [(0, hp), (1, op)], jnp.bfloat16),          # [L,Hp,Op]
        "b2": stack("b2", [(1, op)]),                                     # [L,1,Op]
    }


# -----------------------------------------------------------------------------
# ResGnn forward: one fused pallas_call (everything resident in VMEM / SMEM).
# -----------------------------------------------------------------------------
@functools.partial(jax.jit, static_argnames=("out_channels",))
def res_gnn_forward(stacked, x, edge_index, edge_attr, *, out_channels):
    x = x.astype(jnp.float32)
    n_nodes = x.shape[0]
    n_edges = edge_attr.shape[0]
    num_layers, cp, hp = stacked["w1_t"].shape
    op = stacked["w2_t"].shape[2]
    np_pad = _round_up(n_nodes, SUBLANE)

    src = edge_index[0].astype(jnp.int32)
    dst = edge_index[1].astype(jnp.int32)
    ea = edge_attr.reshape(n_edges).astype(jnp.float32)
    x_p = _pad_axis(_pad_axis(x, np_pad, 0), cp, 1)                  # [Np, Cp]

    # VMEM budget derived from the actual resident buffers (+ headroom), capped
    # so the same configuration also fits v7x's 64 MiB physical VMEM.
    f32, bf16 = 4, 2
    resident_bytes = (
        np_pad * cp * f32                     # x_in
        + np_pad * op * f32                   # out / running state
        + np_pad * cp * f32                   # aggr scratch
        + num_layers * (2 * cp * f32          # we, be
                        + cp * hp * bf16      # w1
                        + 3 * hp * f32        # b1, gamma, beta
                        + hp * op * bf16      # w2
                        + op * f32))          # b2
    vmem_limit = int(min(max(2 * resident_bytes + (4 << 20), 8 << 20), 48 << 20))

    flops = num_layers * (2 * np_pad * cp * hp + 2 * np_pad * hp * op
                          + 4 * n_edges * cp + 12 * np_pad * hp)
    bytes_accessed = int(resident_bytes + 3 * n_edges * 4 + num_layers * 4)

    smem_spec = pl.BlockSpec(memory_space=pltpu.MemorySpace.SMEM)
    vmem_spec = pl.BlockSpec(memory_space=pltpu.MemorySpace.VMEM)

    out_padded = pl.pallas_call(
        functools.partial(_res_gnn_kernel, n_nodes),
        out_shape=jax.ShapeDtypeStruct((np_pad, op), jnp.float32),
        in_specs=[smem_spec, smem_spec, smem_spec, smem_spec,      # eps, src, dst, ea
                  vmem_spec,                                        # x_p
                  vmem_spec, vmem_spec,                             # we, be
                  vmem_spec, vmem_spec, vmem_spec, vmem_spec,       # w1, b1, gamma, beta
                  vmem_spec, vmem_spec],                            # w2, b2
        out_specs=vmem_spec,
        scratch_shapes=[pltpu.VMEM((np_pad, cp), jnp.float32)],     # aggr
        compiler_params=pltpu.CompilerParams(vmem_limit_bytes=vmem_limit),
        cost_estimate=pl.CostEstimate(
            flops=int(flops),
            transcendentals=int(num_layers * hp),
            bytes_accessed=bytes_accessed,
        ),
    )(stacked["one_plus_eps"], src, dst, ea,
      x_p, stacked["we_t"], stacked["be"], stacked["w1_t"], stacked["b1"],
      stacked["gamma"], stacked["beta"], stacked["w2_t"], stacked["b2"])

    return out_padded[:n_nodes, :out_channels]


# -----------------------------------------------------------------------------
# Pure-JAX f32 reference for correctness checking.
# -----------------------------------------------------------------------------
def res_gnn_reference(layer_params, x, edge_index, edge_attr):
    x = x.astype(jnp.float32)
    edge_attr = edge_attr.astype(jnp.float32)
    src, dst = edge_index[0], edge_index[1]
    for i, p in enumerate(layer_params):
        e = edge_attr @ p["we_t"] + p["be"]
        msg = jax.nn.relu(x[src] + e)
        aggr = jax.ops.segment_sum(msg, dst, num_segments=x.shape[0])
        h = aggr + (1.0 + p["eps"][0]) * x
        z1 = h @ p["w1_t"] + p["b1"]
        mean = z1.mean(0, keepdims=True)
        var = ((z1 - mean) ** 2).mean(0, keepdims=True)
        z1 = (z1 - mean) / jnp.sqrt(var + 1e-5) * p["gamma"] + p["beta"]
        z2 = jax.nn.relu(z1) @ p["w2_t"] + p["b2"]
        y = jax.nn.relu(z2)
        x = y if i == 0 else x + y
    return x


def init_layer_params(key, in_c, hidden_c, out_c, edge_dim=1):
    ks = jax.random.split(key, 3)

    def lin(k, fan_in, fan_out):
        bound = 1.0 / jnp.sqrt(fan_in)
        kw, kb = jax.random.split(k)
        w_t = jax.random.uniform(kw, (fan_in, fan_out), jnp.float32, -bound, bound)
        b = jax.random.uniform(kb, (1, fan_out), jnp.float32, -bound, bound)
        return w_t, b

    we_t, be = lin(ks[0], edge_dim, in_c)      # GINEConv edge Linear(edge_dim, in_c)
    w1_t, b1 = lin(ks[1], in_c, hidden_c)      # MLP Linear(in_c, hidden_c)
    w2_t, b2 = lin(ks[2], hidden_c, out_c)     # MLP Linear(hidden_c, out_c)
    return {
        "eps": jnp.zeros((1,), jnp.float32),   # train_eps=True, PyG initial eps=0
        "we_t": we_t, "be": be,
        "w1_t": w1_t, "b1": b1,
        "gamma": jnp.ones((1, hidden_c), jnp.float32),   # BatchNorm1d default init
        "beta": jnp.zeros((1, hidden_c), jnp.float32),
        "w2_t": w2_t, "b2": b2,
    }


if __name__ == "__main__":
    # Small shapes. NOTE: the PyTorch module as written only type-checks when
    # in_channels == hidden_channels == out_channels (residual + per-layer MLP
    # with fixed in_channels), so matching channel sizes are used.
    N_NODES, N_EDGES = 16, 32
    IN_C = HIDDEN_C = OUT_C = 32
    NUM_LAYERS = 3

    key = jax.random.PRNGKey(0)
    k_x, k_ei, k_ea, k_p = jax.random.split(key, 4)

    x = jax.random.normal(k_x, (N_NODES, IN_C), jnp.float32)
    edge_index = jax.random.randint(k_ei, (2, N_EDGES), 0, N_NODES, jnp.int32)
    edge_attr = jax.random.normal(k_ea, (N_EDGES, 1), jnp.float32)

    layer_keys = jax.random.split(k_p, NUM_LAYERS)
    layer_params = []
    for layer in range(NUM_LAYERS):
        out_dim = OUT_C if layer == NUM_LAYERS - 1 else HIDDEN_C
        layer_params.append(init_layer_params(layer_keys[layer], IN_C, HIDDEN_C, out_dim))
    layer_params = tuple(layer_params)

    stacked = prepare_params(layer_params)

    out = res_gnn_forward(stacked, x, edge_index, edge_attr, out_channels=OUT_C)
    out = jax.block_until_ready(out)

    ref = res_gnn_reference(layer_params, x, edge_index, edge_attr)
    assert out.shape == (N_NODES, OUT_C)
    # bf16 MXU operands (per perf review) vs. an f32 reference: validate with a
    # normalized max-error criterion; real bugs produce O(1) relative error.
    rel_err = float(jnp.max(jnp.abs(out - ref)) / (jnp.max(jnp.abs(ref)) + 1e-6))
    assert rel_err < 5e-2, f"Pallas kernel mismatch vs reference (rel_err={rel_err})"

    print("KERNEL_OK")
</pallas_src>

<mosaic_0001>
module attributes {stable_mosaic.version = 11 : i64} {
  func.func @_res_gnn_kernel(%arg0: memref<3xf32, #tpu.memory_space<smem>>, %arg1: memref<32xi32, #tpu.memory_space<smem>>, %arg2: memref<32xi32, #tpu.memory_space<smem>>, %arg3: memref<32xf32, #tpu.memory_space<smem>>, %arg4: memref<16x128xf32, #tpu.memory_space<vmem>>, %arg5: memref<3x1x128xf32, #tpu.memory_space<vmem>>, %arg6: memref<3x1x128xf32, #tpu.memory_space<vmem>>, %arg7: memref<3x128x128xbf16, #tpu.memory_space<vmem>>, %arg8: memref<3x1x128xf32, #tpu.memory_space<vmem>>, %arg9: memref<3x1x128xf32, #tpu.memory_space<vmem>>, %arg10: memref<3x1x128xf32, #tpu.memory_space<vmem>>, %arg11: memref<3x128x128xbf16, #tpu.memory_space<vmem>>, %arg12: memref<3x1x128xf32, #tpu.memory_space<vmem>>, %arg13: memref<16x128xf32, #tpu.memory_space<vmem>>, %arg14: memref<16x128xf32, #tpu.memory_space<vmem>>) attributes {dimension_semantics = [], scalar_prefetch = 0 : i64, scratch_operands = 1 : i64, tpu.core_type = #tpu.core_type<tc>} {
    %0 = tpu.iota {dimensions = array<i32: 0>} : vector<16x1xi32>
    %c16_i32 = arith.constant 16 : i32
    %1 = vector.broadcast %c16_i32 : i32 to vector<16x1xi32>
    %2 = arith.cmpi slt, %0, %1 : vector<16x1xi32>
    %3 = arith.extui %2 : vector<16x1xi1> to vector<16x1xi32>
    %4 = arith.sitofp %3 : vector<16x1xi32> to vector<16x1xf32>
    %c0 = arith.constant 0 : index
    %c0_0 = arith.constant 0 : index
    %5 = vector.load %arg4[%c0, %c0_0] : memref<16x128xf32, #tpu.memory_space<vmem>>, vector<16x128xf32>
    %c0_1 = arith.constant 0 : index
    %c0_2 = arith.constant 0 : index
    %6 = vector.load %arg13[%c0_1, %c0_2] : memref<16x128xf32, #tpu.memory_space<vmem>>, vector<16x128xf32>
    tpu.vector_store %arg13[%c0_1, %c0_2], %5 {strides = array<i32>} : memref<16x128xf32, #tpu.memory_space<vmem>>, vector<16x128xf32>,
    %c0_3 = arith.constant 0 : index
    %c0_4 = arith.constant 0 : index
    %c0_5 = arith.constant 0 : index
    %7 = vector.load %arg5[%c0_3, %c0_4, %c0_5] : memref<3x1x128xf32, #tpu.memory_space<vmem>>, vector<1x1x128xf32>
    %8 = vector.shape_cast %7 : vector<1x1x128xf32> to vector<1x128xf32>
    %c0_6 = arith.constant 0 : index
    %c0_7 = arith.constant 0 : index
    %c0_8 = arith.constant 0 : index
    %9 = vector.load %arg6[%c0_6, %c0_7, %c0_8] : memref<3x1x128xf32, #tpu.memory_space<vmem>>, vector<1x1x128xf32>
    %10 = vector.shape_cast %9 : vector<1x1x128xf32> to vector<1x128xf32>
    %cst = arith.constant 0.000000e+00 : f32
    %11 = vector.broadcast %cst : f32 to vector<16x128xf32>
    %c0_9 = arith.constant 0 : index
    %c0_10 = arith.constant 0 : index
    %12 = vector.load %arg14[%c0_9, %c0_10] : memref<16x128xf32, #tpu.memory_space<vmem>>, vector<16x128xf32>
    tpu.vector_store %arg14[%c0_9, %c0_10], %11 {strides = array<i32>} : memref<16x128xf32, #tpu.memory_space<vmem>>, vector<16x128xf32>,
    %c0_i32 = arith.constant 0 : i32
    %c1_i32 = arith.constant 1 : i32
    %13 = arith.muli %c0_i32, %c1_i32 : i32
    %c0_i32_11 = arith.constant 0 : i32
    %14 = arith.addi %c0_i32_11, %13 : i32
    %15 = arith.index_cast %14 : i32 to index
    %16 = memref.load %arg1[%15] : memref<32xi32, #tpu.memory_space<smem>>
    %17 = arith.index_cast %14 : i32 to index
    %18 = memref.load %arg2[%17] : memref<32xi32, #tpu.memory_space<smem>>
    %19 = arith.index_cast %16 : i32 to index
    %c0_12 = arith.constant 0 : index
    %20 = vector.load %arg13[%19, %c0_12] : memref<16x128xf32, #tpu.memory_space<vmem>>, vector<1x128xf32>
    %21 = arith.index_cast %14 : i32 to index
    %22 = memref.load %arg3[%21] : memref<32xf32, #tpu.memory_space<smem>>
    %23 = vector.broadcast %22 : f32 to vector<1x128xf32>
    %24 = arith.mulf %23, %8 : vector<1x128xf32>
    %25 = arith.addf %20, %24 : vector<1x128xf32>
    %26 = arith.addf %25, %10 : vector<1x128xf32>
    %cst_13 = arith.constant 0.000000e+00 : f32
    %27 = vector.broadcast %cst_13 : f32 to vector<1x128xf32>
    %28 = arith.maximumf %26, %27 : vector<1x128xf32>
    %29 = arith.index_cast %18 : i32 to index
    %c0_14 = arith.constant 0 : index
    %30 = vector.load %arg14[%29, %c0_14] : memref<16x128xf32, #tpu.memory_space<vmem>>, vector<1x128xf32>
    %31 = arith.addf %30, %28 : vector<1x128xf32>
    %32 = arith.index_cast %18 : i32 to index
    %c0_15 = arith.constant 0 : index
    %33 = vector.load %arg14[%32, %c0_15] : memref<16x128xf32, #tpu.memory_space<vmem>>, vector<1x128xf32>
    tpu.vector_store %arg14[%32, %c0_15], %31 {strides = array<i32>} : memref<16x128xf32, #tpu.memory_space<vmem>>, vector<1x128xf32>,
    %c1_i32_16 = arith.constant 1 : i32
    %c1_i32_17 = arith.constant 1 : i32
    %34 = arith.muli %c1_i32_16, %c1_i32_17 : i32
    %c0_i32_18 = arith.constant 0 : i32
    %35 = arith.addi %c0_i32_18, %34 : i32
    %36 = arith.index_cast %35 : i32 to index
    %37 = memref.load %arg1[%36] : memref<32xi32, #tpu.memory_space<smem>>
    %38 = arith.index_cast %35 : i32 to index
    %39 = memref.load %arg2[%38] : memref<32xi32, #tpu.memory_space<smem>>
    %40 = arith.index_cast %37 : i32 to index
    %c0_19 = arith.constant 0 : index
    %41 = vector.load %arg13[%40, %c0_19] : memref<16x128xf32, #tpu.memory_space<vmem>>, vector<1x128xf32>
    %42 = arith.index_cast %35 : i32 to index
    %43 = memref.load %arg3[%42] : memref<32xf32, #tpu.memory_space<smem>>
    %44 = vector.broadcast %43 : f32 to vector<1x128xf32>
    %45 = arith.mulf %44, %8 : vector<1x128xf32>
    %46 = arith.addf %41, %45 : vector<1x128xf32>
    %47 = arith.addf %46, %10 : vector<1x128xf32>
    %cst_20 = arith.constant 0.000000e+00 : f32
    %48 = vector.broadcast %cst_20 : f32 to vector<1x128xf32>
    %49 = arith.maximumf %47, %48 : vector<1x128xf32>
    %50 = arith.index_cast %39 : i32 to index
    %c0_21 = arith.constant 0 : index
    %51 = vector.load %arg14[%50, %c0_21] : memref<16x128xf32, #tpu.memory_space<vmem>>, vector<1x128xf32>
    %52 = arith.addf %51, %49 : vector<1x128xf32>
    %53 = arith.index_cast %39 : i32 to index
    %c0_22 = arith.constant 0 : index
    %54 = vector.load %arg14[%53, %c0_22] : memref<16x128xf32, #tpu.memory_space<vmem>>, vector<1x128xf32>
    tpu.vector_store %arg14[%53, %c0_22], %52 {strides = array<i32>} : memref<16x128xf32, #tpu.memory_space<vmem>>, vector<1x128xf32>,
    %c2_i32 = arith.constant 2 : i32
    %c1_i32_23 = arith.constant 1 : i32
    %55 = arith.muli %c2_i32, %c1_i32_23 : i32
    %c0_i32_24 = arith.constant 0 : i32
    %56 = arith.addi %c0_i32_24, %55 : i32
    %57 = arith.index_cast %56 : i32 to index
    %58 = memref.load %arg1[%57] : memref<32xi32, #tpu.memory_space<smem>>
    %59 = arith.index_cast %56 : i32 to index
    %60 = memref.load %arg2[%59] : memref<32xi32, #tpu.memory_space<smem>>
    %61 = arith.index_cast %58 : i32 to index
    %c0_25 = arith.constant 0 : index
    %62 = vector.load %arg13[%61, %c0_25] : memref<16x128xf32, #tpu.memory_space<vmem>>, vector<1x128xf32>
    %63 = arith.index_cast %56 : i32 to index
    %64 = memref.load %arg3[%63] : memref<32xf32, #tpu.memory_space<smem>>
    %65 = vector.broadcast %64 : f32 to vector<1x128xf32>
    %66 = arith.mulf %65, %8 : vector<1x128xf32>
    %67 = arith.addf %62, %66 : vector<1x128xf32>
    %68 = arith.addf %67, %10 : vector<1x128xf32>
    %cst_26 = arith.constant 0.000000e+00 : f32
    %69 = vector.broadcast %cst_26 : f32 to vector<1x128xf32>
    %70 = arith.maximumf %68, %69 : vector<1x128xf32>
    %71 = arith.index_cast %60 : i32 to index
    %c0_27 = arith.constant 0 : index
    %72 = vector.load %arg14[%71, %c0_27] : memref<16x128xf32, #tpu.memory_space<vmem>>, vector<1x128xf32>
    %73 = arith.addf %72, %70 : vector<1x128xf32>
    %74 = arith.index_cast %60 : i32 to index
    %c0_28 = arith.constant 0 : index
    %75 = vector.load %arg14[%74, %c0_28] : memref<16x128xf32, #tpu.memory_space<vmem>>, vector<1x128xf32>
    tpu.vector_store %arg14[%74, %c0_28], %73 {strides = array<i32>} : memref<16x128xf32, #tpu.memory_space<vmem>>, vector<1x128xf32>,
    %c3_i32 = arith.constant 3 : i32
    %c1_i32_29 = arith.constant 1 : i32
    %76 = arith.muli %c3_i32, %c1_i32_29 : i32
    %c0_i32_30 = arith.constant 0 : i32
    %77 = arith.addi %c0_i32_30, %76 : i32
    %78 = arith.index_cast %77 : i32 to index
    %79 = memref.load %arg1[%78] : memref<32xi32, #tpu.memory_space<smem>>
    %80 = arith.index_cast %77 : i32 to index
    %81 = memref.load %arg2[%80] : memref<32xi32, #tpu.memory_space<smem>>
    %82 = arith.index_cast %79 : i32 to index
    %c0_31 = arith.constant 0 : index
    %83 = vector.load %arg13[%82, %c0_31] : memref<16x128xf32, #tpu.memory_space<vmem>>, vector<1x128xf32>
    %84 = arith.index_cast %77 : i32 to index
    %85 = memref.load %arg3[%84] : memref<32xf32, #tpu.memory_space<smem>>
    %86 = vector.broadcast %85 : f32 to vector<1x128xf32>
    %87 = arith.mulf %86, %8 : vector<1x128xf32>
    %88 = arith.addf %83, %87 : vector<1x128xf32>
    %89 = arith.addf %88, %10 : vector<1x128xf32>
    %cst_32 = arith.constant 0.000000e+00 : f32
    %90 = vector.broadcast %cst_32 : f32 to vector<1x128xf32>
    %91 = arith.maximumf %89, %90 : vector<1x128xf32>
    %92 = arith.index_cast %81 : i32 to index
    %c0_33 = arith.constant 0 : index
    %93 = vector.load %arg14[%92, %c0_33] : memref<16x128xf32, #tpu.memory_space<vmem>>, vector<1x128xf32>
    %94 = arith.addf %93, %91 : vector<1x128xf32>
    %95 = arith.index_cast %81 : i32 to index
    %c0_34 = arith.constant 0 : index
    %96 = vector.load %arg14[%95, %c0_34] : memref<16x128xf32, #tpu.memory_space<vmem>>, vector<1x128xf32>
    tpu.vector_store %arg14[%95, %c0_34], %94 {strides = array<i32>} : memref<16x128xf32, #tpu.memory_space<vmem>>, vector<1x128xf32>,
    %c4_i32 = arith.constant 4 : i32
    %c1_i32_35 = arith.constant 1 : i32
    %97 = arith.muli %c4_i32, %c1_i32_35 : i32
    %c0_i32_36 = arith.constant 0 : i32
    %98 = arith.addi %c0_i32_36, %97 : i32
    %99 = arith.index_cast %98 : i32 to index
    %100 = memref.load %arg1[%99] : memref<32xi32, #tpu.memory_space<smem>>
    %101 = arith.index_cast %98 : i32 to index
    %102 = memref.load %arg2[%101] : memref<32xi32, #tpu.memory_space<smem>>
    %103 = arith.index_cast %100 : i32 to index
    %c0_37 = arith.constant 0 : index
    %104 = vector.load %arg13[%103, %c0_37] : memref<16x128xf32, #tpu.memory_space<vmem>>, vector<1x128xf32>
    %105 = arith.index_cast %98 : i32 to index
    %106 = memref.load %arg3[%105] : memref<32xf32, #tpu.memory_space<smem>>
    %107 = vector.broadcast %106 : f32 to vector<1x128xf32>
    %108 = arith.mulf %107, %8 : vector<1x128xf32>
    %109 = arith.addf %104, %108 : vector<1x128xf32>
    %110 = arith.addf %109, %10 : vector<1x128xf32>
    %cst_38 = arith.constant 0.000000e+00 : f32
    %111 = vector.broadcast %cst_38 : f32 to vector<1x128xf32>
    %112 = arith.maximumf %110, %111 : vector<1x128xf32>
    %113 = arith.index_cast %102 : i32 to index
    %c0_39 = arith.constant 0 : index
    %114 = vector.load %arg14[%113, %c0_39] : memref<16x128xf32, #tpu.memory_space<vmem>>, vector<1x128xf32>
    %115 = arith.addf %114, %112 : vector<1x128xf32>
    %116 = arith.index_cast %102 : i32 to index
    %c0_40 = arith.constant 0 : index
    %117 = vector.load %arg14[%116, %c0_40] : memref<16x128xf32, #tpu.memory_space<vmem>>, vector<1x128xf32>
    tpu.vector_store %arg14[%116, %c0_40], %115 {strides = array<i32>} : memref<16x128xf32, #tpu.memory_space<vmem>>, vector<1x128xf32>,
    %c5_i32 = arith.constant 5 : i32
    %c1_i32_41 = arith.constant 1 : i32
    %118 = arith.muli %c5_i32, %c1_i32_41 : i32
    %c0_i32_42 = arith.constant 0 : i32
    %119 = arith.addi %c0_i32_42, %118 : i32
    %120 = arith.index_cast %119 : i32 to index
    %121 = memref.load %arg1[%120] : memref<32xi32, #tpu.memory_space<smem>>
    %122 = arith.index_cast %119 : i32 to index
    %123 = memref.load %arg2[%122] : memref<32xi32, #tpu.memory_space<smem>>
    %124 = arith.index_cast %121 : i32 to index
    %c0_43 = arith.constant 0 : index
    %125 = vector.load %arg13[%124, %c0_43] : memref<16x128xf32, #tpu.memory_space<vmem>>, vector<1x128xf32>
    %126 = arith.index_cast %119 : i32 to index
    %127 = memref.load %arg3[%126] : memref<32xf32, #tpu.memory_space<smem>>
    %128 = vector.broadcast %127 : f32 to vector<1x128xf32>
    %129 = arith.mulf %128, %8 : vector<1x128xf32>
    %130 = arith.addf %125, %129 : vector<1x128xf32>
    %131 = arith.addf %130, %10 : vector<1x128xf32>
    %cst_44 = arith.constant 0.000000e+00 : f32
    %132 = vector.broadcast %cst_44 : f32 to vector<1x128xf32>
    %133 = arith.maximumf %131, %132 : vector<1x128xf32>
    %134 = arith.index_cast %123 : i32 to index
    %c0_45 = arith.constant 0 : index
    %135 = vector.load %arg14[%134, %c0_45] : memref<16x128xf32, #tpu.memory_space<vmem>>, vector<1x128xf32>
    %136 = arith.addf %135, %133 : vector<1x128xf32>
    %137 = arith.index_cast %123 : i32 to index
    %c0_46 = arith.constant 0 : index
    %138 = vector.load %arg14[%137, %c0_46] : memref<16x128xf32, #tpu.memory_space<vmem>>, vector<1x128xf32>
    tpu.vector_store %arg14[%137, %c0_46], %136 {strides = array<i32>} : memref<16x128xf32, #tpu.memory_space<vmem>>, vector<1x128xf32>,
    %c6_i32 = arith.constant 6 : i32
    %c1_i32_47 = arith.constant 1 : i32
    %139 = arith.muli %c6_i32, %c1_i32_47 : i32
    %c0_i32_48 = arith.constant 0 : i32
    %140 = arith.addi %c0_i32_48, %139 : i32
    %141 = arith.index_cast %140 : i32 to index
    %142 = memref.load %arg1[%141] : memref<32xi32, #tpu.memory_space<smem>>
    %143 = arith.index_cast %140 : i32 to index
    %144 = memref.load %arg2[%143] : memref<32xi32, #tpu.memory_space<smem>>
    %145 = arith.index_cast %142 : i32 to index
    %c0_49 = arith.constant 0 : index
    %146 = vector.load %arg13[%145, %c0_49] : memref<16x128xf32, #tpu.memory_space<vmem>>, vector<1x128xf32>
    %147 = arith.index_cast %140 : i32 to index
    %148 = memref.load %arg3[%147] : memref<32xf32, #tpu.memory_space<smem>>
    %149 = vector.broadcast %148 : f32 to vector<1x128xf32>
    %150 = arith.mulf %149, %8 : vector<1x128xf32>
    %151 = arith.addf %146, %150 : vector<1x128xf32>
    %152 = arith.addf %151, %10 : vector<1x128xf32>
    %cst_50 = arith.constant 0.000000e+00 : f32
    %153 = vector.broadcast %cst_50 : f32 to vector<1x128xf32>
    %154 = arith.maximumf %152, %153 : vector<1x128xf32>
    %155 = arith.index_cast %144 : i32 to index
    %c0_51 = arith.constant 0 : index
    %156 = vector.load %arg14[%155, %c0_51] : memref<16x128xf32, #tpu.memory_space<vmem>>, vector<1x128xf32>
    %157 = arith.addf %156, %154 : vector<1x128xf32>
    %158 = arith.index_cast %144 : i32 to index
    %c0_52 = arith.constant 0 : index
    %159 = vector.load %arg14[%158, %c0_52] : memref<16x128xf32, #tpu.memory_space<vmem>>, vector<1x128xf32>
    tpu.vector_store %arg14[%158, %c0_52], %157 {strides = array<i32>} : memref<16x128xf32, #tpu.memory_space<vmem>>, vector<1x128xf32>,
    %c7_i32 = arith.constant 7 : i32
    %c1_i32_53 = arith.constant 1 : i32
    %160 = arith.muli %c7_i32, %c1_i32_53 : i32
    %c0_i32_54 = arith.constant 0 : i32
    %161 = arith.addi %c0_i32_54, %160 : i32
    %162 = arith.index_cast %161 : i32 to index
    %163 = memref.load %arg1[%162] : memref<32xi32, #tpu.memory_space<smem>>
    %164 = arith.index_cast %161 : i32 to index
    %165 = memref.load %arg2[%164] : memref<32xi32, #tpu.memory_space<smem>>
    %166 = arith.index_cast %163 : i32 to index
    %c0_55 = arith.constant 0 : index
    %167 = vector.load %arg13[%166, %c0_55] : memref<16x128xf32, #tpu.memory_space<vmem>>, vector<1x128xf32>
    %168 = arith.index_cast %161 : i32 to index
    %169 = memref.load %arg3[%168] : memref<32xf32, #tpu.memory_space<smem>>
    %170 = vector.broadcast %169 : f32 to vector<1x128xf32>
    %171 = arith.mulf %170, %8 : vector<1x128xf32>
    %172 = arith.addf %167, %171 : vector<1x128xf32>
    %173 = arith.addf %172, %10 : vector<1x128xf32>
    %cst_56 = arith.constant 0.000000e+00 : f32
    %174 = vector.broadcast %cst_56 : f32 to vector<1x128xf32>
    %175 = arith.maximumf %173, %174 : vector<1x128xf32>
    %176 = arith.index_cast %165 : i32 to index
    %c0_57 = arith.constant 0 : index
    %177 = vector.load %arg14[%176, %c0_57] : memref<16x128xf32, #tpu.memory_space<vmem>>, vector<1x128xf32>
    %178 = arith.addf %177, %175 : vector<1x128xf32>
    %179 = arith.index_cast %165 : i32 to index
    %c0_58 = arith.constant 0 : index
    %180 = vector.load %arg14[%179, %c0_58] : memref<16x128xf32, #tpu.memory_space<vmem>>, vector<1x128xf32>
    tpu.vector_store %arg14[%179, %c0_58], %178 {strides = array<i32>} : memref<16x128xf32, #tpu.memory_space<vmem>>, vector<1x128xf32>,
    %c8_i32 = arith.constant 8 : i32
    %c1_i32_59 = arith.constant 1 : i32
    %181 = arith.muli %c8_i32, %c1_i32_59 : i32
    %c0_i32_60 = arith.constant 0 : i32
    %182 = arith.addi %c0_i32_60, %181 : i32
    %183 = arith.index_cast %182 : i32 to index
    %184 = memref.load %arg1[%183] : memref<32xi32, #tpu.memory_space<smem>>
    %185 = arith.index_cast %182 : i32 to index
    %186 = memref.load %arg2[%185] : memref<32xi32, #tpu.memory_space<smem>>
    %187 = arith.index_cast %184 : i32 to index
    %c0_61 = arith.constant 0 : index
    %188 = vector.load %arg13[%187, %c0_61] : memref<16x128xf32, #tpu.memory_space<vmem>>, vector<1x128xf32>
    %189 = arith.index_cast %182 : i32 to index
    %190 = memref.load %arg3[%189] : memref<32xf32, #tpu.memory_space<smem>>
    %191 = vector.broadcast %190 : f32 to vector<1x128xf32>
    %192 = arith.mulf %191, %8 : vector<1x128xf32>
    %193 = arith.addf %188, %192 : vector<1x128xf32>
    %194 = arith.addf %193, %10 : vector<1x128xf32>
    %cst_62 = arith.constant 0.000000e+00 : f32
    %195 = vector.broadcast %cst_62 : f32 to vector<1x128xf32>
    %196 = arith.maximumf %194, %195 : vector<1x128xf32>
    %197 = arith.index_cast %186 : i32 to index
    %c0_63 = arith.constant 0 : index
    %198 = vector.load %arg14[%197, %c0_63] : memref<16x128xf32, #tpu.memory_space<vmem>>, vector<1x128xf32>
    %199 = arith.addf %198, %196 : vector<1x128xf32>
    %200 = arith.index_cast %186 : i32 to index
    %c0_64 = arith.constant 0 : index
    %201 = vector.load %arg14[%200, %c0_64] : memref<16x128xf32, #tpu.memory_space<vmem>>, vector<1x128xf32>
    tpu.vector_store %arg14[%200, %c0_64], %199 {strides = array<i32>} : memref<16x128xf32, #tpu.memory_space<vmem>>, vector<1x128xf32>,
    %c9_i32 = arith.constant 9 : i32
    %c1_i32_65 = arith.constant 1 : i32
    %202 = arith.muli %c9_i32, %c1_i32_65 : i32
    %c0_i32_66 = arith.constant 0 : i32
    %203 = arith.addi %c0_i32_66, %202 : i32
    %204 = arith.index_cast %203 : i32 to index
    %205 = memref.load %arg1[%204] : memref<32xi32, #tpu.memory_space<smem>>
    %206 = arith.index_cast %203 : i32 to index
    %207 = memref.load %arg2[%206] : memref<32xi32, #tpu.memory_space<smem>>
    %208 = arith.index_cast %205 : i32 to index
    %c0_67 = arith.constant 0 : index
    %209 = vector.load %arg13[%208, %c0_67] : memref<16x128xf32, #tpu.memory_space<vmem>>, vector<1x128xf32>
    %210 = arith.index_cast %203 : i32 to index
    %211 = memref.load %arg3[%210] : memref<32xf32, #tpu.memory_space<smem>>
    %212 = vector.broadcast %211 : f32 to vector<1x128xf32>
    %213 = arith.mulf %212, %8 : vector<1x128xf32>
    %214 = arith.addf %209, %213 : vector<1x128xf32>
    %215 = arith.addf %214, %10 : vector<1x128xf32>
    %cst_68 = arith.constant 0.000000e+00 : f32
    %216 = vector.broadcast %cst_68 : f32 to vector<1x128xf32>
    %217 = arith.maximumf %215, %216 : vector<1x128xf32>
    %218 = arith.index_cast %207 : i32 to index
    %c0_69 = arith.constant 0 : index
    %219 = vector.load %arg14[%218, %c0_69] : memref<16x128xf32, #tpu.memory_space<vmem>>, vector<1x128xf32>
    %220 = arith.addf %219, %217 : vector<1x128xf32>
    %221 = arith.index_cast %207 : i32 to index
    %c0_70 = arith.constant 0 : index
    %222 = vector.load %arg14[%221, %c0_70] : memref<16x128xf32, #tpu.memory_space<vmem>>, vector<1x128xf32>
    tpu.vector_store %arg14[%221, %c0_70], %220 {strides = array<i32>} : memref<16x128xf32, #tpu.memory_space<vmem>>, vector<1x128xf32>,
    %c10_i32 = arith.constant 10 : i32
    %c1_i32_71 = arith.constant 1 : i32
    %223 = arith.muli %c10_i32, %c1_i32_71 : i32
    %c0_i32_72 = arith.constant 0 : i32
    %224 = arith.addi %c0_i32_72, %223 : i32
    %225 = arith.index_cast %224 : i32 to index
    %226 = memref.load %arg1[%225] : memref<32xi32, #tpu.memory_space<smem>>
    %227 = arith.index_cast %224 : i32 to index
    %228 = memref.load %arg2[%227] : memref<32xi32, #tpu.memory_space<smem>>
    %229 = arith.index_cast %226 : i32 to index
    %c0_73 = arith.constant 0 : index
    %230 = vector.load %arg13[%229, %c0_73] : memref<16x128xf32, #tpu.memory_space<vmem>>, vector<1x128xf32>
    %231 = arith.index_cast %224 : i32 to index
    %232 = memref.load %arg3[%231] : memref<32xf32, #tpu.memory_space<smem>>
    %233 = vector.broadcast %232 : f32 to vector<1x128xf32>
    %234 = arith.mulf %233, %8 : vector<1x128xf32>
    %235 = arith.addf %230, %234 : vector<1x128xf32>
    %236 = arith.addf %235, %10 : vector<1x128xf32>
    %cst_74 = arith.constant 0.000000e+00 : f32
    %237 = vector.broadcast %cst_74 : f32 to vector<1x128xf32>
    %238 = arith.maximumf %236, %237 : vector<1x128xf32>
    %239 = arith.index_cast %228 : i32 to index
    %c0_75 = arith.constant 0 : index
    %240 = vector.load %arg14[%239, %c0_75] : memref<16x128xf32, #tpu.memory_space<vmem>>, vector<1x128xf32>
    %241 = arith.addf %240, %238 : vector<1x128xf32>
    %242 = arith.index_cast %228 : i32 to index
    %c0_76 = arith.constant 0 : index
    %243 = vector.load %arg14[%242, %c0_76] : memref<16x128xf32, #tpu.memory_space<vmem>>, vector<1x128xf32>
    tpu.vector_store %arg14[%242, %c0_76], %241 {strides = array<i32>} : memref<16x128xf32, #tpu.memory_space<vmem>>, vector<1x128xf32>,
    %c11_i32 = arith.constant 11 : i32
    %c1_i32_77 = arith.constant 1 : i32
    %244 = arith.muli %c11_i32, %c1_i32_77 : i32
    %c0_i32_78 = arith.constant 0 : i32
    %245 = arith.addi %c0_i32_78, %244 : i32
    %246 = arith.index_cast %245 : i32 to index
    %247 = memref.load %arg1[%246] : memref<32xi32, #tpu.memory_space<smem>>
    %248 = arith.index_cast %245 : i32 to index
    %249 = memref.load %arg2[%248] : memref<32xi32, #tpu.memory_space<smem>>
    %250 = arith.index_cast %247 : i32 to index
    %c0_79 = arith.constant 0 : index
    %251 = vector.load %arg13[%250, %c0_79] : memref<16x128xf32, #tpu.memory_space<vmem>>, vector<1x128xf32>
    %252 = arith.index_cast %245 : i32 to index
    %253 = memref.load %arg3[%252] : memref<32xf32, #tpu.memory_space<smem>>
    %254 = vector.broadcast %253 : f32 to vector<1x128xf32>
    %255 = arith.mulf %254, %8 : vector<1x128xf32>
    %256 = arith.addf %251, %255 : vector<1x128xf32>
    %257 = arith.addf %256, %10 : vector<1x128xf32>
    %cst_80 = arith.constant 0.000000e+00 : f32
    %258 = vector.broadcast %cst_80 : f32 to vector<1x128xf32>
    %259 = arith.maximumf %257, %258 : vector<1x128xf32>
    %260 = arith.index_cast %249 : i32 to index
    %c0_81 = arith.constant 0 : index
    %261 = vector.load %arg14[%260, %c0_81] : memref<16x128xf32, #tpu.memory_space<vmem>>, vector<1x128xf32>
    %262 = arith.addf %261, %259 : vector<1x128xf32>
    %263 = arith.index_cast %249 : i32 to index
    %c0_82 = arith.constant 0 : index
    %264 = vector.load %arg14[%263, %c0_82] : memref<16x128xf32, #tpu.memory_space<vmem>>, vector<1x128xf32>
    tpu.vector_store %arg14[%263, %c0_82], %262 {strides = array<i32>} : memref<16x128xf32, #tpu.memory_space<vmem>>, vector<1x128xf32>,
    %c12_i32 = arith.constant 12 : i32
    %c1_i32_83 = arith.constant 1 : i32
    %265 = arith.muli %c12_i32, %c1_i32_83 : i32
    %c0_i32_84 = arith.constant 0 : i32
    %266 = arith.addi %c0_i32_84, %265 : i32
    %267 = arith.index_cast %266 : i32 to index
    %268 = memref.load %arg1[%267] : memref<32xi32, #tpu.memory_space<smem>>
    %269 = arith.index_cast %266 : i32 to index
    %270 = memref.load %arg2[%269] : memref<32xi32, #tpu.memory_space<smem>>
    %271 = arith.index_cast %268 : i32 to index
    %c0_85 = arith.constant 0 : index
    %272 = vector.load %arg13[%271, %c0_85] : memref<16x128xf32, #tpu.memory_space<vmem>>, vector<1x128xf32>
    %273 = arith.index_cast %266 : i32 to index
    %274 = memref.load %arg3[%273] : memref<32xf32, #tpu.memory_space<smem>>
    %275 = vector.broadcast %274 : f32 to vector<1x128xf32>
    %276 = arith.mulf %275, %8 : vector<1x128xf32>
    %277 = arith.addf %272, %276 : vector<1x128xf32>
    %278 = arith.addf %277, %10 : vector<1x128xf32>
    %cst_86 = arith.constant 0.000000e+00 : f32
    %279 = vector.broadcast %cst_86 : f32 to vector<1x128xf32>
    %280 = arith.maximumf %278, %279 : vector<1x128xf32>
    %281 = arith.index_cast %270 : i32 to index
    %c0_87 = arith.constant 0 : index
    %282 = vector.load %arg14[%281, %c0_87] : memref<16x128xf32, #tpu.memory_space<vmem>>, vector<1x128xf32>
    %283 = arith.addf %282, %280 : vector<1x128xf32>
    %284 = arith.index_cast %270 : i32 to index
    %c0_88 = arith.constant 0 : index
    %285 = vector.load %arg14[%284, %c0_88] : memref<16x128xf32, #tpu.memory_space<vmem>>, vector<1x128xf32>
    tpu.vector_store %arg14[%284, %c0_88], %283 {strides = array<i32>} : memref<16x128xf32, #tpu.memory_space<vmem>>, vector<1x128xf32>,
    %c13_i32 = arith.constant 13 : i32
    %c1_i32_89 = arith.constant 1 : i32
    %286 = arith.muli %c13_i32, %c1_i32_89 : i32
    %c0_i32_90 = arith.constant 0 : i32
    %287 = arith.addi %c0_i32_90, %286 : i32
    %288 = arith.index_cast %287 : i32 to index
    %289 = memref.load %arg1[%288] : memref<32xi32, #tpu.memory_space<smem>>
    %290 = arith.index_cast %287 : i32 to index
    %291 = memref.load %arg2[%290] : memref<32xi32, #tpu.memory_space<smem>>
    %292 = arith.index_cast %289 : i32 to index
    %c0_91 = arith.constant 0 : index
    %293 = vector.load %arg13[%292, %c0_91] : memref<16x128xf32, #tpu.memory_space<vmem>>, vector<1x128xf32>
    %294 = arith.index_cast %287 : i32 to index
    %295 = memref.load %arg3[%294] : memref<32xf32, #tpu.memory_space<smem>>
    %296 = vector.broadcast %295 : f32 to vector<1x128xf32>
    %297 = arith.mulf %296, %8 : vector<1x128xf32>
    %298 = arith.addf %293, %297 : vector<1x128xf32>
    %299 = arith.addf %298, %10 : vector<1x128xf32>
    %cst_92 = arith.constant 0.000000e+00 : f32
    %300 = vector.broadcast %cst_92 : f32 to vector<1x128xf32>
    %301 = arith.maximumf %299, %300 : vector<1x128xf32>
    %302 = arith.index_cast %291 : i32 to index
    %c0_93 = arith.constant 0 : index
    %303 = vector.load %arg14[%302, %c0_93] : memref<16x128xf32, #tpu.memory_space<vmem>>, vector<1x128xf32>
    %304 = arith.addf %303, %301 : vector<1x128xf32>
    %305 = arith.index_cast %291 : i32 to index
    %c0_94 = arith.constant 0 : index
    %306 = vector.load %arg14[%305, %c0_94] : memref<16x128xf32, #tpu.memory_space<vmem>>, vector<1x128xf32>
    tpu.vector_store %arg14[%305, %c0_94], %304 {strides = array<i32>} : memref<16x128xf32, #tpu.memory_space<vmem>>, vector<1x128xf32>,
    %c14_i32 = arith.constant 14 : i32
    %c1_i32_95 = arith.constant 1 : i32
    %307 = arith.muli %c14_i32, %c1_i32_95 : i32
    %c0_i32_96 = arith.constant 0 : i32
    %308 = arith.addi %c0_i32_96, %307 : i32
    %309 = arith.index_cast %308 : i32 to index
    %310 = memref.load %arg1[%309] : memref<32xi32, #tpu.memory_space<smem>>
    %311 = arith.index_cast %308 : i32 to index
    %312 = memref.load %arg2[%311] : memref<32xi32, #tpu.memory_space<smem>>
    %313 = arith.index_cast %310 : i32 to index
    %c0_97 = arith.constant 0 : index
    %314 = vector.load %arg13[%313, %c0_97] : memref<16x128xf32, #tpu.memory_space<vmem>>, vector<1x128xf32>
    %315 = arith.index_cast %308 : i32 to index
    %316 = memref.load %arg3[%315] : memref<32xf32, #tpu.memory_space<smem>>
    %317 = vector.broadcast %316 : f32 to vector<1x128xf32>
    %318 = arith.mulf %317, %8 : vector<1x128xf32>
    %319 = arith.addf %314, %318 : vector<1x128xf32>
    %320 = arith.addf %319, %10 : vector<1x128xf32>
    %cst_98 = arith.constant 0.000000e+00 : f32
    %321 = vector.broadcast %cst_98 : f32 to vector<1x128xf32>
    %322 = arith.maximumf %320, %321 : vector<1x128xf32>
    %323 = arith.index_cast %312 : i32 to index
    %c0_99 = arith.constant 0 : index
    %324 = vector.load %arg14[%323, %c0_99] : memref<16x128xf32, #tpu.memory_space<vmem>>, vector<1x128xf32>
    %325 = arith.addf %324, %322 : vector<1x128xf32>
    %326 = arith.index_cast %312 : i32 to index
    %c0_100 = arith.constant 0 : index
    %327 = vector.load %arg14[%326, %c0_100] : memref<16x128xf32, #tpu.memory_space<vmem>>, vector<1x128xf32>
    tpu.vector_store %arg14[%326, %c0_100], %325 {strides = array<i32>} : memref<16x128xf32, #tpu.memory_space<vmem>>, vector<1x128xf32>,
    %c15_i32 = arith.constant 15 : i32
    %c1_i32_101 = arith.constant 1 : i32
    %328 = arith.muli %c15_i32, %c1_i32_101 : i32
    %c0_i32_102 = arith.constant 0 : i32
    %329 = arith.addi %c0_i32_102, %328 : i32
    %330 = arith.index_cast %329 : i32 to index
    %331 = memref.load %arg1[%330] : memref<32xi32, #tpu.memory_space<smem>>
    %332 = arith.index_cast %329 : i32 to index
    %333 = memref.load %arg2[%332] : memref<32xi32, #tpu.memory_space<smem>>
    %334 = arith.index_cast %331 : i32 to index
    %c0_103 = arith.constant 0 : index
    %335 = vector.load %arg13[%334, %c0_103] : memref<16x128xf32, #tpu.memory_space<vmem>>, vector<1x128xf32>
    %336 = arith.index_cast %329 : i32 to index
    %337 = memref.load %arg3[%336] : memref<32xf32, #tpu.memory_space<smem>>
    %338 = vector.broadcast %337 : f32 to vector<1x128xf32>
    %339 = arith.mulf %338, %8 : vector<1x128xf32>
    %340 = arith.addf %335, %339 : vector<1x128xf32>
    %341 = arith.addf %340, %10 : vector<1x128xf32>
    %cst_104 = arith.constant 0.000000e+00 : f32
    %342 = vector.broadcast %cst_104 : f32 to vector<1x128xf32>
    %343 = arith.maximumf %341, %342 : vector<1x128xf32>
    %344 = arith.index_cast %333 : i32 to index
    %c0_105 = arith.constant 0 : index
    %345 = vector.load %arg14[%344, %c0_105] : memref<16x128xf32, #tpu.memory_space<vmem>>, vector<1x128xf32>
    %346 = arith.addf %345, %343 : vector<1x128xf32>
    %347 = arith.index_cast %333 : i32 to index
    %c0_106 = arith.constant 0 : index
    %348 = vector.load %arg14[%347, %c0_106] : memref<16x128xf32, #tpu.memory_space<vmem>>, vector<1x128xf32>
    tpu.vector_store %arg14[%347, %c0_106], %346 {strides = array<i32>} : memref<16x128xf32, #tpu.memory_space<vmem>>, vector<1x128xf32>,
    %c16_i32_107 = arith.constant 16 : i32
    %c1_i32_108 = arith.constant 1 : i32
    %349 = arith.muli %c16_i32_107, %c1_i32_108 : i32
    %c0_i32_109 = arith.constant 0 : i32
    %350 = arith.addi %c0_i32_109, %349 : i32
    %351 = arith.index_cast %350 : i32 to index
    %352 = memref.load %arg1[%351] : memref<32xi32, #tpu.memory_space<smem>>
    %353 = arith.index_cast %350 : i32 to index
    %354 = memref.load %arg2[%353] : memref<32xi32, #tpu.memory_space<smem>>
    %355 = arith.index_cast %352 : i32 to index
    %c0_110 = arith.constant 0 : index
    %356 = vector.load %arg13[%355, %c0_110] : memref<16x128xf32, #tpu.memory_space<vmem>>, vector<1x128xf32>
    %357 = arith.index_cast %350 : i32 to index
    %358 = memref.load %arg3[%357] : memref<32xf32, #tpu.memory_space<smem>>
    %359 = vector.broadcast %358 : f32 to vector<1x128xf32>
    %360 = arith.mulf %359, %8 : vector<1x128xf32>
    %361 = arith.addf %356, %360 : vector<1x128xf32>
    %362 = arith.addf %361, %10 : vector<1x128xf32>
    %cst_111 = arith.constant 0.000000e+00 : f32
    %363 = vector.broadcast %cst_111 : f32 to vector<1x128xf32>
    %364 = arith.maximumf %362, %363 : vector<1x128xf32>
    %365 = arith.index_cast %354 : i32 to index
    %c0_112 = arith.constant 0 : index
    %366 = vector.load %arg14[%365, %c0_112] : memref<16x128xf32, #tpu.memory_space<vmem>>, vector<1x128xf32>
    %367 = arith.addf %366, %364 : vector<1x128xf32>
    %368 = arith.index_cast %354 : i32 to index
    %c0_113 = arith.constant 0 : index
    %369 = vector.load %arg14[%368, %c0_113] : memref<16x128xf32, #tpu.memory_space<vmem>>, vector<1x128xf32>
    tpu.vector_store %arg14[%368, %c0_113], %367 {strides = array<i32>} : memref<16x128xf32, #tpu.memory_space<vmem>>, vector<1x128xf32>,
    %c17_i32 = arith.constant 17 : i32
    %c1_i32_114 = arith.constant 1 : i32
    %370 = arith.muli %c17_i32, %c1_i32_114 : i32
    %c0_i32_115 = arith.constant 0 : i32
    %371 = arith.addi %c0_i32_115, %370 : i32
    %372 = arith.index_cast %371 : i32 to index
    %373 = memref.load %arg1[%372] : memref<32xi32, #tpu.memory_space<smem>>
    %374 = arith.index_cast %371 : i32 to index
    %375 = memref.load %arg2[%374] : memref<32xi32, #tpu.memory_space<smem>>
    %376 = arith.index_cast %373 : i32 to index
    %c0_116 = arith.constant 0 : index
    %377 = vector.load %arg13[%376, %c0_116] : memref<16x128xf32, #tpu.memory_space<vmem>>, vector<1x128xf32>
    %378 = arith.index_cast %371 : i32 to index
    %379 = memref.load %arg3[%378] : memref<32xf32, #tpu.memory_space<smem>>
    %380 = vector.broadcast %379 : f32 to vector<1x128xf32>
    %381 = arith.mulf %380, %8 : vector<1x128xf32>
    %382 = arith.addf %377, %381 : vector<1x128xf32>
    %383 = arith.addf %382, %10 : vector<1x128xf32>
    %cst_117 = arith.constant 0.000000e+00 : f32
    %384 = vector.broadcast %cst_117 : f32 to vector<1x128xf32>
    %385 = arith.maximumf %383, %384 : vector<1x128xf32>
    %386 = arith.index_cast %375 : i32 to index
    %c0_118 = arith.constant 0 : index
    %387 = vector.load %arg14[%386, %c0_118] : memref<16x128xf32, #tpu.memory_space<vmem>>, vector<1x128xf32>
    %388 = arith.addf %387, %385 : vector<1x128xf32>
    %389 = arith.index_cast %375 : i32 to index
    %c0_119 = arith.constant 0 : index
    %390 = vector.load %arg14[%389, %c0_119] : memref<16x128xf32, #tpu.memory_space<vmem>>, vector<1x128xf32>
    tpu.vector_store %arg14[%389, %c0_119], %388 {strides = array<i32>} : memref<16x128xf32, #tpu.memory_space<vmem>>, vector<1x128xf32>,
    %c18_i32 = arith.constant 18 : i32
    %c1_i32_120 = arith.constant 1 : i32
    %391 = arith.muli %c18_i32, %c1_i32_120 : i32
    %c0_i32_121 = arith.constant 0 : i32
    %392 = arith.addi %c0_i32_121, %391 : i32
    %393 = arith.index_cast %392 : i32 to index
    %394 = memref.load %arg1[%393] : memref<32xi32, #tpu.memory_space<smem>>
    %395 = arith.index_cast %392 : i32 to index
    %396 = memref.load %arg2[%395] : memref<32xi32, #tpu.memory_space<smem>>
    %397 = arith.index_cast %394 : i32 to index
    %c0_122 = arith.constant 0 : index
    %398 = vector.load %arg13[%397, %c0_122] : memref<16x128xf32, #tpu.memory_space<vmem>>, vector<1x128xf32>
    %399 = arith.index_cast %392 : i32 to index
    %400 = memref.load %arg3[%399] : memref<32xf32, #tpu.memory_space<smem>>
    %401 = vector.broadcast %400 : f32 to vector<1x128xf32>
    %402 = arith.mulf %401, %8 : vector<1x128xf32>
    %403 = arith.addf %398, %402 : vector<1x128xf32>
    %404 = arith.addf %403, %10 : vector<1x128xf32>
    %cst_123 = arith.constant 0.000000e+00 : f32
    %405 = vector.broadcast %cst_123 : f32 to vector<1x128xf32>
    %406 = arith.maximumf %404, %405 : vector<1x128xf32>
    %407 = arith.index_cast %396 : i32 to index
    %c0_124 = arith.constant 0 : index
    %408 = vector.load %arg14[%407, %c0_124] : memref<16x128xf32, #tpu.memory_space<vmem>>, vector<1x128xf32>
    %409 = arith.addf %408, %406 : vector<1x128xf32>
    %410 = arith.index_cast %396 : i32 to index
    %c0_125 = arith.constant 0 : index
    %411 = vector.load %arg14[%410, %c0_125] : memref<16x128xf32, #tpu.memory_space<vmem>>, vector<1x128xf32>
    tpu.vector_store %arg14[%410, %c0_125], %409 {strides = array<i32>} : memref<16x128xf32, #tpu.memory_space<vmem>>, vector<1x128xf32>,
    %c19_i32 = arith.constant 19 : i32
    %c1_i32_126 = arith.constant 1 : i32
    %412 = arith.muli %c19_i32, %c1_i32_126 : i32
    %c0_i32_127 = arith.constant 0 : i32
    %413 = arith.addi %c0_i32_127, %412 : i32
    %414 = arith.index_cast %413 : i32 to index
    %415 = memref.load %arg1[%414] : memref<32xi32, #tpu.memory_space<smem>>
    %416 = arith.index_cast %413 : i32 to index
    %417 = memref.load %arg2[%416] : memref<32xi32, #tpu.memory_space<smem>>
    %418 = arith.index_cast %415 : i32 to index
    %c0_128 = arith.constant 0 : index
    %419 = vector.load %arg13[%418, %c0_128] : memref<16x128xf32, #tpu.memory_space<vmem>>, vector<1x128xf32>
    %420 = arith.index_cast %413 : i32 to index
    %421 = memref.load %arg3[%420] : memref<32xf32, #tpu.memory_space<smem>>
    %422 = vector.broadcast %421 : f32 to vector<1x128xf32>
    %423 = arith.mulf %422, %8 : vector<1x128xf32>
    %424 = arith.addf %419, %423 : vector<1x128xf32>
    %425 = arith.addf %424, %10 : vector<1x128xf32>
    %cst_129 = arith.constant 0.000000e+00 : f32
    %426 = vector.broadcast %cst_129 : f32 to vector<1x128xf32>
    %427 = arith.maximumf %425, %426 : vector<1x128xf32>
    %428 = arith.index_cast %417 : i32 to index
    %c0_130 = arith.constant 0 : index
    %429 = vector.load %arg14[%428, %c0_130] : memref<16x128xf32, #tpu.memory_space<vmem>>, vector<1x128xf32>
    %430 = arith.addf %429, %427 : vector<1x128xf32>
    %431 = arith.index_cast %417 : i32 to index
    %c0_131 = arith.constant 0 : index
    %432 = vector.load %arg14[%431, %c0_131] : memref<16x128xf32, #tpu.memory_space<vmem>>, vector<1x128xf32>
    tpu.vector_store %arg14[%431, %c0_131], %430 {strides = array<i32>} : memref<16x128xf32, #tpu.memory_space<vmem>>, vector<1x128xf32>,
    %c20_i32 = arith.constant 20 : i32
    %c1_i32_132 = arith.constant 1 : i32
    %433 = arith.muli %c20_i32, %c1_i32_132 : i32
    %c0_i32_133 = arith.constant 0 : i32
    %434 = arith.addi %c0_i32_133, %433 : i32
    %435 = arith.index_cast %434 : i32 to index
    %436 = memref.load %arg1[%435] : memref<32xi32, #tpu.memory_space<smem>>
    %437 = arith.index_cast %434 : i32 to index
    %438 = memref.load %arg2[%437] : memref<32xi32, #tpu.memory_space<smem>>
    %439 = arith.index_cast %436 : i32 to index
    %c0_134 = arith.constant 0 : index
    %440 = vector.load %arg13[%439, %c0_134] : memref<16x128xf32, #tpu.memory_space<vmem>>, vector<1x128xf32>
    %441 = arith.index_cast %434 : i32 to index
    %442 = memref.load %arg3[%441] : memref<32xf32, #tpu.memory_space<smem>>
    %443 = vector.broadcast %442 : f32 to vector<1x128xf32>
    %444 = arith.mulf %443, %8 : vector<1x128xf32>
    %445 = arith.addf %440, %444 : vector<1x128xf32>
    %446 = arith.addf %445, %10 : vector<1x128xf32>
    %cst_135 = arith.constant 0.000000e+00 : f32
    %447 = vector.broadcast %cst_135 : f32 to vector<1x128xf32>
    %448 = arith.maximumf %446, %447 : vector<1x128xf32>
    %449 = arith.index_cast %438 : i32 to index
    %c0_136 = arith.constant 0 : index
    %450 = vector.load %arg14[%449, %c0_136] : memref<16x128xf32, #tpu.memory_space<vmem>>, vector<1x128xf32>
    %451 = arith.addf %450, %448 : vector<1x128xf32>
    %452 = arith.index_cast %438 : i32 to index
    %c0_137 = arith.constant 0 : index
    %453 = vector.load %arg14[%452, %c0_137] : memref<16x128xf32, #tpu.memory_space<vmem>>, vector<1x128xf32>
    tpu.vector_store %arg14[%452, %c0_137], %451 {strides = array<i32>} : memref<16x128xf32, #tpu.memory_space<vmem>>, vector<1x128xf32>,
    %c21_i32 = arith.constant 21 : i32
    %c1_i32_138 = arith.constant 1 : i32
    %454 = arith.muli %c21_i32, %c1_i32_138 : i32
    %c0_i32_139 = arith.constant 0 : i32
    %455 = arith.addi %c0_i32_139, %454 : i32
    %456 = arith.index_cast %455 : i32 to index
    %457 = memref.load %arg1[%456] : memref<32xi32, #tpu.memory_space<smem>>
    %458 = arith.index_cast %455 : i32 to index
    %459 = memref.load %arg2[%458] : memref<32xi32, #tpu.memory_space<smem>>
    %460 = arith.index_cast %457 : i32 to index
    %c0_140 = arith.constant 0 : index
    %461 = vector.load %arg13[%460, %c0_140] : memref<16x128xf32, #tpu.memory_space<vmem>>, vector<1x128xf32>
    %462 = arith.index_cast %455 : i32 to index
    %463 = memref.load %arg3[%462] : memref<32xf32, #tpu.memory_space<smem>>
    %464 = vector.broadcast %463 : f32 to vector<1x128xf32>
    %465 = arith.mulf %464, %8 : vector<1x128xf32>
    %466 = arith.addf %461, %465 : vector<1x128xf32>
    %467 = arith.addf %466, %10 : vector<1x128xf32>
    %cst_141 = arith.constant 0.000000e+00 : f32
    %468 = vector.broadcast %cst_141 : f32 to vector<1x128xf32>
    %469 = arith.maximumf %467, %468 : vector<1x128xf32>
    %470 = arith.index_cast %459 : i32 to index
    %c0_142 = arith.constant 0 : index
    %471 = vector.load %arg14[%470, %c0_142] : memref<16x128xf32, #tpu.memory_space<vmem>>, vector<1x128xf32>
    %472 = arith.addf %471, %469 : vector<1x128xf32>
    %473 = arith.index_cast %459 : i32 to index
    %c0_143 = arith.constant 0 : index
    %474 = vector.load %arg14[%473, %c0_143] : memref<16x128xf32, #tpu.memory_space<vmem>>, vector<1x128xf32>
    tpu.vector_store %arg14[%473, %c0_143], %472 {strides = array<i32>} : memref<16x128xf32, #tpu.memory_space<vmem>>, vector<1x128xf32>,
    %c22_i32 = arith.constant 22 : i32
    %c1_i32_144 = arith.constant 1 : i32
    %475 = arith.muli %c22_i32, %c1_i32_144 : i32
    %c0_i32_145 = arith.constant 0 : i32
    %476 = arith.addi %c0_i32_145, %475 : i32
    %477 = arith.index_cast %476 : i32 to index
    %478 = memref.load %arg1[%477] : memref<32xi32, #tpu.memory_space<smem>>
    %479 = arith.index_cast %476 : i32 to index
    %480 = memref.load %arg2[%479] : memref<32xi32, #tpu.memory_space<smem>>
    %481 = arith.index_cast %478 : i32 to index
    %c0_146 = arith.constant 0 : index
    %482 = vector.load %arg13[%481, %c0_146] : memref<16x128xf32, #tpu.memory_space<vmem>>, vector<1x128xf32>
    %483 = arith.index_cast %476 : i32 to index
    %484 = memref.load %arg3[%483] : memref<32xf32, #tpu.memory_space<smem>>
    %485 = vector.broadcast %484 : f32 to vector<1x128xf32>
    %486 = arith.mulf %485, %8 : vector<1x128xf32>
    %487 = arith.addf %482, %486 : vector<1x128xf32>
    %488 = arith.addf %487, %10 : vector<1x128xf32>
    %cst_147 = arith.constant 0.000000e+00 : f32
    %489 = vector.broadcast %cst_147 : f32 to vector<1x128xf32>
    %490 = arith.maximumf %488, %489 : vector<1x128xf32>
    %491 = arith.index_cast %480 : i32 to index
    %c0_148 = arith.constant 0 : index
    %492 = vector.load %arg14[%491, %c0_148] : memref<16x128xf32, #tpu.memory_space<vmem>>, vector<1x128xf32>
    %493 = arith.addf %492, %490 : vector<1x128xf32>
    %494 = arith.index_cast %480 : i32 to index
    %c0_149 = arith.constant 0 : index
    %495 = vector.load %arg14[%494, %c0_149] : memref<16x128xf32, #tpu.memory_space<vmem>>, vector<1x128xf32>
    tpu.vector_store %arg14[%494, %c0_149], %493 {strides = array<i32>} : memref<16x128xf32, #tpu.memory_space<vmem>>, vector<1x128xf32>,
    %c23_i32 = arith.constant 23 : i32
    %c1_i32_150 = arith.constant 1 : i32
    %496 = arith.muli %c23_i32, %c1_i32_150 : i32
    %c0_i32_151 = arith.constant 0 : i32
    %497 = arith.addi %c0_i32_151, %496 : i32
    %498 = arith.index_cast %497 : i32 to index
    %499 = memref.load %arg1[%498] : memref<32xi32, #tpu.memory_space<smem>>
    %500 = arith.index_cast %497 : i32 to index
    %501 = memref.load %arg2[%500] : memref<32xi32, #tpu.memory_space<smem>>
    %502 = arith.index_cast %499 : i32 to index
    %c0_152 = arith.constant 0 : index
    %503 = vector.load %arg13[%502, %c0_152] : memref<16x128xf32, #tpu.memory_space<vmem>>, vector<1x128xf32>
    %504 = arith.index_cast %497 : i32 to index
    %505 = memref.load %arg3[%504] : memref<32xf32, #tpu.memory_space<smem>>
    %506 = vector.broadcast %505 : f32 to vector<1x128xf32>
    %507 = arith.mulf %506, %8 : vector<1x128xf32>
    %508 = arith.addf %503, %507 : vector<1x128xf32>
    %509 = arith.addf %508, %10 : vector<1x128xf32>
    %cst_153 = arith.constant 0.000000e+00 : f32
    %510 = vector.broadcast %cst_153 : f32 to vector<1x128xf32>
    %511 = arith.maximumf %509, %510 : vector<1x128xf32>
    %512 = arith.index_cast %501 : i32 to index
    %c0_154 = arith.constant 0 : index
    %513 = vector.load %arg14[%512, %c0_154] : memref<16x128xf32, #tpu.memory_space<vmem>>, vector<1x128xf32>
    %514 = arith.addf %513, %511 : vector<1x128xf32>
    %515 = arith.index_cast %501 : i32 to index
    %c0_155 = arith.constant 0 : index
    %516 = vector.load %arg14[%515, %c0_155] : memref<16x128xf32, #tpu.memory_space<vmem>>, vector<1x128xf32>
    tpu.vector_store %arg14[%515, %c0_155], %514 {strides = array<i32>} : memref<16x128xf32, #tpu.memory_space<vmem>>, vector<1x128xf32>,
    %c24_i32 = arith.constant 24 : i32
    %c1_i32_156 = arith.constant 1 : i32
    %517 = arith.muli %c24_i32, %c1_i32_156 : i32
    %c0_i32_157 = arith.constant 0 : i32
    %518 = arith.addi %c0_i32_157, %517 : i32
    %519 = arith.index_cast %518 : i32 to index
    %520 = memref.load %arg1[%519] : memref<32xi32, #tpu.memory_space<smem>>
    %521 = arith.index_cast %518 : i32 to index
    %522 = memref.load %arg2[%521] : memref<32xi32, #tpu.memory_space<smem>>
    %523 = arith.index_cast %520 : i32 to index
    %c0_158 = arith.constant 0 : index
    %524 = vector.load %arg13[%523, %c0_158] : memref<16x128xf32, #tpu.memory_space<vmem>>, vector<1x128xf32>
    %525 = arith.index_cast %518 : i32 to index
    %526 = memref.load %arg3[%525] : memref<32xf32, #tpu.memory_space<smem>>
    %527 = vector.broadcast %526 : f32 to vector<1x128xf32>
    %528 = arith.mulf %527, %8 : vector<1x128xf32>
    %529 = arith.addf %524, %528 : vector<1x128xf32>
    %530 = arith.addf %529, %10 : vector<1x128xf32>
    %cst_159 = arith.constant 0.000000e+00 : f32
    %531 = vector.broadcast %cst_159 : f32 to vector<1x128xf32>
    %532 = arith.maximumf %530, %531 : vector<1x128xf32>
    %533 = arith.index_cast %522 : i32 to index
    %c0_160 = arith.constant 0 : index
    %534 = vector.load %arg14[%533, %c0_160] : memref<16x128xf32, #tpu.memory_space<vmem>>, vector<1x128xf32>
    %535 = arith.addf %534, %532 : vector<1x128xf32>
    %536 = arith.index_cast %522 : i32 to index
    %c0_161 = arith.constant 0 : index
    %537 = vector.load %arg14[%536, %c0_161] : memref<16x128xf32, #tpu.memory_space<vmem>>, vector<1x128xf32>
    tpu.vector_store %arg14[%536, %c0_161], %535 {strides = array<i32>} : memref<16x128xf32, #tpu.memory_space<vmem>>, vector<1x128xf32>,
    %c25_i32 = arith.constant 25 : i32
    %c1_i32_162 = arith.constant 1 : i32
    %538 = arith.muli %c25_i32, %c1_i32_162 : i32
    %c0_i32_163 = arith.constant 0 : i32
    %539 = arith.addi %c0_i32_163, %538 : i32
    %540 = arith.index_cast %539 : i32 to index
    %541 = memref.load %arg1[%540] : memref<32xi32, #tpu.memory_space<smem>>
    %542 = arith.index_cast %539 : i32 to index
    %543 = memref.load %arg2[%542] : memref<32xi32, #tpu.memory_space<smem>>
    %544 = arith.index_cast %541 : i32 to index
    %c0_164 = arith.constant 0 : index
    %545 = vector.load %arg13[%544, %c0_164] : memref<16x128xf32, #tpu.memory_space<vmem>>, vector<1x128xf32>
    %546 = arith.index_cast %539 : i32 to index
    %547 = memref.load %arg3[%546] : memref<32xf32, #tpu.memory_space<smem>>
    %548 = vector.broadcast %547 : f32 to vector<1x128xf32>
    %549 = arith.mulf %548, %8 : vector<1x128xf32>
    %550 = arith.addf %545, %549 : vector<1x128xf32>
    %551 = arith.addf %550, %10 : vector<1x128xf32>
    %cst_165 = arith.constant 0.000000e+00 : f32
    %552 = vector.broadcast %cst_165 : f32 to vector<1x128xf32>
    %553 = arith.maximumf %551, %552 : vector<1x128xf32>
    %554 = arith.index_cast %543 : i32 to index
    %c0_166 = arith.constant 0 : index
    %555 = vector.load %arg14[%554, %c0_166] : memref<16x128xf32, #tpu.memory_space<vmem>>, vector<1x128xf32>
    %556 = arith.addf %555, %553 : vector<1x128xf32>
    %557 = arith.index_cast %543 : i32 to index
    %c0_167 = arith.constant 0 : index
    %558 = vector.load %arg14[%557, %c0_167] : memref<16x128xf32, #tpu.memory_space<vmem>>, vector<1x128xf32>
    tpu.vector_store %arg14[%557, %c0_167], %556 {strides = array<i32>} : memref<16x128xf32, #tpu.memory_space<vmem>>, vector<1x128xf32>,
    %c26_i32 = arith.constant 26 : i32
    %c1_i32_168 = arith.constant 1 : i32
    %559 = arith.muli %c26_i32, %c1_i32_168 : i32
    %c0_i32_169 = arith.constant 0 : i32
    %560 = arith.addi %c0_i32_169, %559 : i32
    %561 = arith.index_cast %560 : i32 to index
    %562 = memref.load %arg1[%561] : memref<32xi32, #tpu.memory_space<smem>>
    %563 = arith.index_cast %560 : i32 to index
    %564 = memref.load %arg2[%563] : memref<32xi32, #tpu.memory_space<smem>>
    %565 = arith.index_cast %562 : i32 to index
    %c0_170 = arith.constant 0 : index
    %566 = vector.load %arg13[%565, %c0_170] : memref<16x128xf32, #tpu.memory_space<vmem>>, vector<1x128xf32>
    %567 = arith.index_cast %560 : i32 to index
    %568 = memref.load %arg3[%567] : memref<32xf32, #tpu.memory_space<smem>>
    %569 = vector.broadcast %568 : f32 to vector<1x128xf32>
    %570 = arith.mulf %569, %8 : vector<1x128xf32>
    %571 = arith.addf %566, %570 : vector<1x128xf32>
    %572 = arith.addf %571, %10 : vector<1x128xf32>
    %cst_171 = arith.constant 0.000000e+00 : f32
    %573 = vector.broadcast %cst_171 : f32 to vector<1x128xf32>
    %574 = arith.maximumf %572, %573 : vector<1x128xf32>
    %575 = arith.index_cast %564 : i32 to index
    %c0_172 = arith.constant 0 : index
    %576 = vector.load %arg14[%575, %c0_172] : memref<16x128xf32, #tpu.memory_space<vmem>>, vector<1x128xf32>
    %577 = arith.addf %576, %574 : vector<1x128xf32>
    %578 = arith.index_cast %564 : i32 to index
    %c0_173 = arith.constant 0 : index
    %579 = vector.load %arg14[%578, %c0_173] : memref<16x128xf32, #tpu.memory_space<vmem>>, vector<1x128xf32>
    tpu.vector_store %arg14[%578, %c0_173], %577 {strides = array<i32>} : memref<16x128xf32, #tpu.memory_space<vmem>>, vector<1x128xf32>,
    %c27_i32 = arith.constant 27 : i32
    %c1_i32_174 = arith.constant 1 : i32
    %580 = arith.muli %c27_i32, %c1_i32_174 : i32
    %c0_i32_175 = arith.constant 0 : i32
    %581 = arith.addi %c0_i32_175, %580 : i32
    %582 = arith.index_cast %581 : i32 to index
    %583 = memref.load %arg1[%582] : memref<32xi32, #tpu.memory_space<smem>>
    %584 = arith.index_cast %581 : i32 to index
    %585 = memref.load %arg2[%584] : memref<32xi32, #tpu.memory_space<smem>>
    %586 = arith.index_cast %583 : i32 to index
    %c0_176 = arith.constant 0 : index
    %587 = vector.load %arg13[%586, %c0_176] : memref<16x128xf32, #tpu.memory_space<vmem>>, vector<1x128xf32>
    %588 = arith.index_cast %581 : i32 to index
    %589 = memref.load %arg3[%588] : memref<32xf32, #tpu.memory_space<smem>>
    %590 = vector.broadcast %589 : f32 to vector<1x128xf32>
    %591 = arith.mulf %590, %8 : vector<1x128xf32>
    %592 = arith.addf %587, %591 : vector<1x128xf32>
    %593 = arith.addf %592, %10 : vector<1x128xf32>
    %cst_177 = arith.constant 0.000000e+00 : f32
    %594 = vector.broadcast %cst_177 : f32 to vector<1x128xf32>
    %595 = arith.maximumf %593, %594 : vector<1x128xf32>
    %596 = arith.index_cast %585 : i32 to index
    %c0_178 = arith.constant 0 : index
    %597 = vector.load %arg14[%596, %c0_178] : memref<16x128xf32, #tpu.memory_space<vmem>>, vector<1x128xf32>
    %598 = arith.addf %597, %595 : vector<1x128xf32>
    %599 = arith.index_cast %585 : i32 to index
    %c0_179 = arith.constant 0 : index
    %600 = vector.load %arg14[%599, %c0_179] : memref<16x128xf32, #tpu.memory_space<vmem>>, vector<1x128xf32>
    tpu.vector_store %arg14[%599, %c0_179], %598 {strides = array<i32>} : memref<16x128xf32, #tpu.memory_space<vmem>>, vector<1x128xf32>,
    %c28_i32 = arith.constant 28 : i32
    %c1_i32_180 = arith.constant 1 : i32
    %601 = arith.muli %c28_i32, %c1_i32_180 : i32
    %c0_i32_181 = arith.constant 0 : i32
    %602 = arith.addi %c0_i32_181, %601 : i32
    %603 = arith.index_cast %602 : i32 to index
    %604 = memref.load %arg1[%603] : memref<32xi32, #tpu.memory_space<smem>>
    %605 = arith.index_cast %602 : i32 to index
    %606 = memref.load %arg2[%605] : memref<32xi32, #tpu.memory_space<smem>>
    %607 = arith.index_cast %604 : i32 to index
    %c0_182 = arith.constant 0 : index
    %608 = vector.load %arg13[%607, %c0_182] : memref<16x128xf32, #tpu.memory_space<vmem>>, vector<1x128xf32>
    %609 = arith.index_cast %602 : i32 to index
    %610 = memref.load %arg3[%609] : memref<32xf32, #tpu.memory_space<smem>>
    %611 = vector.broadcast %610 : f32 to vector<1x128xf32>
    %612 = arith.mulf %611, %8 : vector<1x128xf32>
    %613 = arith.addf %608, %612 : vector<1x128xf32>
    %614 = arith.addf %613, %10 : vector<1x128xf32>
    %cst_183 = arith.constant 0.000000e+00 : f32
    %615 = vector.broadcast %cst_183 : f32 to vector<1x128xf32>
    %616 = arith.maximumf %614, %615 : vector<1x128xf32>
    %617 = arith.index_cast %606 : i32 to index
    %c0_184 = arith.constant 0 : index
    %618 = vector.load %arg14[%617, %c0_184] : memref<16x128xf32, #tpu.memory_space<vmem>>, vector<1x128xf32>
    %619 = arith.addf %618, %616 : vector<1x128xf32>
    %620 = arith.index_cast %606 : i32 to index
    %c0_185 = arith.constant 0 : index
    %621 = vector.load %arg14[%620, %c0_185] : memref<16x128xf32, #tpu.memory_space<vmem>>, vector<1x128xf32>
    tpu.vector_store %arg14[%620, %c0_185], %619 {strides = array<i32>} : memref<16x128xf32, #tpu.memory_space<vmem>>, vector<1x128xf32>,
    %c29_i32 = arith.constant 29 : i32
    %c1_i32_186 = arith.constant 1 : i32
    %622 = arith.muli %c29_i32, %c1_i32_186 : i32
    %c0_i32_187 = arith.constant 0 : i32
    %623 = arith.addi %c0_i32_187, %622 : i32
    %624 = arith.index_cast %623 : i32 to index
    %625 = memref.load %arg1[%624] : memref<32xi32, #tpu.memory_space<smem>>
    %626 = arith.index_cast %623 : i32 to index
    %627 = memref.load %arg2[%626] : memref<32xi32, #tpu.memory_space<smem>>
    %628 = arith.index_cast %625 : i32 to index
    %c0_188 = arith.constant 0 : index
    %629 = vector.load %arg13[%628, %c0_188] : memref<16x128xf32, #tpu.memory_space<vmem>>, vector<1x128xf32>
    %630 = arith.index_cast %623 : i32 to index
    %631 = memref.load %arg3[%630] : memref<32xf32, #tpu.memory_space<smem>>
    %632 = vector.broadcast %631 : f32 to vector<1x128xf32>
    %633 = arith.mulf %632, %8 : vector<1x128xf32>
    %634 = arith.addf %629, %633 : vector<1x128xf32>
    %635 = arith.addf %634, %10 : vector<1x128xf32>
    %cst_189 = arith.constant 0.000000e+00 : f32
    %636 = vector.broadcast %cst_189 : f32 to vector<1x128xf32>
    %637 = arith.maximumf %635, %636 : vector<1x128xf32>
    %638 = arith.index_cast %627 : i32 to index
    %c0_190 = arith.constant 0 : index
    %639 = vector.load %arg14[%638, %c0_190] : memref<16x128xf32, #tpu.memory_space<vmem>>, vector<1x128xf32>
    %640 = arith.addf %639, %637 : vector<1x128xf32>
    %641 = arith.index_cast %627 : i32 to index
    %c0_191 = arith.constant 0 : index
    %642 = vector.load %arg14[%641, %c0_191] : memref<16x128xf32, #tpu.memory_space<vmem>>, vector<1x128xf32>
    tpu.vector_store %arg14[%641, %c0_191], %640 {strides = array<i32>} : memref<16x128xf32, #tpu.memory_space<vmem>>, vector<1x128xf32>,
    %c30_i32 = arith.constant 30 : i32
    %c1_i32_192 = arith.constant 1 : i32
    %643 = arith.muli %c30_i32, %c1_i32_192 : i32
    %c0_i32_193 = arith.constant 0 : i32
    %644 = arith.addi %c0_i32_193, %643 : i32
    %645 = arith.index_cast %644 : i32 to index
    %646 = memref.load %arg1[%645] : memref<32xi32, #tpu.memory_space<smem>>
    %647 = arith.index_cast %644 : i32 to index
    %648 = memref.load %arg2[%647] : memref<32xi32, #tpu.memory_space<smem>>
    %649 = arith.index_cast %646 : i32 to index
    %c0_194 = arith.constant 0 : index
    %650 = vector.load %arg13[%649, %c0_194] : memref<16x128xf32, #tpu.memory_space<vmem>>, vector<1x128xf32>
    %651 = arith.index_cast %644 : i32 to index
    %652 = memref.load %arg3[%651] : memref<32xf32, #tpu.memory_space<smem>>
    %653 = vector.broadcast %652 : f32 to vector<1x128xf32>
    %654 = arith.mulf %653, %8 : vector<1x128xf32>
    %655 = arith.addf %650, %654 : vector<1x128xf32>
    %656 = arith.addf %655, %10 : vector<1x128xf32>
    %cst_195 = arith.constant 0.000000e+00 : f32
    %657 = vector.broadcast %cst_195 : f32 to vector<1x128xf32>
    %658 = arith.maximumf %656, %657 : vector<1x128xf32>
    %659 = arith.index_cast %648 : i32 to index
    %c0_196 = arith.constant 0 : index
    %660 = vector.load %arg14[%659, %c0_196] : memref<16x128xf32, #tpu.memory_space<vmem>>, vector<1x128xf32>
    %661 = arith.addf %660, %658 : vector<1x128xf32>
    %662 = arith.index_cast %648 : i32 to index
    %c0_197 = arith.constant 0 : index
    %663 = vector.load %arg14[%662, %c0_197] : memref<16x128xf32, #tpu.memory_space<vmem>>, vector<1x128xf32>
    tpu.vector_store %arg14[%662, %c0_197], %661 {strides = array<i32>} : memref<16x128xf32, #tpu.memory_space<vmem>>, vector<1x128xf32>,
    %c31_i32 = arith.constant 31 : i32
    %c1_i32_198 = arith.constant 1 : i32
    %664 = arith.muli %c31_i32, %c1_i32_198 : i32
    %c0_i32_199 = arith.constant 0 : i32
    %665 = arith.addi %c0_i32_199, %664 : i32
    %666 = arith.index_cast %665 : i32 to index
    %667 = memref.load %arg1[%666] : memref<32xi32, #tpu.memory_space<smem>>
    %668 = arith.index_cast %665 : i32 to index
    %669 = memref.load %arg2[%668] : memref<32xi32, #tpu.memory_space<smem>>
    %670 = arith.index_cast %667 : i32 to index
    %c0_200 = arith.constant 0 : index
    %671 = vector.load %arg13[%670, %c0_200] : memref<16x128xf32, #tpu.memory_space<vmem>>, vector<1x128xf32>
    %672 = arith.index_cast %665 : i32 to index
    %673 = memref.load %arg3[%672] : memref<32xf32, #tpu.memory_space<smem>>
    %674 = vector.broadcast %673 : f32 to vector<1x128xf32>
    %675 = arith.mulf %674, %8 : vector<1x128xf32>
    %676 = arith.addf %671, %675 : vector<1x128xf32>
    %677 = arith.addf %676, %10 : vector<1x128xf32>
    %cst_201 = arith.constant 0.000000e+00 : f32
    %678 = vector.broadcast %cst_201 : f32 to vector<1x128xf32>
    %679 = arith.maximumf %677, %678 : vector<1x128xf32>
    %680 = arith.index_cast %669 : i32 to index
    %c0_202 = arith.constant 0 : index
    %681 = vector.load %arg14[%680, %c0_202] : memref<16x128xf32, #tpu.memory_space<vmem>>, vector<1x128xf32>
    %682 = arith.addf %681, %679 : vector<1x128xf32>
    %683 = arith.index_cast %669 : i32 to index
    %c0_203 = arith.constant 0 : index
    %684 = vector.load %arg14[%683, %c0_203] : memref<16x128xf32, #tpu.memory_space<vmem>>, vector<1x128xf32>
    tpu.vector_store %arg14[%683, %c0_203], %682 {strides = array<i32>} : memref<16x128xf32, #tpu.memory_space<vmem>>, vector<1x128xf32>,
    %c32_i32 = arith.constant 32 : i32
    %c0_204 = arith.constant 0 : index
    %c0_205 = arith.constant 0 : index
    %685 = vector.load %arg13[%c0_204, %c0_205] : memref<16x128xf32, #tpu.memory_space<vmem>>, vector<16x128xf32>
    %c0_206 = arith.constant 0 : index
    %c0_207 = arith.constant 0 : index
    %686 = vector.load %arg14[%c0_206, %c0_207] : memref<16x128xf32, #tpu.memory_space<vmem>>, vector<16x128xf32>
    %c0_208 = arith.constant 0 : index
    %687 = memref.load %arg0[%c0_208] : memref<3xf32, #tpu.memory_space<smem>>
    %688 = vector.broadcast %687 : f32 to vector<16x128xf32>
    %689 = arith.mulf %688, %685 : vector<16x128xf32>
    %690 = arith.addf %686, %689 : vector<16x128xf32>
    %691 = arith.truncf %690 : vector<16x128xf32> to vector<16x128xbf16>
    %c0_209 = arith.constant 0 : index
    %c0_210 = arith.constant 0 : index
    %c0_211 = arith.constant 0 : index
    %692 = vector.load %arg7[%c0_209, %c0_210, %c0_211] : memref<3x128x128xbf16, #tpu.memory_space<vmem>>, vector<1x128x128xbf16>
    %693 = vector.shape_cast %692 : vector<1x128x128xbf16> to vector<128x128xbf16>
    %cst_212 = arith.constant dense<0.000000e+00> : vector<16x128xf32>
    %694 = tpu.matmul %691, %693, %cst_212 {dimension_numbers = #tpu.dot_dimension_numbers<[1], [0], [0], [1], [0, 0, 1, 1], [], []>} : vector<16x128xbf16>, vector<128x128xbf16>, vector<16x128xf32> -> vector<16x128xf32>
    %c0_213 = arith.constant 0 : index
    %c0_214 = arith.constant 0 : index
    %c0_215 = arith.constant 0 : index
    %695 = vector.load %arg8[%c0_213, %c0_214, %c0_215] : memref<3x1x128xf32, #tpu.memory_space<vmem>>, vector<1x1x128xf32>
    %696 = vector.shape_cast %695 : vector<1x1x128xf32> to vector<1x128xf32>
    %697 = vector.broadcast %696 : vector<1x128xf32> to vector<16x128xf32>
    %698 = arith.addf %694, %697 : vector<16x128xf32>
    %699 = vector.broadcast %4 : vector<16x1xf32> to vector<16x128xf32>
    %700 = arith.mulf %698, %699 : vector<16x128xf32>
    %cst_216 = arith.constant dense<0.000000e+00> : vector<128xf32>
    %701 = vector.multi_reduction <add>, %700, %cst_216 [0] : vector<16x128xf32> to vector<128xf32>
    %702 = vector.shape_cast %701 : vector<128xf32> to vector<1x128xf32>
    %cst_217 = arith.constant 6.250000e-02 : f32
    %703 = vector.broadcast %cst_217 : f32 to vector<1x128xf32>
    %704 = arith.mulf %702, %703 : vector<1x128xf32>
    %705 = vector.broadcast %704 : vector<1x128xf32> to vector<16x128xf32>
    %706 = arith.subf %698, %705 : vector<16x128xf32>
    %707 = vector.broadcast %4 : vector<16x1xf32> to vector<16x128xf32>
    %708 = arith.mulf %706, %707 : vector<16x128xf32>
    %709 = arith.mulf %708, %708 : vector<16x128xf32>
    %cst_218 = arith.constant dense<0.000000e+00> : vector<128xf32>
    %710 = vector.multi_reduction <add>, %709, %cst_218 [0] : vector<16x128xf32> to vector<128xf32>
    %711 = vector.shape_cast %710 : vector<128xf32> to vector<1x128xf32>
    %cst_219 = arith.constant 6.250000e-02 : f32
    %712 = vector.broadcast %cst_219 : f32 to vector<1x128xf32>
    %713 = arith.mulf %711, %712 : vector<1x128xf32>
    %714 = vector.broadcast %704 : vector<1x128xf32> to vector<16x128xf32>
    %715 = arith.subf %698, %714 : vector<16x128xf32>
    %cst_220 = arith.constant 9.99999974E-6 : f32
    %716 = vector.broadcast %cst_220 : f32 to vector<1x128xf32>
    %717 = arith.addf %713, %716 : vector<1x128xf32>
    %718 = math.rsqrt %717 : vector<1x128xf32>
    %719 = vector.broadcast %718 : vector<1x128xf32> to vector<16x128xf32>
    %720 = arith.mulf %715, %719 : vector<16x128xf32>
    %c0_221 = arith.constant 0 : index
    %c0_222 = arith.constant 0 : index
    %c0_223 = arith.constant 0 : index
    %721 = vector.load %arg9[%c0_221, %c0_222, %c0_223] : memref<3x1x128xf32, #tpu.memory_space<vmem>>, vector<1x1x128xf32>
    %722 = vector.shape_cast %721 : vector<1x1x128xf32> to vector<1x128xf32>
    %723 = vector.broadcast %722 : vector<1x128xf32> to vector<16x128xf32>
    %724 = arith.mulf %720, %723 : vector<16x128xf32>
    %c0_224 = arith.constant 0 : index
    %c0_225 = arith.constant 0 : index
    %c0_226 = arith.constant 0 : index
    %725 = vector.load %arg10[%c0_224, %c0_225, %c0_226] : memref<3x1x128xf32, #tpu.memory_space<vmem>>, vector<1x1x128xf32>
    %726 = vector.shape_cast %725 : vector<1x1x128xf32> to vector<1x128xf32>
    %727 = vector.broadcast %726 : vector<1x128xf32> to vector<16x128xf32>
    %728 = arith.addf %724, %727 : vector<16x128xf32>
    %cst_227 = arith.constant 0.000000e+00 : f32
    %729 = vector.broadcast %cst_227 : f32 to vector<16x128xf32>
    %730 = arith.maximumf %728, %729 : vector<16x128xf32>
    %731 = arith.truncf %730 : vector<16x128xf32> to vector<16x128xbf16>
    %c0_228 = arith.constant 0 : index
    %c0_229 = arith.constant 0 : index
    %c0_230 = arith.constant 0 : index
    %732 = vector.load %arg11[%c0_228, %c0_229, %c0_230] : memref<3x128x128xbf16, #tpu.memory_space<vmem>>, vector<1x128x128xbf16>
    %733 = vector.shape_cast %732 : vector<1x128x128xbf16> to vector<128x128xbf16>
    %cst_231 = arith.constant dense<0.000000e+00> : vector<16x128xf32>
    %734 = tpu.matmul %731, %733, %cst_231 {dimension_numbers = #tpu.dot_dimension_numbers<[1], [0], [0], [1], [0, 0, 1, 1], [], []>} : vector<16x128xbf16>, vector<128x128xbf16>, vector<16x128xf32> -> vector<16x128xf32>
    %c0_232 = arith.constant 0 : index
    %c0_233 = arith.constant 0 : index
    %c0_234 = arith.constant 0 : index
    %735 = vector.load %arg12[%c0_232, %c0_233, %c0_234] : memref<3x1x128xf32, #tpu.memory_space<vmem>>, vector<1x1x128xf32>
    %736 = vector.shape_cast %735 : vector<1x1x128xf32> to vector<1x128xf32>
    %737 = vector.broadcast %736 : vector<1x128xf32> to vector<16x128xf32>
    %738 = arith.addf %734, %737 : vector<16x128xf32>
    %cst_235 = arith.constant 0.000000e+00 : f32
    %739 = vector.broadcast %cst_235 : f32 to vector<16x128xf32>
    %740 = arith.maximumf %738, %739 : vector<16x128xf32>
    %c0_236 = arith.constant 0 : index
    %c0_237 = arith.constant 0 : index
    %741 = vector.load %arg13[%c0_236, %c0_237] : memref<16x128xf32, #tpu.memory_space<vmem>>, vector<16x128xf32>
    tpu.vector_store %arg13[%c0_236, %c0_237], %740 {strides = array<i32>} : memref<16x128xf32, #tpu.memory_space<vmem>>, vector<16x128xf32>,
    %c1 = arith.constant 1 : index
    %c0_238 = arith.constant 0 : index
    %c0_239 = arith.constant 0 : index
    %742 = vector.load %arg5[%c1, %c0_238, %c0_239] : memref<3x1x128xf32, #tpu.memory_space<vmem>>, vector<1x1x128xf32>
    %743 = vector.shape_cast %742 : vector<1x1x128xf32> to vector<1x128xf32>
    %c1_240 = arith.constant 1 : index
    %c0_241 = arith.constant 0 : index
    %c0_242 = arith.constant 0 : index
    %744 = vector.load %arg6[%c1_240, %c0_241, %c0_242] : memref<3x1x128xf32, #tpu.memory_space<vmem>>, vector<1x1x128xf32>
    %745 = vector.shape_cast %744 : vector<1x1x128xf32> to vector<1x128xf32>
    %cst_243 = arith.constant 0.000000e+00 : f32
    %746 = vector.broadcast %cst_243 : f32 to vector<16x128xf32>
    %c0_244 = arith.constant 0 : index
    %c0_245 = arith.constant 0 : index
    %747 = vector.load %arg14[%c0_244, %c0_245] : memref<16x128xf32, #tpu.memory_space<vmem>>, vector<16x128xf32>
    tpu.vector_store %arg14[%c0_244, %c0_245], %746 {strides = array<i32>} : memref<16x128xf32, #tpu.memory_space<vmem>>, vector<16x128xf32>,
    %c0_i32_246 = arith.constant 0 : i32
    %c1_i32_247 = arith.constant 1 : i32
    %748 = arith.muli %c0_i32_246, %c1_i32_247 : i32
    %c0_i32_248 = arith.constant 0 : i32
    %749 = arith.addi %c0_i32_248, %748 : i32
    %750 = arith.index_cast %749 : i32 to index
    %751 = memref.load %arg1[%750] : memref<32xi32, #tpu.memory_space<smem>>
    %752 = arith.index_cast %749 : i32 to index
    %753 = memref.load %arg2[%752] : memref<32xi32, #tpu.memory_space<smem>>
    %754 = arith.index_cast %751 : i32 to index
    %c0_249 = arith.constant 0 : index
    %755 = vector.load %arg13[%754, %c0_249] : memref<16x128xf32, #tpu.memory_space<vmem>>, vector<1x128xf32>
    %756 = arith.index_cast %749 : i32 to index
    %757 = memref.load %arg3[%756] : memref<32xf32, #tpu.memory_space<smem>>
    %758 = vector.broadcast %757 : f32 to vector<1x128xf32>
    %759 = arith.mulf %758, %743 : vector<1x128xf32>
    %760 = arith.addf %755, %759 : vector<1x128xf32>
    %761 = arith.addf %760, %745 : vector<1x128xf32>
    %cst_250 = arith.constant 0.000000e+00 : f32
    %762 = vector.broadcast %cst_250 : f32 to vector<1x128xf32>
    %763 = arith.maximumf %761, %762 : vector<1x128xf32>
    %764 = arith.index_cast %753 : i32 to index
    %c0_251 = arith.constant 0 : index
    %765 = vector.load %arg14[%764, %c0_251] : memref<16x128xf32, #tpu.memory_space<vmem>>, vector<1x128xf32>
    %766 = arith.addf %765, %763 : vector<1x128xf32>
    %767 = arith.index_cast %753 : i32 to index
    %c0_252 = arith.constant 0 : index
    %768 = vector.load %arg14[%767, %c0_252] : memref<16x128xf32, #tpu.memory_space<vmem>>, vector<1x128xf32>
    tpu.vector_store %arg14[%767, %c0_252], %766 {strides = array<i32>} : memref<16x128xf32, #tpu.memory_space<vmem>>, vector<1x128xf32>,
    %c1_i32_253 = arith.constant 1 : i32
    %c1_i32_254 = arith.constant 1 : i32
    %769 = arith.muli %c1_i32_253, %c1_i32_254 : i32
    %c0_i32_255 = arith.constant 0 : i32
    %770 = arith.addi %c0_i32_255, %769 : i32
    %771 = arith.index_cast %770 : i32 to index
    %772 = memref.load %arg1[%771] : memref<32xi32, #tpu.memory_space<smem>>
    %773 = arith.index_cast %770 : i32 to index
    %774 = memref.load %arg2[%773] : memref<32xi32, #tpu.memory_space<smem>>
    %775 = arith.index_cast %772 : i32 to index
    %c0_256 = arith.constant 0 : index
    %776 = vector.load %arg13[%775, %c0_256] : memref<16x128xf32, #tpu.memory_space<vmem>>, vector<1x128xf32>
    %777 = arith.index_cast %770 : i32 to index
    %778 = memref.load %arg3[%777] : memref<32xf32, #tpu.memory_space<smem>>
    %779 = vector.broadcast %778 : f32 to vector<1x128xf32>
    %780 = arith.mulf %779, %743 : vector<1x128xf32>
    %781 = arith.addf %776, %780 : vector<1x128xf32>
    %782 = arith.addf %781, %745 : vector<1x128xf32>
    %cst_257 = arith.constant 0.000000e+00 : f32
    %783 = vector.broadcast %cst_257 : f32 to vector<1x128xf32>
    %784 = arith.maximumf %782, %783 : vector<1x128xf32>
    %785 = arith.index_cast %774 : i32 to index
    %c0_258 = arith.constant 0 : index
    %786 = vector.load %arg14[%785, %c0_258] : memref<16x128xf32, #tpu.memory_space<vmem>>, vector<1x128xf32>
    %787 = arith.addf %786, %784 : vector<1x128xf32>
    %788 = arith.index_cast %774 : i32 to index
    %c0_259 = arith.constant 0 : index
    %789 = vector.load %arg14[%788, %c0_259] : memref<16x128xf32, #tpu.memory_space<vmem>>, vector<1x128xf32>
    tpu.vector_store %arg14[%788, %c0_259], %787 {strides = array<i32>} : memref<16x128xf32, #tpu.memory_space<vmem>>, vector<1x128xf32>,
    %c2_i32_260 = arith.constant 2 : i32
    %c1_i32_261 = arith.constant 1 : i32
    %790 = arith.muli %c2_i32_260, %c1_i32_261 : i32
    %c0_i32_262 = arith.constant 0 : i32
    %791 = arith.addi %c0_i32_262, %790 : i32
    %792 = arith.index_cast %791 : i32 to index
    %793 = memref.load %arg1[%792] : memref<32xi32, #tpu.memory_space<smem>>
    %794 = arith.index_cast %791 : i32 to index
    %795 = memref.load %arg2[%794] : memref<32xi32, #tpu.memory_space<smem>>
    %796 = arith.index_cast %793 : i32 to index
    %c0_263 = arith.constant 0 : index
    %797 = vector.load %arg13[%796, %c0_263] : memref<16x128xf32, #tpu.memory_space<vmem>>, vector<1x128xf32>
    %798 = arith.index_cast %791 : i32 to index
    %799 = memref.load %arg3[%798] : memref<32xf32, #tpu.memory_space<smem>>
    %800 = vector.broadcast %799 : f32 to vector<1x128xf32>
    %801 = arith.mulf %800, %743 : vector<1x128xf32>
    %802 = arith.addf %797, %801 : vector<1x128xf32>
    %803 = arith.addf %802, %745 : vector<1x128xf32>
    %cst_264 = arith.constant 0.000000e+00 : f32
    %804 = vector.broadcast %cst_264 : f32 to vector<1x128xf32>
    %805 = arith.maximumf %803, %804 : vector<1x128xf32>
    %806 = arith.index_cast %795 : i32 to index
    %c0_265 = arith.constant 0 : index
    %807 = vector.load %arg14[%806, %c0_265] : memref<16x128xf32, #tpu.memory_space<vmem>>, vector<1x128xf32>
    %808 = arith.addf %807, %805 : vector<1x128xf32>
    %809 = arith.index_cast %795 : i32 to index
    %c0_266 = arith.constant 0 : index
    %810 = vector.load %arg14[%809, %c0_266] : memref<16x128xf32, #tpu.memory_space<vmem>>, vector<1x128xf32>
    tpu.vector_store %arg14[%809, %c0_266], %808 {strides = array<i32>} : memref<16x128xf32, #tpu.memory_space<vmem>>, vector<1x128xf32>,
    %c3_i32_267 = arith.constant 3 : i32
    %c1_i32_268 = arith.constant 1 : i32
    %811 = arith.muli %c3_i32_267, %c1_i32_268 : i32
    %c0_i32_269 = arith.constant 0 : i32
    %812 = arith.addi %c0_i32_269, %811 : i32
    %813 = arith.index_cast %812 : i32 to index
    %814 = memref.load %arg1[%813] : memref<32xi32, #tpu.memory_space<smem>>
    %815 = arith.index_cast %812 : i32 to index
    %816 = memref.load %arg2[%815] : memref<32xi32, #tpu.memory_space<smem>>
    %817 = arith.index_cast %814 : i32 to index
    %c0_270 = arith.constant 0 : index
    %818 = vector.load %arg13[%817, %c0_270] : memref<16x128xf32, #tpu.memory_space<vmem>>, vector<1x128xf32>
    %819 = arith.index_cast %812 : i32 to index
    %820 = memref.load %arg3[%819] : memref<32xf32, #tpu.memory_space<smem>>
    %821 = vector.broadcast %820 : f32 to vector<1x128xf32>
    %822 = arith.mulf %821, %743 : vector<1x128xf32>
    %823 = arith.addf %818, %822 : vector<1x128xf32>
    %824 = arith.addf %823, %745 : vector<1x128xf32>
    %cst_271 = arith.constant 0.000000e+00 : f32
    %825 = vector.broadcast %cst_271 : f32 to vector<1x128xf32>
    %826 = arith.maximumf %824, %825 : vector<1x128xf32>
    %827 = arith.index_cast %816 : i32 to index
    %c0_272 = arith.constant 0 : index
    %828 = vector.load %arg14[%827, %c0_272] : memref<16x128xf32, #tpu.memory_space<vmem>>, vector<1x128xf32>
    %829 = arith.addf %828, %826 : vector<1x128xf32>
    %830 = arith.index_cast %816 : i32 to index
    %c0_273 = arith.constant 0 : index
    %831 = vector.load %arg14[%830, %c0_273] : memref<16x128xf32, #tpu.memory_space<vmem>>, vector<1x128xf32>
    tpu.vector_store %arg14[%830, %c0_273], %829 {strides = array<i32>} : memref<16x128xf32, #tpu.memory_space<vmem>>, vector<1x128xf32>,
    %c4_i32_274 = arith.constant 4 : i32
    %c1_i32_275 = arith.constant 1 : i32
    %832 = arith.muli %c4_i32_274, %c1_i32_275 : i32
    %c0_i32_276 = arith.constant 0 : i32
    %833 = arith.addi %c0_i32_276, %832 : i32
    %834 = arith.index_cast %833 : i32 to index
    %835 = memref.load %arg1[%834] : memref<32xi32, #tpu.memory_space<smem>>
    %836 = arith.index_cast %833 : i32 to index
    %837 = memref.load %arg2[%836] : memref<32xi32, #tpu.memory_space<smem>>
    %838 = arith.index_cast %835 : i32 to index
    %c0_277 = arith.constant 0 : index
    %839 = vector.load %arg13[%838, %c0_277] : memref<16x128xf32, #tpu.memory_space<vmem>>, vector<1x128xf32>
    %840 = arith.index_cast %833 : i32 to index
    %841 = memref.load %arg3[%840] : memref<32xf32, #tpu.memory_space<smem>>
    %842 = vector.broadcast %841 : f32 to vector<1x128xf32>
    %843 = arith.mulf %842, %743 : vector<1x128xf32>
    %844 = arith.addf %839, %843 : vector<1x128xf32>
    %845 = arith.addf %844, %745 : vector<1x128xf32>
    %cst_278 = arith.constant 0.000000e+00 : f32
    %846 = vector.broadcast %cst_278 : f32 to vector<1x128xf32>
    %847 = arith.maximumf %845, %846 : vector<1x128xf32>
    %848 = arith.index_cast %837 : i32 to index
    %c0_279 = arith.constant 0 : index
    %849 = vector.load %arg14[%848, %c0_279] : memref<16x128xf32, #tpu.memory_space<vmem>>, vector<1x128xf32>
    %850 = arith.addf %849, %847 : vector<1x128xf32>
    %851 = arith.index_cast %837 : i32 to index
    %c0_280 = arith.constant 0 : index
    %852 = vector.load %arg14[%851, %c0_280] : memref<16x128xf32, #tpu.memory_space<vmem>>, vector<1x128xf32>
    tpu.vector_store %arg14[%851, %c0_280], %850 {strides = array<i32>} : memref<16x128xf32, #tpu.memory_space<vmem>>, vector<1x128xf32>,
    %c5_i32_281 = arith.constant 5 : i32
    %c1_i32_282 = arith.constant 1 : i32
    %853 = arith.muli %c5_i32_281, %c1_i32_282 : i32
    %c0_i32_283 = arith.constant 0 : i32
    %854 = arith.addi %c0_i32_283, %853 : i32
    %855 = arith.index_cast %854 : i32 to index
    %856 = memref.load %arg1[%855] : memref<32xi32, #tpu.memory_space<smem>>
    %857 = arith.index_cast %854 : i32 to index
    %858 = memref.load %arg2[%857] : memref<32xi32, #tpu.memory_space<smem>>
    %859 = arith.index_cast %856 : i32 to index
    %c0_284 = arith.constant 0 : index
    %860 = vector.load %arg13[%859, %c0_284] : memref<16x128xf32, #tpu.memory_space<vmem>>, vector<1x128xf32>
    %861 = arith.index_cast %854 : i32 to index
    %862 = memref.load %arg3[%861] : memref<32xf32, #tpu.memory_space<smem>>
    %863 = vector.broadcast %862 : f32 to vector<1x128xf32>
    %864 = arith.mulf %863, %743 : vector<1x128xf32>
    %865 = arith.addf %860, %864 : vector<1x128xf32>
    %866 = arith.addf %865, %745 : vector<1x128xf32>
    %cst_285 = arith.constant 0.000000e+00 : f32
    %867 = vector.broadcast %cst_285 : f32 to vector<1x128xf32>
    %868 = arith.maximumf %866, %867 : vector<1x128xf32>
    %869 = arith.index_cast %858 : i32 to index
    %c0_286 = arith.constant 0 : index
    %870 = vector.load %arg14[%869, %c0_286] : memref<16x128xf32, #tpu.memory_space<vmem>>, vector<1x128xf32>
    %871 = arith.addf %870, %868 : vector<1x128xf32>
    %872 = arith.index_cast %858 : i32 to index
    %c0_287 = arith.constant 0 : index
    %873 = vector.load %arg14[%872, %c0_287] : memref<16x128xf32, #tpu.memory_space<vmem>>, vector<1x128xf32>
    tpu.vector_store %arg14[%872, %c0_287], %871 {strides = array<i32>} : memref<16x128xf32, #tpu.memory_space<vmem>>, vector<1x128xf32>,
    %c6_i32_288 = arith.constant 6 : i32
    %c1_i32_289 = arith.constant 1 : i32
    %874 = arith.muli %c6_i32_288, %c1_i32_289 : i32
    %c0_i32_290 = arith.constant 0 : i32
    %875 = arith.addi %c0_i32_290, %874 : i32
    %876 = arith.index_cast %875 : i32 to index
    %877 = memref.load %arg1[%876] : memref<32xi32, #tpu.memory_space<smem>>
    %878 = arith.index_cast %875 : i32 to index
    %879 = memref.load %arg2[%878] : memref<32xi32, #tpu.memory_space<smem>>
    %880 = arith.index_cast %877 : i32 to index
    %c0_291 = arith.constant 0 : index
    %881 = vector.load %arg13[%880, %c0_291] : memref<16x128xf32, #tpu.memory_space<vmem>>, vector<1x128xf32>
    %882 = arith.index_cast %875 : i32 to index
    %883 = memref.load %arg3[%882] : memref<32xf32, #tpu.memory_space<smem>>
    %884 = vector.broadcast %883 : f32 to vector<1x128xf32>
    %885 = arith.mulf %884, %743 : vector<1x128xf32>
    %886 = arith.addf %881, %885 : vector<1x128xf32>
    %887 = arith.addf %886, %745 : vector<1x128xf32>
    %cst_292 = arith.constant 0.000000e+00 : f32
    %888 = vector.broadcast %cst_292 : f32 to vector<1x128xf32>
    %889 = arith.maximumf %887, %888 : vector<1x128xf32>
    %890 = arith.index_cast %879 : i32 to index
    %c0_293 = arith.constant 0 : index
    %891 = vector.load %arg14[%890, %c0_293] : memref<16x128xf32, #tpu.memory_space<vmem>>, vector<1x128xf32>
    %892 = arith.addf %891, %889 : vector<1x128xf32>
    %893 = arith.index_cast %879 : i32 to index
    %c0_294 = arith.constant 0 : index
    %894 = vector.load %arg14[%893, %c0_294] : memref<16x128xf32, #tpu.memory_space<vmem>>, vector<1x128xf32>
    tpu.vector_store %arg14[%893, %c0_294], %892 {strides = array<i32>} : memref<16x128xf32, #tpu.memory_space<vmem>>, vector<1x128xf32>,
    %c7_i32_295 = arith.constant 7 : i32
    %c1_i32_296 = arith.constant 1 : i32
    %895 = arith.muli %c7_i32_295, %c1_i32_296 : i32
    %c0_i32_297 = arith.constant 0 : i32
    %896 = arith.addi %c0_i32_297, %895 : i32
    %897 = arith.index_cast %896 : i32 to index
    %898 = memref.load %arg1[%897] : memref<32xi32, #tpu.memory_space<smem>>
    %899 = arith.index_cast %896 : i32 to index
    %900 = memref.load %arg2[%899] : memref<32xi32, #tpu.memory_space<smem>>
    %901 = arith.index_cast %898 : i32 to index
    %c0_298 = arith.constant 0 : index
    %902 = vector.load %arg13[%901, %c0_298] : memref<16x128xf32, #tpu.memory_space<vmem>>, vector<1x128xf32>
    %903 = arith.index_cast %896 : i32 to index
    %904 = memref.load %arg3[%903] : memref<32xf32, #tpu.memory_space<smem>>
    %905 = vector.broadcast %904 : f32 to vector<1x128xf32>
    %906 = arith.mulf %905, %743 : vector<1x128xf32>
    %907 = arith.addf %902, %906 : vector<1x128xf32>
    %908 = arith.addf %907, %745 : vector<1x128xf32>
    %cst_299 = arith.constant 0.000000e+00 : f32
    %909 = vector.broadcast %cst_299 : f32 to vector<1x128xf32>
    %910 = arith.maximumf %908, %909 : vector<1x128xf32>
    %911 = arith.index_cast %900 : i32 to index
    %c0_300 = arith.constant 0 : index
    %912 = vector.load %arg14[%911, %c0_300] : memref<16x128xf32, #tpu.memory_space<vmem>>, vector<1x128xf32>
    %913 = arith.addf %912, %910 : vector<1x128xf32>
    %914 = arith.index_cast %900 : i32 to index
    %c0_301 = arith.constant 0 : index
    %915 = vector.load %arg14[%914, %c0_301] : memref<16x128xf32, #tpu.memory_space<vmem>>, vector<1x128xf32>
    tpu.vector_store %arg14[%914, %c0_301], %913 {strides = array<i32>} : memref<16x128xf32, #tpu.memory_space<vmem>>, vector<1x128xf32>,
    %c8_i32_302 = arith.constant 8 : i32
    %c1_i32_303 = arith.constant 1 : i32
    %916 = arith.muli %c8_i32_302, %c1_i32_303 : i32
    %c0_i32_304 = arith.constant 0 : i32
    %917 = arith.addi %c0_i32_304, %916 : i32
    %918 = arith.index_cast %917 : i32 to index
    %919 = memref.load %arg1[%918] : memref<32xi32, #tpu.memory_space<smem>>
    %920 = arith.index_cast %917 : i32 to index
    %921 = memref.load %arg2[%920] : memref<32xi32, #tpu.memory_space<smem>>
    %922 = arith.index_cast %919 : i32 to index
    %c0_305 = arith.constant 0 : index
    %923 = vector.load %arg13[%922, %c0_305] : memref<16x128xf32, #tpu.memory_space<vmem>>, vector<1x128xf32>
    %924 = arith.index_cast %917 : i32 to index
    %925 = memref.load %arg3[%924] : memref<32xf32, #tpu.memory_space<smem>>
    %926 = vector.broadcast %925 : f32 to vector<1x128xf32>
    %927 = arith.mulf %926, %743 : vector<1x128xf32>
    %928 = arith.addf %923, %927 : vector<1x128xf32>
    %929 = arith.addf %928, %745 : vector<1x128xf32>
    %cst_306 = arith.constant 0.000000e+00 : f32
    %930 = vector.broadcast %cst_306 : f32 to vector<1x128xf32>
    %931 = arith.maximumf %929, %930 : vector<1x128xf32>
    %932 = arith.index_cast %921 : i32 to index
    %c0_307 = arith.constant 0 : index
    %933 = vector.load %arg14[%932, %c0_307] : memref<16x128xf32, #tpu.memory_space<vmem>>, vector<1x128xf32>
    %934 = arith.addf %933, %931 : vector<1x128xf32>
    %935 = arith.index_cast %921 : i32 to index
    %c0_308 = arith.constant 0 : index
    %936 = vector.load %arg14[%935, %c0_308] : memref<16x128xf32, #tpu.memory_space<vmem>>, vector<1x128xf32>
    tpu.vector_store %arg14[%935, %c0_308], %934 {strides = array<i32>} : memref<16x128xf32, #tpu.memory_space<vmem>>, vector<1x128xf32>,
    %c9_i32_309 = arith.constant 9 : i32
    %c1_i32_310 = arith.constant 1 : i32
    %937 = arith.muli %c9_i32_309, %c1_i32_310 : i32
    %c0_i32_311 = arith.constant 0 : i32
    %938 = arith.addi %c0_i32_311, %937 : i32
    %939 = arith.index_cast %938 : i32 to index
    %940 = memref.load %arg1[%939] : memref<32xi32, #tpu.memory_space<smem>>
    %941 = arith.index_cast %938 : i32 to index
    %942 = memref.load %arg2[%941] : memref<32xi32, #tpu.memory_space<smem>>
    %943 = arith.index_cast %940 : i32 to index
    %c0_312 = arith.constant 0 : index
    %944 = vector.load %arg13[%943, %c0_312] : memref<16x128xf32, #tpu.memory_space<vmem>>, vector<1x128xf32>
    %945 = arith.index_cast %938 : i32 to index
    %946 = memref.load %arg3[%945] : memref<32xf32, #tpu.memory_space<smem>>
    %947 = vector.broadcast %946 : f32 to vector<1x128xf32>
    %948 = arith.mulf %947, %743 : vector<1x128xf32>
    %949 = arith.addf %944, %948 : vector<1x128xf32>
    %950 = arith.addf %949, %745 : vector<1x128xf32>
    %cst_313 = arith.constant 0.000000e+00 : f32
    %951 = vector.broadcast %cst_313 : f32 to vector<1x128xf32>
    %952 = arith.maximumf %950, %951 : vector<1x128xf32>
    %953 = arith.index_cast %942 : i32 to index
    %c0_314 = arith.constant 0 : index
    %954 = vector.load %arg14[%953, %c0_314] : memref<16x128xf32, #tpu.memory_space<vmem>>, vector<1x128xf32>
    %955 = arith.addf %954, %952 : vector<1x128xf32>
    %956 = arith.index_cast %942 : i32 to index
    %c0_315 = arith.constant 0 : index
    %957 = vector.load %arg14[%956, %c0_315] : memref<16x128xf32, #tpu.memory_space<vmem>>, vector<1x128xf32>
    tpu.vector_store %arg14[%956, %c0_315], %955 {strides = array<i32>} : memref<16x128xf32, #tpu.memory_space<vmem>>, vector<1x128xf32>,
    %c10_i32_316 = arith.constant 10 : i32
    %c1_i32_317 = arith.constant 1 : i32
    %958 = arith.muli %c10_i32_316, %c1_i32_317 : i32
    %c0_i32_318 = arith.constant 0 : i32
    %959 = arith.addi %c0_i32_318, %958 : i32
    %960 = arith.index_cast %959 : i32 to index
    %961 = memref.load %arg1[%960] : memref<32xi32, #tpu.memory_space<smem>>
    %962 = arith.index_cast %959 : i32 to index
    %963 = memref.load %arg2[%962] : memref<32xi32, #tpu.memory_space<smem>>
    %964 = arith.index_cast %961 : i32 to index
    %c0_319 = arith.constant 0 : index
    %965 = vector.load %arg13[%964, %c0_319] : memref<16x128xf32, #tpu.memory_space<vmem>>, vector<1x128xf32>
    %966 = arith.index_cast %959 : i32 to index
    %967 = memref.load %arg3[%966] : memref<32xf32, #tpu.memory_space<smem>>
    %968 = vector.broadcast %967 : f32 to vector<1x128xf32>
    %969 = arith.mulf %968, %743 : vector<1x128xf32>
    %970 = arith.addf %965, %969 : vector<1x128xf32>
    %971 = arith.addf %970, %745 : vector<1x128xf32>
    %cst_320 = arith.constant 0.000000e+00 : f32
    %972 = vector.broadcast %cst_320 : f32 to vector<1x128xf32>
    %973 = arith.maximumf %971, %972 : vector<1x128xf32>
    %974 = arith.index_cast %963 : i32 to index
    %c0_321 = arith.constant 0 : index
    %975 = vector.load %arg14[%974, %c0_321] : memref<16x128xf32, #tpu.memory_space<vmem>>, vector<1x128xf32>
    %976 = arith.addf %975, %973 : vector<1x128xf32>
    %977 = arith.index_cast %963 : i32 to index
    %c0_322 = arith.constant 0 : index
    %978 = vector.load %arg14[%977, %c0_322] : memref<16x128xf32, #tpu.memory_space<vmem>>, vector<1x128xf32>
    tpu.vector_store %arg14[%977, %c0_322], %976 {strides = array<i32>} : memref<16x128xf32, #tpu.memory_space<vmem>>, vector<1x128xf32>,
    %c11_i32_323 = arith.constant 11 : i32
    %c1_i32_324 = arith.constant 1 : i32
    %979 = arith.muli %c11_i32_323, %c1_i32_324 : i32
    %c0_i32_325 = arith.constant 0 : i32
    %980 = arith.addi %c0_i32_325, %979 : i32
    %981 = arith.index_cast %980 : i32 to index
    %982 = memref.load %arg1[%981] : memref<32xi32, #tpu.memory_space<smem>>
    %983 = arith.index_cast %980 : i32 to index
    %984 = memref.load %arg2[%983] : memref<32xi32, #tpu.memory_space<smem>>
    %985 = arith.index_cast %982 : i32 to index
    %c0_326 = arith.constant 0 : index
    %986 = vector.load %arg13[%985, %c0_326] : memref<16x128xf32, #tpu.memory_space<vmem>>, vector<1x128xf32>
    %987 = arith.index_cast %980 : i32 to index
    %988 = memref.load %arg3[%987] : memref<32xf32, #tpu.memory_space<smem>>
    %989 = vector.broadcast %988 : f32 to vector<1x128xf32>
    %990 = arith.mulf %989, %743 : vector<1x128xf32>
    %991 = arith.addf %986, %990 : vector<1x128xf32>
    %992 = arith.addf %991, %745 : vector<1x128xf32>
    %cst_327 = arith.constant 0.000000e+00 : f32
    %993 = vector.broadcast %cst_327 : f32 to vector<1x128xf32>
    %994 = arith.maximumf %992, %993 : vector<1x128xf32>
    %995 = arith.index_cast %984 : i32 to index
    %c0_328 = arith.constant 0 : index
    %996 = vector.load %arg14[%995, %c0_328] : memref<16x128xf32, #tpu.memory_space<vmem>>, vector<1x128xf32>
    %997 = arith.addf %996, %994 : vector<1x128xf32>
    %998 = arith.index_cast %984 : i32 to index
    %c0_329 = arith.constant 0 : index
    %999 = vector.load %arg14[%998, %c0_329] : memref<16x128xf32, #tpu.memory_space<vmem>>, vector<1x128xf32>
    tpu.vector_store %arg14[%998, %c0_329], %997 {strides = array<i32>} : memref<16x128xf32, #tpu.memory_space<vmem>>, vector<1x128xf32>,
    %c12_i32_330 = arith.constant 12 : i32
    %c1_i32_331 = arith.constant 1 : i32
    %1000 = arith.muli %c12_i32_330, %c1_i32_331 : i32
    %c0_i32_332 = arith.constant 0 : i32
    %1001 = arith.addi %c0_i32_332, %1000 : i32
    %1002 = arith.index_cast %1001 : i32 to index
    %1003 = memref.load %arg1[%1002] : memref<32xi32, #tpu.memory_space<smem>>
    %1004 = arith.index_cast %1001 : i32 to index
    %1005 = memref.load %arg2[%1004] : memref<32xi32, #tpu.memory_space<smem>>
    %1006 = arith.index_cast %1003 : i32 to index
    %c0_333 = arith.constant 0 : index
    %1007 = vector.load %arg13[%1006, %c0_333] : memref<16x128xf32, #tpu.memory_space<vmem>>, vector<1x128xf32>
    %1008 = arith.index_cast %1001 : i32 to index
    %1009 = memref.load %arg3[%1008] : memref<32xf32, #tpu.memory_space<smem>>
    %1010 = vector.broadcast %1009 : f32 to vector<1x128xf32>
    %1011 = arith.mulf %1010, %743 : vector<1x128xf32>
    %1012 = arith.addf %1007, %1011 : vector<1x128xf32>
    %1013 = arith.addf %1012, %745 : vector<1x128xf32>
    %cst_334 = arith.constant 0.000000e+00 : f32
    %1014 = vector.broadcast %cst_334 : f32 to vector<1x128xf32>
    %1015 = arith.maximumf %1013, %1014 : vector<1x128xf32>
    %1016 = arith.index_cast %1005 : i32 to index
    %c0_335 = arith.constant 0 : index
    %1017 = vector.load %arg14[%1016, %c0_335] : memref<16x128xf32, #tpu.memory_space<vmem>>, vector<1x128xf32>
    %1018 = arith.addf %1017, %1015 : vector<1x128xf32>
    %1019 = arith.index_cast %1005 : i32 to index
    %c0_336 = arith.constant 0 : index
    %1020 = vector.load %arg14[%1019, %c0_336] : memref<16x128xf32, #tpu.memory_space<vmem>>, vector<1x128xf32>
    tpu.vector_store %arg14[%1019, %c0_336], %1018 {strides = array<i32>} : memref<16x128xf32, #tpu.memory_space<vmem>>, vector<1x128xf32>,
    %c13_i32_337 = arith.constant 13 : i32
    %c1_i32_338 = arith.constant 1 : i32
    %1021 = arith.muli %c13_i32_337, %c1_i32_338 : i32
    %c0_i32_339 = arith.constant 0 : i32
    %1022 = arith.addi %c0_i32_339, %1021 : i32
    %1023 = arith.index_cast %1022 : i32 to index
    %1024 = memref.load %arg1[%1023] : memref<32xi32, #tpu.memory_space<smem>>
    %1025 = arith.index_cast %1022 : i32 to index
    %1026 = memref.load %arg2[%1025] : memref<32xi32, #tpu.memory_space<smem>>
    %1027 = arith.index_cast %1024 : i32 to index
    %c0_340 = arith.constant 0 : index
    %1028 = vector.load %arg13[%1027, %c0_340] : memref<16x128xf32, #tpu.memory_space<vmem>>, vector<1x128xf32>
    %1029 = arith.index_cast %1022 : i32 to index
    %1030 = memref.load %arg3[%1029] : memref<32xf32, #tpu.memory_space<smem>>
    %1031 = vector.broadcast %1030 : f32 to vector<1x128xf32>
    %1032 = arith.mulf %1031, %743 : vector<1x128xf32>
    %1033 = arith.addf %1028, %1032 : vector<1x128xf32>
    %1034 = arith.addf %1033, %745 : vector<1x128xf32>
    %cst_341 = arith.constant 0.000000e+00 : f32
    %1035 = vector.broadcast %cst_341 : f32 to vector<1x128xf32>
    %1036 = arith.maximumf %1034, %1035 : vector<1x128xf32>
    %1037 = arith.index_cast %1026 : i32 to index
    %c0_342 = arith.constant 0 : index
    %1038 = vector.load %arg14[%1037, %c0_342] : memref<16x128xf32, #tpu.memory_space<vmem>>, vector<1x128xf32>
    %1039 = arith.addf %1038, %1036 : vector<1x128xf32>
    %1040 = arith.index_cast %1026 : i32 to index
    %c0_343 = arith.constant 0 : index
    %1041 = vector.load %arg14[%1040, %c0_343] : memref<16x128xf32, #tpu.memory_space<vmem>>, vector<1x128xf32>
    tpu.vector_store %arg14[%1040, %c0_343], %1039 {strides = array<i32>} : memref<16x128xf32, #tpu.memory_space<vmem>>, vector<1x128xf32>,
    %c14_i32_344 = arith.constant 14 : i32
    %c1_i32_345 = arith.constant 1 : i32
    %1042 = arith.muli %c14_i32_344, %c1_i32_345 : i32
    %c0_i32_346 = arith.constant 0 : i32
    %1043 = arith.addi %c0_i32_346, %1042 : i32
    %1044 = arith.index_cast %1043 : i32 to index
    %1045 = memref.load %arg1[%1044] : memref<32xi32, #tpu.memory_space<smem>>
    %1046 = arith.index_cast %1043 : i32 to index
    %1047 = memref.load %arg2[%1046] : memref<32xi32, #tpu.memory_space<smem>>
    %1048 = arith.index_cast %1045 : i32 to index
    %c0_347 = arith.constant 0 : index
    %1049 = vector.load %arg13[%1048, %c0_347] : memref<16x128xf32, #tpu.memory_space<vmem>>, vector<1x128xf32>
    %1050 = arith.index_cast %1043 : i32 to index
    %1051 = memref.load %arg3[%1050] : memref<32xf32, #tpu.memory_space<smem>>
    %1052 = vector.broadcast %1051 : f32 to vector<1x128xf32>
    %1053 = arith.mulf %1052, %743 : vector<1x128xf32>
    %1054 = arith.addf %1049, %1053 : vector<1x128xf32>
    %1055 = arith.addf %1054, %745 : vector<1x128xf32>
    %cst_348 = arith.constant 0.000000e+00 : f32
    %1056 = vector.broadcast %cst_348 : f32 to vector<1x128xf32>
    %1057 = arith.maximumf %1055, %1056 : vector<1x128xf32>
    %1058 = arith.index_cast %1047 : i32 to index
    %c0_349 = arith.constant 0 : index
    %1059 = vector.load %arg14[%1058, %c0_349] : memref<16x128xf32, #tpu.memory_space<vmem>>, vector<1x128xf32>
    %1060 = arith.addf %1059, %1057 : vector<1x128xf32>
    %1061 = arith.index_cast %1047 : i32 to index
    %c0_350 = arith.constant 0 : index
    %1062 = vector.load %arg14[%1061, %c0_350] : memref<16x128xf32, #tpu.memory_space<vmem>>, vector<1x128xf32>
    tpu.vector_store %arg14[%1061, %c0_350], %1060 {strides = array<i32>} : memref<16x128xf32, #tpu.memory_space<vmem>>, vector<1x128xf32>,
    %c15_i32_351 = arith.constant 15 : i32
    %c1_i32_352 = arith.constant 1 : i32
    %1063 = arith.muli %c15_i32_351, %c1_i32_352 : i32
    %c0_i32_353 = arith.constant 0 : i32
    %1064 = arith.addi %c0_i32_353, %1063 : i32
    %1065 = arith.index_cast %1064 : i32 to index
    %1066 = memref.load %arg1[%1065] : memref<32xi32, #tpu.memory_space<smem>>
    %1067 = arith.index_cast %1064 : i32 to index
    %1068 = memref.load %arg2[%1067] : memref<32xi32, #tpu.memory_space<smem>>
    %1069 = arith.index_cast %1066 : i32 to index
    %c0_354 = arith.constant 0 : index
    %1070 = vector.load %arg13[%1069, %c0_354] : memref<16x128xf32, #tpu.memory_space<vmem>>, vector<1x128xf32>
    %1071 = arith.index_cast %1064 : i32 to index
    %1072 = memref.load %arg3[%1071] : memref<32xf32, #tpu.memory_space<smem>>
    %1073 = vector.broadcast %1072 : f32 to vector<1x128xf32>
    %1074 = arith.mulf %1073, %743 : vector<1x128xf32>
    %1075 = arith.addf %1070, %1074 : vector<1x128xf32>
    %1076 = arith.addf %1075, %745 : vector<1x128xf32>
    %cst_355 = arith.constant 0.000000e+00 : f32
    %1077 = vector.broadcast %cst_355 : f32 to vector<1x128xf32>
    %1078 = arith.maximumf %1076, %1077 : vector<1x128xf32>
    %1079 = arith.index_cast %1068 : i32 to index
    %c0_356 = arith.constant 0 : index
    %1080 = vector.load %arg14[%1079, %c0_356] : memref<16x128xf32, #tpu.memory_space<vmem>>, vector<1x128xf32>
    %1081 = arith.addf %1080, %1078 : vector<1x128xf32>
    %1082 = arith.index_cast %1068 : i32 to index
    %c0_357 = arith.constant 0 : index
    %1083 = vector.load %arg14[%1082, %c0_357] : memref<16x128xf32, #tpu.memory_space<vmem>>, vector<1x128xf32>
    tpu.vector_store %arg14[%1082, %c0_357], %1081 {strides = array<i32>} : memref<16x128xf32, #tpu.memory_space<vmem>>, vector<1x128xf32>,
    %c16_i32_358 = arith.constant 16 : i32
    %c1_i32_359 = arith.constant 1 : i32
    %1084 = arith.muli %c16_i32_358, %c1_i32_359 : i32
    %c0_i32_360 = arith.constant 0 : i32
    %1085 = arith.addi %c0_i32_360, %1084 : i32
    %1086 = arith.index_cast %1085 : i32 to index
    %1087 = memref.load %arg1[%1086] : memref<32xi32, #tpu.memory_space<smem>>
    %1088 = arith.index_cast %1085 : i32 to index
    %1089 = memref.load %arg2[%1088] : memref<32xi32, #tpu.memory_space<smem>>
    %1090 = arith.index_cast %1087 : i32 to index
    %c0_361 = arith.constant 0 : index
    %1091 = vector.load %arg13[%1090, %c0_361] : memref<16x128xf32, #tpu.memory_space<vmem>>, vector<1x128xf32>
    %1092 = arith.index_cast %1085 : i32 to index
    %1093 = memref.load %arg3[%1092] : memref<32xf32, #tpu.memory_space<smem>>
    %1094 = vector.broadcast %1093 : f32 to vector<1x128xf32>
    %1095 = arith.mulf %1094, %743 : vector<1x128xf32>
    %1096 = arith.addf %1091, %1095 : vector<1x128xf32>
    %1097 = arith.addf %1096, %745 : vector<1x128xf32>
    %cst_362 = arith.constant 0.000000e+00 : f32
    %1098 = vector.broadcast %cst_362 : f32 to vector<1x128xf32>
    %1099 = arith.maximumf %1097, %1098 : vector<1x128xf32>
    %1100 = arith.index_cast %1089 : i32 to index
    %c0_363 = arith.constant 0 : index
    %1101 = vector.load %arg14[%1100, %c0_363] : memref<16x128xf32, #tpu.memory_space<vmem>>, vector<1x128xf32>
    %1102 = arith.addf %1101, %1099 : vector<1x128xf32>
    %1103 = arith.index_cast %1089 : i32 to index
    %c0_364 = arith.constant 0 : index
    %1104 = vector.load %arg14[%1103, %c0_364] : memref<16x128xf32, #tpu.memory_space<vmem>>, vector<1x128xf32>
    tpu.vector_store %arg14[%1103, %c0_364], %1102 {strides = array<i32>} : memref<16x128xf32, #tpu.memory_space<vmem>>, vector<1x128xf32>,
    %c17_i32_365 = arith.constant 17 : i32
    %c1_i32_366 = arith.constant 1 : i32
    %1105 = arith.muli %c17_i32_365, %c1_i32_366 : i32
    %c0_i32_367 = arith.constant 0 : i32
    %1106 = arith.addi %c0_i32_367, %1105 : i32
    %1107 = arith.index_cast %1106 : i32 to index
    %1108 = memref.load %arg1[%1107] : memref<32xi32, #tpu.memory_space<smem>>
    %1109 = arith.index_cast %1106 : i32 to index
    %1110 = memref.load %arg2[%1109] : memref<32xi32, #tpu.memory_space<smem>>
    %1111 = arith.index_cast %1108 : i32 to index
    %c0_368 = arith.constant 0 : index
    %1112 = vector.load %arg13[%1111, %c0_368] : memref<16x128xf32, #tpu.memory_space<vmem>>, vector<1x128xf32>
    %1113 = arith.index_cast %1106 : i32 to index
    %1114 = memref.load %arg3[%1113] : memref<32xf32, #tpu.memory_space<smem>>
    %1115 = vector.broadcast %1114 : f32 to vector<1x128xf32>
    %1116 = arith.mulf %1115, %743 : vector<1x128xf32>
    %1117 = arith.addf %1112, %1116 : vector<1x128xf32>
    %1118 = arith.addf %1117, %745 : vector<1x128xf32>
    %cst_369 = arith.constant 0.000000e+00 : f32
    %1119 = vector.broadcast %cst_369 : f32 to vector<1x128xf32>
    %1120 = arith.maximumf %1118, %1119 : vector<1x128xf32>
    %1121 = arith.index_cast %1110 : i32 to index
    %c0_370 = arith.constant 0 : index
    %1122 = vector.load %arg14[%1121, %c0_370] : memref<16x128xf32, #tpu.memory_space<vmem>>, vector<1x128xf32>
    %1123 = arith.addf %1122, %1120 : vector<1x128xf32>
    %1124 = arith.index_cast %1110 : i32 to index
    %c0_371 = arith.constant 0 : index
    %1125 = vector.load %arg14[%1124, %c0_371] : memref<16x128xf32, #tpu.memory_space<vmem>>, vector<1x128xf32>
    tpu.vector_store %arg14[%1124, %c0_371], %1123 {strides = array<i32>} : memref<16x128xf32, #tpu.memory_space<vmem>>, vector<1x128xf32>,
    %c18_i32_372 = arith.constant 18 : i32
    %c1_i32_373 = arith.constant 1 : i32
    %1126 = arith.muli %c18_i32_372, %c1_i32_373 : i32
    %c0_i32_374 = arith.constant 0 : i32
    %1127 = arith.addi %c0_i32_374, %1126 : i32
    %1128 = arith.index_cast %1127 : i32 to index
    %1129 = memref.load %arg1[%1128] : memref<32xi32, #tpu.memory_space<smem>>
    %1130 = arith.index_cast %1127 : i32 to index
    %1131 = memref.load %arg2[%1130] : memref<32xi32, #tpu.memory_space<smem>>
    %1132 = arith.index_cast %1129 : i32 to index
    %c0_375 = arith.constant 0 : index
    %1133 = vector.load %arg13[%1132, %c0_375] : memref<16x128xf32, #tpu.memory_space<vmem>>, vector<1x128xf32>
    %1134 = arith.index_cast %1127 : i32 to index
    %1135 = memref.load %arg3[%1134] : memref<32xf32, #tpu.memory_space<smem>>
    %1136 = vector.broadcast %1135 : f32 to vector<1x128xf32>
    %1137 = arith.mulf %1136, %743 : vector<1x128xf32>
    %1138 = arith.addf %1133, %1137 : vector<1x128xf32>
    %1139 = arith.addf %1138, %745 : vector<1x128xf32>
    %cst_376 = arith.constant 0.000000e+00 : f32
    %1140 = vector.broadcast %cst_376 : f32 to vector<1x128xf32>
    %1141 = arith.maximumf %1139, %1140 : vector<1x128xf32>
    %1142 = arith.index_cast %1131 : i32 to index
    %c0_377 = arith.constant 0 : index
    %1143 = vector.load %arg14[%1142, %c0_377] : memref<16x128xf32, #tpu.memory_space<vmem>>, vector<1x128xf32>
    %1144 = arith.addf %1143, %1141 : vector<1x128xf32>
    %1145 = arith.index_cast %1131 : i32 to index
    %c0_378 = arith.constant 0 : index
    %1146 = vector.load %arg14[%1145, %c0_378] : memref<16x128xf32, #tpu.memory_space<vmem>>, vector<1x128xf32>
    tpu.vector_store %arg14[%1145, %c0_378], %1144 {strides = array<i32>} : memref<16x128xf32, #tpu.memory_space<vmem>>, vector<1x128xf32>,
    %c19_i32_379 = arith.constant 19 : i32
    %c1_i32_380 = arith.constant 1 : i32
    %1147 = arith.muli %c19_i32_379, %c1_i32_380 : i32
    %c0_i32_381 = arith.constant 0 : i32
    %1148 = arith.addi %c0_i32_381, %1147 : i32
    %1149 = arith.index_cast %1148 : i32 to index
    %1150 = memref.load %arg1[%1149] : memref<32xi32, #tpu.memory_space<smem>>
    %1151 = arith.index_cast %1148 : i32 to index
    %1152 = memref.load %arg2[%1151] : memref<32xi32, #tpu.memory_space<smem>>
    %1153 = arith.index_cast %1150 : i32 to index
    %c0_382 = arith.constant 0 : index
    %1154 = vector.load %arg13[%1153, %c0_382] : memref<16x128xf32, #tpu.memory_space<vmem>>, vector<1x128xf32>
    %1155 = arith.index_cast %1148 : i32 to index
    %1156 = memref.load %arg3[%1155] : memref<32xf32, #tpu.memory_space<smem>>
    %1157 = vector.broadcast %1156 : f32 to vector<1x128xf32>
    %1158 = arith.mulf %1157, %743 : vector<1x128xf32>
    %1159 = arith.addf %1154, %1158 : vector<1x128xf32>
    %1160 = arith.addf %1159, %745 : vector<1x128xf32>
    %cst_383 = arith.constant 0.000000e+00 : f32
    %1161 = vector.broadcast %cst_383 : f32 to vector<1x128xf32>
    %1162 = arith.maximumf %1160, %1161 : vector<1x128xf32>
    %1163 = arith.index_cast %1152 : i32 to index
    %c0_384 = arith.constant 0 : index
    %1164 = vector.load %arg14[%1163, %c0_384] : memref<16x128xf32, #tpu.memory_space<vmem>>, vector<1x128xf32>
    %1165 = arith.addf %1164, %1162 : vector<1x128xf32>
    %1166 = arith.index_cast %1152 : i32 to index
    %c0_385 = arith.constant 0 : index
    %1167 = vector.load %arg14[%1166, %c0_385] : memref<16x128xf32, #tpu.memory_space<vmem>>, vector<1x128xf32>
    tpu.vector_store %arg14[%1166, %c0_385], %1165 {strides = array<i32>} : memref<16x128xf32, #tpu.memory_space<vmem>>, vector<1x128xf32>,
    %c20_i32_386 = arith.constant 20 : i32
    %c1_i32_387 = arith.constant 1 : i32
    %1168 = arith.muli %c20_i32_386, %c1_i32_387 : i32
    %c0_i32_388 = arith.constant 0 : i32
    %1169 = arith.addi %c0_i32_388, %1168 : i32
    %1170 = arith.index_cast %1169 : i32 to index
    %1171 = memref.load %arg1[%1170] : memref<32xi32, #tpu.memory_space<smem>>
    %1172 = arith.index_cast %1169 : i32 to index
    %1173 = memref.load %arg2[%1172] : memref<32xi32, #tpu.memory_space<smem>>
    %1174 = arith.index_cast %1171 : i32 to index
    %c0_389 = arith.constant 0 : index
    %1175 = vector.load %arg13[%1174, %c0_389] : memref<16x128xf32, #tpu.memory_space<vmem>>, vector<1x128xf32>
    %1176 = arith.index_cast %1169 : i32 to index
    %1177 = memref.load %arg3[%1176] : memref<32xf32, #tpu.memory_space<smem>>
    %1178 = vector.broadcast %1177 : f32 to vector<1x128xf32>
    %1179 = arith.mulf %1178, %743 : vector<1x128xf32>
    %1180 = arith.addf %1175, %1179 : vector<1x128xf32>
    %1181 = arith.addf %1180, %745 : vector<1x128xf32>
    %cst_390 = arith.constant 0.000000e+00 : f32
    %1182 = vector.broadcast %cst_390 : f32 to vector<1x128xf32>
    %1183 = arith.maximumf %1181, %1182 : vector<1x128xf32>
    %1184 = arith.index_cast %1173 : i32 to index
    %c0_391 = arith.constant 0 : index
    %1185 = vector.load %arg14[%1184, %c0_391] : memref<16x128xf32, #tpu.memory_space<vmem>>, vector<1x128xf32>
    %1186 = arith.addf %1185, %1183 : vector<1x128xf32>
    %1187 = arith.index_cast %1173 : i32 to index
    %c0_392 = arith.constant 0 : index
    %1188 = vector.load %arg14[%1187, %c0_392] : memref<16x128xf32, #tpu.memory_space<vmem>>, vector<1x128xf32>
    tpu.vector_store %arg14[%1187, %c0_392], %1186 {strides = array<i32>} : memref<16x128xf32, #tpu.memory_space<vmem>>, vector<1x128xf32>,
    %c21_i32_393 = arith.constant 21 : i32
    %c1_i32_394 = arith.constant 1 : i32
    %1189 = arith.muli %c21_i32_393, %c1_i32_394 : i32
    %c0_i32_395 = arith.constant 0 : i32
    %1190 = arith.addi %c0_i32_395, %1189 : i32
    %1191 = arith.index_cast %1190 : i32 to index
    %1192 = memref.load %arg1[%1191] : memref<32xi32, #tpu.memory_space<smem>>
    %1193 = arith.index_cast %1190 : i32 to index
    %1194 = memref.load %arg2[%1193] : memref<32xi32, #tpu.memory_space<smem>>
    %1195 = arith.index_cast %1192 : i32 to index
    %c0_396 = arith.constant 0 : index
    %1196 = vector.load %arg13[%1195, %c0_396] : memref<16x128xf32, #tpu.memory_space<vmem>>, vector<1x128xf32>
    %1197 = arith.index_cast %1190 : i32 to index
    %1198 = memref.load %arg3[%1197] : memref<32xf32, #tpu.memory_space<smem>>
    %1199 = vector.broadcast %1198 : f32 to vector<1x128xf32>
    %1200 = arith.mulf %1199, %743 : vector<1x128xf32>
    %1201 = arith.addf %1196, %1200 : vector<1x128xf32>
    %1202 = arith.addf %1201, %745 : vector<1x128xf32>
    %cst_397 = arith.constant 0.000000e+00 : f32
    %1203 = vector.broadcast %cst_397 : f32 to vector<1x128xf32>
    %1204 = arith.maximumf %1202, %1203 : vector<1x128xf32>
    %1205 = arith.index_cast %1194 : i32 to index
    %c0_398 = arith.constant 0 : index
    %1206 = vector.load %arg14[%1205, %c0_398] : memref<16x128xf32, #tpu.memory_space<vmem>>, vector<1x128xf32>
    %1207 = arith.addf %1206, %1204 : vector<1x128xf32>
    %1208 = arith.index_cast %1194 : i32 to index
    %c0_399 = arith.constant 0 : index
    %1209 = vector.load %arg14[%1208, %c0_399] : memref<16x128xf32, #tpu.memory_space<vmem>>, vector<1x128xf32>
    tpu.vector_store %arg14[%1208, %c0_399], %1207 {strides = array<i32>} : memref<16x128xf32, #tpu.memory_space<vmem>>, vector<1x128xf32>,
    %c22_i32_400 = arith.constant 22 : i32
    %c1_i32_401 = arith.constant 1 : i32
    %1210 = arith.muli %c22_i32_400, %c1_i32_401 : i32
    %c0_i32_402 = arith.constant 0 : i32
    %1211 = arith.addi %c0_i32_402, %1210 : i32
    %1212 = arith.index_cast %1211 : i32 to index
    %1213 = memref.load %arg1[%1212] : memref<32xi32, #tpu.memory_space<smem>>
    %1214 = arith.index_cast %1211 : i32 to index
    %1215 = memref.load %arg2[%1214] : memref<32xi32, #tpu.memory_space<smem>>
    %1216 = arith.index_cast %1213 : i32 to index
    %c0_403 = arith.constant 0 : index
    %1217 = vector.load %arg13[%1216, %c0_403] : memref<16x128xf32, #tpu.memory_space<vmem>>, vector<1x128xf32>
    %1218 = arith.index_cast %1211 : i32 to index
    %1219 = memref.load %arg3[%1218] : memref<32xf32, #tpu.memory_space<smem>>
    %1220 = vector.broadcast %1219 : f32 to vector<1x128xf32>
    %1221 = arith.mulf %1220, %743 : vector<1x128xf32>
    %1222 = arith.addf %1217, %1221 : vector<1x128xf32>
    %1223 = arith.addf %1222, %745 : vector<1x128xf32>
    %cst_404 = arith.constant 0.000000e+00 : f32
    %1224 = vector.broadcast %cst_404 : f32 to vector<1x128xf32>
    %1225 = arith.maximumf %1223, %1224 : vector<1x128xf32>
    %1226 = arith.index_cast %1215 : i32 to index
    %c0_405 = arith.constant 0 : index
    %1227 = vector.load %arg14[%1226, %c0_405] : memref<16x128xf32, #tpu.memory_space<vmem>>, vector<1x128xf32>
    %1228 = arith.addf %1227, %1225 : vector<1x128xf32>
    %1229 = arith.index_cast %1215 : i32 to index
    %c0_406 = arith.constant 0 : index
    %1230 = vector.load %arg14[%1229, %c0_406] : memref<16x128xf32, #tpu.memory_space<vmem>>, vector<1x128xf32>
    tpu.vector_store %arg14[%1229, %c0_406], %1228 {strides = array<i32>} : memref<16x128xf32, #tpu.memory_space<vmem>>, vector<1x128xf32>,
    %c23_i32_407 = arith.constant 23 : i32
    %c1_i32_408 = arith.constant 1 : i32
    %1231 = arith.muli %c23_i32_407, %c1_i32_408 : i32
    %c0_i32_409 = arith.constant 0 : i32
    %1232 = arith.addi %c0_i32_409, %1231 : i32
    %1233 = arith.index_cast %1232 : i32 to index
    %1234 = memref.load %arg1[%1233] : memref<32xi32, #tpu.memory_space<smem>>
    %1235 = arith.index_cast %1232 : i32 to index
    %1236 = memref.load %arg2[%1235] : memref<32xi32, #tpu.memory_space<smem>>
    %1237 = arith.index_cast %1234 : i32 to index
    %c0_410 = arith.constant 0 : index
    %1238 = vector.load %arg13[%1237, %c0_410] : memref<16x128xf32, #tpu.memory_space<vmem>>, vector<1x128xf32>
    %1239 = arith.index_cast %1232 : i32 to index
    %1240 = memref.load %arg3[%1239] : memref<32xf32, #tpu.memory_space<smem>>
    %1241 = vector.broadcast %1240 : f32 to vector<1x128xf32>
    %1242 = arith.mulf %1241, %743 : vector<1x128xf32>
    %1243 = arith.addf %1238, %1242 : vector<1x128xf32>
    %1244 = arith.addf %1243, %745 : vector<1x128xf32>
    %cst_411 = arith.constant 0.000000e+00 : f32
    %1245 = vector.broadcast %cst_411 : f32 to vector<1x128xf32>
    %1246 = arith.maximumf %1244, %1245 : vector<1x128xf32>
    %1247 = arith.index_cast %1236 : i32 to index
    %c0_412 = arith.constant 0 : index
    %1248 = vector.load %arg14[%1247, %c0_412] : memref<16x128xf32, #tpu.memory_space<vmem>>, vector<1x128xf32>
    %1249 = arith.addf %1248, %1246 : vector<1x128xf32>
    %1250 = arith.index_cast %1236 : i32 to index
    %c0_413 = arith.constant 0 : index
    %1251 = vector.load %arg14[%1250, %c0_413] : memref<16x128xf32, #tpu.memory_space<vmem>>, vector<1x128xf32>
    tpu.vector_store %arg14[%1250, %c0_413], %1249 {strides = array<i32>} : memref<16x128xf32, #tpu.memory_space<vmem>>, vector<1x128xf32>,
    %c24_i32_414 = arith.constant 24 : i32
    %c1_i32_415 = arith.constant 1 : i32
    %1252 = arith.muli %c24_i32_414, %c1_i32_415 : i32
    %c0_i32_416 = arith.constant 0 : i32
    %1253 = arith.addi %c0_i32_416, %1252 : i32
    %1254 = arith.index_cast %1253 : i32 to index
    %1255 = memref.load %arg1[%1254] : memref<32xi32, #tpu.memory_space<smem>>
    %1256 = arith.index_cast %1253 : i32 to index
    %1257 = memref.load %arg2[%1256] : memref<32xi32, #tpu.memory_space<smem>>
    %1258 = arith.index_cast %1255 : i32 to index
    %c0_417 = arith.constant 0 : index
    %1259 = vector.load %arg13[%1258, %c0_417] : memref<16x128xf32, #tpu.memory_space<vmem>>, vector<1x128xf32>
    %1260 = arith.index_cast %1253 : i32 to index
    %1261 = memref.load %arg3[%1260] : memref<32xf32, #tpu.memory_space<smem>>
    %1262 = vector.broadcast %1261 : f32 to vector<1x128xf32>
    %1263 = arith.mulf %1262, %743 : vector<1x128xf32>
    %1264 = arith.addf %1259, %1263 : vector<1x128xf32>
    %1265 = arith.addf %1264, %745 : vector<1x128xf32>
    %cst_418 = arith.constant 0.000000e+00 : f32
    %1266 = vector.broadcast %cst_418 : f32 to vector<1x128xf32>
    %1267 = arith.maximumf %1265, %1266 : vector<1x128xf32>
    %1268 = arith.index_cast %1257 : i32 to index
    %c0_419 = arith.constant 0 : index
    %1269 = vector.load %arg14[%1268, %c0_419] : memref<16x128xf32, #tpu.memory_space<vmem>>, vector<1x128xf32>
    %1270 = arith.addf %1269, %1267 : vector<1x128xf32>
    %1271 = arith.index_cast %1257 : i32 to index
    %c0_420 = arith.constant 0 : index
    %1272 = vector.load %arg14[%1271, %c0_420] : memref<16x128xf32, #tpu.memory_space<vmem>>, vector<1x128xf32>
    tpu.vector_store %arg14[%1271, %c0_420], %1270 {strides = array<i32>} : memref<16x128xf32, #tpu.memory_space<vmem>>, vector<1x128xf32>,
    %c25_i32_421 = arith.constant 25 : i32
    %c1_i32_422 = arith.constant 1 : i32
    %1273 = arith.muli %c25_i32_421, %c1_i32_422 : i32
    %c0_i32_423 = arith.constant 0 : i32
    %1274 = arith.addi %c0_i32_423, %1273 : i32
    %1275 = arith.index_cast %1274 : i32 to index
    %1276 = memref.load %arg1[%1275] : memref<32xi32, #tpu.memory_space<smem>>
    %1277 = arith.index_cast %1274 : i32 to index
    %1278 = memref.load %arg2[%1277] : memref<32xi32, #tpu.memory_space<smem>>
    %1279 = arith.index_cast %1276 : i32 to index
    %c0_424 = arith.constant 0 : index
    %1280 = vector.load %arg13[%1279, %c0_424] : memref<16x128xf32, #tpu.memory_space<vmem>>, vector<1x128xf32>
    %1281 = arith.index_cast %1274 : i32 to index
    %1282 = memref.load %arg3[%1281] : memref<32xf32, #tpu.memory_space<smem>>
    %1283 = vector.broadcast %1282 : f32 to vector<1x128xf32>
    %1284 = arith.mulf %1283, %743 : vector<1x128xf32>
    %1285 = arith.addf %1280, %1284 : vector<1x128xf32>
    %1286 = arith.addf %1285, %745 : vector<1x128xf32>
    %cst_425 = arith.constant 0.000000e+00 : f32
    %1287 = vector.broadcast %cst_425 : f32 to vector<1x128xf32>
    %1288 = arith.maximumf %1286, %1287 : vector<1x128xf32>
    %1289 = arith.index_cast %1278 : i32 to index
    %c0_426 = arith.constant 0 : index
    %1290 = vector.load %arg14[%1289, %c0_426] : memref<16x128xf32, #tpu.memory_space<vmem>>, vector<1x128xf32>
    %1291 = arith.addf %1290, %1288 : vector<1x128xf32>
    %1292 = arith.index_cast %1278 : i32 to index
    %c0_427 = arith.constant 0 : index
    %1293 = vector.load %arg14[%1292, %c0_427] : memref<16x128xf32, #tpu.memory_space<vmem>>, vector<1x128xf32>
    tpu.vector_store %arg14[%1292, %c0_427], %1291 {strides = array<i32>} : memref<16x128xf32, #tpu.memory_space<vmem>>, vector<1x128xf32>,
    %c26_i32_428 = arith.constant 26 : i32
    %c1_i32_429 = arith.constant 1 : i32
    %1294 = arith.muli %c26_i32_428, %c1_i32_429 : i32
    %c0_i32_430 = arith.constant 0 : i32
    %1295 = arith.addi %c0_i32_430, %1294 : i32
    %1296 = arith.index_cast %1295 : i32 to index
    %1297 = memref.load %arg1[%1296] : memref<32xi32, #tpu.memory_space<smem>>
    %1298 = arith.index_cast %1295 : i32 to index
    %1299 = memref.load %arg2[%1298] : memref<32xi32, #tpu.memory_space<smem>>
    %1300 = arith.index_cast %1297 : i32 to index
    %c0_431 = arith.constant 0 : index
    %1301 = vector.load %arg13[%1300, %c0_431] : memref<16x128xf32, #tpu.memory_space<vmem>>, vector<1x128xf32>
    %1302 = arith.index_cast %1295 : i32 to index
    %1303 = memref.load %arg3[%1302] : memref<32xf32, #tpu.memory_space<smem>>
    %1304 = vector.broadcast %1303 : f32 to vector<1x128xf32>
    %1305 = arith.mulf %1304, %743 : vector<1x128xf32>
    %1306 = arith.addf %1301, %1305 : vector<1x128xf32>
    %1307 = arith.addf %1306, %745 : vector<1x128xf32>
    %cst_432 = arith.constant 0.000000e+00 : f32
    %1308 = vector.broadcast %cst_432 : f32 to vector<1x128xf32>
    %1309 = arith.maximumf %1307, %1308 : vector<1x128xf32>
    %1310 = arith.index_cast %1299 : i32 to index
    %c0_433 = arith.constant 0 : index
    %1311 = vector.load %arg14[%1310, %c0_433] : memref<16x128xf32, #tpu.memory_space<vmem>>, vector<1x128xf32>
    %1312 = arith.addf %1311, %1309 : vector<1x128xf32>
    %1313 = arith.index_cast %1299 : i32 to index
    %c0_434 = arith.constant 0 : index
    %1314 = vector.load %arg14[%1313, %c0_434] : memref<16x128xf32, #tpu.memory_space<vmem>>, vector<1x128xf32>
    tpu.vector_store %arg14[%1313, %c0_434], %1312 {strides = array<i32>} : memref<16x128xf32, #tpu.memory_space<vmem>>, vector<1x128xf32>,
    %c27_i32_435 = arith.constant 27 : i32
    %c1_i32_436 = arith.constant 1 : i32
    %1315 = arith.muli %c27_i32_435, %c1_i32_436 : i32
    %c0_i32_437 = arith.constant 0 : i32
    %1316 = arith.addi %c0_i32_437, %1315 : i32
    %1317 = arith.index_cast %1316 : i32 to index
    %1318 = memref.load %arg1[%1317] : memref<32xi32, #tpu.memory_space<smem>>
    %1319 = arith.index_cast %1316 : i32 to index
    %1320 = memref.load %arg2[%1319] : memref<32xi32, #tpu.memory_space<smem>>
    %1321 = arith.index_cast %1318 : i32 to index
    %c0_438 = arith.constant 0 : index
    %1322 = vector.load %arg13[%1321, %c0_438] : memref<16x128xf32, #tpu.memory_space<vmem>>, vector<1x128xf32>
    %1323 = arith.index_cast %1316 : i32 to index
    %1324 = memref.load %arg3[%1323] : memref<32xf32, #tpu.memory_space<smem>>
    %1325 = vector.broadcast %1324 : f32 to vector<1x128xf32>
    %1326 = arith.mulf %1325, %743 : vector<1x128xf32>
    %1327 = arith.addf %1322, %1326 : vector<1x128xf32>
    %1328 = arith.addf %1327, %745 : vector<1x128xf32>
    %cst_439 = arith.constant 0.000000e+00 : f32
    %1329 = vector.broadcast %cst_439 : f32 to vector<1x128xf32>
    %1330 = arith.maximumf %1328, %1329 : vector<1x128xf32>
    %1331 = arith.index_cast %1320 : i32 to index
    %c0_440 = arith.constant 0 : index
    %1332 = vector.load %arg14[%1331, %c0_440] : memref<16x128xf32, #tpu.memory_space<vmem>>, vector<1x128xf32>
    %1333 = arith.addf %1332, %1330 : vector<1x128xf32>
    %1334 = arith.index_cast %1320 : i32 to index
    %c0_441 = arith.constant 0 : index
    %1335 = vector.load %arg14[%1334, %c0_441] : memref<16x128xf32, #tpu.memory_space<vmem>>, vector<1x128xf32>
    tpu.vector_store %arg14[%1334, %c0_441], %1333 {strides = array<i32>} : memref<16x128xf32, #tpu.memory_space<vmem>>, vector<1x128xf32>,
    %c28_i32_442 = arith.constant 28 : i32
    %c1_i32_443 = arith.constant 1 : i32
    %1336 = arith.muli %c28_i32_442, %c1_i32_443 : i32
    %c0_i32_444 = arith.constant 0 : i32
    %1337 = arith.addi %c0_i32_444, %1336 : i32
    %1338 = arith.index_cast %1337 : i32 to index
    %1339 = memref.load %arg1[%1338] : memref<32xi32, #tpu.memory_space<smem>>
    %1340 = arith.index_cast %1337 : i32 to index
    %1341 = memref.load %arg2[%1340] : memref<32xi32, #tpu.memory_space<smem>>
    %1342 = arith.index_cast %1339 : i32 to index
    %c0_445 = arith.constant 0 : index
    %1343 = vector.load %arg13[%1342, %c0_445] : memref<16x128xf32, #tpu.memory_space<vmem>>, vector<1x128xf32>
    %1344 = arith.index_cast %1337 : i32 to index
    %1345 = memref.load %arg3[%1344] : memref<32xf32, #tpu.memory_space<smem>>
    %1346 = vector.broadcast %1345 : f32 to vector<1x128xf32>
    %1347 = arith.mulf %1346, %743 : vector<1x128xf32>
    %1348 = arith.addf %1343, %1347 : vector<1x128xf32>
    %1349 = arith.addf %1348, %745 : vector<1x128xf32>
    %cst_446 = arith.constant 0.000000e+00 : f32
    %1350 = vector.broadcast %cst_446 : f32 to vector<1x128xf32>
    %1351 = arith.maximumf %1349, %1350 : vector<1x128xf32>
    %1352 = arith.index_cast %1341 : i32 to index
    %c0_447 = arith.constant 0 : index
    %1353 = vector.load %arg14[%1352, %c0_447] : memref<16x128xf32, #tpu.memory_space<vmem>>, vector<1x128xf32>
    %1354 = arith.addf %1353, %1351 : vector<1x128xf32>
    %1355 = arith.index_cast %1341 : i32 to index
    %c0_448 = arith.constant 0 : index
    %1356 = vector.load %arg14[%1355, %c0_448] : memref<16x128xf32, #tpu.memory_space<vmem>>, vector<1x128xf32>
    tpu.vector_store %arg14[%1355, %c0_448], %1354 {strides = array<i32>} : memref<16x128xf32, #tpu.memory_space<vmem>>, vector<1x128xf32>,
    %c29_i32_449 = arith.constant 29 : i32
    %c1_i32_450 = arith.constant 1 : i32
    %1357 = arith.muli %c29_i32_449, %c1_i32_450 : i32
    %c0_i32_451 = arith.constant 0 : i32
    %1358 = arith.addi %c0_i32_451, %1357 : i32
    %1359 = arith.index_cast %1358 : i32 to index
    %1360 = memref.load %arg1[%1359] : memref<32xi32, #tpu.memory_space<smem>>
    %1361 = arith.index_cast %1358 : i32 to index
    %1362 = memref.load %arg2[%1361] : memref<32xi32, #tpu.memory_space<smem>>
    %1363 = arith.index_cast %1360 : i32 to index
    %c0_452 = arith.constant 0 : index
    %1364 = vector.load %arg13[%1363, %c0_452] : memref<16x128xf32, #tpu.memory_space<vmem>>, vector<1x128xf32>
    %1365 = arith.index_cast %1358 : i32 to index
    %1366 = memref.load %arg3[%1365] : memref<32xf32, #tpu.memory_space<smem>>
    %1367 = vector.broadcast %1366 : f32 to vector<1x128xf32>
    %1368 = arith.mulf %1367, %743 : vector<1x128xf32>
    %1369 = arith.addf %1364, %1368 : vector<1x128xf32>
    %1370 = arith.addf %1369, %745 : vector<1x128xf32>
    %cst_453 = arith.constant 0.000000e+00 : f32
    %1371 = vector.broadcast %cst_453 : f32 to vector<1x128xf32>
    %1372 = arith.maximumf %1370, %1371 : vector<1x128xf32>
    %1373 = arith.index_cast %1362 : i32 to index
    %c0_454 = arith.constant 0 : index
    %1374 = vector.load %arg14[%1373, %c0_454] : memref<16x128xf32, #tpu.memory_space<vmem>>, vector<1x128xf32>
    %1375 = arith.addf %1374, %1372 : vector<1x128xf32>
    %1376 = arith.index_cast %1362 : i32 to index
    %c0_455 = arith.constant 0 : index
    %1377 = vector.load %arg14[%1376, %c0_455] : memref<16x128xf32, #tpu.memory_space<vmem>>, vector<1x128xf32>
    tpu.vector_store %arg14[%1376, %c0_455], %1375 {strides = array<i32>} : memref<16x128xf32, #tpu.memory_space<vmem>>, vector<1x128xf32>,
    %c30_i32_456 = arith.constant 30 : i32
    %c1_i32_457 = arith.constant 1 : i32
    %1378 = arith.muli %c30_i32_456, %c1_i32_457 : i32
    %c0_i32_458 = arith.constant 0 : i32
    %1379 = arith.addi %c0_i32_458, %1378 : i32
    %1380 = arith.index_cast %1379 : i32 to index
    %1381 = memref.load %arg1[%1380] : memref<32xi32, #tpu.memory_space<smem>>
    %1382 = arith.index_cast %1379 : i32 to index
    %1383 = memref.load %arg2[%1382] : memref<32xi32, #tpu.memory_space<smem>>
    %1384 = arith.index_cast %1381 : i32 to index
    %c0_459 = arith.constant 0 : index
    %1385 = vector.load %arg13[%1384, %c0_459] : memref<16x128xf32, #tpu.memory_space<vmem>>, vector<1x128xf32>
    %1386 = arith.index_cast %1379 : i32 to index
    %1387 = memref.load %arg3[%1386] : memref<32xf32, #tpu.memory_space<smem>>
    %1388 = vector.broadcast %1387 : f32 to vector<1x128xf32>
    %1389 = arith.mulf %1388, %743 : vector<1x128xf32>
    %1390 = arith.addf %1385, %1389 : vector<1x128xf32>
    %1391 = arith.addf %1390, %745 : vector<1x128xf32>
    %cst_460 = arith.constant 0.000000e+00 : f32
    %1392 = vector.broadcast %cst_460 : f32 to vector<1x128xf32>
    %1393 = arith.maximumf %1391, %1392 : vector<1x128xf32>
    %1394 = arith.index_cast %1383 : i32 to index
    %c0_461 = arith.constant 0 : index
    %1395 = vector.load %arg14[%1394, %c0_461] : memref<16x128xf32, #tpu.memory_space<vmem>>, vector<1x128xf32>
    %1396 = arith.addf %1395, %1393 : vector<1x128xf32>
    %1397 = arith.index_cast %1383 : i32 to index
    %c0_462 = arith.constant 0 : index
    %1398 = vector.load %arg14[%1397, %c0_462] : memref<16x128xf32, #tpu.memory_space<vmem>>, vector<1x128xf32>
    tpu.vector_store %arg14[%1397, %c0_462], %1396 {strides = array<i32>} : memref<16x128xf32, #tpu.memory_space<vmem>>, vector<1x128xf32>,
    %c31_i32_463 = arith.constant 31 : i32
    %c1_i32_464 = arith.constant 1 : i32
    %1399 = arith.muli %c31_i32_463, %c1_i32_464 : i32
    %c0_i32_465 = arith.constant 0 : i32
    %1400 = arith.addi %c0_i32_465, %1399 : i32
    %1401 = arith.index_cast %1400 : i32 to index
    %1402 = memref.load %arg1[%1401] : memref<32xi32, #tpu.memory_space<smem>>
    %1403 = arith.index_cast %1400 : i32 to index
    %1404 = memref.load %arg2[%1403] : memref<32xi32, #tpu.memory_space<smem>>
    %1405 = arith.index_cast %1402 : i32 to index
    %c0_466 = arith.constant 0 : index
    %1406 = vector.load %arg13[%1405, %c0_466] : memref<16x128xf32, #tpu.memory_space<vmem>>, vector<1x128xf32>
    %1407 = arith.index_cast %1400 : i32 to index
    %1408 = memref.load %arg3[%1407] : memref<32xf32, #tpu.memory_space<smem>>
    %1409 = vector.broadcast %1408 : f32 to vector<1x128xf32>
    %1410 = arith.mulf %1409, %743 : vector<1x128xf32>
    %1411 = arith.addf %1406, %1410 : vector<1x128xf32>
    %1412 = arith.addf %1411, %745 : vector<1x128xf32>
    %cst_467 = arith.constant 0.000000e+00 : f32
    %1413 = vector.broadcast %cst_467 : f32 to vector<1x128xf32>
    %1414 = arith.maximumf %1412, %1413 : vector<1x128xf32>
    %1415 = arith.index_cast %1404 : i32 to index
    %c0_468 = arith.constant 0 : index
    %1416 = vector.load %arg14[%1415, %c0_468] : memref<16x128xf32, #tpu.memory_space<vmem>>, vector<1x128xf32>
    %1417 = arith.addf %1416, %1414 : vector<1x128xf32>
    %1418 = arith.index_cast %1404 : i32 to index
    %c0_469 = arith.constant 0 : index
    %1419 = vector.load %arg14[%1418, %c0_469] : memref<16x128xf32, #tpu.memory_space<vmem>>, vector<1x128xf32>
    tpu.vector_store %arg14[%1418, %c0_469], %1417 {strides = array<i32>} : memref<16x128xf32, #tpu.memory_space<vmem>>, vector<1x128xf32>,
    %c32_i32_470 = arith.constant 32 : i32
    %c0_471 = arith.constant 0 : index
    %c0_472 = arith.constant 0 : index
    %1420 = vector.load %arg13[%c0_471, %c0_472] : memref<16x128xf32, #tpu.memory_space<vmem>>, vector<16x128xf32>
    %c0_473 = arith.constant 0 : index
    %c0_474 = arith.constant 0 : index
    %1421 = vector.load %arg14[%c0_473, %c0_474] : memref<16x128xf32, #tpu.memory_space<vmem>>, vector<16x128xf32>
    %c1_475 = arith.constant 1 : index
    %1422 = memref.load %arg0[%c1_475] : memref<3xf32, #tpu.memory_space<smem>>
    %1423 = vector.broadcast %1422 : f32 to vector<16x128xf32>
    %1424 = arith.mulf %1423, %1420 : vector<16x128xf32>
    %1425 = arith.addf %1421, %1424 : vector<16x128xf32>
    %1426 = arith.truncf %1425 : vector<16x128xf32> to vector<16x128xbf16>
    %c1_476 = arith.constant 1 : index
    %c0_477 = arith.constant 0 : index
    %c0_478 = arith.constant 0 : index
    %1427 = vector.load %arg7[%c1_476, %c0_477, %c0_478] : memref<3x128x128xbf16, #tpu.memory_space<vmem>>, vector<1x128x128xbf16>
    %1428 = vector.shape_cast %1427 : vector<1x128x128xbf16> to vector<128x128xbf16>
    %cst_479 = arith.constant dense<0.000000e+00> : vector<16x128xf32>
    %1429 = tpu.matmul %1426, %1428, %cst_479 {dimension_numbers = #tpu.dot_dimension_numbers<[1], [0], [0], [1], [0, 0, 1, 1], [], []>} : vector<16x128xbf16>, vector<128x128xbf16>, vector<16x128xf32> -> vector<16x128xf32>
    %c1_480 = arith.constant 1 : index
    %c0_481 = arith.constant 0 : index
    %c0_482 = arith.constant 0 : index
    %1430 = vector.load %arg8[%c1_480, %c0_481, %c0_482] : memref<3x1x128xf32, #tpu.memory_space<vmem>>, vector<1x1x128xf32>
    %1431 = vector.shape_cast %1430 : vector<1x1x128xf32> to vector<1x128xf32>
    %1432 = vector.broadcast %1431 : vector<1x128xf32> to vector<16x128xf32>
    %1433 = arith.addf %1429, %1432 : vector<16x128xf32>
    %1434 = vector.broadcast %4 : vector<16x1xf32> to vector<16x128xf32>
    %1435 = arith.mulf %1433, %1434 : vector<16x128xf32>
    %cst_483 = arith.constant dense<0.000000e+00> : vector<128xf32>
    %1436 = vector.multi_reduction <add>, %1435, %cst_483 [0] : vector<16x128xf32> to vector<128xf32>
    %1437 = vector.shape_cast %1436 : vector<128xf32> to vector<1x128xf32>
    %cst_484 = arith.constant 6.250000e-02 : f32
    %1438 = vector.broadcast %cst_484 : f32 to vector<1x128xf32>
    %1439 = arith.mulf %1437, %1438 : vector<1x128xf32>
    %1440 = vector.broadcast %1439 : vector<1x128xf32> to vector<16x128xf32>
    %1441 = arith.subf %1433, %1440 : vector<16x128xf32>
    %1442 = vector.broadcast %4 : vector<16x1xf32> to vector<16x128xf32>
    %1443 = arith.mulf %1441, %1442 : vector<16x128xf32>
    %1444 = arith.mulf %1443, %1443 : vector<16x128xf32>
    %cst_485 = arith.constant dense<0.000000e+00> : vector<128xf32>
    %1445 = vector.multi_reduction <add>, %1444, %cst_485 [0] : vector<16x128xf32> to vector<128xf32>
    %1446 = vector.shape_cast %1445 : vector<128xf32> to vector<1x128xf32>
    %cst_486 = arith.constant 6.250000e-02 : f32
    %1447 = vector.broadcast %cst_486 : f32 to vector<1x128xf32>
    %1448 = arith.mulf %1446, %1447 : vector<1x128xf32>
    %1449 = vector.broadcast %1439 : vector<1x128xf32> to vector<16x128xf32>
    %1450 = arith.subf %1433, %1449 : vector<16x128xf32>
    %cst_487 = arith.constant 9.99999974E-6 : f32
    %1451 = vector.broadcast %cst_487 : f32 to vector<1x128xf32>
    %1452 = arith.addf %1448, %1451 : vector<1x128xf32>
    %1453 = math.rsqrt %1452 : vector<1x128xf32>
    %1454 = vector.broadcast %1453 : vector<1x128xf32> to vector<16x128xf32>
    %1455 = arith.mulf %1450, %1454 : vector<16x128xf32>
    %c1_488 = arith.constant 1 : index
    %c0_489 = arith.constant 0 : index
    %c0_490 = arith.constant 0 : index
    %1456 = vector.load %arg9[%c1_488, %c0_489, %c0_490] : memref<3x1x128xf32, #tpu.memory_space<vmem>>, vector<1x1x128xf32>
    %1457 = vector.shape_cast %1456 : vector<1x1x128xf32> to vector<1x128xf32>
    %1458 = vector.broadcast %1457 : vector<1x128xf32> to vector<16x128xf32>
    %1459 = arith.mulf %1455, %1458 : vector<16x128xf32>
    %c1_491 = arith.constant 1 : index
    %c0_492 = arith.constant 0 : index
    %c0_493 = arith.constant 0 : index
    %1460 = vector.load %arg10[%c1_491, %c0_492, %c0_493] : memref<3x1x128xf32, #tpu.memory_space<vmem>>, vector<1x1x128xf32>
    %1461 = vector.shape_cast %1460 : vector<1x1x128xf32> to vector<1x128xf32>
    %1462 = vector.broadcast %1461 : vector<1x128xf32> to vector<16x128xf32>
    %1463 = arith.addf %1459, %1462 : vector<16x128xf32>
    %cst_494 = arith.constant 0.000000e+00 : f32
    %1464 = vector.broadcast %cst_494 : f32 to vector<16x128xf32>
    %1465 = arith.maximumf %1463, %1464 : vector<16x128xf32>
    %1466 = arith.truncf %1465 : vector<16x128xf32> to vector<16x128xbf16>
    %c1_495 = arith.constant 1 : index
    %c0_496 = arith.constant 0 : index
    %c0_497 = arith.constant 0 : index
    %1467 = vector.load %arg11[%c1_495, %c0_496, %c0_497] : memref<3x128x128xbf16, #tpu.memory_space<vmem>>, vector<1x128x128xbf16>
    %1468 = vector.shape_cast %1467 : vector<1x128x128xbf16> to vector<128x128xbf16>
    %cst_498 = arith.constant dense<0.000000e+00> : vector<16x128xf32>
    %1469 = tpu.matmul %1466, %1468, %cst_498 {dimension_numbers = #tpu.dot_dimension_numbers<[1], [0], [0], [1], [0, 0, 1, 1], [], []>} : vector<16x128xbf16>, vector<128x128xbf16>, vector<16x128xf32> -> vector<16x128xf32>
    %c1_499 = arith.constant 1 : index
    %c0_500 = arith.constant 0 : index
    %c0_501 = arith.constant 0 : index
    %1470 = vector.load %arg12[%c1_499, %c0_500, %c0_501] : memref<3x1x128xf32, #tpu.memory_space<vmem>>, vector<1x1x128xf32>
    %1471 = vector.shape_cast %1470 : vector<1x1x128xf32> to vector<1x128xf32>
    %1472 = vector.broadcast %1471 : vector<1x128xf32> to vector<16x128xf32>
    %1473 = arith.addf %1469, %1472 : vector<16x128xf32>
    %cst_502 = arith.constant 0.000000e+00 : f32
    %1474 = vector.broadcast %cst_502 : f32 to vector<16x128xf32>
    %1475 = arith.maximumf %1473, %1474 : vector<16x128xf32>
    %1476 = arith.addf %1420, %1475 : vector<16x128xf32>
    %c0_503 = arith.constant 0 : index
    %c0_504 = arith.constant 0 : index
    %1477 = vector.load %arg13[%c0_503, %c0_504] : memref<16x128xf32, #tpu.memory_space<vmem>>, vector<16x128xf32>
    tpu.vector_store %arg13[%c0_503, %c0_504], %1476 {strides = array<i32>} : memref<16x128xf32, #tpu.memory_space<vmem>>, vector<16x128xf32>,
    %c2 = arith.constant 2 : index
    %c0_505 = arith.constant 0 : index
    %c0_506 = arith.constant 0 : index
    %1478 = vector.load %arg5[%c2, %c0_505, %c0_506] : memref<3x1x128xf32, #tpu.memory_space<vmem>>, vector<1x1x128xf32>
    %1479 = vector.shape_cast %1478 : vector<1x1x128xf32> to vector<1x128xf32>
    %c2_507 = arith.constant 2 : index
    %c0_508 = arith.constant 0 : index
    %c0_509 = arith.constant 0 : index
    %1480 = vector.load %arg6[%c2_507, %c0_508, %c0_509] : memref<3x1x128xf32, #tpu.memory_space<vmem>>, vector<1x1x128xf32>
    %1481 = vector.shape_cast %1480 : vector<1x1x128xf32> to vector<1x128xf32>
    %cst_510 = arith.constant 0.000000e+00 : f32
    %1482 = vector.broadcast %cst_510 : f32 to vector<16x128xf32>
    %c0_511 = arith.constant 0 : index
    %c0_512 = arith.constant 0 : index
    %1483 = vector.load %arg14[%c0_511, %c0_512] : memref<16x128xf32, #tpu.memory_space<vmem>>, vector<16x128xf32>
    tpu.vector_store %arg14[%c0_511, %c0_512], %1482 {strides = array<i32>} : memref<16x128xf32, #tpu.memory_space<vmem>>, vector<16x128xf32>,
    %c0_i32_513 = arith.constant 0 : i32
    %c1_i32_514 = arith.constant 1 : i32
    %1484 = arith.muli %c0_i32_513, %c1_i32_514 : i32
    %c0_i32_515 = arith.constant 0 : i32
    %1485 = arith.addi %c0_i32_515, %1484 : i32
    %1486 = arith.index_cast %1485 : i32 to index
    %1487 = memref.load %arg1[%1486] : memref<32xi32, #tpu.memory_space<smem>>
    %1488 = arith.index_cast %1485 : i32 to index
    %1489 = memref.load %arg2[%1488] : memref<32xi32, #tpu.memory_space<smem>>
    %1490 = arith.index_cast %1487 : i32 to index
    %c0_516 = arith.constant 0 : index
    %1491 = vector.load %arg13[%1490, %c0_516] : memref<16x128xf32, #tpu.memory_space<vmem>>, vector<1x128xf32>
    %1492 = arith.index_cast %1485 : i32 to index
    %1493 = memref.load %arg3[%1492] : memref<32xf32, #tpu.memory_space<smem>>
    %1494 = vector.broadcast %1493 : f32 to vector<1x128xf32>
    %1495 = arith.mulf %1494, %1479 : vector<1x128xf32>
    %1496 = arith.addf %1491, %1495 : vector<1x128xf32>
    %1497 = arith.addf %1496, %1481 : vector<1x128xf32>
    %cst_517 = arith.constant 0.000000e+00 : f32
    %1498 = vector.broadcast %cst_517 : f32 to vector<1x128xf32>
    %1499 = arith.maximumf %1497, %1498 : vector<1x128xf32>
    %1500 = arith.index_cast %1489 : i32 to index
    %c0_518 = arith.constant 0 : index
    %1501 = vector.load %arg14[%1500, %c0_518] : memref<16x128xf32, #tpu.memory_space<vmem>>, vector<1x128xf32>
    %1502 = arith.addf %1501, %1499 : vector<1x128xf32>
    %1503 = arith.index_cast %1489 : i32 to index
    %c0_519 = arith.constant 0 : index
    %1504 = vector.load %arg14[%1503, %c0_519] : memref<16x128xf32, #tpu.memory_space<vmem>>, vector<1x128xf32>
    tpu.vector_store %arg14[%1503, %c0_519], %1502 {strides = array<i32>} : memref<16x128xf32, #tpu.memory_space<vmem>>, vector<1x128xf32>,
    %c1_i32_520 = arith.constant 1 : i32
    %c1_i32_521 = arith.constant 1 : i32
    %1505 = arith.muli %c1_i32_520, %c1_i32_521 : i32
    %c0_i32_522 = arith.constant 0 : i32
    %1506 = arith.addi %c0_i32_522, %1505 : i32
    %1507 = arith.index_cast %1506 : i32 to index
    %1508 = memref.load %arg1[%1507] : memref<32xi32, #tpu.memory_space<smem>>
    %1509 = arith.index_cast %1506 : i32 to index
    %1510 = memref.load %arg2[%1509] : memref<32xi32, #tpu.memory_space<smem>>
    %1511 = arith.index_cast %1508 : i32 to index
    %c0_523 = arith.constant 0 : index
    %1512 = vector.load %arg13[%1511, %c0_523] : memref<16x128xf32, #tpu.memory_space<vmem>>, vector<1x128xf32>
    %1513 = arith.index_cast %1506 : i32 to index
    %1514 = memref.load %arg3[%1513] : memref<32xf32, #tpu.memory_space<smem>>
    %1515 = vector.broadcast %1514 : f32 to vector<1x128xf32>
    %1516 = arith.mulf %1515, %1479 : vector<1x128xf32>
    %1517 = arith.addf %1512, %1516 : vector<1x128xf32>
    %1518 = arith.addf %1517, %1481 : vector<1x128xf32>
    %cst_524 = arith.constant 0.000000e+00 : f32
    %1519 = vector.broadcast %cst_524 : f32 to vector<1x128xf32>
    %1520 = arith.maximumf %1518, %1519 : vector<1x128xf32>
    %1521 = arith.index_cast %1510 : i32 to index
    %c0_525 = arith.constant 0 : index
    %1522 = vector.load %arg14[%1521, %c0_525] : memref<16x128xf32, #tpu.memory_space<vmem>>, vector<1x128xf32>
    %1523 = arith.addf %1522, %1520 : vector<1x128xf32>
    %1524 = arith.index_cast %1510 : i32 to index
    %c0_526 = arith.constant 0 : index
    %1525 = vector.load %arg14[%1524, %c0_526] : memref<16x128xf32, #tpu.memory_space<vmem>>, vector<1x128xf32>
    tpu.vector_store %arg14[%1524, %c0_526], %1523 {strides = array<i32>} : memref<16x128xf32, #tpu.memory_space<vmem>>, vector<1x128xf32>,
    %c2_i32_527 = arith.constant 2 : i32
    %c1_i32_528 = arith.constant 1 : i32
    %1526 = arith.muli %c2_i32_527, %c1_i32_528 : i32
    %c0_i32_529 = arith.constant 0 : i32
    %1527 = arith.addi %c0_i32_529, %1526 : i32
    %1528 = arith.index_cast %1527 : i32 to index
    %1529 = memref.load %arg1[%1528] : memref<32xi32, #tpu.memory_space<smem>>
    %1530 = arith.index_cast %1527 : i32 to index
    %1531 = memref.load %arg2[%1530] : memref<32xi32, #tpu.memory_space<smem>>
    %1532 = arith.index_cast %1529 : i32 to index
    %c0_530 = arith.constant 0 : index
    %1533 = vector.load %arg13[%1532, %c0_530] : memref<16x128xf32, #tpu.memory_space<vmem>>, vector<1x128xf32>
    %1534 = arith.index_cast %1527 : i32 to index
    %1535 = memref.load %arg3[%1534] : memref<32xf32, #tpu.memory_space<smem>>
    %1536 = vector.broadcast %1535 : f32 to vector<1x128xf32>
    %1537 = arith.mulf %1536, %1479 : vector<1x128xf32>
    %1538 = arith.addf %1533, %1537 : vector<1x128xf32>
    %1539 = arith.addf %1538, %1481 : vector<1x128xf32>
    %cst_531 = arith.constant 0.000000e+00 : f32
    %1540 = vector.broadcast %cst_531 : f32 to vector<1x128xf32>
    %1541 = arith.maximumf %1539, %1540 : vector<1x128xf32>
    %1542 = arith.index_cast %1531 : i32 to index
    %c0_532 = arith.constant 0 : index
    %1543 = vector.load %arg14[%1542, %c0_532] : memref<16x128xf32, #tpu.memory_space<vmem>>, vector<1x128xf32>
    %1544 = arith.addf %1543, %1541 : vector<1x128xf32>
    %1545 = arith.index_cast %1531 : i32 to index
    %c0_533 = arith.constant 0 : index
    %1546 = vector.load %arg14[%1545, %c0_533] : memref<16x128xf32, #tpu.memory_space<vmem>>, vector<1x128xf32>
    tpu.vector_store %arg14[%1545, %c0_533], %1544 {strides = array<i32>} : memref<16x128xf32, #tpu.memory_space<vmem>>, vector<1x128xf32>,
    %c3_i32_534 = arith.constant 3 : i32
    %c1_i32_535 = arith.constant 1 : i32
    %1547 = arith.muli %c3_i32_534, %c1_i32_535 : i32
    %c0_i32_536 = arith.constant 0 : i32
    %1548 = arith.addi %c0_i32_536, %1547 : i32
    %1549 = arith.index_cast %1548 : i32 to index
    %1550 = memref.load %arg1[%1549] : memref<32xi32, #tpu.memory_space<smem>>
    %1551 = arith.index_cast %1548 : i32 to index
    %1552 = memref.load %arg2[%1551] : memref<32xi32, #tpu.memory_space<smem>>
    %1553 = arith.index_cast %1550 : i32 to index
    %c0_537 = arith.constant 0 : index
    %1554 = vector.load %arg13[%1553, %c0_537] : memref<16x128xf32, #tpu.memory_space<vmem>>, vector<1x128xf32>
    %1555 = arith.index_cast %1548 : i32 to index
    %1556 = memref.load %arg3[%1555] : memref<32xf32, #tpu.memory_space<smem>>
    %1557 = vector.broadcast %1556 : f32 to vector<1x128xf32>
    %1558 = arith.mulf %1557, %1479 : vector<1x128xf32>
    %1559 = arith.addf %1554, %1558 : vector<1x128xf32>
    %1560 = arith.addf %1559, %1481 : vector<1x128xf32>
    %cst_538 = arith.constant 0.000000e+00 : f32
    %1561 = vector.broadcast %cst_538 : f32 to vector<1x128xf32>
    %1562 = arith.maximumf %1560, %1561 : vector<1x128xf32>
    %1563 = arith.index_cast %1552 : i32 to index
    %c0_539 = arith.constant 0 : index
    %1564 = vector.load %arg14[%1563, %c0_539] : memref<16x128xf32, #tpu.memory_space<vmem>>, vector<1x128xf32>
    %1565 = arith.addf %1564, %1562 : vector<1x128xf32>
    %1566 = arith.index_cast %1552 : i32 to index
    %c0_540 = arith.constant 0 : index
    %1567 = vector.load %arg14[%1566, %c0_540] : memref<16x128xf32, #tpu.memory_space<vmem>>, vector<1x128xf32>
    tpu.vector_store %arg14[%1566, %c0_540], %1565 {strides = array<i32>} : memref<16x128xf32, #tpu.memory_space<vmem>>, vector<1x128xf32>,
    %c4_i32_541 = arith.constant 4 : i32
    %c1_i32_542 = arith.constant 1 : i32
    %1568 = arith.muli %c4_i32_541, %c1_i32_542 : i32
    %c0_i32_543 = arith.constant 0 : i32
    %1569 = arith.addi %c0_i32_543, %1568 : i32
    %1570 = arith.index_cast %1569 : i32 to index
    %1571 = memref.load %arg1[%1570] : memref<32xi32, #tpu.memory_space<smem>>
    %1572 = arith.index_cast %1569 : i32 to index
    %1573 = memref.load %arg2[%1572] : memref<32xi32, #tpu.memory_space<smem>>
    %1574 = arith.index_cast %1571 : i32 to index
    %c0_544 = arith.constant 0 : index
    %1575 = vector.load %arg13[%1574, %c0_544] : memref<16x128xf32, #tpu.memory_space<vmem>>, vector<1x128xf32>
    %1576 = arith.index_cast %1569 : i32 to index
    %1577 = memref.load %arg3[%1576] : memref<32xf32, #tpu.memory_space<smem>>
    %1578 = vector.broadcast %1577 : f32 to vector<1x128xf32>
    %1579 = arith.mulf %1578, %1479 : vector<1x128xf32>
    %1580 = arith.addf %1575, %1579 : vector<1x128xf32>
    %1581 = arith.addf %1580, %1481 : vector<1x128xf32>
    %cst_545 = arith.constant 0.000000e+00 : f32
    %1582 = vector.broadcast %cst_545 : f32 to vector<1x128xf32>
    %1583 = arith.maximumf %1581, %1582 : vector<1x128xf32>
    %1584 = arith.index_cast %1573 : i32 to index
    %c0_546 = arith.constant 0 : index
    %1585 = vector.load %arg14[%1584, %c0_546] : memref<16x128xf32, #tpu.memory_space<vmem>>, vector<1x128xf32>
    %1586 = arith.addf %1585, %1583 : vector<1x128xf32>
    %1587 = arith.index_cast %1573 : i32 to index
    %c0_547 = arith.constant 0 : index
    %1588 = vector.load %arg14[%1587, %c0_547] : memref<16x128xf32, #tpu.memory_space<vmem>>, vector<1x128xf32>
    tpu.vector_store %arg14[%1587, %c0_547], %1586 {strides = array<i32>} : memref<16x128xf32, #tpu.memory_space<vmem>>, vector<1x128xf32>,
    %c5_i32_548 = arith.constant 5 : i32
    %c1_i32_549 = arith.constant 1 : i32
    %1589 = arith.muli %c5_i32_548, %c1_i32_549 : i32
    %c0_i32_550 = arith.constant 0 : i32
    %1590 = arith.addi %c0_i32_550, %1589 : i32
    %1591 = arith.index_cast %1590 : i32 to index
    %1592 = memref.load %arg1[%1591] : memref<32xi32, #tpu.memory_space<smem>>
    %1593 = arith.index_cast %1590 : i32 to index
    %1594 = memref.load %arg2[%1593] : memref<32xi32, #tpu.memory_space<smem>>
    %1595 = arith.index_cast %1592 : i32 to index
    %c0_551 = arith.constant 0 : index
    %1596 = vector.load %arg13[%1595, %c0_551] : memref<16x128xf32, #tpu.memory_space<vmem>>, vector<1x128xf32>
    %1597 = arith.index_cast %1590 : i32 to index
    %1598 = memref.load %arg3[%1597] : memref<32xf32, #tpu.memory_space<smem>>
    %1599 = vector.broadcast %1598 : f32 to vector<1x128xf32>
    %1600 = arith.mulf %1599, %1479 : vector<1x128xf32>
    %1601 = arith.addf %1596, %1600 : vector<1x128xf32>
    %1602 = arith.addf %1601, %1481 : vector<1x128xf32>
    %cst_552 = arith.constant 0.000000e+00 : f32
    %1603 = vector.broadcast %cst_552 : f32 to vector<1x128xf32>
    %1604 = arith.maximumf %1602, %1603 : vector<1x128xf32>
    %1605 = arith.index_cast %1594 : i32 to index
    %c0_553 = arith.constant 0 : index
    %1606 = vector.load %arg14[%1605, %c0_553] : memref<16x128xf32, #tpu.memory_space<vmem>>, vector<1x128xf32>
    %1607 = arith.addf %1606, %1604 : vector<1x128xf32>
    %1608 = arith.index_cast %1594 : i32 to index
    %c0_554 = arith.constant 0 : index
    %1609 = vector.load %arg14[%1608, %c0_554] : memref<16x128xf32, #tpu.memory_space<vmem>>, vector<1x128xf32>
    tpu.vector_store %arg14[%1608, %c0_554], %1607 {strides = array<i32>} : memref<16x128xf32, #tpu.memory_space<vmem>>, vector<1x128xf32>,
    %c6_i32_555 = arith.constant 6 : i32
    %c1_i32_556 = arith.constant 1 : i32
    %1610 = arith.muli %c6_i32_555, %c1_i32_556 : i32
    %c0_i32_557 = arith.constant 0 : i32
    %1611 = arith.addi %c0_i32_557, %1610 : i32
    %1612 = arith.index_cast %1611 : i32 to index
    %1613 = memref.load %arg1[%1612] : memref<32xi32, #tpu.memory_space<smem>>
    %1614 = arith.index_cast %1611 : i32 to index
    %1615 = memref.load %arg2[%1614] : memref<32xi32, #tpu.memory_space<smem>>
    %1616 = arith.index_cast %1613 : i32 to index
    %c0_558 = arith.constant 0 : index
    %1617 = vector.load %arg13[%1616, %c0_558] : memref<16x128xf32, #tpu.memory_space<vmem>>, vector<1x128xf32>
    %1618 = arith.index_cast %1611 : i32 to index
    %1619 = memref.load %arg3[%1618] : memref<32xf32, #tpu.memory_space<smem>>
    %1620 = vector.broadcast %1619 : f32 to vector<1x128xf32>
    %1621 = arith.mulf %1620, %1479 : vector<1x128xf32>
    %1622 = arith.addf %1617, %1621 : vector<1x128xf32>
    %1623 = arith.addf %1622, %1481 : vector<1x128xf32>
    %cst_559 = arith.constant 0.000000e+00 : f32
    %1624 = vector.broadcast %cst_559 : f32 to vector<1x128xf32>
    %1625 = arith.maximumf %1623, %1624 : vector<1x128xf32>
    %1626 = arith.index_cast %1615 : i32 to index
    %c0_560 = arith.constant 0 : index
    %1627 = vector.load %arg14[%1626, %c0_560] : memref<16x128xf32, #tpu.memory_space<vmem>>, vector<1x128xf32>
    %1628 = arith.addf %1627, %1625 : vector<1x128xf32>
    %1629 = arith.index_cast %1615 : i32 to index
    %c0_561 = arith.constant 0 : index
    %1630 = vector.load %arg14[%1629, %c0_561] : memref<16x128xf32, #tpu.memory_space<vmem>>, vector<1x128xf32>
    tpu.vector_store %arg14[%1629, %c0_561], %1628 {strides = array<i32>} : memref<16x128xf32, #tpu.memory_space<vmem>>, vector<1x128xf32>,
    %c7_i32_562 = arith.constant 7 : i32
    %c1_i32_563 = arith.constant 1 : i32
    %1631 = arith.muli %c7_i32_562, %c1_i32_563 : i32
    %c0_i32_564 = arith.constant 0 : i32
    %1632 = arith.addi %c0_i32_564, %1631 : i32
    %1633 = arith.index_cast %1632 : i32 to index
    %1634 = memref.load %arg1[%1633] : memref<32xi32, #tpu.memory_space<smem>>
    %1635 = arith.index_cast %1632 : i32 to index
    %1636 = memref.load %arg2[%1635] : memref<32xi32, #tpu.memory_space<smem>>
    %1637 = arith.index_cast %1634 : i32 to index
    %c0_565 = arith.constant 0 : index
    %1638 = vector.load %arg13[%1637, %c0_565] : memref<16x128xf32, #tpu.memory_space<vmem>>, vector<1x128xf32>
    %1639 = arith.index_cast %1632 : i32 to index
    %1640 = memref.load %arg3[%1639] : memref<32xf32, #tpu.memory_space<smem>>
    %1641 = vector.broadcast %1640 : f32 to vector<1x128xf32>
    %1642 = arith.mulf %1641, %1479 : vector<1x128xf32>
    %1643 = arith.addf %1638, %1642 : vector<1x128xf32>
    %1644 = arith.addf %1643, %1481 : vector<1x128xf32>
    %cst_566 = arith.constant 0.000000e+00 : f32
    %1645 = vector.broadcast %cst_566 : f32 to vector<1x128xf32>
    %1646 = arith.maximumf %1644, %1645 : vector<1x128xf32>
    %1647 = arith.index_cast %1636 : i32 to index
    %c0_567 = arith.constant 0 : index
    %1648 = vector.load %arg14[%1647, %c0_567] : memref<16x128xf32, #tpu.memory_space<vmem>>, vector<1x128xf32>
    %1649 = arith.addf %1648, %1646 : vector<1x128xf32>
    %1650 = arith.index_cast %1636 : i32 to index
    %c0_568 = arith.constant 0 : index
    %1651 = vector.load %arg14[%1650, %c0_568] : memref<16x128xf32, #tpu.memory_space<vmem>>, vector<1x128xf32>
    tpu.vector_store %arg14[%1650, %c0_568], %1649 {strides = array<i32>} : memref<16x128xf32, #tpu.memory_space<vmem>>, vector<1x128xf32>,
    %c8_i32_569 = arith.constant 8 : i32
    %c1_i32_570 = arith.constant 1 : i32
    %1652 = arith.muli %c8_i32_569, %c1_i32_570 : i32
    %c0_i32_571 = arith.constant 0 : i32
    %1653 = arith.addi %c0_i32_571, %1652 : i32
    %1654 = arith.index_cast %1653 : i32 to index
    %1655 = memref.load %arg1[%1654] : memref<32xi32, #tpu.memory_space<smem>>
    %1656 = arith.index_cast %1653 : i32 to index
    %1657 = memref.load %arg2[%1656] : memref<32xi32, #tpu.memory_space<smem>>
    %1658 = arith.index_cast %1655 : i32 to index
    %c0_572 = arith.constant 0 : index
    %1659 = vector.load %arg13[%1658, %c0_572] : memref<16x128xf32, #tpu.memory_space<vmem>>, vector<1x128xf32>
    %1660 = arith.index_cast %1653 : i32 to index
    %1661 = memref.load %arg3[%1660] : memref<32xf32, #tpu.memory_space<smem>>
    %1662 = vector.broadcast %1661 : f32 to vector<1x128xf32>
    %1663 = arith.mulf %1662, %1479 : vector<1x128xf32>
    %1664 = arith.addf %1659, %1663 : vector<1x128xf32>
    %1665 = arith.addf %1664, %1481 : vector<1x128xf32>
    %cst_573 = arith.constant 0.000000e+00 : f32
    %1666 = vector.broadcast %cst_573 : f32 to vector<1x128xf32>
    %1667 = arith.maximumf %1665, %1666 : vector<1x128xf32>
    %1668 = arith.index_cast %1657 : i32 to index
    %c0_574 = arith.constant 0 : index
    %1669 = vector.load %arg14[%1668, %c0_574] : memref<16x128xf32, #tpu.memory_space<vmem>>, vector<1x128xf32>
    %1670 = arith.addf %1669, %1667 : vector<1x128xf32>
    %1671 = arith.index_cast %1657 : i32 to index
    %c0_575 = arith.constant 0 : index
    %1672 = vector.load %arg14[%1671, %c0_575] : memref<16x128xf32, #tpu.memory_space<vmem>>, vector<1x128xf32>
    tpu.vector_store %arg14[%1671, %c0_575], %1670 {strides = array<i32>} : memref<16x128xf32, #tpu.memory_space<vmem>>, vector<1x128xf32>,
    %c9_i32_576 = arith.constant 9 : i32
    %c1_i32_577 = arith.constant 1 : i32
    %1673 = arith.muli %c9_i32_576, %c1_i32_577 : i32
    %c0_i32_578 = arith.constant 0 : i32
    %1674 = arith.addi %c0_i32_578, %1673 : i32
    %1675 = arith.index_cast %1674 : i32 to index
    %1676 = memref.load %arg1[%1675] : memref<32xi32, #tpu.memory_space<smem>>
    %1677 = arith.index_cast %1674 : i32 to index
    %1678 = memref.load %arg2[%1677] : memref<32xi32, #tpu.memory_space<smem>>
    %1679 = arith.index_cast %1676 : i32 to index
    %c0_579 = arith.constant 0 : index
    %1680 = vector.load %arg13[%1679, %c0_579] : memref<16x128xf32, #tpu.memory_space<vmem>>, vector<1x128xf32>
    %1681 = arith.index_cast %1674 : i32 to index
    %1682 = memref.load %arg3[%1681] : memref<32xf32, #tpu.memory_space<smem>>
    %1683 = vector.broadcast %1682 : f32 to vector<1x128xf32>
    %1684 = arith.mulf %1683, %1479 : vector<1x128xf32>
    %1685 = arith.addf %1680, %1684 : vector<1x128xf32>
    %1686 = arith.addf %1685, %1481 : vector<1x128xf32>
    %cst_580 = arith.constant 0.000000e+00 : f32
    %1687 = vector.broadcast %cst_580 : f32 to vector<1x128xf32>
    %1688 = arith.maximumf %1686, %1687 : vector<1x128xf32>
    %1689 = arith.index_cast %1678 : i32 to index
    %c0_581 = arith.constant 0 : index
    %1690 = vector.load %arg14[%1689, %c0_581] : memref<16x128xf32, #tpu.memory_space<vmem>>, vector<1x128xf32>
    %1691 = arith.addf %1690, %1688 : vector<1x128xf32>
    %1692 = arith.index_cast %1678 : i32 to index
    %c0_582 = arith.constant 0 : index
    %1693 = vector.load %arg14[%1692, %c0_582] : memref<16x128xf32, #tpu.memory_space<vmem>>, vector<1x128xf32>
    tpu.vector_store %arg14[%1692, %c0_582], %1691 {strides = array<i32>} : memref<16x128xf32, #tpu.memory_space<vmem>>, vector<1x128xf32>,
    %c10_i32_583 = arith.constant 10 : i32
    %c1_i32_584 = arith.constant 1 : i32
    %1694 = arith.muli %c10_i32_583, %c1_i32_584 : i32
    %c0_i32_585 = arith.constant 0 : i32
    %1695 = arith.addi %c0_i32_585, %1694 : i32
    %1696 = arith.index_cast %1695 : i32 to index
    %1697 = memref.load %arg1[%1696] : memref<32xi32, #tpu.memory_space<smem>>
    %1698 = arith.index_cast %1695 : i32 to index
    %1699 = memref.load %arg2[%1698] : memref<32xi32, #tpu.memory_space<smem>>
    %1700 = arith.index_cast %1697 : i32 to index
    %c0_586 = arith.constant 0 : index
    %1701 = vector.load %arg13[%1700, %c0_586] : memref<16x128xf32, #tpu.memory_space<vmem>>, vector<1x128xf32>
    %1702 = arith.index_cast %1695 : i32 to index
    %1703 = memref.load %arg3[%1702] : memref<32xf32, #tpu.memory_space<smem>>
    %1704 = vector.broadcast %1703 : f32 to vector<1x128xf32>
    %1705 = arith.mulf %1704, %1479 : vector<1x128xf32>
    %1706 = arith.addf %1701, %1705 : vector<1x128xf32>
    %1707 = arith.addf %1706, %1481 : vector<1x128xf32>
    %cst_587 = arith.constant 0.000000e+00 : f32
    %1708 = vector.broadcast %cst_587 : f32 to vector<1x128xf32>
    %1709 = arith.maximumf %1707, %1708 : vector<1x128xf32>
    %1710 = arith.index_cast %1699 : i32 to index
    %c0_588 = arith.constant 0 : index
    %1711 = vector.load %arg14[%1710, %c0_588] : memref<16x128xf32, #tpu.memory_space<vmem>>, vector<1x128xf32>
    %1712 = arith.addf %1711, %1709 : vector<1x128xf32>
    %1713 = arith.index_cast %1699 : i32 to index
    %c0_589 = arith.constant 0 : index
    %1714 = vector.load %arg14[%1713, %c0_589] : memref<16x128xf32, #tpu.memory_space<vmem>>, vector<1x128xf32>
    tpu.vector_store %arg14[%1713, %c0_589], %1712 {strides = array<i32>} : memref<16x128xf32, #tpu.memory_space<vmem>>, vector<1x128xf32>,
    %c11_i32_590 = arith.constant 11 : i32
    %c1_i32_591 = arith.constant 1 : i32
    %1715 = arith.muli %c11_i32_590, %c1_i32_591 : i32
    %c0_i32_592 = arith.constant 0 : i32
    %1716 = arith.addi %c0_i32_592, %1715 : i32
    %1717 = arith.index_cast %1716 : i32 to index
    %1718 = memref.load %arg1[%1717] : memref<32xi32, #tpu.memory_space<smem>>
    %1719 = arith.index_cast %1716 : i32 to index
    %1720 = memref.load %arg2[%1719] : memref<32xi32, #tpu.memory_space<smem>>
    %1721 = arith.index_cast %1718 : i32 to index
    %c0_593 = arith.constant 0 : index
    %1722 = vector.load %arg13[%1721, %c0_593] : memref<16x128xf32, #tpu.memory_space<vmem>>, vector<1x128xf32>
    %1723 = arith.index_cast %1716 : i32 to index
    %1724 = memref.load %arg3[%1723] : memref<32xf32, #tpu.memory_space<smem>>
    %1725 = vector.broadcast %1724 : f32 to vector<1x128xf32>
    %1726 = arith.mulf %1725, %1479 : vector<1x128xf32>
    %1727 = arith.addf %1722, %1726 : vector<1x128xf32>
    %1728 = arith.addf %1727, %1481 : vector<1x128xf32>
    %cst_594 = arith.constant 0.000000e+00 : f32
    %1729 = vector.broadcast %cst_594 : f32 to vector<1x128xf32>
    %1730 = arith.maximumf %1728, %1729 : vector<1x128xf32>
    %1731 = arith.index_cast %1720 : i32 to index
    %c0_595 = arith.constant 0 : index
    %1732 = vector.load %arg14[%1731, %c0_595] : memref<16x128xf32, #tpu.memory_space<vmem>>, vector<1x128xf32>
    %1733 = arith.addf %1732, %1730 : vector<1x128xf32>
    %1734 = arith.index_cast %1720 : i32 to index
    %c0_596 = arith.constant 0 : index
    %1735 = vector.load %arg14[%1734, %c0_596] : memref<16x128xf32, #tpu.memory_space<vmem>>, vector<1x128xf32>
    tpu.vector_store %arg14[%1734, %c0_596], %1733 {strides = array<i32>} : memref<16x128xf32, #tpu.memory_space<vmem>>, vector<1x128xf32>,
    %c12_i32_597 = arith.constant 12 : i32
    %c1_i32_598 = arith.constant 1 : i32
    %1736 = arith.muli %c12_i32_597, %c1_i32_598 : i32
    %c0_i32_599 = arith.constant 0 : i32
    %1737 = arith.addi %c0_i32_599, %1736 : i32
    %1738 = arith.index_cast %1737 : i32 to index
    %1739 = memref.load %arg1[%1738] : memref<32xi32, #tpu.memory_space<smem>>
    %1740 = arith.index_cast %1737 : i32 to index
    %1741 = memref.load %arg2[%1740] : memref<32xi32, #tpu.memory_space<smem>>
    %1742 = arith.index_cast %1739 : i32 to index
    %c0_600 = arith.constant 0 : index
    %1743 = vector.load %arg13[%1742, %c0_600] : memref<16x128xf32, #tpu.memory_space<vmem>>, vector<1x128xf32>
    %1744 = arith.index_cast %1737 : i32 to index
    %1745 = memref.load %arg3[%1744] : memref<32xf32, #tpu.memory_space<smem>>
    %1746 = vector.broadcast %1745 : f32 to vector<1x128xf32>
    %1747 = arith.mulf %1746, %1479 : vector<1x128xf32>
    %1748 = arith.addf %1743, %1747 : vector<1x128xf32>
    %1749 = arith.addf %1748, %1481 : vector<1x128xf32>
    %cst_601 = arith.constant 0.000000e+00 : f32
    %1750 = vector.broadcast %cst_601 : f32 to vector<1x128xf32>
    %1751 = arith.maximumf %1749, %1750 : vector<1x128xf32>
    %1752 = arith.index_cast %1741 : i32 to index
    %c0_602 = arith.constant 0 : index
    %1753 = vector.load %arg14[%1752, %c0_602] : memref<16x128xf32, #tpu.memory_space<vmem>>, vector<1x128xf32>
    %1754 = arith.addf %1753, %1751 : vector<1x128xf32>
    %1755 = arith.index_cast %1741 : i32 to index
    %c0_603 = arith.constant 0 : index
    %1756 = vector.load %arg14[%1755, %c0_603] : memref<16x128xf32, #tpu.memory_space<vmem>>, vector<1x128xf32>
    tpu.vector_store %arg14[%1755, %c0_603], %1754 {strides = array<i32>} : memref<16x128xf32, #tpu.memory_space<vmem>>, vector<1x128xf32>,
    %c13_i32_604 = arith.constant 13 : i32
    %c1_i32_605 = arith.constant 1 : i32
    %1757 = arith.muli %c13_i32_604, %c1_i32_605 : i32
    %c0_i32_606 = arith.constant 0 : i32
    %1758 = arith.addi %c0_i32_606, %1757 : i32
    %1759 = arith.index_cast %1758 : i32 to index
    %1760 = memref.load %arg1[%1759] : memref<32xi32, #tpu.memory_space<smem>>
    %1761 = arith.index_cast %1758 : i32 to index
    %1762 = memref.load %arg2[%1761] : memref<32xi32, #tpu.memory_space<smem>>
    %1763 = arith.index_cast %1760 : i32 to index
    %c0_607 = arith.constant 0 : index
    %1764 = vector.load %arg13[%1763, %c0_607] : memref<16x128xf32, #tpu.memory_space<vmem>>, vector<1x128xf32>
    %1765 = arith.index_cast %1758 : i32 to index
    %1766 = memref.load %arg3[%1765] : memref<32xf32, #tpu.memory_space<smem>>
    %1767 = vector.broadcast %1766 : f32 to vector<1x128xf32>
    %1768 = arith.mulf %1767, %1479 : vector<1x128xf32>
    %1769 = arith.addf %1764, %1768 : vector<1x128xf32>
    %1770 = arith.addf %1769, %1481 : vector<1x128xf32>
    %cst_608 = arith.constant 0.000000e+00 : f32
    %1771 = vector.broadcast %cst_608 : f32 to vector<1x128xf32>
    %1772 = arith.maximumf %1770, %1771 : vector<1x128xf32>
    %1773 = arith.index_cast %1762 : i32 to index
    %c0_609 = arith.constant 0 : index
    %1774 = vector.load %arg14[%1773, %c0_609] : memref<16x128xf32, #tpu.memory_space<vmem>>, vector<1x128xf32>
    %1775 = arith.addf %1774, %1772 : vector<1x128xf32>
    %1776 = arith.index_cast %1762 : i32 to index
    %c0_610 = arith.constant 0 : index
    %1777 = vector.load %arg14[%1776, %c0_610] : memref<16x128xf32, #tpu.memory_space<vmem>>, vector<1x128xf32>
    tpu.vector_store %arg14[%1776, %c0_610], %1775 {strides = array<i32>} : memref<16x128xf32, #tpu.memory_space<vmem>>, vector<1x128xf32>,
    %c14_i32_611 = arith.constant 14 : i32
    %c1_i32_612 = arith.constant 1 : i32
    %1778 = arith.muli %c14_i32_611, %c1_i32_612 : i32
    %c0_i32_613 = arith.constant 0 : i32
    %1779 = arith.addi %c0_i32_613, %1778 : i32
    %1780 = arith.index_cast %1779 : i32 to index
    %1781 = memref.load %arg1[%1780] : memref<32xi32, #tpu.memory_space<smem>>
    %1782 = arith.index_cast %1779 : i32 to index
    %1783 = memref.load %arg2[%1782] : memref<32xi32, #tpu.memory_space<smem>>
    %1784 = arith.index_cast %1781 : i32 to index
    %c0_614 = arith.constant 0 : index
    %1785 = vector.load %arg13[%1784, %c0_614] : memref<16x128xf32, #tpu.memory_space<vmem>>, vector<1x128xf32>
    %1786 = arith.index_cast %1779 : i32 to index
    %1787 = memref.load %arg3[%1786] : memref<32xf32, #tpu.memory_space<smem>>
    %1788 = vector.broadcast %1787 : f32 to vector<1x128xf32>
    %1789 = arith.mulf %1788, %1479 : vector<1x128xf32>
    %1790 = arith.addf %1785, %1789 : vector<1x128xf32>
    %1791 = arith.addf %1790, %1481 : vector<1x128xf32>
    %cst_615 = arith.constant 0.000000e+00 : f32
    %1792 = vector.broadcast %cst_615 : f32 to vector<1x128xf32>
    %1793 = arith.maximumf %1791, %1792 : vector<1x128xf32>
    %1794 = arith.index_cast %1783 : i32 to index
    %c0_616 = arith.constant 0 : index
    %1795 = vector.load %arg14[%1794, %c0_616] : memref<16x128xf32, #tpu.memory_space<vmem>>, vector<1x128xf32>
    %1796 = arith.addf %1795, %1793 : vector<1x128xf32>
    %1797 = arith.index_cast %1783 : i32 to index
    %c0_617 = arith.constant 0 : index
    %1798 = vector.load %arg14[%1797, %c0_617] : memref<16x128xf32, #tpu.memory_space<vmem>>, vector<1x128xf32>
    tpu.vector_store %arg14[%1797, %c0_617], %1796 {strides = array<i32>} : memref<16x128xf32, #tpu.memory_space<vmem>>, vector<1x128xf32>,
    %c15_i32_618 = arith.constant 15 : i32
    %c1_i32_619 = arith.constant 1 : i32
    %1799 = arith.muli %c15_i32_618, %c1_i32_619 : i32
    %c0_i32_620 = arith.constant 0 : i32
    %1800 = arith.addi %c0_i32_620, %1799 : i32
    %1801 = arith.index_cast %1800 : i32 to index
    %1802 = memref.load %arg1[%1801] : memref<32xi32, #tpu.memory_space<smem>>
    %1803 = arith.index_cast %1800 : i32 to index
    %1804 = memref.load %arg2[%1803] : memref<32xi32, #tpu.memory_space<smem>>
    %1805 = arith.index_cast %1802 : i32 to index
    %c0_621 = arith.constant 0 : index
    %1806 = vector.load %arg13[%1805, %c0_621] : memref<16x128xf32, #tpu.memory_space<vmem>>, vector<1x128xf32>
    %1807 = arith.index_cast %1800 : i32 to index
    %1808 = memref.load %arg3[%1807] : memref<32xf32, #tpu.memory_space<smem>>
    %1809 = vector.broadcast %1808 : f32 to vector<1x128xf32>
    %1810 = arith.mulf %1809, %1479 : vector<1x128xf32>
    %1811 = arith.addf %1806, %1810 : vector<1x128xf32>
    %1812 = arith.addf %1811, %1481 : vector<1x128xf32>
    %cst_622 = arith.constant 0.000000e+00 : f32
    %1813 = vector.broadcast %cst_622 : f32 to vector<1x128xf32>
    %1814 = arith.maximumf %1812, %1813 : vector<1x128xf32>
    %1815 = arith.index_cast %1804 : i32 to index
    %c0_623 = arith.constant 0 : index
    %1816 = vector.load %arg14[%1815, %c0_623] : memref<16x128xf32, #tpu.memory_space<vmem>>, vector<1x128xf32>
    %1817 = arith.addf %1816, %1814 : vector<1x128xf32>
    %1818 = arith.index_cast %1804 : i32 to index
    %c0_624 = arith.constant 0 : index
    %1819 = vector.load %arg14[%1818, %c0_624] : memref<16x128xf32, #tpu.memory_space<vmem>>, vector<1x128xf32>
    tpu.vector_store %arg14[%1818, %c0_624], %1817 {strides = array<i32>} : memref<16x128xf32, #tpu.memory_space<vmem>>, vector<1x128xf32>,
    %c16_i32_625 = arith.constant 16 : i32
    %c1_i32_626 = arith.constant 1 : i32
    %1820 = arith.muli %c16_i32_625, %c1_i32_626 : i32
    %c0_i32_627 = arith.constant 0 : i32
    %1821 = arith.addi %c0_i32_627, %1820 : i32
    %1822 = arith.index_cast %1821 : i32 to index
    %1823 = memref.load %arg1[%1822] : memref<32xi32, #tpu.memory_space<smem>>
    %1824 = arith.index_cast %1821 : i32 to index
    %1825 = memref.load %arg2[%1824] : memref<32xi32, #tpu.memory_space<smem>>
    %1826 = arith.index_cast %1823 : i32 to index
    %c0_628 = arith.constant 0 : index
    %1827 = vector.load %arg13[%1826, %c0_628] : memref<16x128xf32, #tpu.memory_space<vmem>>, vector<1x128xf32>
    %1828 = arith.index_cast %1821 : i32 to index
    %1829 = memref.load %arg3[%1828] : memref<32xf32, #tpu.memory_space<smem>>
    %1830 = vector.broadcast %1829 : f32 to vector<1x128xf32>
    %1831 = arith.mulf %1830, %1479 : vector<1x128xf32>
    %1832 = arith.addf %1827, %1831 : vector<1x128xf32>
    %1833 = arith.addf %1832, %1481 : vector<1x128xf32>
    %cst_629 = arith.constant 0.000000e+00 : f32
    %1834 = vector.broadcast %cst_629 : f32 to vector<1x128xf32>
    %1835 = arith.maximumf %1833, %1834 : vector<1x128xf32>
    %1836 = arith.index_cast %1825 : i32 to index
    %c0_630 = arith.constant 0 : index
    %1837 = vector.load %arg14[%1836, %c0_630] : memref<16x128xf32, #tpu.memory_space<vmem>>, vector<1x128xf32>
    %1838 = arith.addf %1837, %1835 : vector<1x128xf32>
    %1839 = arith.index_cast %1825 : i32 to index
    %c0_631 = arith.constant 0 : index
    %1840 = vector.load %arg14[%1839, %c0_631] : memref<16x128xf32, #tpu.memory_space<vmem>>, vector<1x128xf32>
    tpu.vector_store %arg14[%1839, %c0_631], %1838 {strides = array<i32>} : memref<16x128xf32, #tpu.memory_space<vmem>>, vector<1x128xf32>,
    %c17_i32_632 = arith.constant 17 : i32
    %c1_i32_633 = arith.constant 1 : i32
    %1841 = arith.muli %c17_i32_632, %c1_i32_633 : i32
    %c0_i32_634 = arith.constant 0 : i32
    %1842 = arith.addi %c0_i32_634, %1841 : i32
    %1843 = arith.index_cast %1842 : i32 to index
    %1844 = memref.load %arg1[%1843] : memref<32xi32, #tpu.memory_space<smem>>
    %1845 = arith.index_cast %1842 : i32 to index
    %1846 = memref.load %arg2[%1845] : memref<32xi32, #tpu.memory_space<smem>>
    %1847 = arith.index_cast %1844 : i32 to index
    %c0_635 = arith.constant 0 : index
    %1848 = vector.load %arg13[%1847, %c0_635] : memref<16x128xf32, #tpu.memory_space<vmem>>, vector<1x128xf32>
    %1849 = arith.index_cast %1842 : i32 to index
    %1850 = memref.load %arg3[%1849] : memref<32xf32, #tpu.memory_space<smem>>
    %1851 = vector.broadcast %1850 : f32 to vector<1x128xf32>
    %1852 = arith.mulf %1851, %1479 : vector<1x128xf32>
    %1853 = arith.addf %1848, %1852 : vector<1x128xf32>
    %1854 = arith.addf %1853, %1481 : vector<1x128xf32>
    %cst_636 = arith.constant 0.000000e+00 : f32
    %1855 = vector.broadcast %cst_636 : f32 to vector<1x128xf32>
    %1856 = arith.maximumf %1854, %1855 : vector<1x128xf32>
    %1857 = arith.index_cast %1846 : i32 to index
    %c0_637 = arith.constant 0 : index
    %1858 = vector.load %arg14[%1857, %c0_637] : memref<16x128xf32, #tpu.memory_space<vmem>>, vector<1x128xf32>
    %1859 = arith.addf %1858, %1856 : vector<1x128xf32>
    %1860 = arith.index_cast %1846 : i32 to index
    %c0_638 = arith.constant 0 : index
    %1861 = vector.load %arg14[%1860, %c0_638] : memref<16x128xf32, #tpu.memory_space<vmem>>, vector<1x128xf32>
    tpu.vector_store %arg14[%1860, %c0_638], %1859 {strides = array<i32>} : memref<16x128xf32, #tpu.memory_space<vmem>>, vector<1x128xf32>,
    %c18_i32_639 = arith.constant 18 : i32
    %c1_i32_640 = arith.constant 1 : i32
    %1862 = arith.muli %c18_i32_639, %c1_i32_640 : i32
    %c0_i32_641 = arith.constant 0 : i32
    %1863 = arith.addi %c0_i32_641, %1862 : i32
    %1864 = arith.index_cast %1863 : i32 to index
    %1865 = memref.load %arg1[%1864] : memref<32xi32, #tpu.memory_space<smem>>
    %1866 = arith.index_cast %1863 : i32 to index
    %1867 = memref.load %arg2[%1866] : memref<32xi32, #tpu.memory_space<smem>>
    %1868 = arith.index_cast %1865 : i32 to index
    %c0_642 = arith.constant 0 : index
    %1869 = vector.load %arg13[%1868, %c0_642] : memref<16x128xf32, #tpu.memory_space<vmem>>, vector<1x128xf32>
    %1870 = arith.index_cast %1863 : i32 to index
    %1871 = memref.load %arg3[%1870] : memref<32xf32, #tpu.memory_space<smem>>
    %1872 = vector.broadcast %1871 : f32 to vector<1x128xf32>
    %1873 = arith.mulf %1872, %1479 : vector<1x128xf32>
    %1874 = arith.addf %1869, %1873 : vector<1x128xf32>
    %1875 = arith.addf %1874, %1481 : vector<1x128xf32>
    %cst_643 = arith.constant 0.000000e+00 : f32
    %1876 = vector.broadcast %cst_643 : f32 to vector<1x128xf32>
    %1877 = arith.maximumf %1875, %1876 : vector<1x128xf32>
    %1878 = arith.index_cast %1867 : i32 to index
    %c0_644 = arith.constant 0 : index
    %1879 = vector.load %arg14[%1878, %c0_644] : memref<16x128xf32, #tpu.memory_space<vmem>>, vector<1x128xf32>
    %1880 = arith.addf %1879, %1877 : vector<1x128xf32>
    %1881 = arith.index_cast %1867 : i32 to index
    %c0_645 = arith.constant 0 : index
    %1882 = vector.load %arg14[%1881, %c0_645] : memref<16x128xf32, #tpu.memory_space<vmem>>, vector<1x128xf32>
    tpu.vector_store %arg14[%1881, %c0_645], %1880 {strides = array<i32>} : memref<16x128xf32, #tpu.memory_space<vmem>>, vector<1x128xf32>,
    %c19_i32_646 = arith.constant 19 : i32
    %c1_i32_647 = arith.constant 1 : i32
    %1883 = arith.muli %c19_i32_646, %c1_i32_647 : i32
    %c0_i32_648 = arith.constant 0 : i32
    %1884 = arith.addi %c0_i32_648, %1883 : i32
    %1885 = arith.index_cast %1884 : i32 to index
    %1886 = memref.load %arg1[%1885] : memref<32xi32, #tpu.memory_space<smem>>
    %1887 = arith.index_cast %1884 : i32 to index
    %1888 = memref.load %arg2[%1887] : memref<32xi32, #tpu.memory_space<smem>>
    %1889 = arith.index_cast %1886 : i32 to index
    %c0_649 = arith.constant 0 : index
    %1890 = vector.load %arg13[%1889, %c0_649] : memref<16x128xf32, #tpu.memory_space<vmem>>, vector<1x128xf32>
    %1891 = arith.index_cast %1884 : i32 to index
    %1892 = memref.load %arg3[%1891] : memref<32xf32, #tpu.memory_space<smem>>
    %1893 = vector.broadcast %1892 : f32 to vector<1x128xf32>
    %1894 = arith.mulf %1893, %1479 : vector<1x128xf32>
    %1895 = arith.addf %1890, %1894 : vector<1x128xf32>
    %1896 = arith.addf %1895, %1481 : vector<1x128xf32>
    %cst_650 = arith.constant 0.000000e+00 : f32
    %1897 = vector.broadcast %cst_650 : f32 to vector<1x128xf32>
    %1898 = arith.maximumf %1896, %1897 : vector<1x128xf32>
    %1899 = arith.index_cast %1888 : i32 to index
    %c0_651 = arith.constant 0 : index
    %1900 = vector.load %arg14[%1899, %c0_651] : memref<16x128xf32, #tpu.memory_space<vmem>>, vector<1x128xf32>
    %1901 = arith.addf %1900, %1898 : vector<1x128xf32>
    %1902 = arith.index_cast %1888 : i32 to index
    %c0_652 = arith.constant 0 : index
    %1903 = vector.load %arg14[%1902, %c0_652] : memref<16x128xf32, #tpu.memory_space<vmem>>, vector<1x128xf32>
    tpu.vector_store %arg14[%1902, %c0_652], %1901 {strides = array<i32>} : memref<16x128xf32, #tpu.memory_space<vmem>>, vector<1x128xf32>,
    %c20_i32_653 = arith.constant 20 : i32
    %c1_i32_654 = arith.constant 1 : i32
    %1904 = arith.muli %c20_i32_653, %c1_i32_654 : i32
    %c0_i32_655 = arith.constant 0 : i32
    %1905 = arith.addi %c0_i32_655, %1904 : i32
    %1906 = arith.index_cast %1905 : i32 to index
    %1907 = memref.load %arg1[%1906] : memref<32xi32, #tpu.memory_space<smem>>
    %1908 = arith.index_cast %1905 : i32 to index
    %1909 = memref.load %arg2[%1908] : memref<32xi32, #tpu.memory_space<smem>>
    %1910 = arith.index_cast %1907 : i32 to index
    %c0_656 = arith.constant 0 : index
    %1911 = vector.load %arg13[%1910, %c0_656] : memref<16x128xf32, #tpu.memory_space<vmem>>, vector<1x128xf32>
    %1912 = arith.index_cast %1905 : i32 to index
    %1913 = memref.load %arg3[%1912] : memref<32xf32, #tpu.memory_space<smem>>
    %1914 = vector.broadcast %1913 : f32 to vector<1x128xf32>
    %1915 = arith.mulf %1914, %1479 : vector<1x128xf32>
    %1916 = arith.addf %1911, %1915 : vector<1x128xf32>
    %1917 = arith.addf %1916, %1481 : vector<1x128xf32>
    %cst_657 = arith.constant 0.000000e+00 : f32
    %1918 = vector.broadcast %cst_657 : f32 to vector<1x128xf32>
    %1919 = arith.maximumf %1917, %1918 : vector<1x128xf32>
    %1920 = arith.index_cast %1909 : i32 to index
    %c0_658 = arith.constant 0 : index
    %1921 = vector.load %arg14[%1920, %c0_658] : memref<16x128xf32, #tpu.memory_space<vmem>>, vector<1x128xf32>
    %1922 = arith.addf %1921, %1919 : vector<1x128xf32>
    %1923 = arith.index_cast %1909 : i32 to index
    %c0_659 = arith.constant 0 : index
    %1924 = vector.load %arg14[%1923, %c0_659] : memref<16x128xf32, #tpu.memory_space<vmem>>, vector<1x128xf32>
    tpu.vector_store %arg14[%1923, %c0_659], %1922 {strides = array<i32>} : memref<16x128xf32, #tpu.memory_space<vmem>>, vector<1x128xf32>,
    %c21_i32_660 = arith.constant 21 : i32
    %c1_i32_661 = arith.constant 1 : i32
    %1925 = arith.muli %c21_i32_660, %c1_i32_661 : i32
    %c0_i32_662 = arith.constant 0 : i32
    %1926 = arith.addi %c0_i32_662, %1925 : i32
    %1927 = arith.index_cast %1926 : i32 to index
    %1928 = memref.load %arg1[%1927] : memref<32xi32, #tpu.memory_space<smem>>
    %1929 = arith.index_cast %1926 : i32 to index
    %1930 = memref.load %arg2[%1929] : memref<32xi32, #tpu.memory_space<smem>>
    %1931 = arith.index_cast %1928 : i32 to index
    %c0_663 = arith.constant 0 : index
    %1932 = vector.load %arg13[%1931, %c0_663] : memref<16x128xf32, #tpu.memory_space<vmem>>, vector<1x128xf32>
    %1933 = arith.index_cast %1926 : i32 to index
    %1934 = memref.load %arg3[%1933] : memref<32xf32, #tpu.memory_space<smem>>
    %1935 = vector.broadcast %1934 : f32 to vector<1x128xf32>
    %1936 = arith.mulf %1935, %1479 : vector<1x128xf32>
    %1937 = arith.addf %1932, %1936 : vector<1x128xf32>
    %1938 = arith.addf %1937, %1481 : vector<1x128xf32>
    %cst_664 = arith.constant 0.000000e+00 : f32
    %1939 = vector.broadcast %cst_664 : f32 to vector<1x128xf32>
    %1940 = arith.maximumf %1938, %1939 : vector<1x128xf32>
    %1941 = arith.index_cast %1930 : i32 to index
    %c0_665 = arith.constant 0 : index
    %1942 = vector.load %arg14[%1941, %c0_665] : memref<16x128xf32, #tpu.memory_space<vmem>>, vector<1x128xf32>
    %1943 = arith.addf %1942, %1940 : vector<1x128xf32>
    %1944 = arith.index_cast %1930 : i32 to index
    %c0_666 = arith.constant 0 : index
    %1945 = vector.load %arg14[%1944, %c0_666] : memref<16x128xf32, #tpu.memory_space<vmem>>, vector<1x128xf32>
    tpu.vector_store %arg14[%1944, %c0_666], %1943 {strides = array<i32>} : memref<16x128xf32, #tpu.memory_space<vmem>>, vector<1x128xf32>,
    %c22_i32_667 = arith.constant 22 : i32
    %c1_i32_668 = arith.constant 1 : i32
    %1946 = arith.muli %c22_i32_667, %c1_i32_668 : i32
    %c0_i32_669 = arith.constant 0 : i32
    %1947 = arith.addi %c0_i32_669, %1946 : i32
    %1948 = arith.index_cast %1947 : i32 to index
    %1949 = memref.load %arg1[%1948] : memref<32xi32, #tpu.memory_space<smem>>
    %1950 = arith.index_cast %1947 : i32 to index
    %1951 = memref.load %arg2[%1950] : memref<32xi32, #tpu.memory_space<smem>>
    %1952 = arith.index_cast %1949 : i32 to index
    %c0_670 = arith.constant 0 : index
    %1953 = vector.load %arg13[%1952, %c0_670] : memref<16x128xf32, #tpu.memory_space<vmem>>, vector<1x128xf32>
    %1954 = arith.index_cast %1947 : i32 to index
    %1955 = memref.load %arg3[%1954] : memref<32xf32, #tpu.memory_space<smem>>
    %1956 = vector.broadcast %1955 : f32 to vector<1x128xf32>
    %1957 = arith.mulf %1956, %1479 : vector<1x128xf32>
    %1958 = arith.addf %1953, %1957 : vector<1x128xf32>
    %1959 = arith.addf %1958, %1481 : vector<1x128xf32>
    %cst_671 = arith.constant 0.000000e+00 : f32
    %1960 = vector.broadcast %cst_671 : f32 to vector<1x128xf32>
    %1961 = arith.maximumf %1959, %1960 : vector<1x128xf32>
    %1962 = arith.index_cast %1951 : i32 to index
    %c0_672 = arith.constant 0 : index
    %1963 = vector.load %arg14[%1962, %c0_672] : memref<16x128xf32, #tpu.memory_space<vmem>>, vector<1x128xf32>
    %1964 = arith.addf %1963, %1961 : vector<1x128xf32>
    %1965 = arith.index_cast %1951 : i32 to index
    %c0_673 = arith.constant 0 : index
    %1966 = vector.load %arg14[%1965, %c0_673] : memref<16x128xf32, #tpu.memory_space<vmem>>, vector<1x128xf32>
    tpu.vector_store %arg14[%1965, %c0_673], %1964 {strides = array<i32>} : memref<16x128xf32, #tpu.memory_space<vmem>>, vector<1x128xf32>,
    %c23_i32_674 = arith.constant 23 : i32
    %c1_i32_675 = arith.constant 1 : i32
    %1967 = arith.muli %c23_i32_674, %c1_i32_675 : i32
    %c0_i32_676 = arith.constant 0 : i32
    %1968 = arith.addi %c0_i32_676, %1967 : i32
    %1969 = arith.index_cast %1968 : i32 to index
    %1970 = memref.load %arg1[%1969] : memref<32xi32, #tpu.memory_space<smem>>
    %1971 = arith.index_cast %1968 : i32 to index
    %1972 = memref.load %arg2[%1971] : memref<32xi32, #tpu.memory_space<smem>>
    %1973 = arith.index_cast %1970 : i32 to index
    %c0_677 = arith.constant 0 : index
    %1974 = vector.load %arg13[%1973, %c0_677] : memref<16x128xf32, #tpu.memory_space<vmem>>, vector<1x128xf32>
    %1975 = arith.index_cast %1968 : i32 to index
    %1976 = memref.load %arg3[%1975] : memref<32xf32, #tpu.memory_space<smem>>
    %1977 = vector.broadcast %1976 : f32 to vector<1x128xf32>
    %1978 = arith.mulf %1977, %1479 : vector<1x128xf32>
    %1979 = arith.addf %1974, %1978 : vector<1x128xf32>
    %1980 = arith.addf %1979, %1481 : vector<1x128xf32>
    %cst_678 = arith.constant 0.000000e+00 : f32
    %1981 = vector.broadcast %cst_678 : f32 to vector<1x128xf32>
    %1982 = arith.maximumf %1980, %1981 : vector<1x128xf32>
    %1983 = arith.index_cast %1972 : i32 to index
    %c0_679 = arith.constant 0 : index
    %1984 = vector.load %arg14[%1983, %c0_679] : memref<16x128xf32, #tpu.memory_space<vmem>>, vector<1x128xf32>
    %1985 = arith.addf %1984, %1982 : vector<1x128xf32>
    %1986 = arith.index_cast %1972 : i32 to index
    %c0_680 = arith.constant 0 : index
    %1987 = vector.load %arg14[%1986, %c0_680] : memref<16x128xf32, #tpu.memory_space<vmem>>, vector<1x128xf32>
    tpu.vector_store %arg14[%1986, %c0_680], %1985 {strides = array<i32>} : memref<16x128xf32, #tpu.memory_space<vmem>>, vector<1x128xf32>,
    %c24_i32_681 = arith.constant 24 : i32
    %c1_i32_682 = arith.constant 1 : i32
    %1988 = arith.muli %c24_i32_681, %c1_i32_682 : i32
    %c0_i32_683 = arith.constant 0 : i32
    %1989 = arith.addi %c0_i32_683, %1988 : i32
    %1990 = arith.index_cast %1989 : i32 to index
    %1991 = memref.load %arg1[%1990] : memref<32xi32, #tpu.memory_space<smem>>
    %1992 = arith.index_cast %1989 : i32 to index
    %1993 = memref.load %arg2[%1992] : memref<32xi32, #tpu.memory_space<smem>>
    %1994 = arith.index_cast %1991 : i32 to index
    %c0_684 = arith.constant 0 : index
    %1995 = vector.load %arg13[%1994, %c0_684] : memref<16x128xf32, #tpu.memory_space<vmem>>, vector<1x128xf32>
    %1996 = arith.index_cast %1989 : i32 to index
    %1997 = memref.load %arg3[%1996] : memref<32xf32, #tpu.memory_space<smem>>
    %1998 = vector.broadcast %1997 : f32 to vector<1x128xf32>
    %1999 = arith.mulf %1998, %1479 : vector<1x128xf32>
    %2000 = arith.addf %1995, %1999 : vector<1x128xf32>
    %2001 = arith.addf %2000, %1481 : vector<1x128xf32>
    %cst_685 = arith.constant 0.000000e+00 : f32
    %2002 = vector.broadcast %cst_685 : f32 to vector<1x128xf32>
    %2003 = arith.maximumf %2001, %2002 : vector<1x128xf32>
    %2004 = arith.index_cast %1993 : i32 to index
    %c0_686 = arith.constant 0 : index
    %2005 = vector.load %arg14[%2004, %c0_686] : memref<16x128xf32, #tpu.memory_space<vmem>>, vector<1x128xf32>
    %2006 = arith.addf %2005, %2003 : vector<1x128xf32>
    %2007 = arith.index_cast %1993 : i32 to index
    %c0_687 = arith.constant 0 : index
    %2008 = vector.load %arg14[%2007, %c0_687] : memref<16x128xf32, #tpu.memory_space<vmem>>, vector<1x128xf32>
    tpu.vector_store %arg14[%2007, %c0_687], %2006 {strides = array<i32>} : memref<16x128xf32, #tpu.memory_space<vmem>>, vector<1x128xf32>,
    %c25_i32_688 = arith.constant 25 : i32
    %c1_i32_689 = arith.constant 1 : i32
    %2009 = arith.muli %c25_i32_688, %c1_i32_689 : i32
    %c0_i32_690 = arith.constant 0 : i32
    %2010 = arith.addi %c0_i32_690, %2009 : i32
    %2011 = arith.index_cast %2010 : i32 to index
    %2012 = memref.load %arg1[%2011] : memref<32xi32, #tpu.memory_space<smem>>
    %2013 = arith.index_cast %2010 : i32 to index
    %2014 = memref.load %arg2[%2013] : memref<32xi32, #tpu.memory_space<smem>>
    %2015 = arith.index_cast %2012 : i32 to index
    %c0_691 = arith.constant 0 : index
    %2016 = vector.load %arg13[%2015, %c0_691] : memref<16x128xf32, #tpu.memory_space<vmem>>, vector<1x128xf32>
    %2017 = arith.index_cast %2010 : i32 to index
    %2018 = memref.load %arg3[%2017] : memref<32xf32, #tpu.memory_space<smem>>
    %2019 = vector.broadcast %2018 : f32 to vector<1x128xf32>
    %2020 = arith.mulf %2019, %1479 : vector<1x128xf32>
    %2021 = arith.addf %2016, %2020 : vector<1x128xf32>
    %2022 = arith.addf %2021, %1481 : vector<1x128xf32>
    %cst_692 = arith.constant 0.000000e+00 : f32
    %2023 = vector.broadcast %cst_692 : f32 to vector<1x128xf32>
    %2024 = arith.maximumf %2022, %2023 : vector<1x128xf32>
    %2025 = arith.index_cast %2014 : i32 to index
    %c0_693 = arith.constant 0 : index
    %2026 = vector.load %arg14[%2025, %c0_693] : memref<16x128xf32, #tpu.memory_space<vmem>>, vector<1x128xf32>
    %2027 = arith.addf %2026, %2024 : vector<1x128xf32>
    %2028 = arith.index_cast %2014 : i32 to index
    %c0_694 = arith.constant 0 : index
    %2029 = vector.load %arg14[%2028, %c0_694] : memref<16x128xf32, #tpu.memory_space<vmem>>, vector<1x128xf32>
    tpu.vector_store %arg14[%2028, %c0_694], %2027 {strides = array<i32>} : memref<16x128xf32, #tpu.memory_space<vmem>>, vector<1x128xf32>,
    %c26_i32_695 = arith.constant 26 : i32
    %c1_i32_696 = arith.constant 1 : i32
    %2030 = arith.muli %c26_i32_695, %c1_i32_696 : i32
    %c0_i32_697 = arith.constant 0 : i32
    %2031 = arith.addi %c0_i32_697, %2030 : i32
    %2032 = arith.index_cast %2031 : i32 to index
    %2033 = memref.load %arg1[%2032] : memref<32xi32, #tpu.memory_space<smem>>
    %2034 = arith.index_cast %2031 : i32 to index
    %2035 = memref.load %arg2[%2034] : memref<32xi32, #tpu.memory_space<smem>>
    %2036 = arith.index_cast %2033 : i32 to index
    %c0_698 = arith.constant 0 : index
    %2037 = vector.load %arg13[%2036, %c0_698] : memref<16x128xf32, #tpu.memory_space<vmem>>, vector<1x128xf32>
    %2038 = arith.index_cast %2031 : i32 to index
    %2039 = memref.load %arg3[%2038] : memref<32xf32, #tpu.memory_space<smem>>
    %2040 = vector.broadcast %2039 : f32 to vector<1x128xf32>
    %2041 = arith.mulf %2040, %1479 : vector<1x128xf32>
    %2042 = arith.addf %2037, %2041 : vector<1x128xf32>
    %2043 = arith.addf %2042, %1481 : vector<1x128xf32>
    %cst_699 = arith.constant 0.000000e+00 : f32
    %2044 = vector.broadcast %cst_699 : f32 to vector<1x128xf32>
    %2045 = arith.maximumf %2043, %2044 : vector<1x128xf32>
    %2046 = arith.index_cast %2035 : i32 to index
    %c0_700 = arith.constant 0 : index
    %2047 = vector.load %arg14[%2046, %c0_700] : memref<16x128xf32, #tpu.memory_space<vmem>>, vector<1x128xf32>
    %2048 = arith.addf %2047, %2045 : vector<1x128xf32>
    %2049 = arith.index_cast %2035 : i32 to index
    %c0_701 = arith.constant 0 : index
    %2050 = vector.load %arg14[%2049, %c0_701] : memref<16x128xf32, #tpu.memory_space<vmem>>, vector<1x128xf32>
    tpu.vector_store %arg14[%2049, %c0_701], %2048 {strides = array<i32>} : memref<16x128xf32, #tpu.memory_space<vmem>>, vector<1x128xf32>,
    %c27_i32_702 = arith.constant 27 : i32
    %c1_i32_703 = arith.constant 1 : i32
    %2051 = arith.muli %c27_i32_702, %c1_i32_703 : i32
    %c0_i32_704 = arith.constant 0 : i32
    %2052 = arith.addi %c0_i32_704, %2051 : i32
    %2053 = arith.index_cast %2052 : i32 to index
    %2054 = memref.load %arg1[%2053] : memref<32xi32, #tpu.memory_space<smem>>
    %2055 = arith.index_cast %2052 : i32 to index
    %2056 = memref.load %arg2[%2055] : memref<32xi32, #tpu.memory_space<smem>>
    %2057 = arith.index_cast %2054 : i32 to index
    %c0_705 = arith.constant 0 : index
    %2058 = vector.load %arg13[%2057, %c0_705] : memref<16x128xf32, #tpu.memory_space<vmem>>, vector<1x128xf32>
    %2059 = arith.index_cast %2052 : i32 to index
    %2060 = memref.load %arg3[%2059] : memref<32xf32, #tpu.memory_space<smem>>
    %2061 = vector.broadcast %2060 : f32 to vector<1x128xf32>
    %2062 = arith.mulf %2061, %1479 : vector<1x128xf32>
    %2063 = arith.addf %2058, %2062 : vector<1x128xf32>
    %2064 = arith.addf %2063, %1481 : vector<1x128xf32>
    %cst_706 = arith.constant 0.000000e+00 : f32
    %2065 = vector.broadcast %cst_706 : f32 to vector<1x128xf32>
    %2066 = arith.maximumf %2064, %2065 : vector<1x128xf32>
    %2067 = arith.index_cast %2056 : i32 to index
    %c0_707 = arith.constant 0 : index
    %2068 = vector.load %arg14[%2067, %c0_707] : memref<16x128xf32, #tpu.memory_space<vmem>>, vector<1x128xf32>
    %2069 = arith.addf %2068, %2066 : vector<1x128xf32>
    %2070 = arith.index_cast %2056 : i32 to index
    %c0_708 = arith.constant 0 : index
    %2071 = vector.load %arg14[%2070, %c0_708] : memref<16x128xf32, #tpu.memory_space<vmem>>, vector<1x128xf32>
    tpu.vector_store %arg14[%2070, %c0_708], %2069 {strides = array<i32>} : memref<16x128xf32, #tpu.memory_space<vmem>>, vector<1x128xf32>,
    %c28_i32_709 = arith.constant 28 : i32
    %c1_i32_710 = arith.constant 1 : i32
    %2072 = arith.muli %c28_i32_709, %c1_i32_710 : i32
    %c0_i32_711 = arith.constant 0 : i32
    %2073 = arith.addi %c0_i32_711, %2072 : i32
    %2074 = arith.index_cast %2073 : i32 to index
    %2075 = memref.load %arg1[%2074] : memref<32xi32, #tpu.memory_space<smem>>
    %2076 = arith.index_cast %2073 : i32 to index
    %2077 = memref.load %arg2[%2076] : memref<32xi32, #tpu.memory_space<smem>>
    %2078 = arith.index_cast %2075 : i32 to index
    %c0_712 = arith.constant 0 : index
    %2079 = vector.load %arg13[%2078, %c0_712] : memref<16x128xf32, #tpu.memory_space<vmem>>, vector<1x128xf32>
    %2080 = arith.index_cast %2073 : i32 to index
    %2081 = memref.load %arg3[%2080] : memref<32xf32, #tpu.memory_space<smem>>
    %2082 = vector.broadcast %2081 : f32 to vector<1x128xf32>
    %2083 = arith.mulf %2082, %1479 : vector<1x128xf32>
    %2084 = arith.addf %2079, %2083 : vector<1x128xf32>
    %2085 = arith.addf %2084, %1481 : vector<1x128xf32>
    %cst_713 = arith.constant 0.000000e+00 : f32
    %2086 = vector.broadcast %cst_713 : f32 to vector<1x128xf32>
    %2087 = arith.maximumf %2085, %2086 : vector<1x128xf32>
    %2088 = arith.index_cast %2077 : i32 to index
    %c0_714 = arith.constant 0 : index
    %2089 = vector.load %arg14[%2088, %c0_714] : memref<16x128xf32, #tpu.memory_space<vmem>>, vector<1x128xf32>
    %2090 = arith.addf %2089, %2087 : vector<1x128xf32>
    %2091 = arith.index_cast %2077 : i32 to index
    %c0_715 = arith.constant 0 : index
    %2092 = vector.load %arg14[%2091, %c0_715] : memref<16x128xf32, #tpu.memory_space<vmem>>, vector<1x128xf32>
    tpu.vector_store %arg14[%2091, %c0_715], %2090 {strides = array<i32>} : memref<16x128xf32, #tpu.memory_space<vmem>>, vector<1x128xf32>,
    %c29_i32_716 = arith.constant 29 : i32
    %c1_i32_717 = arith.constant 1 : i32
    %2093 = arith.muli %c29_i32_716, %c1_i32_717 : i32
    %c0_i32_718 = arith.constant 0 : i32
    %2094 = arith.addi %c0_i32_718, %2093 : i32
    %2095 = arith.index_cast %2094 : i32 to index
    %2096 = memref.load %arg1[%2095] : memref<32xi32, #tpu.memory_space<smem>>
    %2097 = arith.index_cast %2094 : i32 to index
    %2098 = memref.load %arg2[%2097] : memref<32xi32, #tpu.memory_space<smem>>
    %2099 = arith.index_cast %2096 : i32 to index
    %c0_719 = arith.constant 0 : index
    %2100 = vector.load %arg13[%2099, %c0_719] : memref<16x128xf32, #tpu.memory_space<vmem>>, vector<1x128xf32>
    %2101 = arith.index_cast %2094 : i32 to index
    %2102 = memref.load %arg3[%2101] : memref<32xf32, #tpu.memory_space<smem>>
    %2103 = vector.broadcast %2102 : f32 to vector<1x128xf32>
    %2104 = arith.mulf %2103, %1479 : vector<1x128xf32>
    %2105 = arith.addf %2100, %2104 : vector<1x128xf32>
    %2106 = arith.addf %2105, %1481 : vector<1x128xf32>
    %cst_720 = arith.constant 0.000000e+00 : f32
    %2107 = vector.broadcast %cst_720 : f32 to vector<1x128xf32>
    %2108 = arith.maximumf %2106, %2107 : vector<1x128xf32>
    %2109 = arith.index_cast %2098 : i32 to index
    %c0_721 = arith.constant 0 : index
    %2110 = vector.load %arg14[%2109, %c0_721] : memref<16x128xf32, #tpu.memory_space<vmem>>, vector<1x128xf32>
    %2111 = arith.addf %2110, %2108 : vector<1x128xf32>
    %2112 = arith.index_cast %2098 : i32 to index
    %c0_722 = arith.constant 0 : index
    %2113 = vector.load %arg14[%2112, %c0_722] : memref<16x128xf32, #tpu.memory_space<vmem>>, vector<1x128xf32>
    tpu.vector_store %arg14[%2112, %c0_722], %2111 {strides = array<i32>} : memref<16x128xf32, #tpu.memory_space<vmem>>, vector<1x128xf32>,
    %c30_i32_723 = arith.constant 30 : i32
    %c1_i32_724 = arith.constant 1 : i32
    %2114 = arith.muli %c30_i32_723, %c1_i32_724 : i32
    %c0_i32_725 = arith.constant 0 : i32
    %2115 = arith.addi %c0_i32_725, %2114 : i32
    %2116 = arith.index_cast %2115 : i32 to index
    %2117 = memref.load %arg1[%2116] : memref<32xi32, #tpu.memory_space<smem>>
    %2118 = arith.index_cast %2115 : i32 to index
    %2119 = memref.load %arg2[%2118] : memref<32xi32, #tpu.memory_space<smem>>
    %2120 = arith.index_cast %2117 : i32 to index
    %c0_726 = arith.constant 0 : index
    %2121 = vector.load %arg13[%2120, %c0_726] : memref<16x128xf32, #tpu.memory_space<vmem>>, vector<1x128xf32>
    %2122 = arith.index_cast %2115 : i32 to index
    %2123 = memref.load %arg3[%2122] : memref<32xf32, #tpu.memory_space<smem>>
    %2124 = vector.broadcast %2123 : f32 to vector<1x128xf32>
    %2125 = arith.mulf %2124, %1479 : vector<1x128xf32>
    %2126 = arith.addf %2121, %2125 : vector<1x128xf32>
    %2127 = arith.addf %2126, %1481 : vector<1x128xf32>
    %cst_727 = arith.constant 0.000000e+00 : f32
    %2128 = vector.broadcast %cst_727 : f32 to vector<1x128xf32>
    %2129 = arith.maximumf %2127, %2128 : vector<1x128xf32>
    %2130 = arith.index_cast %2119 : i32 to index
    %c0_728 = arith.constant 0 : index
    %2131 = vector.load %arg14[%2130, %c0_728] : memref<16x128xf32, #tpu.memory_space<vmem>>, vector<1x128xf32>
    %2132 = arith.addf %2131, %2129 : vector<1x128xf32>
    %2133 = arith.index_cast %2119 : i32 to index
    %c0_729 = arith.constant 0 : index
    %2134 = vector.load %arg14[%2133, %c0_729] : memref<16x128xf32, #tpu.memory_space<vmem>>, vector<1x128xf32>
    tpu.vector_store %arg14[%2133, %c0_729], %2132 {strides = array<i32>} : memref<16x128xf32, #tpu.memory_space<vmem>>, vector<1x128xf32>,
    %c31_i32_730 = arith.constant 31 : i32
    %c1_i32_731 = arith.constant 1 : i32
    %2135 = arith.muli %c31_i32_730, %c1_i32_731 : i32
    %c0_i32_732 = arith.constant 0 : i32
    %2136 = arith.addi %c0_i32_732, %2135 : i32
    %2137 = arith.index_cast %2136 : i32 to index
    %2138 = memref.load %arg1[%2137] : memref<32xi32, #tpu.memory_space<smem>>
    %2139 = arith.index_cast %2136 : i32 to index
    %2140 = memref.load %arg2[%2139] : memref<32xi32, #tpu.memory_space<smem>>
    %2141 = arith.index_cast %2138 : i32 to index
    %c0_733 = arith.constant 0 : index
    %2142 = vector.load %arg13[%2141, %c0_733] : memref<16x128xf32, #tpu.memory_space<vmem>>, vector<1x128xf32>
    %2143 = arith.index_cast %2136 : i32 to index
    %2144 = memref.load %arg3[%2143] : memref<32xf32, #tpu.memory_space<smem>>
    %2145 = vector.broadcast %2144 : f32 to vector<1x128xf32>
    %2146 = arith.mulf %2145, %1479 : vector<1x128xf32>
    %2147 = arith.addf %2142, %2146 : vector<1x128xf32>
    %2148 = arith.addf %2147, %1481 : vector<1x128xf32>
    %cst_734 = arith.constant 0.000000e+00 : f32
    %2149 = vector.broadcast %cst_734 : f32 to vector<1x128xf32>
    %2150 = arith.maximumf %2148, %2149 : vector<1x128xf32>
    %2151 = arith.index_cast %2140 : i32 to index
    %c0_735 = arith.constant 0 : index
    %2152 = vector.load %arg14[%2151, %c0_735] : memref<16x128xf32, #tpu.memory_space<vmem>>, vector<1x128xf32>
    %2153 = arith.addf %2152, %2150 : vector<1x128xf32>
    %2154 = arith.index_cast %2140 : i32 to index
    %c0_736 = arith.constant 0 : index
    %2155 = vector.load %arg14[%2154, %c0_736] : memref<16x128xf32, #tpu.memory_space<vmem>>, vector<1x128xf32>
    tpu.vector_store %arg14[%2154, %c0_736], %2153 {strides = array<i32>} : memref<16x128xf32, #tpu.memory_space<vmem>>, vector<1x128xf32>,
    %c32_i32_737 = arith.constant 32 : i32
    %c0_738 = arith.constant 0 : index
    %c0_739 = arith.constant 0 : index
    %2156 = vector.load %arg13[%c0_738, %c0_739] : memref<16x128xf32, #tpu.memory_space<vmem>>, vector<16x128xf32>
    %c0_740 = arith.constant 0 : index
    %c0_741 = arith.constant 0 : index
    %2157 = vector.load %arg14[%c0_740, %c0_741] : memref<16x128xf32, #tpu.memory_space<vmem>>, vector<16x128xf32>
    %c2_742 = arith.constant 2 : index
    %2158 = memref.load %arg0[%c2_742] : memref<3xf32, #tpu.memory_space<smem>>
    %2159 = vector.broadcast %2158 : f32 to vector<16x128xf32>
    %2160 = arith.mulf %2159, %2156 : vector<16x128xf32>
    %2161 = arith.addf %2157, %2160 : vector<16x128xf32>
    %2162 = arith.truncf %2161 : vector<16x128xf32> to vector<16x128xbf16>
    %c2_743 = arith.constant 2 : index
    %c0_744 = arith.constant 0 : index
    %c0_745 = arith.constant 0 : index
    %2163 = vector.load %arg7[%c2_743, %c0_744, %c0_745] : memref<3x128x128xbf16, #tpu.memory_space<vmem>>, vector<1x128x128xbf16>
    %2164 = vector.shape_cast %2163 : vector<1x128x128xbf16> to vector<128x128xbf16>
    %cst_746 = arith.constant dense<0.000000e+00> : vector<16x128xf32>
    %2165 = tpu.matmul %2162, %2164, %cst_746 {dimension_numbers = #tpu.dot_dimension_numbers<[1], [0], [0], [1], [0, 0, 1, 1], [], []>} : vector<16x128xbf16>, vector<128x128xbf16>, vector<16x128xf32> -> vector<16x128xf32>
    %c2_747 = arith.constant 2 : index
    %c0_748 = arith.constant 0 : index
    %c0_749 = arith.constant 0 : index
    %2166 = vector.load %arg8[%c2_747, %c0_748, %c0_749] : memref<3x1x128xf32, #tpu.memory_space<vmem>>, vector<1x1x128xf32>
    %2167 = vector.shape_cast %2166 : vector<1x1x128xf32> to vector<1x128xf32>
    %2168 = vector.broadcast %2167 : vector<1x128xf32> to vector<16x128xf32>
    %2169 = arith.addf %2165, %2168 : vector<16x128xf32>
    %2170 = vector.broadcast %4 : vector<16x1xf32> to vector<16x128xf32>
    %2171 = arith.mulf %2169, %2170 : vector<16x128xf32>
    %cst_750 = arith.constant dense<0.000000e+00> : vector<128xf32>
    %2172 = vector.multi_reduction <add>, %2171, %cst_750 [0] : vector<16x128xf32> to vector<128xf32>
    %2173 = vector.shape_cast %2172 : vector<128xf32> to vector<1x128xf32>
    %cst_751 = arith.constant 6.250000e-02 : f32
    %2174 = vector.broadcast %cst_751 : f32 to vector<1x128xf32>
    %2175 = arith.mulf %2173, %2174 : vector<1x128xf32>
    %2176 = vector.broadcast %2175 : vector<1x128xf32> to vector<16x128xf32>
    %2177 = arith.subf %2169, %2176 : vector<16x128xf32>
    %2178 = vector.broadcast %4 : vector<16x1xf32> to vector<16x128xf32>
    %2179 = arith.mulf %2177, %2178 : vector<16x128xf32>
    %2180 = arith.mulf %2179, %2179 : vector<16x128xf32>
    %cst_752 = arith.constant dense<0.000000e+00> : vector<128xf32>
    %2181 = vector.multi_reduction <add>, %2180, %cst_752 [0] : vector<16x128xf32> to vector<128xf32>
    %2182 = vector.shape_cast %2181 : vector<128xf32> to vector<1x128xf32>
    %cst_753 = arith.constant 6.250000e-02 : f32
    %2183 = vector.broadcast %cst_753 : f32 to vector<1x128xf32>
    %2184 = arith.mulf %2182, %2183 : vector<1x128xf32>
    %2185 = vector.broadcast %2175 : vector<1x128xf32> to vector<16x128xf32>
    %2186 = arith.subf %2169, %2185 : vector<16x128xf32>
    %cst_754 = arith.constant 9.99999974E-6 : f32
    %2187 = vector.broadcast %cst_754 : f32 to vector<1x128xf32>
    %2188 = arith.addf %2184, %2187 : vector<1x128xf32>
    %2189 = math.rsqrt %2188 : vector<1x128xf32>
    %2190 = vector.broadcast %2189 : vector<1x128xf32> to vector<16x128xf32>
    %2191 = arith.mulf %2186, %2190 : vector<16x128xf32>
    %c2_755 = arith.constant 2 : index
    %c0_756 = arith.constant 0 : index
    %c0_757 = arith.constant 0 : index
    %2192 = vector.load %arg9[%c2_755, %c0_756, %c0_757] : memref<3x1x128xf32, #tpu.memory_space<vmem>>, vector<1x1x128xf32>
    %2193 = vector.shape_cast %2192 : vector<1x1x128xf32> to vector<1x128xf32>
    %2194 = vector.broadcast %2193 : vector<1x128xf32> to vector<16x128xf32>
    %2195 = arith.mulf %2191, %2194 : vector<16x128xf32>
    %c2_758 = arith.constant 2 : index
    %c0_759 = arith.constant 0 : index
    %c0_760 = arith.constant 0 : index
    %2196 = vector.load %arg10[%c2_758, %c0_759, %c0_760] : memref<3x1x128xf32, #tpu.memory_space<vmem>>, vector<1x1x128xf32>
    %2197 = vector.shape_cast %2196 : vector<1x1x128xf32> to vector<1x128xf32>
    %2198 = vector.broadcast %2197 : vector<1x128xf32> to vector<16x128xf32>
    %2199 = arith.addf %2195, %2198 : vector<16x128xf32>
    %cst_761 = arith.constant 0.000000e+00 : f32
    %2200 = vector.broadcast %cst_761 : f32 to vector<16x128xf32>
    %2201 = arith.maximumf %2199, %2200 : vector<16x128xf32>
    %2202 = arith.truncf %2201 : vector<16x128xf32> to vector<16x128xbf16>
    %c2_762 = arith.constant 2 : index
    %c0_763 = arith.constant 0 : index
    %c0_764 = arith.constant 0 : index
    %2203 = vector.load %arg11[%c2_762, %c0_763, %c0_764] : memref<3x128x128xbf16, #tpu.memory_space<vmem>>, vector<1x128x128xbf16>
    %2204 = vector.shape_cast %2203 : vector<1x128x128xbf16> to vector<128x128xbf16>
    %cst_765 = arith.constant dense<0.000000e+00> : vector<16x128xf32>
    %2205 = tpu.matmul %2202, %2204, %cst_765 {dimension_numbers = #tpu.dot_dimension_numbers<[1], [0], [0], [1], [0, 0, 1, 1], [], []>} : vector<16x128xbf16>, vector<128x128xbf16>, vector<16x128xf32> -> vector<16x128xf32>
    %c2_766 = arith.constant 2 : index
    %c0_767 = arith.constant 0 : index
    %c0_768 = arith.constant 0 : index
    %2206 = vector.load %arg12[%c2_766, %c0_767, %c0_768] : memref<3x1x128xf32, #tpu.memory_space<vmem>>, vector<1x1x128xf32>
    %2207 = vector.shape_cast %2206 : vector<1x1x128xf32> to vector<1x128xf32>
    %2208 = vector.broadcast %2207 : vector<1x128xf32> to vector<16x128xf32>
    %2209 = arith.addf %2205, %2208 : vector<16x128xf32>
    %cst_769 = arith.constant 0.000000e+00 : f32
    %2210 = vector.broadcast %cst_769 : f32 to vector<16x128xf32>
    %2211 = arith.maximumf %2209, %2210 : vector<16x128xf32>
    %2212 = arith.addf %2156, %2211 : vector<16x128xf32>
    %c0_770 = arith.constant 0 : index
    %c0_771 = arith.constant 0 : index
    %2213 = vector.load %arg13[%c0_770, %c0_771] : memref<16x128xf32, #tpu.memory_space<vmem>>, vector<16x128xf32>
    tpu.vector_store %arg13[%c0_770, %c0_771], %2212 {strides = array<i32>} : memref<16x128xf32, #tpu.memory_space<vmem>>, vector<16x128xf32>,
    return
  }
}

</mosaic_0001>

<llo_original>
// kernel: res_gnn_forward.1
$region0: #{res_gnn_forward.1}
  #allocation0 [shape = 'u32[]', space=smem, size = 0x4, offset = 0x4, fixed_abs, tag = 'smem constant byte address 0x4 - core index']
  #allocation1 [shape = 'u32[144,128]{1,0:T(1,128)}', space=vmem, size = 0x12000, scoped, tag = 'internal scratch']
  #allocation2 [shape = 'f32[16,128]{1,0:T(8,128)}', space=vmem, size = 0x2000, scoped, tag = 'scratch operand']
  %s0 = inlined_call_operand.vmem [shape: f32[3], index: 0, kind: input, shape index: {}]
  %s1 = inlined_call_operand.vmem [shape: s32[32], index: 1, kind: input, shape index: {}]
  %s2 = inlined_call_operand.vmem [shape: s32[32], index: 2, kind: input, shape index: {}]
  %s3 = inlined_call_operand.vmem [shape: f32[32], index: 3, kind: input, shape index: {}]
  %s4 = inlined_call_operand.vmem [shape: f32[16,128], index: 4, kind: input, shape index: {}]
  %s5 = inlined_call_operand.vmem [shape: f32[3,1,128], index: 5, kind: input, shape index: {}]
  %s6 = inlined_call_operand.vmem [shape: f32[3,1,128], index: 6, kind: input, shape index: {}]
  %s7 = inlined_call_operand.hbm [shape: bf16[3,128,128], index: 7, kind: input, shape index: {}]
  %s8 = inlined_call_operand.vmem [shape: f32[3,1,128], index: 8, kind: input, shape index: {}]
  %s9 = inlined_call_operand.vmem [shape: f32[3,1,128], index: 9, kind: input, shape index: {}]
  %s10 = inlined_call_operand.vmem [shape: f32[3,1,128], index: 10, kind: input, shape index: {}]
  %s11 = inlined_call_operand.hbm [shape: bf16[3,128,128], index: 11, kind: input, shape index: {}]
  %s12 = inlined_call_operand.vmem [shape: f32[3,1,128], index: 12, kind: input, shape index: {}]
  %s13 = inlined_call_operand.hbm [shape: f32[16,128], index: 13, kind: output, shape index: {}]
  %s14 = sld [smem:[#allocation0]]
  $region86: #{res_gnn_forward.1} parent=0
    _
  %s16 = ssub.s32 1, %s14
  %s17 = scalar_select 0, %s16, %s14
  $region1: #{res_gnn_forward.1} parent=0
    #allocation3 [shape = 'u8[512]{0}', space=smem, size = 0x200, scoped, tag = 'input window, operand 0, single buffered']
    #allocation4 [shape = 's32[1]{0}', space=sflag, size = 0x4, scoped, tag = 'scoped memory for res_gnn_forward.1']
    #allocation5 [shape = 's32[1]{0}', space=sflag, size = 0x4, scoped, tag = 'scoped memory for res_gnn_forward.1']
    #allocation6 [shape = 's32[1]{0}', space=sflag, size = 0x4, scoped, tag = 'scoped memory for res_gnn_forward.1']
    #allocation7 [shape = 'u8[512]{0}', space=smem, size = 0x200, scoped, tag = 'input window, operand 1, single buffered']
    #allocation8 [shape = 's32[1]{0}', space=sflag, size = 0x4, scoped, tag = 'scoped memory for res_gnn_forward.1']
    #allocation9 [shape = 'u8[512]{0}', space=smem, size = 0x200, scoped, tag = 'input window, operand 2, single buffered']
    #allocation10 [shape = 'u8[512]{0}', space=smem, size = 0x200, scoped, tag = 'input window, operand 3, single buffered']
    #allocation11 [shape = 's32[1]{0}', space=sflag, size = 0x4, scoped, tag = 'scoped memory for res_gnn_forward.1']
    #allocation12 [shape = 'u8[98304]{0}', space=vmem, size = 0x18000, scoped, tag = 'input window, operand 7, single buffered']
    #allocation13 [shape = 'u8[98304]{0}', space=vmem, size = 0x18000, scoped, tag = 'input window, operand 11, single buffered']
    #allocation14 [shape = 's32[1]{0}', space=sflag, size = 0x4, scoped, tag = 'scoped memory for res_gnn_forward.1']
    #allocation15 [shape = 'u8[8192]{0}', space=vmem, size = 0x2000, scoped, tag = 'output window, operand 0, single buffered']
    %18 = vsyncpa [#allocation6], 0
    %19 = vsyncpa [#allocation8], 0
    %20 = vsyncpa [#allocation11], 0
    %21 = vsyncpa [#allocation4], 0
    %22 = vsyncpa [#allocation14], 0
    %23 = vsyncpa [#allocation5], 0
    // Predicated region
    $region2: #{res_gnn_forward.1} parent=1 // pred_check
      _
    $region3: #{res_gnn_forward.1} parent=1 // pred_check_branch
      %25 = sbr.rel (0) target = $region5
    $region4: #{res_gnn_forward.1} parent=1 // pred_region
      %s27 = ssub.s32 16, 16
      %28 = vsyncadd [#allocation6], %s27
      %s30 = sshll.u32 %s0, 4
      %s31 = int_to_ptr.vmem [resolvable:$true] %s30
      %33 = dma.vmem_to_smem %s31, 16, [#allocation3], [#allocation6]
    $region5: #{res_gnn_forward.1} parent=1 // pred_fallthru
      _
    // Predicated region
    $region6: #{res_gnn_forward.1} parent=1 // pred_check
      _
    $region7: #{res_gnn_forward.1} parent=1 // pred_check_branch
      %35 = sbr.rel (0) target = $region9
    $region8: #{res_gnn_forward.1} parent=1 // pred_region
      %s37 = ssub.s32 16, 16
      %38 = vsyncadd [#allocation8], %s37
      %s40 = sshll.u32 %s1, 4
      %s41 = int_to_ptr.vmem [resolvable:$true] %s40
      %43 = dma.vmem_to_smem %s41, 16, [#allocation7], [#allocation8]
    $region9: #{res_gnn_forward.1} parent=1 // pred_fallthru
      _
    // Predicated region
    $region10: #{res_gnn_forward.1} parent=1 // pred_check
      _
    $region11: #{res_gnn_forward.1} parent=1 // pred_check_branch
      %45 = sbr.rel (0) target = $region13
    $region12: #{res_gnn_forward.1} parent=1 // pred_region
      %s47 = ssub.s32 16, 16
      %48 = vsyncadd [#allocation8], %s47
      %s50 = sshll.u32 %s2, 4
      %s51 = int_to_ptr.vmem [resolvable:$true] %s50
      %53 = dma.vmem_to_smem %s51, 16, [#allocation9], [#allocation8]
    $region13: #{res_gnn_forward.1} parent=1 // pred_fallthru
      _
    // Predicated region
    $region14: #{res_gnn_forward.1} parent=1 // pred_check
      _
    $region15: #{res_gnn_forward.1} parent=1 // pred_check_branch
      %55 = sbr.rel (0) target = $region17
    $region16: #{res_gnn_forward.1} parent=1 // pred_region
      %s57 = ssub.s32 16, 16
      %58 = vsyncadd [#allocation11], %s57
      %s60 = sshll.u32 %s3, 4
      %s61 = int_to_ptr.vmem [resolvable:$true] %s60
      %63 = dma.vmem_to_smem %s61, 16, [#allocation10], [#allocation11]
    $region17: #{res_gnn_forward.1} parent=1 // pred_fallthru
      _
    // Predicated region
    $region18: #{res_gnn_forward.1} parent=1 // pred_check
      _
    $region19: #{res_gnn_forward.1} parent=1 // pred_check_branch
      %65 = sbr.rel (0) target = $region21
    $region20: #{res_gnn_forward.1} parent=1 // pred_region
      _
    $region21: #{res_gnn_forward.1} parent=1 // pred_fallthru
      _
    // Predicated region
    $region22: #{res_gnn_forward.1} parent=1 // pred_check
      _
    $region23: #{res_gnn_forward.1} parent=1 // pred_check_branch
      %67 = sbr.rel (0) target = $region25
    $region24: #{res_gnn_forward.1} parent=1 // pred_region
      _
    $region25: #{res_gnn_forward.1} parent=1 // pred_fallthru
      _
    // Predicated region
    $region26: #{res_gnn_forward.1} parent=1 // pred_check
      _
    $region27: #{res_gnn_forward.1} parent=1 // pred_check_branch
      %69 = sbr.rel (0) target = $region29
    $region28: #{res_gnn_forward.1} parent=1 // pred_region
      _
    $region29: #{res_gnn_forward.1} parent=1 // pred_fallthru
      _
    // Predicated region
    $region30: #{res_gnn_forward.1} parent=1 // pred_check
      _
    $region31: #{res_gnn_forward.1} parent=1 // pred_check_branch
      %71 = sbr.rel (0) target = $region33
    $region32: #{res_gnn_forward.1} parent=1 // pred_region
      %s73 = ssub.s32 3072, 3072
      %74 = vsyncadd [#allocation4], %s73
      %s75 = sshll.u32 [#allocation12], 4
      %s76 = int_to_ptr.vmem [resolvable:$true] %s75
      %81 = dma.hbm_to_vmem [thread:$0]  %s7, 3072, %s76, [#allocation4], 64, 64, 4
    $region33: #{res_gnn_forward.1} parent=1 // pred_fallthru
      _
    // Predicated region
    $region34: #{res_gnn_forward.1} parent=1 // pred_check
      _
    $region35: #{res_gnn_forward.1} parent=1 // pred_check_branch
      %83 = sbr.rel (0) target = $region37
    $region36: #{res_gnn_forward.1} parent=1 // pred_region
      _
    $region37: #{res_gnn_forward.1} parent=1 // pred_fallthru
      _
    // Predicated region
    $region38: #{res_gnn_forward.1} parent=1 // pred_check
      _
    $region39: #{res_gnn_forward.1} parent=1 // pred_check_branch
      %85 = sbr.rel (0) target = $region41
    $region40: #{res_gnn_forward.1} parent=1 // pred_region
      _
    $region41: #{res_gnn_forward.1} parent=1 // pred_fallthru
      _
    // Predicated region
    $region42: #{res_gnn_forward.1} parent=1 // pred_check
      _
    $region43: #{res_gnn_forward.1} parent=1 // pred_check_branch
      %87 = sbr.rel (0) target = $region45
    $region44: #{res_gnn_forward.1} parent=1 // pred_region
      _
    $region45: #{res_gnn_forward.1} parent=1 // pred_fallthru
      _
    // Predicated region
    $region46: #{res_gnn_forward.1} parent=1 // pred_check
      _
    $region47: #{res_gnn_forward.1} parent=1 // pred_check_branch
      %89 = sbr.rel (0) target = $region49
    $region48: #{res_gnn_forward.1} parent=1 // pred_region
      %s91 = ssub.s32 3072, 3072
      %92 = vsyncadd [#allocation14], %s91
      %s93 = sshll.u32 [#allocation13], 4
      %s94 = int_to_ptr.vmem [resolvable:$true] %s93
      %99 = dma.hbm_to_vmem [thread:$0]  %s11, 3072, %s94, [#allocation14], 64, 64, 4
    $region49: #{res_gnn_forward.1} parent=1 // pred_fallthru
      _
    // Predicated region
    $region50: #{res_gnn_forward.1} parent=1 // pred_check
      _
    $region51: #{res_gnn_forward.1} parent=1 // pred_check_branch
      %101 = sbr.rel (0) target = $region53
    $region52: #{res_gnn_forward.1} parent=1 // pred_region
      _
    $region53: #{res_gnn_forward.1} parent=1 // pred_fallthru
      _
    // Predicated region
    $region54: #{res_gnn_forward.1} parent=1 // pred_check
      _
    $region55: #{res_gnn_forward.1} parent=1 // pred_check_branch
      %103 = sbr.rel (0) target = $region57
    $region56: #{res_gnn_forward.1} parent=1 // pred_region
      %104 = dma.done [#allocation6], 16
    $region57: #{res_gnn_forward.1} parent=1 // pred_fallthru
      _
    // Predicated region
    $region58: #{res_gnn_forward.1} parent=1 // pred_check
      _
    $region59: #{res_gnn_forward.1} parent=1 // pred_check_branch
      %106 = sbr.rel (0) target = $region61
    $region60: #{res_gnn_forward.1} parent=1 // pred_region
      %107 = dma.done [#allocation8], 16
    $region61: #{res_gnn_forward.1} parent=1 // pred_fallthru
      _
    // Predicated region
    $region62: #{res_gnn_forward.1} parent=1 // pred_check
      _
    $region63: #{res_gnn_forward.1} parent=1 // pred_check_branch
      %109 = sbr.rel (0) target = $region65
    $region64: #{res_gnn_forward.1} parent=1 // pred_region
      %110 = dma.done [#allocation8], 16
    $region65: #{res_gnn_forward.1} parent=1 // pred_fallthru
      _
    // Predicated region
    $region66: #{res_gnn_forward.1} parent=1 // pred_check
      _
    $region67: #{res_gnn_forward.1} parent=1 // pred_check_branch
      %112 = sbr.rel (0) target = $region69
    $region68: #{res_gnn_forward.1} parent=1 // pred_region
      %113 = dma.done [#allocation11], 16
    $region69: #{res_gnn_forward.1} parent=1 // pred_fallthru
      _
    // Predicated region
    $region70: #{res_gnn_forward.1} parent=1 // pred_check
      _
    $region71: #{res_gnn_forward.1} parent=1 // pred_check_branch
      %115 = sbr.rel (0) target = $region73
    $region72: #{res_gnn_forward.1} parent=1 // pred_region
      %116 = dma.done [#allocation4], 3072
    $region73: #{res_gnn_forward.1} parent=1 // pred_fallthru
      _
    // Predicated region
    $region74: #{res_gnn_forward.1} parent=1 // pred_check
      _
    $region75: #{res_gnn_forward.1} parent=1 // pred_check_branch
      %118 = sbr.rel (0) target = $region77
    $region76: #{res_gnn_forward.1} parent=1 // pred_region
      %119 = dma.done [#allocation14], 3072
    $region77: #{res_gnn_forward.1} parent=1 // pred_fallthru
      _
    %120 = sfence
    %v122 = vlaneseq
    %v123 = vshrl.u32 %v122, 7
    %v124 = vadd.s32 %v123, 8
    %vm125 = vcmp.lt.s32.totalorder %v123, 16
    %vm126 = vcmp.lt.s32.totalorder %v124, 16
    %v127 = vsel %vm125, 1, 0
    %v128 = vsel %vm126, 1, 0
    %v129 = vcvt.s32.f32 %v127
    %v130 = vcvt.s32.f32 %v128
    %v131 = vld [vmem:[%s4] sm:$0xff]
    %v132 = vld [vmem:[%s4 + $0x8] sm:$0xff]
    %133 = vst [vmem:[#allocation15] sm:$0xff] %v131
    %134 = vst [vmem:[#allocation15 + $0x8] sm:$0xff] %v132
    %v135 = vld [vmem:[%s5] sm:$0x1]
    %v136 = vld [vmem:[%s6] sm:$0x1]
    %137 = vst [vmem:[#allocation2] sm:$0xff] 0.0
    %138 = vst [vmem:[#allocation2 + $0x8] sm:$0xff] 0.0
    %s139 = sld [smem:[#allocation7]]
    %s140 = sld [smem:[#allocation9]]
    %s141 = scalar_lea.vmem [#allocation15], %s139
    %v142 = vld [vmem:[%s141] sm:$0x1]
    %s143 = sld [smem:[#allocation10]]
    %v144 = vstv %s143
    %v145 = vmul.f32 %v144, %v135
    %v146 = vadd.f32 %v142, %v145
    %v147 = vadd.f32 %v146, %v136
    %v148 = vmax.f32 %v147, 0.0
    %s149 = scalar_lea.vmem [#allocation2], %s140
    %v150 = vld [vmem:[%s149] sm:$0x1]
    %v151 = vadd.f32 %v150, %v148
    %152 = vst [vmem:[%s149] sm:$0x1] %v151
    %s153 = sld [smem:[#allocation7 + $0x1]]
    %s154 = sld [smem:[#allocation9 + $0x1]]
    %s155 = scalar_lea.vmem [#allocation15], %s153
    %v156 = vld [vmem:[%s155] sm:$0x1]
    %s157 = sld [smem:[#allocation10 + $0x1]]
    %v158 = vstv %s157
    %v159 = vmul.f32 %v158, %v135
    %v160 = vadd.f32 %v156, %v159
    %v161 = vadd.f32 %v160, %v136
    %v162 = vmax.f32 %v161, 0.0
    %s163 = scalar_lea.vmem [#allocation2], %s154
    %v164 = vld [vmem:[%s163] sm:$0x1]
    %v165 = vadd.f32 %v164, %v162
    %166 = vst [vmem:[%s163] sm:$0x1] %v165
    %s167 = sld [smem:[#allocation7 + $0x2]]
    %s168 = sld [smem:[#allocation9 + $0x2]]
    %s169 = scalar_lea.vmem [#allocation15], %s167
    %v170 = vld [vmem:[%s169] sm:$0x1]
    %s171 = sld [smem:[#allocation10 + $0x2]]
    %v172 = vstv %s171
    %v173 = vmul.f32 %v172, %v135
    %v174 = vadd.f32 %v170, %v173
    %v175 = vadd.f32 %v174, %v136
    %v176 = vmax.f32 %v175, 0.0
    %s177 = scalar_lea.vmem [#allocation2], %s168
    %v178 = vld [vmem:[%s177] sm:$0x1]
    %v179 = vadd.f32 %v178, %v176
    %180 = vst [vmem:[%s177] sm:$0x1] %v179
    %s181 = sld [smem:[#allocation7 + $0x3]]
    %s182 = sld [smem:[#allocation9 + $0x3]]
    %s183 = scalar_lea.vmem [#allocation15], %s181
    %v184 = vld [vmem:[%s183] sm:$0x1]
    %s185 = sld [smem:[#allocation10 + $0x3]]
    %v186 = vstv %s185
    %v187 = vmul.f32 %v186, %v135
    %v188 = vadd.f32 %v184, %v187
    %v189 = vadd.f32 %v188, %v136
    %v190 = vmax.f32 %v189, 0.0
    %s191 = scalar_lea.vmem [#allocation2], %s182
    %v192 = vld [vmem:[%s191] sm:$0x1]
    %v193 = vadd.f32 %v192, %v190
    %194 = vst [vmem:[%s191] sm:$0x1] %v193
    %s195 = sld [smem:[#allocation7 + $0x4]]
    %s196 = sld [smem:[#allocation9 + $0x4]]
    %s197 = scalar_lea.vmem [#allocation15], %s195
    %v198 = vld [vmem:[%s197] sm:$0x1]
    %s199 = sld [smem:[#allocation10 + $0x4]]
    %v200 = vstv %s199
    %v201 = vmul.f32 %v200, %v135
    %v202 = vadd.f32 %v198, %v201
    %v203 = vadd.f32 %v202, %v136
    %v204 = vmax.f32 %v203, 0.0
    %s205 = scalar_lea.vmem [#allocation2], %s196
    %v206 = vld [vmem:[%s205] sm:$0x1]
    %v207 = vadd.f32 %v206, %v204
    %208 = vst [vmem:[%s205] sm:$0x1] %v207
    %s209 = sld [smem:[#allocation7 + $0x5]]
    %s210 = sld [smem:[#allocation9 + $0x5]]
    %s211 = scalar_lea.vmem [#allocation15], %s209
    %v212 = vld [vmem:[%s211] sm:$0x1]
    %s213 = sld [smem:[#allocation10 + $0x5]]
    %v214 = vstv %s213
    %v215 = vmul.f32 %v214, %v135
    %v216 = vadd.f32 %v212, %v215
    %v217 = vadd.f32 %v216, %v136
    %v218 = vmax.f32 %v217, 0.0
    %s219 = scalar_lea.vmem [#allocation2], %s210
    %v220 = vld [vmem:[%s219] sm:$0x1]
    %v221 = vadd.f32 %v220, %v218
    %222 = vst [vmem:[%s219] sm:$0x1] %v221
    %s223 = sld [smem:[#allocation7 + $0x6]]
    %s224 = sld [smem:[#allocation9 + $0x6]]
    %s225 = scalar_lea.vmem [#allocation15], %s223
    %v226 = vld [vmem:[%s225] sm:$0x1]
    %s227 = sld [smem:[#allocation10 + $0x6]]
    %v228 = vstv %s227
    %v229 = vmul.f32 %v228, %v135
    %v230 = vadd.f32 %v226, %v229
    %v231 = vadd.f32 %v230, %v136
    %v232 = vmax.f32 %v231, 0.0
    %s233 = scalar_lea.vmem [#allocation2], %s224
    %v234 = vld [vmem:[%s233] sm:$0x1]
    %v235 = vadd.f32 %v234, %v232
    %236 = vst [vmem:[%s233] sm:$0x1] %v235
    %s237 = sld [smem:[#allocation7 + $0x7]]
    %s238 = sld [smem:[#allocation9 + $0x7]]
    %s239 = scalar_lea.vmem [#allocation15], %s237
    %v240 = vld [vmem:[%s239] sm:$0x1]
    %s241 = sld [smem:[#allocation10 + $0x7]]
    %v242 = vstv %s241
    %v243 = vmul.f32 %v242, %v135
    %v244 = vadd.f32 %v240, %v243
    %v245 = vadd.f32 %v244, %v136
    %v246 = vmax.f32 %v245, 0.0
    %s247 = scalar_lea.vmem [#allocation2], %s238
    %v248 = vld [vmem:[%s247] sm:$0x1]
    %v249 = vadd.f32 %v248, %v246
    %250 = vst [vmem:[%s247] sm:$0x1] %v249
    %s251 = sld [smem:[#allocation7 + $0x8]]
    %s252 = sld [smem:[#allocation9 + $0x8]]
    %s253 = scalar_lea.vmem [#allocation15], %s251
    %v254 = vld [vmem:[%s253] sm:$0x1]
    %s255 = sld [smem:[#allocation10 + $0x8]]
    %v256 = vstv %s255
    %v257 = vmul.f32 %v256, %v135
    %v258 = vadd.f32 %v254, %v257
    %v259 = vadd.f32 %v258, %v136
    %v260 = vmax.f32 %v259, 0.0
    %s261 = scalar_lea.vmem [#allocation2], %s252
    %v262 = vld [vmem:[%s261] sm:$0x1]
    %v263 = vadd.f32 %v262, %v260
    %264 = vst [vmem:[%s261] sm:$0x1] %v263
    %s265 = sld [smem:[#allocation7 + $0x9]]
    %s266 = sld [smem:[#allocation9 + $0x9]]
    %s267 = scalar_lea.vmem [#allocation15], %s265
    %v268 = vld [vmem:[%s267] sm:$0x1]
    %s269 = sld [smem:[#allocation10 + $0x9]]
    %v270 = vstv %s269
    %v271 = vmul.f32 %v270, %v135
    %v272 = vadd.f32 %v268, %v271
    %v273 = vadd.f32 %v272, %v136
    %v274 = vmax.f32 %v273, 0.0
    %s275 = scalar_lea.vmem [#allocation2], %s266
    %v276 = vld [vmem:[%s275] sm:$0x1]
    %v277 = vadd.f32 %v276, %v274
    %278 = vst [vmem:[%s275] sm:$0x1] %v277
    %s279 = sld [smem:[#allocation7 + $0xa]]
    %s280 = sld [smem:[#allocation9 + $0xa]]
    %s281 = scalar_lea.vmem [#allocation15], %s279
    %v282 = vld [vmem:[%s281] sm:$0x1]
    %s283 = sld [smem:[#allocation10 + $0xa]]
    %v284 = vstv %s283
    %v285 = vmul.f32 %v284, %v135
    %v286 = vadd.f32 %v282, %v285
    %v287 = vadd.f32 %v286, %v136
    %v288 = vmax.f32 %v287, 0.0
    %s289 = scalar_lea.vmem [#allocation2], %s280
    %v290 = vld [vmem:[%s289] sm:$0x1]
    %v291 = vadd.f32 %v290, %v288
    %292 = vst [vmem:[%s289] sm:$0x1] %v291
    %s293 = sld [smem:[#allocation7 + $0xb]]
    %s294 = sld [smem:[#allocation9 + $0xb]]
    %s295 = scalar_lea.vmem [#allocation15], %s293
    %v296 = vld [vmem:[%s295] sm:$0x1]
    %s297 = sld [smem:[#allocation10 + $0xb]]
    %v298 = vstv %s297
    %v299 = vmul.f32 %v298, %v135
    %v300 = vadd.f32 %v296, %v299
    %v301 = vadd.f32 %v300, %v136
    %v302 = vmax.f32 %v301, 0.0
    %s303 = scalar_lea.vmem [#allocation2], %s294
    %v304 = vld [vmem:[%s303] sm:$0x1]
    %v305 = vadd.f32 %v304, %v302
    %306 = vst [vmem:[%s303] sm:$0x1] %v305
    %s307 = sld [smem:[#allocation7 + $0xc]]
    %s308 = sld [smem:[#allocation9 + $0xc]]
    %s309 = scalar_lea.vmem [#allocation15], %s307
    %v310 = vld [vmem:[%s309] sm:$0x1]
    %s311 = sld [smem:[#allocation10 + $0xc]]
    %v312 = vstv %s311
    %v313 = vmul.f32 %v312, %v135
    %v314 = vadd.f32 %v310, %v313
    %v315 = vadd.f32 %v314, %v136
    %v316 = vmax.f32 %v315, 0.0
    %s317 = scalar_lea.vmem [#allocation2], %s308
    %v318 = vld [vmem:[%s317] sm:$0x1]
    %v319 = vadd.f32 %v318, %v316
    %320 = vst [vmem:[%s317] sm:$0x1] %v319
    %s321 = sld [smem:[#allocation7 + $0xd]]
    %s322 = sld [smem:[#allocation9 + $0xd]]
    %s323 = scalar_lea.vmem [#allocation15], %s321
    %v324 = vld [vmem:[%s323] sm:$0x1]
    %s325 = sld [smem:[#allocation10 + $0xd]]
    %v326 = vstv %s325
    %v327 = vmul.f32 %v326, %v135
    %v328 = vadd.f32 %v324, %v327
    %v329 = vadd.f32 %v328, %v136
    %v330 = vmax.f32 %v329, 0.0
    %s331 = scalar_lea.vmem [#allocation2], %s322
    %v332 = vld [vmem:[%s331] sm:$0x1]
    %v333 = vadd.f32 %v332, %v330
    %334 = vst [vmem:[%s331] sm:$0x1] %v333
    %s335 = sld [smem:[#allocation7 + $0xe]]
    %s336 = sld [smem:[#allocation9 + $0xe]]
    %s337 = scalar_lea.vmem [#allocation15], %s335
    %v338 = vld [vmem:[%s337] sm:$0x1]
    %s339 = sld [smem:[#allocation10 + $0xe]]
    %v340 = vstv %s339
    %v341 = vmul.f32 %v340, %v135
    %v342 = vadd.f32 %v338, %v341
    %v343 = vadd.f32 %v342, %v136
    %v344 = vmax.f32 %v343, 0.0
    %s345 = scalar_lea.vmem [#allocation2], %s336
    %v346 = vld [vmem:[%s345] sm:$0x1]
    %v347 = vadd.f32 %v346, %v344
    %348 = vst [vmem:[%s345] sm:$0x1] %v347
    %s349 = sld [smem:[#allocation7 + $0xf]]
    %s350 = sld [smem:[#allocation9 + $0xf]]
    %s351 = scalar_lea.vmem [#allocation15], %s349
    %v352 = vld [vmem:[%s351] sm:$0x1]
    %s353 = sld [smem:[#allocation10 + $0xf]]
    %v354 = vstv %s353
    %v355 = vmul.f32 %v354, %v135
    %v356 = vadd.f32 %v352, %v355
    %v357 = vadd.f32 %v356, %v136
    %v358 = vmax.f32 %v357, 0.0
    %s359 = scalar_lea.vmem [#allocation2], %s350
    %v360 = vld [vmem:[%s359] sm:$0x1]
    %v361 = vadd.f32 %v360, %v358
    %362 = vst [vmem:[%s359] sm:$0x1] %v361
    %s363 = sld [smem:[#allocation7 + $0x10]]
    %s364 = sld [smem:[#allocation9 + $0x10]]
    %s365 = scalar_lea.vmem [#allocation15], %s363
    %v366 = vld [vmem:[%s365] sm:$0x1]
    %s367 = sld [smem:[#allocation10 + $0x10]]
    %v368 = vstv %s367
    %v369 = vmul.f32 %v368, %v135
    %v370 = vadd.f32 %v366, %v369
    %v371 = vadd.f32 %v370, %v136
    %v372 = vmax.f32 %v371, 0.0
    %s373 = scalar_lea.vmem [#allocation2], %s364
    %v374 = vld [vmem:[%s373] sm:$0x1]
    %v375 = vadd.f32 %v374, %v372
    %376 = vst [vmem:[%s373] sm:$0x1] %v375
    %s377 = sld [smem:[#allocation7 + $0x11]]
    %s378 = sld [smem:[#allocation9 + $0x11]]
    %s379 = scalar_lea.vmem [#allocation15], %s377
    %v380 = vld [vmem:[%s379] sm:$0x1]
    %s381 = sld [smem:[#allocation10 + $0x11]]
    %v382 = vstv %s381
    %v383 = vmul.f32 %v382, %v135
    %v384 = vadd.f32 %v380, %v383
    %v385 = vadd.f32 %v384, %v136
    %v386 = vmax.f32 %v385, 0.0
    %s387 = scalar_lea.vmem [#allocation2], %s378
    %v388 = vld [vmem:[%s387] sm:$0x1]
    %v389 = vadd.f32 %v388, %v386
    %390 = vst [vmem:[%s387] sm:$0x1] %v389
    %s391 = sld [smem:[#allocation7 + $0x12]]
    %s392 = sld [smem:[#allocation9 + $0x12]]
    %s393 = scalar_lea.vmem [#allocation15], %s391
    %v394 = vld [vmem:[%s393] sm:$0x1]
    %s395 = sld [smem:[#allocation10 + $0x12]]
    %v396 = vstv %s395
    %v397 = vmul.f32 %v396, %v135
    %v398 = vadd.f32 %v394, %v397
    %v399 = vadd.f32 %v398, %v136
    %v400 = vmax.f32 %v399, 0.0
    %s401 = scalar_lea.vmem [#allocation2], %s392
    %v402 = vld [vmem:[%s401] sm:$0x1]
    %v403 = vadd.f32 %v402, %v400
    %404 = vst [vmem:[%s401] sm:$0x1] %v403
    %s405 = sld [smem:[#allocation7 + $0x13]]
    %s406 = sld [smem:[#allocation9 + $0x13]]
    %s407 = scalar_lea.vmem [#allocation15], %s405
    %v408 = vld [vmem:[%s407] sm:$0x1]
    %s409 = sld [smem:[#allocation10 + $0x13]]
    %v410 = vstv %s409
    %v411 = vmul.f32 %v410, %v135
    %v412 = vadd.f32 %v408, %v411
    %v413 = vadd.f32 %v412, %v136
    %v414 = vmax.f32 %v413, 0.0
    %s415 = scalar_lea.vmem [#allocation2], %s406
    %v416 = vld [vmem:[%s415] sm:$0x1]
    %v417 = vadd.f32 %v416, %v414
    %418 = vst [vmem:[%s415] sm:$0x1] %v417
    %s419 = sld [smem:[#allocation7 + $0x14]]
    %s420 = sld [smem:[#allocation9 + $0x14]]
    %s421 = scalar_lea.vmem [#allocation15], %s419
    %v422 = vld [vmem:[%s421] sm:$0x1]
    %s423 = sld [smem:[#allocation10 + $0x14]]
    %v424 = vstv %s423
    %v425 = vmul.f32 %v424, %v135
    %v426 = vadd.f32 %v422, %v425
    %v427 = vadd.f32 %v426, %v136
    %v428 = vmax.f32 %v427, 0.0
    %s429 = scalar_lea.vmem [#allocation2], %s420
    %v430 = vld [vmem:[%s429] sm:$0x1]
    %v431 = vadd.f32 %v430, %v428
    %432 = vst [vmem:[%s429] sm:$0x1] %v431
    %s433 = sld [smem:[#allocation7 + $0x15]]
    %s434 = sld [smem:[#allocation9 + $0x15]]
    %s435 = scalar_lea.vmem [#allocation15], %s433
    %v436 = vld [vmem:[%s435] sm:$0x1]
    %s437 = sld [smem:[#allocation10 + $0x15]]
    %v438 = vstv %s437
    %v439 = vmul.f32 %v438, %v135
    %v440 = vadd.f32 %v436, %v439
    %v441 = vadd.f32 %v440, %v136
    %v442 = vmax.f32 %v441, 0.0
    %s443 = scalar_lea.vmem [#allocation2], %s434
    %v444 = vld [vmem:[%s443] sm:$0x1]
    %v445 = vadd.f32 %v444, %v442
    %446 = vst [vmem:[%s443] sm:$0x1] %v445
    %s447 = sld [smem:[#allocation7 + $0x16]]
    %s448 = sld [smem:[#allocation9 + $0x16]]
    %s449 = scalar_lea.vmem [#allocation15], %s447
    %v450 = vld [vmem:[%s449] sm:$0x1]
    %s451 = sld [smem:[#allocation10 + $0x16]]
    %v452 = vstv %s451
    %v453 = vmul.f32 %v452, %v135
    %v454 = vadd.f32 %v450, %v453
    %v455 = vadd.f32 %v454, %v136
    %v456 = vmax.f32 %v455, 0.0
    %s457 = scalar_lea.vmem [#allocation2], %s448
    %v458 = vld [vmem:[%s457] sm:$0x1]
    %v459 = vadd.f32 %v458, %v456
    %460 = vst [vmem:[%s457] sm:$0x1] %v459
    %s461 = sld [smem:[#allocation7 + $0x17]]
    %s462 = sld [smem:[#allocation9 + $0x17]]
    %s463 = scalar_lea.vmem [#allocation15], %s461
    %v464 = vld [vmem:[%s463] sm:$0x1]
    %s465 = sld [smem:[#allocation10 + $0x17]]
    %v466 = vstv %s465
    %v467 = vmul.f32 %v466, %v135
    %v468 = vadd.f32 %v464, %v467
    %v469 = vadd.f32 %v468, %v136
    %v470 = vmax.f32 %v469, 0.0
    %s471 = scalar_lea.vmem [#allocation2], %s462
    %v472 = vld [vmem:[%s471] sm:$0x1]
    %v473 = vadd.f32 %v472, %v470
    %474 = vst [vmem:[%s471] sm:$0x1] %v473
    %s475 = sld [smem:[#allocation7 + $0x18]]
    %s476 = sld [smem:[#allocation9 + $0x18]]
    %s477 = scalar_lea.vmem [#allocation15], %s475
    %v478 = vld [vmem:[%s477] sm:$0x1]
    %s479 = sld [smem:[#allocation10 + $0x18]]
    %v480 = vstv %s479
    %v481 = vmul.f32 %v480, %v135
    %v482 = vadd.f32 %v478, %v481
    %v483 = vadd.f32 %v482, %v136
    %v484 = vmax.f32 %v483, 0.0
    %s485 = scalar_lea.vmem [#allocation2], %s476
    %v486 = vld [vmem:[%s485] sm:$0x1]
    %v487 = vadd.f32 %v486, %v484
    %488 = vst [vmem:[%s485] sm:$0x1] %v487
    %s489 = sld [smem:[#allocation7 + $0x19]]
    %s490 = sld [smem:[#allocation9 + $0x19]]
    %s491 = scalar_lea.vmem [#allocation15], %s489
    %v492 = vld [vmem:[%s491] sm:$0x1]
    %s493 = sld [smem:[#allocation10 + $0x19]]
    %v494 = vstv %s493
    %v495 = vmul.f32 %v494, %v135
    %v496 = vadd.f32 %v492, %v495
    %v497 = vadd.f32 %v496, %v136
    %v498 = vmax.f32 %v497, 0.0
    %s499 = scalar_lea.vmem [#allocation2], %s490
    %v500 = vld [vmem:[%s499] sm:$0x1]
    %v501 = vadd.f32 %v500, %v498
    %502 = vst [vmem:[%s499] sm:$0x1] %v501
    %s503 = sld [smem:[#allocation7 + $0x1a]]
    %s504 = sld [smem:[#allocation9 + $0x1a]]
    %s505 = scalar_lea.vmem [#allocation15], %s503
    %v506 = vld [vmem:[%s505] sm:$0x1]
    %s507 = sld [smem:[#allocation10 + $0x1a]]
    %v508 = vstv %s507
    %v509 = vmul.f32 %v508, %v135
    %v510 = vadd.f32 %v506, %v509
    %v511 = vadd.f32 %v510, %v136
    %v512 = vmax.f32 %v511, 0.0
    %s513 = scalar_lea.vmem [#allocation2], %s504
    %v514 = vld [vmem:[%s513] sm:$0x1]
    %v515 = vadd.f32 %v514, %v512
    %516 = vst [vmem:[%s513] sm:$0x1] %v515
    %s517 = sld [smem:[#allocation7 + $0x1b]]
    %s518 = sld [smem:[#allocation9 + $0x1b]]
    %s519 = scalar_lea.vmem [#allocation15], %s517
    %v520 = vld [vmem:[%s519] sm:$0x1]
    %s521 = sld [smem:[#allocation10 + $0x1b]]
    %v522 = vstv %s521
    %v523 = vmul.f32 %v522, %v135
    %v524 = vadd.f32 %v520, %v523
    %v525 = vadd.f32 %v524, %v136
    %v526 = vmax.f32 %v525, 0.0
    %s527 = scalar_lea.vmem [#allocation2], %s518
    %v528 = vld [vmem:[%s527] sm:$0x1]
    %v529 = vadd.f32 %v528, %v526
    %530 = vst [vmem:[%s527] sm:$0x1] %v529
    %s531 = sld [smem:[#allocation7 + $0x1c]]
    %s532 = sld [smem:[#allocation9 + $0x1c]]
    %s533 = scalar_lea.vmem [#allocation15], %s531
    %v534 = vld [vmem:[%s533] sm:$0x1]
    %s535 = sld [smem:[#allocation10 + $0x1c]]
    %v536 = vstv %s535
    %v537 = vmul.f32 %v536, %v135
    %v538 = vadd.f32 %v534, %v537
    %v539 = vadd.f32 %v538, %v136
    %v540 = vmax.f32 %v539, 0.0
    %s541 = scalar_lea.vmem [#allocation2], %s532
    %v542 = vld [vmem:[%s541] sm:$0x1]
    %v543 = vadd.f32 %v542, %v540
    %544 = vst [vmem:[%s541] sm:$0x1] %v543
    %s545 = sld [smem:[#allocation7 + $0x1d]]
    %s546 = sld [smem:[#allocation9 + $0x1d]]
    %s547 = scalar_lea.vmem [#allocation15], %s545
    %v548 = vld [vmem:[%s547] sm:$0x1]
    %s549 = sld [smem:[#allocation10 + $0x1d]]
    %v550 = vstv %s549
    %v551 = vmul.f32 %v550, %v135
    %v552 = vadd.f32 %v548, %v551
    %v553 = vadd.f32 %v552, %v136
    %v554 = vmax.f32 %v553, 0.0
    %s555 = scalar_lea.vmem [#allocation2], %s546
    %v556 = vld [vmem:[%s555] sm:$0x1]
    %v557 = vadd.f32 %v556, %v554
    %558 = vst [vmem:[%s555] sm:$0x1] %v557
    %s559 = sld [smem:[#allocation7 + $0x1e]]
    %s560 = sld [smem:[#allocation9 + $0x1e]]
    %s561 = scalar_lea.vmem [#allocation15], %s559
    %v562 = vld [vmem:[%s561] sm:$0x1]
    %s563 = sld [smem:[#allocation10 + $0x1e]]
    %v564 = vstv %s563
    %v565 = vmul.f32 %v564, %v135
    %v566 = vadd.f32 %v562, %v565
    %v567 = vadd.f32 %v566, %v136
    %v568 = vmax.f32 %v567, 0.0
    %s569 = scalar_lea.vmem [#allocation2], %s560
    %v570 = vld [vmem:[%s569] sm:$0x1]
    %v571 = vadd.f32 %v570, %v568
    %572 = vst [vmem:[%s569] sm:$0x1] %v571
    %s573 = sld [smem:[#allocation7 + $0x1f]]
    %s574 = sld [smem:[#allocation9 + $0x1f]]
    %s575 = scalar_lea.vmem [#allocation15], %s573
    %v576 = vld [vmem:[%s575] sm:$0x1]
    %s577 = sld [smem:[#allocation10 + $0x1f]]
    %v578 = vstv %s577
    %v579 = vmul.f32 %v578, %v135
    %v580 = vadd.f32 %v576, %v579
    %v581 = vadd.f32 %v580, %v136
    %v582 = vmax.f32 %v581, 0.0
    %s583 = scalar_lea.vmem [#allocation2], %s574
    %v584 = vld [vmem:[%s583] sm:$0x1]
    %v585 = vadd.f32 %v584, %v582
    %586 = vst [vmem:[%s583] sm:$0x1] %v585
    %v587 = vld [vmem:[#allocation15] sm:$0xff]
    %v588 = vld [vmem:[#allocation15 + $0x8] sm:$0xff]
    %v589 = vld [vmem:[#allocation2] sm:$0xff]
    %v590 = vld [vmem:[#allocation2 + $0x8] sm:$0xff]
    %s591 = sld [smem:[#allocation3]]
    %v592 = vstv %s591
    %v593 = vmul.f32 %v592, %v587
    %v594 = vmul.f32 %v592, %v588
    %v595 = vadd.f32 %v589, %v593
    %v596 = vadd.f32 %v590, %v594
    %v597 = vpack.c.bf16 %v596, %v595
    %v598 = vld [vmem:[#allocation12] sm:$0xf]
    %v599 = vld [vmem:[#allocation12 + $0x4] sm:$0xf]
    %v600 = vld [vmem:[#allocation12 + $0x8] sm:$0xf]
    %v601 = vld [vmem:[#allocation12 + $0xc] sm:$0xf]
    %v602 = vld [vmem:[#allocation12 + $0x10] sm:$0xf]
    %v603 = vld [vmem:[#allocation12 + $0x14] sm:$0xf]
    %v604 = vld [vmem:[#allocation12 + $0x18] sm:$0xf]
    %v605 = vld [vmem:[#allocation12 + $0x1c] sm:$0xf]
    %v606 = vld [vmem:[#allocation12 + $0x20] sm:$0xf]
    %v607 = vld [vmem:[#allocation12 + $0x24] sm:$0xf]
    %v608 = vld [vmem:[#allocation12 + $0x28] sm:$0xf]
    %v609 = vld [vmem:[#allocation12 + $0x2c] sm:$0xf]
    %v610 = vld [vmem:[#allocation12 + $0x30] sm:$0xf]
    %v611 = vld [vmem:[#allocation12 + $0x34] sm:$0xf]
    %v612 = vld [vmem:[#allocation12 + $0x38] sm:$0xf]
    %v613 = vld [vmem:[#allocation12 + $0x3c] sm:$0xf]
    %v614 = vld [vmem:[%s8] sm:$0x1]
    %v616 = vlaneseq
    %v617 = vshrl.u32 %v616, 7
    %v618 = vsub.s32 0, %v617
    %v619 = vrot.slane %v614, %v618
    %v637 = vunpack.c.l.b16 %v598
    %v638 = vunpack.c.l.b16 %v599
    %v639 = vunpack.c.l.b16 %v600
    %v640 = vunpack.c.l.b16 %v601
    %v641 = vunpack.c.l.b16 %v602
    %v642 = vunpack.c.l.b16 %v603
    %v643 = vunpack.c.l.b16 %v604
    %v644 = vunpack.c.l.b16 %v605
    %v645 = vunpack.c.l.b16 %v606
    %v646 = vunpack.c.l.b16 %v607
    %v647 = vunpack.c.l.b16 %v608
    %v648 = vunpack.c.l.b16 %v609
    %v649 = vunpack.c.l.b16 %v610
    %v650 = vunpack.c.l.b16 %v611
    %v651 = vunpack.c.l.b16 %v612
    %v652 = vunpack.c.l.b16 %v613
    %v653 = vpack.c.b16 %v638, %v637
    %v654 = vpack.c.b16 %v640, %v639
    %v655 = vpack.c.b16 %v642, %v641
    %v656 = vpack.c.b16 %v644, %v643
    %v657 = vpack.c.b16 %v646, %v645
    %v658 = vpack.c.b16 %v648, %v647
    %v659 = vpack.c.b16 %v650, %v649
    %v660 = vpack.c.b16 %v652, %v651
    %669 = vmatprep.subr.bf16.mxu0 0
    %670 = vmatpush1.bf16.msra.mxu0 %v660
    %671 = vmatprep.subr.bf16.mxu0 0
    %672 = vmatpush1.bf16.msra.mxu0 %v659
    %673 = vmatprep.subr.bf16.mxu0 0
    %674 = vmatpush1.bf16.msra.mxu0 %v658
    %675 = vmatprep.subr.bf16.mxu0 0
    %676 = vmatpush1.bf16.msra.mxu0 %v657
    %677 = vmatprep.subr.bf16.mxu0 0
    %678 = vmatpush1.bf16.msra.mxu0 %v656
    %679 = vmatprep.subr.bf16.mxu0 0
    %680 = vmatpush1.bf16.msra.mxu0 %v655
    %681 = vmatprep.subr.bf16.mxu0 0
    %682 = vmatpush1.bf16.msra.mxu0 %v654
    %683 = vmatprep.subr.bf16.mxu0 0
    %684 = vmatpush1.bf16.msra.mxu0 %v653
    %685 = vmatprep.subr.bf16.mxu0 0
    %686 = vmatpush2.bf16.msra.mxu0 0
    %687 = vmatprep.subr.bf16.mxu0 0
    %688 = vmatpush2.bf16.msra.mxu0 0
    %689 = vmatprep.subr.bf16.mxu0 0
    %690 = vmatpush2.bf16.msra.mxu0 0
    %691 = vmatprep.subr.bf16.mxu0 0
    %692 = vmatpush2.bf16.msra.mxu0 0
    %693 = vmatprep.subr.bf16.mxu0 0
    %694 = vmatpush2.bf16.msra.mxu0 0
    %695 = vmatprep.subr.bf16.mxu0 0
    %696 = vmatpush2.bf16.msra.mxu0 0
    %697 = vmatprep.subr.bf16.mxu0 0
    %698 = vmatpush2.bf16.msra.mxu0 0
    %699 = vmatprep.subr.bf16.mxu0 0
    %700 = vmatpush2.bf16.msra.mxu0 0
    %701 = vmatprep.mubr.bf16.mxu0 0
    %702 = vmatmul.mubr.bf16.gmra.mxu0 %v597
    %v703 = vpop.f32.mrf.mxu0
    %v704 = vadd.f32 %v619, %v703
    %v705 = vpop.f32.mrf.mxu0
    %v706 = vpop.f32.mrf.mxu0
    %v707 = vadd.f32 %v619, %v706
    %v708 = vpop.f32.mrf.mxu0
    %709 = vdwg.mxu0
    %v710 = vmul.f32 %v704, %v129
    %v711 = vmul.f32 %v707, %v130
    %v712 = vadd.f32 %v710, %v711
    %v713 = vrot.slane %v712, 4
    %v714 = vadd.f32 %v712, %v713
    %v715 = vrot.slane %v714, 2
    %v716 = vadd.f32 %v714, %v715
    %v717 = vrot.slane %v716, 1
    %v718 = vadd.f32 %v716, %v717
    %v719 = vmul.f32 %v718, 0.0625
    %v720 = vsub.f32 %v704, %v719
    %v721 = vsub.f32 %v707, %v719
    %v722 = vmul.f32 %v720, %v129
    %v723 = vmul.f32 %v721, %v130
    %v724 = vmul.f32 %v722, %v722
    %v725 = vmul.f32 %v723, %v723
    %v726 = vadd.f32 %v724, %v725
    %v727 = vrot.slane %v726, 4
    %v728 = vadd.f32 %v726, %v727
    %v729 = vrot.slane %v728, 2
    %v730 = vadd.f32 %v728, %v729
    %v731 = vrot.slane %v730, 1
    %v732 = vadd.f32 %v730, %v731
    %v733 = vmul.f32 %v732, 0.0625
    %v734 = vadd.f32 %v733, 1e-05
    %v735 = vrsqrt.pop %v734
    %v736 = vmul.f32 %v720, %v735
    %v737 = vmul.f32 %v721, %v735
    %v738 = vld [vmem:[%s9] sm:$0x1]
    %v740 = vlaneseq
    %v741 = vshrl.u32 %v740, 7
    %v742 = vsub.s32 0, %v741
    %v743 = vrot.slane %v738, %v742
    %v745 = vmul.f32 %v736, %v743
    %v746 = vmul.f32 %v737, %v743
    %v747 = vld [vmem:[%s10] sm:$0x1]
    %v749 = vlaneseq
    %v750 = vshrl.u32 %v749, 7
    %v751 = vsub.s32 0, %v750
    %v752 = vrot.slane %v747, %v751
    %v754 = vadd.f32 %v745, %v752
    %v755 = vadd.f32 %v746, %v752
    %v756 = vmax.f32 %v754, 0.0
    %v757 = vmax.f32 %v755, 0.0
    %v758 = vpack.c.bf16 %v757, %v756
    %v759 = vld [vmem:[#allocation13] sm:$0xf]
    %v760 = vld [vmem:[#allocation13 + $0x4] sm:$0xf]
    %v761 = vld [vmem:[#allocation13 + $0x8] sm:$0xf]
    %v762 = vld [vmem:[#allocation13 + $0xc] sm:$0xf]
    %v763 = vld [vmem:[#allocation13 + $0x10] sm:$0xf]
    %v764 = vld [vmem:[#allocation13 + $0x14] sm:$0xf]
    %v765 = vld [vmem:[#allocation13 + $0x18] sm:$0xf]
    %v766 = vld [vmem:[#allocation13 + $0x1c] sm:$0xf]
    %v767 = vld [vmem:[#allocation13 + $0x20] sm:$0xf]
    %v768 = vld [vmem:[#allocation13 + $0x24] sm:$0xf]
    %v769 = vld [vmem:[#allocation13 + $0x28] sm:$0xf]
    %v770 = vld [vmem:[#allocation13 + $0x2c] sm:$0xf]
    %v771 = vld [vmem:[#allocation13 + $0x30] sm:$0xf]
    %v772 = vld [vmem:[#allocation13 + $0x34] sm:$0xf]
    %v773 = vld [vmem:[#allocation13 + $0x38] sm:$0xf]
    %v774 = vld [vmem:[#allocation13 + $0x3c] sm:$0xf]
    %v775 = vld [vmem:[%s12] sm:$0x1]
    %v777 = vlaneseq
    %v778 = vshrl.u32 %v777, 7
    %v779 = vsub.s32 0, %v778
    %v780 = vrot.slane %v775, %v779
    %v798 = vunpack.c.l.b16 %v759
    %v799 = vunpack.c.l.b16 %v760
    %v800 = vunpack.c.l.b16 %v761
    %v801 = vunpack.c.l.b16 %v762
    %v802 = vunpack.c.l.b16 %v763
    %v803 = vunpack.c.l.b16 %v764
    %v804 = vunpack.c.l.b16 %v765
    %v805 = vunpack.c.l.b16 %v766
    %v806 = vunpack.c.l.b16 %v767
    %v807 = vunpack.c.l.b16 %v768
    %v808 = vunpack.c.l.b16 %v769
    %v809 = vunpack.c.l.b16 %v770
    %v810 = vunpack.c.l.b16 %v771
    %v811 = vunpack.c.l.b16 %v772
    %v812 = vunpack.c.l.b16 %v773
    %v813 = vunpack.c.l.b16 %v774
    %v814 = vpack.c.b16 %v799, %v798
    %v815 = vpack.c.b16 %v801, %v800
    %v816 = vpack.c.b16 %v803, %v802
    %v817 = vpack.c.b16 %v805, %v804
    %v818 = vpack.c.b16 %v807, %v806
    %v819 = vpack.c.b16 %v809, %v808
    %v820 = vpack.c.b16 %v811, %v810
    %v821 = vpack.c.b16 %v813, %v812
    %830 = vmatprep.subr.bf16.mxu0 0
    %831 = vmatpush1.bf16.msra.mxu0 %v821
    %832 = vmatprep.subr.bf16.mxu0 0
    %833 = vmatpush1.bf16.msra.mxu0 %v820
    %834 = vmatprep.subr.bf16.mxu0 0
    %835 = vmatpush1.bf16.msra.mxu0 %v819
    %836 = vmatprep.subr.bf16.mxu0 0
    %837 = vmatpush1.bf16.msra.mxu0 %v818
    %838 = vmatprep.subr.bf16.mxu0 0
    %839 = vmatpush1.bf16.msra.mxu0 %v817
    %840 = vmatprep.subr.bf16.mxu0 0
    %841 = vmatpush1.bf16.msra.mxu0 %v816
    %842 = vmatprep.subr.bf16.mxu0 0
    %843 = vmatpush1.bf16.msra.mxu0 %v815
    %844 = vmatprep.subr.bf16.mxu0 0
    %845 = vmatpush1.bf16.msra.mxu0 %v814
    %846 = vmatprep.subr.bf16.mxu0 0
    %847 = vmatpush2.bf16.msra.mxu0 0
    %848 = vmatprep.subr.bf16.mxu0 0
    %849 = vmatpush2.bf16.msra.mxu0 0
    %850 = vmatprep.subr.bf16.mxu0 0
    %851 = vmatpush2.bf16.msra.mxu0 0
    %852 = vmatprep.subr.bf16.mxu0 0
    %853 = vmatpush2.bf16.msra.mxu0 0
    %854 = vmatprep.subr.bf16.mxu0 0
    %855 = vmatpush2.bf16.msra.mxu0 0
    %856 = vmatprep.subr.bf16.mxu0 0
    %857 = vmatpush2.bf16.msra.mxu0 0
    %858 = vmatprep.subr.bf16.mxu0 0
    %859 = vmatpush2.bf16.msra.mxu0 0
    %860 = vmatprep.subr.bf16.mxu0 0
    %861 = vmatpush2.bf16.msra.mxu0 0
    %862 = vmatprep.mubr.bf16.mxu0 0
    %863 = vmatmul.mubr.bf16.gmra.mxu0 %v758
    %v864 = vpop.f32.mrf.mxu0
    %v865 = vadd.f32 %v780, %v864
    %v866 = vpop.f32.mrf.mxu0
    %v867 = vpop.f32.mrf.mxu0
    %v868 = vadd.f32 %v780, %v867
    %v869 = vpop.f32.mrf.mxu0
    %870 = vdwg.mxu0
    %v871 = vmax.f32 %v865, 0.0
    %v872 = vmax.f32 %v868, 0.0
    %873 = vst [vmem:[#allocation15] sm:$0xff] %v871
    %874 = vst [vmem:[#allocation15 + $0x8] sm:$0xff] %v872
    %s875 = scalar_lea.vmem %s5, 1
    %v876 = vld [vmem:[%s875] sm:$0x1]
    %s877 = scalar_lea.vmem %s6, 1
    %v878 = vld [vmem:[%s877] sm:$0x1]
    %879 = vst [vmem:[#allocation2] sm:$0xff] 0.0
    %880 = vst [vmem:[#allocation2 + $0x8] sm:$0xff] 0.0
    %s881 = sld [smem:[#allocation7]]
    %s882 = sld [smem:[#allocation9]]
    %s883 = scalar_lea.vmem [#allocation15], %s881
    %v884 = vld [vmem:[%s883] sm:$0x1]
    %s885 = sld [smem:[#allocation10]]
    %v886 = vstv %s885
    %v887 = vmul.f32 %v886, %v876
    %v888 = vadd.f32 %v884, %v887
    %v889 = vadd.f32 %v888, %v878
    %v890 = vmax.f32 %v889, 0.0
    %s891 = scalar_lea.vmem [#allocation2], %s882
    %v892 = vld [vmem:[%s891] sm:$0x1]
    %v893 = vadd.f32 %v892, %v890
    %894 = vst [vmem:[%s891] sm:$0x1] %v893
    %s895 = sld [smem:[#allocation7 + $0x1]]
    %s896 = sld [smem:[#allocation9 + $0x1]]
    %s897 = scalar_lea.vmem [#allocation15], %s895
    %v898 = vld [vmem:[%s897] sm:$0x1]
    %s899 = sld [smem:[#allocation10 + $0x1]]
    %v900 = vstv %s899
    %v901 = vmul.f32 %v900, %v876
    %v902 = vadd.f32 %v898, %v901
    %v903 = vadd.f32 %v902, %v878
    %v904 = vmax.f32 %v903, 0.0
    %s905 = scalar_lea.vmem [#allocation2], %s896
    %v906 = vld [vmem:[%s905] sm:$0x1]
    %v907 = vadd.f32 %v906, %v904
    %908 = vst [vmem:[%s905] sm:$0x1] %v907
    %s909 = sld [smem:[#allocation7 + $0x2]]
    %s910 = sld [smem:[#allocation9 + $0x2]]
    %s911 = scalar_lea.vmem [#allocation15], %s909
    %v912 = vld [vmem:[%s911] sm:$0x1]
    %s913 = sld [smem:[#allocation10 + $0x2]]
    %v914 = vstv %s913
    %v915 = vmul.f32 %v914, %v876
    %v916 = vadd.f32 %v912, %v915
    %v917 = vadd.f32 %v916, %v878
    %v918 = vmax.f32 %v917, 0.0
    %s919 = scalar_lea.vmem [#allocation2], %s910
    %v920 = vld [vmem:[%s919] sm:$0x1]
    %v921 = vadd.f32 %v920, %v918
    %922 = vst [vmem:[%s919] sm:$0x1] %v921
    %s923 = sld [smem:[#allocation7 + $0x3]]
    %s924 = sld [smem:[#allocation9 + $0x3]]
    %s925 = scalar_lea.vmem [#allocation15], %s923
    %v926 = vld [vmem:[%s925] sm:$0x1]
    %s927 = sld [smem:[#allocation10 + $0x3]]
    %v928 = vstv %s927
    %v929 = vmul.f32 %v928, %v876
    %v930 = vadd.f32 %v926, %v929
    %v931 = vadd.f32 %v930, %v878
    %v932 = vmax.f32 %v931, 0.0
    %s933 = scalar_lea.vmem [#allocation2], %s924
    %v934 = vld [vmem:[%s933] sm:$0x1]
    %v935 = vadd.f32 %v934, %v932
    %936 = vst [vmem:[%s933] sm:$0x1] %v935
    %s937 = sld [smem:[#allocation7 + $0x4]]
    %s938 = sld [smem:[#allocation9 + $0x4]]
    %s939 = scalar_lea.vmem [#allocation15], %s937
    %v940 = vld [vmem:[%s939] sm:$0x1]
    %s941 = sld [smem:[#allocation10 + $0x4]]
    %v942 = vstv %s941
    %v943 = vmul.f32 %v942, %v876
    %v944 = vadd.f32 %v940, %v943
    %v945 = vadd.f32 %v944, %v878
    %v946 = vmax.f32 %v945, 0.0
    %s947 = scalar_lea.vmem [#allocation2], %s938
    %v948 = vld [vmem:[%s947] sm:$0x1]
    %v949 = vadd.f32 %v948, %v946
    %950 = vst [vmem:[%s947] sm:$0x1] %v949
    %s951 = sld [smem:[#allocation7 + $0x5]]
    %s952 = sld [smem:[#allocation9 + $0x5]]
    %s953 = scalar_lea.vmem [#allocation15], %s951
    %v954 = vld [vmem:[%s953] sm:$0x1]
    %s955 = sld [smem:[#allocation10 + $0x5]]
    %v956 = vstv %s955
    %v957 = vmul.f32 %v956, %v876
    %v958 = vadd.f32 %v954, %v957
    %v959 = vadd.f32 %v958, %v878
    %v960 = vmax.f32 %v959, 0.0
    %s961 = scalar_lea.vmem [#allocation2], %s952
    %v962 = vld [vmem:[%s961] sm:$0x1]
    %v963 = vadd.f32 %v962, %v960
    %964 = vst [vmem:[%s961] sm:$0x1] %v963
    %s965 = sld [smem:[#allocation7 + $0x6]]
    %s966 = sld [smem:[#allocation9 + $0x6]]
    %s967 = scalar_lea.vmem [#allocation15], %s965
    %v968 = vld [vmem:[%s967] sm:$0x1]
    %s969 = sld [smem:[#allocation10 + $0x6]]
    %v970 = vstv %s969
    %v971 = vmul.f32 %v970, %v876
    %v972 = vadd.f32 %v968, %v971
    %v973 = vadd.f32 %v972, %v878
    %v974 = vmax.f32 %v973, 0.0
    %s975 = scalar_lea.vmem [#allocation2], %s966
    %v976 = vld [vmem:[%s975] sm:$0x1]
    %v977 = vadd.f32 %v976, %v974
    %978 = vst [vmem:[%s975] sm:$0x1] %v977
    %s979 = sld [smem:[#allocation7 + $0x7]]
    %s980 = sld [smem:[#allocation9 + $0x7]]
    %s981 = scalar_lea.vmem [#allocation15], %s979
    %v982 = vld [vmem:[%s981] sm:$0x1]
    %s983 = sld [smem:[#allocation10 + $0x7]]
    %v984 = vstv %s983
    %v985 = vmul.f32 %v984, %v876
    %v986 = vadd.f32 %v982, %v985
    %v987 = vadd.f32 %v986, %v878
    %v988 = vmax.f32 %v987, 0.0
    %s989 = scalar_lea.vmem [#allocation2], %s980
    %v990 = vld [vmem:[%s989] sm:$0x1]
    %v991 = vadd.f32 %v990, %v988
    %992 = vst [vmem:[%s989] sm:$0x1] %v991
    %s993 = sld [smem:[#allocation7 + $0x8]]
    %s994 = sld [smem:[#allocation9 + $0x8]]
    %s995 = scalar_lea.vmem [#allocation15], %s993
    %v996 = vld [vmem:[%s995] sm:$0x1]
    %s997 = sld [smem:[#allocation10 + $0x8]]
    %v998 = vstv %s997
    %v999 = vmul.f32 %v998, %v876
    %v1000 = vadd.f32 %v996, %v999
    %v1001 = vadd.f32 %v1000, %v878
    %v1002 = vmax.f32 %v1001, 0.0
    %s1003 = scalar_lea.vmem [#allocation2], %s994
    %v1004 = vld [vmem:[%s1003] sm:$0x1]
    %v1005 = vadd.f32 %v1004, %v1002
    %1006 = vst [vmem:[%s1003] sm:$0x1] %v1005
    %s1007 = sld [smem:[#allocation7 + $0x9]]
    %s1008 = sld [smem:[#allocation9 + $0x9]]
    %s1009 = scalar_lea.vmem [#allocation15], %s1007
    %v1010 = vld [vmem:[%s1009] sm:$0x1]
    %s1011 = sld [smem:[#allocation10 + $0x9]]
    %v1012 = vstv %s1011
    %v1013 = vmul.f32 %v1012, %v876
    %v1014 = vadd.f32 %v1010, %v1013
    %v1015 = vadd.f32 %v1014, %v878
    %v1016 = vmax.f32 %v1015, 0.0
    %s1017 = scalar_lea.vmem [#allocation2], %s1008
    %v1018 = vld [vmem:[%s1017] sm:$0x1]
    %v1019 = vadd.f32 %v1018, %v1016
    %1020 = vst [vmem:[%s1017] sm:$0x1] %v1019
    %s1021 = sld [smem:[#allocation7 + $0xa]]
    %s1022 = sld [smem:[#allocation9 + $0xa]]
    %s1023 = scalar_lea.vmem [#allocation15], %s1021
    %v1024 = vld [vmem:[%s1023] sm:$0x1]
    %s1025 = sld [smem:[#allocation10 + $0xa]]
    %v1026 = vstv %s1025
    %v1027 = vmul.f32 %v1026, %v876
    %v1028 = vadd.f32 %v1024, %v1027
    %v1029 = vadd.f32 %v1028, %v878
    %v1030 = vmax.f32 %v1029, 0.0
    %s1031 = scalar_lea.vmem [#allocation2], %s1022
    %v1032 = vld [vmem:[%s1031] sm:$0x1]
    %v1033 = vadd.f32 %v1032, %v1030
    %1034 = vst [vmem:[%s1031] sm:$0x1] %v1033
    %s1035 = sld [smem:[#allocation7 + $0xb]]
    %s1036 = sld [smem:[#allocation9 + $0xb]]
    %s1037 = scalar_lea.vmem [#allocation15], %s1035
    %v1038 = vld [vmem:[%s1037] sm:$0x1]
    %s1039 = sld [smem:[#allocation10 + $0xb]]
    %v1040 = vstv %s1039
    %v1041 = vmul.f32 %v1040, %v876
    %v1042 = vadd.f32 %v1038, %v1041
    %v1043 = vadd.f32 %v1042, %v878
    %v1044 = vmax.f32 %v1043, 0.0
    %s1045 = scalar_lea.vmem [#allocation2], %s1036
    %v1046 = vld [vmem:[%s1045] sm:$0x1]
    %v1047 = vadd.f32 %v1046, %v1044
    %1048 = vst [vmem:[%s1045] sm:$0x1] %v1047
    %s1049 = sld [smem:[#allocation7 + $0xc]]
    %s1050 = sld [smem:[#allocation9 + $0xc]]
    %s1051 = scalar_lea.vmem [#allocation15], %s1049
    %v1052 = vld [vmem:[%s1051] sm:$0x1]
    %s1053 = sld [smem:[#allocation10 + $0xc]]
    %v1054 = vstv %s1053
    %v1055 = vmul.f32 %v1054, %v876
    %v1056 = vadd.f32 %v1052, %v1055
    %v1057 = vadd.f32 %v1056, %v878
    %v1058 = vmax.f32 %v1057, 0.0
    %s1059 = scalar_lea.vmem [#allocation2], %s1050
    %v1060 = vld [vmem:[%s1059] sm:$0x1]
    %v1061 = vadd.f32 %v1060, %v1058
    %1062 = vst [vmem:[%s1059] sm:$0x1] %v1061
    %s1063 = sld [smem:[#allocation7 + $0xd]]
    %s1064 = sld [smem:[#allocation9 + $0xd]]
    %s1065 = scalar_lea.vmem [#allocation15], %s1063
    %v1066 = vld [vmem:[%s1065] sm:$0x1]
    %s1067 = sld [smem:[#allocation10 + $0xd]]
    %v1068 = vstv %s1067
    %v1069 = vmul.f32 %v1068, %v876
    %v1070 = vadd.f32 %v1066, %v1069
    %v1071 = vadd.f32 %v1070, %v878
    %v1072 = vmax.f32 %v1071, 0.0
    %s1073 = scalar_lea.vmem [#allocation2], %s1064
    %v1074 = vld [vmem:[%s1073] sm:$0x1]
    %v1075 = vadd.f32 %v1074, %v1072
    %1076 = vst [vmem:[%s1073] sm:$0x1] %v1075
    %s1077 = sld [smem:[#allocation7 + $0xe]]
    %s1078 = sld [smem:[#allocation9 + $0xe]]
    %s1079 = scalar_lea.vmem [#allocation15], %s1077
    %v1080 = vld [vmem:[%s1079] sm:$0x1]
    %s1081 = sld [smem:[#allocation10 + $0xe]]
    %v1082 = vstv %s1081
    %v1083 = vmul.f32 %v1082, %v876
    %v1084 = vadd.f32 %v1080, %v1083
    %v1085 = vadd.f32 %v1084, %v878
    %v1086 = vmax.f32 %v1085, 0.0
    %s1087 = scalar_lea.vmem [#allocation2], %s1078
    %v1088 = vld [vmem:[%s1087] sm:$0x1]
    %v1089 = vadd.f32 %v1088, %v1086
    %1090 = vst [vmem:[%s1087] sm:$0x1] %v1089
    %s1091 = sld [smem:[#allocation7 + $0xf]]
    %s1092 = sld [smem:[#allocation9 + $0xf]]
    %s1093 = scalar_lea.vmem [#allocation15], %s1091
    %v1094 = vld [vmem:[%s1093] sm:$0x1]
    %s1095 = sld [smem:[#allocation10 + $0xf]]
    %v1096 = vstv %s1095
    %v1097 = vmul.f32 %v1096, %v876
    %v1098 = vadd.f32 %v1094, %v1097
    %v1099 = vadd.f32 %v1098, %v878
    %v1100 = vmax.f32 %v1099, 0.0
    %s1101 = scalar_lea.vmem [#allocation2], %s1092
    %v1102 = vld [vmem:[%s1101] sm:$0x1]
    %v1103 = vadd.f32 %v1102, %v1100
    %1104 = vst [vmem:[%s1101] sm:$0x1] %v1103
    %s1105 = sld [smem:[#allocation7 + $0x10]]
    %s1106 = sld [smem:[#allocation9 + $0x10]]
    %s1107 = scalar_lea.vmem [#allocation15], %s1105
    %v1108 = vld [vmem:[%s1107] sm:$0x1]
    %s1109 = sld [smem:[#allocation10 + $0x10]]
    %v1110 = vstv %s1109
    %v1111 = vmul.f32 %v1110, %v876
    %v1112 = vadd.f32 %v1108, %v1111
    %v1113 = vadd.f32 %v1112, %v878
    %v1114 = vmax.f32 %v1113, 0.0
    %s1115 = scalar_lea.vmem [#allocation2], %s1106
    %v1116 = vld [vmem:[%s1115] sm:$0x1]
    %v1117 = vadd.f32 %v1116, %v1114
    %1118 = vst [vmem:[%s1115] sm:$0x1] %v1117
    %s1119 = sld [smem:[#allocation7 + $0x11]]
    %s1120 = sld [smem:[#allocation9 + $0x11]]
    %s1121 = scalar_lea.vmem [#allocation15], %s1119
    %v1122 = vld [vmem:[%s1121] sm:$0x1]
    %s1123 = sld [smem:[#allocation10 + $0x11]]
    %v1124 = vstv %s1123
    %v1125 = vmul.f32 %v1124, %v876
    %v1126 = vadd.f32 %v1122, %v1125
    %v1127 = vadd.f32 %v1126, %v878
    %v1128 = vmax.f32 %v1127, 0.0
    %s1129 = scalar_lea.vmem [#allocation2], %s1120
    %v1130 = vld [vmem:[%s1129] sm:$0x1]
    %v1131 = vadd.f32 %v1130, %v1128
    %1132 = vst [vmem:[%s1129] sm:$0x1] %v1131
    %s1133 = sld [smem:[#allocation7 + $0x12]]
    %s1134 = sld [smem:[#allocation9 + $0x12]]
    %s1135 = scalar_lea.vmem [#allocation15], %s1133
    %v1136 = vld [vmem:[%s1135] sm:$0x1]
    %s1137 = sld [smem:[#allocation10 + $0x12]]
    %v1138 = vstv %s1137
    %v1139 = vmul.f32 %v1138, %v876
    %v1140 = vadd.f32 %v1136, %v1139
    %v1141 = vadd.f32 %v1140, %v878
    %v1142 = vmax.f32 %v1141, 0.0
    %s1143 = scalar_lea.vmem [#allocation2], %s1134
    %v1144 = vld [vmem:[%s1143] sm:$0x1]
    %v1145 = vadd.f32 %v1144, %v1142
    %1146 = vst [vmem:[%s1143] sm:$0x1] %v1145
    %s1147 = sld [smem:[#allocation7 + $0x13]]
    %s1148 = sld [smem:[#allocation9 + $0x13]]
    %s1149 = scalar_lea.vmem [#allocation15], %s1147
    %v1150 = vld [vmem:[%s1149] sm:$0x1]
    %s1151 = sld [smem:[#allocation10 + $0x13]]
    %v1152 = vstv %s1151
    %v1153 = vmul.f32 %v1152, %v876
    %v1154 = vadd.f32 %v1150, %v1153
    %v1155 = vadd.f32 %v1154, %v878
    %v1156 = vmax.f32 %v1155, 0.0
    %s1157 = scalar_lea.vmem [#allocation2], %s1148
    %v1158 = vld [vmem:[%s1157] sm:$0x1]
    %v1159 = vadd.f32 %v1158, %v1156
    %1160 = vst [vmem:[%s1157] sm:$0x1] %v1159
    %s1161 = sld [smem:[#allocation7 + $0x14]]
    %s1162 = sld [smem:[#allocation9 + $0x14]]
    %s1163 = scalar_lea.vmem [#allocation15], %s1161
    %v1164 = vld [vmem:[%s1163] sm:$0x1]
    %s1165 = sld [smem:[#allocation10 + $0x14]]
    %v1166 = vstv %s1165
    %v1167 = vmul.f32 %v1166, %v876
    %v1168 = vadd.f32 %v1164, %v1167
    %v1169 = vadd.f32 %v1168, %v878
    %v1170 = vmax.f32 %v1169, 0.0
    %s1171 = scalar_lea.vmem [#allocation2], %s1162
    %v1172 = vld [vmem:[%s1171] sm:$0x1]
    %v1173 = vadd.f32 %v1172, %v1170
    %1174 = vst [vmem:[%s1171] sm:$0x1] %v1173
    %s1175 = sld [smem:[#allocation7 + $0x15]]
    %s1176 = sld [smem:[#allocation9 + $0x15]]
    %s1177 = scalar_lea.vmem [#allocation15], %s1175
    %v1178 = vld [vmem:[%s1177] sm:$0x1]
    %s1179 = sld [smem:[#allocation10 + $0x15]]
    %v1180 = vstv %s1179
    %v1181 = vmul.f32 %v1180, %v876
    %v1182 = vadd.f32 %v1178, %v1181
    %v1183 = vadd.f32 %v1182, %v878
    %v1184 = vmax.f32 %v1183, 0.0
    %s1185 = scalar_lea.vmem [#allocation2], %s1176
    %v1186 = vld [vmem:[%s1185] sm:$0x1]
    %v1187 = vadd.f32 %v1186, %v1184
    %1188 = vst [vmem:[%s1185] sm:$0x1] %v1187
    %s1189 = sld [smem:[#allocation7 + $0x16]]
    %s1190 = sld [smem:[#allocation9 + $0x16]]
    %s1191 = scalar_lea.vmem [#allocation15], %s1189
    %v1192 = vld [vmem:[%s1191] sm:$0x1]
    %s1193 = sld [smem:[#allocation10 + $0x16]]
    %v1194 = vstv %s1193
    %v1195 = vmul.f32 %v1194, %v876
    %v1196 = vadd.f32 %v1192, %v1195
    %v1197 = vadd.f32 %v1196, %v878
    %v1198 = vmax.f32 %v1197, 0.0
    %s1199 = scalar_lea.vmem [#allocation2], %s1190
    %v1200 = vld [vmem:[%s1199] sm:$0x1]
    %v1201 = vadd.f32 %v1200, %v1198
    %1202 = vst [vmem:[%s1199] sm:$0x1] %v1201
    %s1203 = sld [smem:[#allocation7 + $0x17]]
    %s1204 = sld [smem:[#allocation9 + $0x17]]
    %s1205 = scalar_lea.vmem [#allocation15], %s1203
    %v1206 = vld [vmem:[%s1205] sm:$0x1]
    %s1207 = sld [smem:[#allocation10 + $0x17]]
    %v1208 = vstv %s1207
    %v1209 = vmul.f32 %v1208, %v876
    %v1210 = vadd.f32 %v1206, %v1209
    %v1211 = vadd.f32 %v1210, %v878
    %v1212 = vmax.f32 %v1211, 0.0
    %s1213 = scalar_lea.vmem [#allocation2], %s1204
    %v1214 = vld [vmem:[%s1213] sm:$0x1]
    %v1215 = vadd.f32 %v1214, %v1212
    %1216 = vst [vmem:[%s1213] sm:$0x1] %v1215
    %s1217 = sld [smem:[#allocation7 + $0x18]]
    %s1218 = sld [smem:[#allocation9 + $0x18]]
    %s1219 = scalar_lea.vmem [#allocation15], %s1217
    %v1220 = vld [vmem:[%s1219] sm:$0x1]
    %s1221 = sld [smem:[#allocation10 + $0x18]]
    %v1222 = vstv %s1221
    %v1223 = vmul.f32 %v1222, %v876
    %v1224 = vadd.f32 %v1220, %v1223
    %v1225 = vadd.f32 %v1224, %v878
    %v1226 = vmax.f32 %v1225, 0.0
    %s1227 = scalar_lea.vmem [#allocation2], %s1218
    %v1228 = vld [vmem:[%s1227] sm:$0x1]
    %v1229 = vadd.f32 %v1228, %v1226
    %1230 = vst [vmem:[%s1227] sm:$0x1] %v1229
    %s1231 = sld [smem:[#allocation7 + $0x19]]
    %s1232 = sld [smem:[#allocation9 + $0x19]]
    %s1233 = scalar_lea.vmem [#allocation15], %s1231
    %v1234 = vld [vmem:[%s1233] sm:$0x1]
    %s1235 = sld [smem:[#allocation10 + $0x19]]
    %v1236 = vstv %s1235
    %v1237 = vmul.f32 %v1236, %v876
    %v1238 = vadd.f32 %v1234, %v1237
    %v1239 = vadd.f32 %v1238, %v878
    %v1240 = vmax.f32 %v1239, 0.0
    %s1241 = scalar_lea.vmem [#allocation2], %s1232
    %v1242 = vld [vmem:[%s1241] sm:$0x1]
    %v1243 = vadd.f32 %v1242, %v1240
    %1244 = vst [vmem:[%s1241] sm:$0x1] %v1243
    %s1245 = sld [smem:[#allocation7 + $0x1a]]
    %s1246 = sld [smem:[#allocation9 + $0x1a]]
    %s1247 = scalar_lea.vmem [#allocation15], %s1245
    %v1248 = vld [vmem:[%s1247] sm:$0x1]
    %s1249 = sld [smem:[#allocation10 + $0x1a]]
    %v1250 = vstv %s1249
    %v1251 = vmul.f32 %v1250, %v876
    %v1252 = vadd.f32 %v1248, %v1251
    %v1253 = vadd.f32 %v1252, %v878
    %v1254 = vmax.f32 %v1253, 0.0
    %s1255 = scalar_lea.vmem [#allocation2], %s1246
    %v1256 = vld [vmem:[%s1255] sm:$0x1]
    %v1257 = vadd.f32 %v1256, %v1254
    %1258 = vst [vmem:[%s1255] sm:$0x1] %v1257
    %s1259 = sld [smem:[#allocation7 + $0x1b]]
    %s1260 = sld [smem:[#allocation9 + $0x1b]]
    %s1261 = scalar_lea.vmem [#allocation15], %s1259
    %v1262 = vld [vmem:[%s1261] sm:$0x1]
    %s1263 = sld [smem:[#allocation10 + $0x1b]]
    %v1264 = vstv %s1263
    %v1265 = vmul.f32 %v1264, %v876
    %v1266 = vadd.f32 %v1262, %v1265
    %v1267 = vadd.f32 %v1266, %v878
    %v1268 = vmax.f32 %v1267, 0.0
    %s1269 = scalar_lea.vmem [#allocation2], %s1260
    %v1270 = vld [vmem:[%s1269] sm:$0x1]
    %v1271 = vadd.f32 %v1270, %v1268
    %1272 = vst [vmem:[%s1269] sm:$0x1] %v1271
    %s1273 = sld [smem:[#allocation7 + $0x1c]]
    %s1274 = sld [smem:[#allocation9 + $0x1c]]
    %s1275 = scalar_lea.vmem [#allocation15], %s1273
    %v1276 = vld [vmem:[%s1275] sm:$0x1]
    %s1277 = sld [smem:[#allocation10 + $0x1c]]
    %v1278 = vstv %s1277
    %v1279 = vmul.f32 %v1278, %v876
    %v1280 = vadd.f32 %v1276, %v1279
    %v1281 = vadd.f32 %v1280, %v878
    %v1282 = vmax.f32 %v1281, 0.0
    %s1283 = scalar_lea.vmem [#allocation2], %s1274
    %v1284 = vld [vmem:[%s1283] sm:$0x1]
    %v1285 = vadd.f32 %v1284, %v1282
    %1286 = vst [vmem:[%s1283] sm:$0x1] %v1285
    %s1287 = sld [smem:[#allocation7 + $0x1d]]
    %s1288 = sld [smem:[#allocation9 + $0x1d]]
    %s1289 = scalar_lea.vmem [#allocation15], %s1287
    %v1290 = vld [vmem:[%s1289] sm:$0x1]
    %s1291 = sld [smem:[#allocation10 + $0x1d]]
    %v1292 = vstv %s1291
    %v1293 = vmul.f32 %v1292, %v876
    %v1294 = vadd.f32 %v1290, %v1293
    %v1295 = vadd.f32 %v1294, %v878
    %v1296 = vmax.f32 %v1295, 0.0
    %s1297 = scalar_lea.vmem [#allocation2], %s1288
    %v1298 = vld [vmem:[%s1297] sm:$0x1]
    %v1299 = vadd.f32 %v1298, %v1296
    %1300 = vst [vmem:[%s1297] sm:$0x1] %v1299
    %s1301 = sld [smem:[#allocation7 + $0x1e]]
    %s1302 = sld [smem:[#allocation9 + $0x1e]]
    %s1303 = scalar_lea.vmem [#allocation15], %s1301
    %v1304 = vld [vmem:[%s1303] sm:$0x1]
    %s1305 = sld [smem:[#allocation10 + $0x1e]]
    %v1306 = vstv %s1305
    %v1307 = vmul.f32 %v1306, %v876
    %v1308 = vadd.f32 %v1304, %v1307
    %v1309 = vadd.f32 %v1308, %v878
    %v1310 = vmax.f32 %v1309, 0.0
    %s1311 = scalar_lea.vmem [#allocation2], %s1302
    %v1312 = vld [vmem:[%s1311] sm:$0x1]
    %v1313 = vadd.f32 %v1312, %v1310
    %1314 = vst [vmem:[%s1311] sm:$0x1] %v1313
    %s1315 = sld [smem:[#allocation7 + $0x1f]]
    %s1316 = sld [smem:[#allocation9 + $0x1f]]
    %s1317 = scalar_lea.vmem [#allocation15], %s1315
    %v1318 = vld [vmem:[%s1317] sm:$0x1]
    %s1319 = sld [smem:[#allocation10 + $0x1f]]
    %v1320 = vstv %s1319
    %v1321 = vmul.f32 %v1320, %v876
    %v1322 = vadd.f32 %v1318, %v1321
    %v1323 = vadd.f32 %v1322, %v878
    %v1324 = vmax.f32 %v1323, 0.0
    %s1325 = scalar_lea.vmem [#allocation2], %s1316
    %v1326 = vld [vmem:[%s1325] sm:$0x1]
    %v1327 = vadd.f32 %v1326, %v1324
    %1328 = vst [vmem:[%s1325] sm:$0x1] %v1327
    %v1329 = vld [vmem:[#allocation15] sm:$0xff]
    %v1330 = vld [vmem:[#allocation15 + $0x8] sm:$0xff]
    %v1331 = vld [vmem:[#allocation2] sm:$0xff]
    %v1332 = vld [vmem:[#allocation2 + $0x8] sm:$0xff]
    %s1333 = sld [smem:[#allocation3 + $0x1]]
    %v1334 = vstv %s1333
    %v1335 = vmul.f32 %v1334, %v1329
    %v1336 = vmul.f32 %v1334, %v1330
    %v1337 = vadd.f32 %v1331, %v1335
    %v1338 = vadd.f32 %v1332, %v1336
    %v1339 = vpack.c.bf16 %v1338, %v1337
    %s1340 = scalar_lea.vmem [#allocation12], 64
    %v1341 = vld [vmem:[%s1340] sm:$0xf]
    %v1342 = vld [vmem:[%s1340 + $0x4] sm:$0xf]
    %v1343 = vld [vmem:[%s1340 + $0x8] sm:$0xf]
    %v1344 = vld [vmem:[%s1340 + $0xc] sm:$0xf]
    %v1345 = vld [vmem:[%s1340 + $0x10] sm:$0xf]
    %v1346 = vld [vmem:[%s1340 + $0x14] sm:$0xf]
    %v1347 = vld [vmem:[%s1340 + $0x18] sm:$0xf]
    %v1348 = vld [vmem:[%s1340 + $0x1c] sm:$0xf]
    %v1349 = vld [vmem:[%s1340 + $0x20] sm:$0xf]
    %v1350 = vld [vmem:[%s1340 + $0x24] sm:$0xf]
    %v1351 = vld [vmem:[%s1340 + $0x28] sm:$0xf]
    %v1352 = vld [vmem:[%s1340 + $0x2c] sm:$0xf]
    %v1353 = vld [vmem:[%s1340 + $0x30] sm:$0xf]
    %v1354 = vld [vmem:[%s1340 + $0x34] sm:$0xf]
    %v1355 = vld [vmem:[%s1340 + $0x38] sm:$0xf]
    %v1356 = vld [vmem:[%s1340 + $0x3c] sm:$0xf]
    %s1357 = scalar_lea.vmem %s8, 1
    %v1358 = vld [vmem:[%s1357] sm:$0x1]
    %v1360 = vlaneseq
    %v1361 = vshrl.u32 %v1360, 7
    %v1362 = vsub.s32 0, %v1361
    %v1363 = vrot.slane %v1358, %v1362
    %v1381 = vunpack.c.l.b16 %v1341
    %v1382 = vunpack.c.l.b16 %v1342
    %v1383 = vunpack.c.l.b16 %v1343
    %v1384 = vunpack.c.l.b16 %v1344
    %v1385 = vunpack.c.l.b16 %v1345
    %v1386 = vunpack.c.l.b16 %v1346
    %v1387 = vunpack.c.l.b16 %v1347
    %v1388 = vunpack.c.l.b16 %v1348
    %v1389 = vunpack.c.l.b16 %v1349
    %v1390 = vunpack.c.l.b16 %v1350
    %v1391 = vunpack.c.l.b16 %v1351
    %v1392 = vunpack.c.l.b16 %v1352
    %v1393 = vunpack.c.l.b16 %v1353
    %v1394 = vunpack.c.l.b16 %v1354
    %v1395 = vunpack.c.l.b16 %v1355
    %v1396 = vunpack.c.l.b16 %v1356
    %v1397 = vpack.c.b16 %v1382, %v1381
    %v1398 = vpack.c.b16 %v1384, %v1383
    %v1399 = vpack.c.b16 %v1386, %v1385
    %v1400 = vpack.c.b16 %v1388, %v1387
    %v1401 = vpack.c.b16 %v1390, %v1389
    %v1402 = vpack.c.b16 %v1392, %v1391
    %v1403 = vpack.c.b16 %v1394, %v1393
    %v1404 = vpack.c.b16 %v1396, %v1395
    %1413 = vmatprep.subr.bf16.mxu0 0
    %1414 = vmatpush1.bf16.msra.mxu0 %v1404
    %1415 = vmatprep.subr.bf16.mxu0 0
    %1416 = vmatpush1.bf16.msra.mxu0 %v1403
    %1417 = vmatprep.subr.bf16.mxu0 0
    %1418 = vmatpush1.bf16.msra.mxu0 %v1402
    %1419 = vmatprep.subr.bf16.mxu0 0
    %1420 = vmatpush1.bf16.msra.mxu0 %v1401
    %1421 = vmatprep.subr.bf16.mxu0 0
    %1422 = vmatpush1.bf16.msra.mxu0 %v1400
    %1423 = vmatprep.subr.bf16.mxu0 0
    %1424 = vmatpush1.bf16.msra.mxu0 %v1399
    %1425 = vmatprep.subr.bf16.mxu0 0
    %1426 = vmatpush1.bf16.msra.mxu0 %v1398
    %1427 = vmatprep.subr.bf16.mxu0 0
    %1428 = vmatpush1.bf16.msra.mxu0 %v1397
    %1429 = vmatprep.subr.bf16.mxu0 0
    %1430 = vmatpush2.bf16.msra.mxu0 0
    %1431 = vmatprep.subr.bf16.mxu0 0
    %1432 = vmatpush2.bf16.msra.mxu0 0
    %1433 = vmatprep.subr.bf16.mxu0 0
    %1434 = vmatpush2.bf16.msra.mxu0 0
    %1435 = vmatprep.subr.bf16.mxu0 0
    %1436 = vmatpush2.bf16.msra.mxu0 0
    %1437 = vmatprep.subr.bf16.mxu0 0
    %1438 = vmatpush2.bf16.msra.mxu0 0
    %1439 = vmatprep.subr.bf16.mxu0 0
    %1440 = vmatpush2.bf16.msra.mxu0 0
    %1441 = vmatprep.subr.bf16.mxu0 0
    %1442 = vmatpush2.bf16.msra.mxu0 0
    %1443 = vmatprep.subr.bf16.mxu0 0
    %1444 = vmatpush2.bf16.msra.mxu0 0
    %1445 = vmatprep.mubr.bf16.mxu0 0
    %1446 = vmatmul.mubr.bf16.gmra.mxu0 %v1339
    %v1447 = vpop.f32.mrf.mxu0
    %v1448 = vadd.f32 %v1363, %v1447
    %v1449 = vpop.f32.mrf.mxu0
    %v1450 = vpop.f32.mrf.mxu0
    %v1451 = vadd.f32 %v1363, %v1450
    %v1452 = vpop.f32.mrf.mxu0
    %1453 = vdwg.mxu0
    %v1454 = vmul.f32 %v1448, %v129
    %v1455 = vmul.f32 %v1451, %v130
    %v1456 = vadd.f32 %v1454, %v1455
    %v1457 = vrot.slane %v1456, 4
    %v1458 = vadd.f32 %v1456, %v1457
    %v1459 = vrot.slane %v1458, 2
    %v1460 = vadd.f32 %v1458, %v1459
    %v1461 = vrot.slane %v1460, 1
    %v1462 = vadd.f32 %v1460, %v1461
    %v1463 = vmul.f32 %v1462, 0.0625
    %v1464 = vsub.f32 %v1448, %v1463
    %v1465 = vsub.f32 %v1451, %v1463
    %v1466 = vmul.f32 %v1464, %v129
    %v1467 = vmul.f32 %v1465, %v130
    %v1468 = vmul.f32 %v1466, %v1466
    %v1469 = vmul.f32 %v1467, %v1467
    %v1470 = vadd.f32 %v1468, %v1469
    %v1471 = vrot.slane %v1470, 4
    %v1472 = vadd.f32 %v1470, %v1471
    %v1473 = vrot.slane %v1472, 2
    %v1474 = vadd.f32 %v1472, %v1473
    %v1475 = vrot.slane %v1474, 1
    %v1476 = vadd.f32 %v1474, %v1475
    %v1477 = vmul.f32 %v1476, 0.0625
    %v1478 = vadd.f32 %v1477, 1e-05
    %v1479 = vrsqrt.pop %v1478
    %v1480 = vmul.f32 %v1464, %v1479
    %v1481 = vmul.f32 %v1465, %v1479
    %s1482 = scalar_lea.vmem %s9, 1
    %v1483 = vld [vmem:[%s1482] sm:$0x1]
    %v1485 = vlaneseq
    %v1486 = vshrl.u32 %v1485, 7
    %v1487 = vsub.s32 0, %v1486
    %v1488 = vrot.slane %v1483, %v1487
    %v1490 = vmul.f32 %v1480, %v1488
    %v1491 = vmul.f32 %v1481, %v1488
    %s1492 = scalar_lea.vmem %s10, 1
    %v1493 = vld [vmem:[%s1492] sm:$0x1]
    %v1495 = vlaneseq
    %v1496 = vshrl.u32 %v1495, 7
    %v1497 = vsub.s32 0, %v1496
    %v1498 = vrot.slane %v1493, %v1497
    %v1500 = vadd.f32 %v1490, %v1498
    %v1501 = vadd.f32 %v1491, %v1498
    %v1502 = vmax.f32 %v1500, 0.0
    %v1503 = vmax.f32 %v1501, 0.0
    %v1504 = vpack.c.bf16 %v1503, %v1502
    %s1505 = scalar_lea.vmem [#allocation13], 64
    %v1506 = vld [vmem:[%s1505] sm:$0xf]
    %v1507 = vld [vmem:[%s1505 + $0x4] sm:$0xf]
    %v1508 = vld [vmem:[%s1505 + $0x8] sm:$0xf]
    %v1509 = vld [vmem:[%s1505 + $0xc] sm:$0xf]
    %v1510 = vld [vmem:[%s1505 + $0x10] sm:$0xf]
    %v1511 = vld [vmem:[%s1505 + $0x14] sm:$0xf]
    %v1512 = vld [vmem:[%s1505 + $0x18] sm:$0xf]
    %v1513 = vld [vmem:[%s1505 + $0x1c] sm:$0xf]
    %v1514 = vld [vmem:[%s1505 + $0x20] sm:$0xf]
    %v1515 = vld [vmem:[%s1505 + $0x24] sm:$0xf]
    %v1516 = vld [vmem:[%s1505 + $0x28] sm:$0xf]
    %v1517 = vld [vmem:[%s1505 + $0x2c] sm:$0xf]
    %v1518 = vld [vmem:[%s1505 + $0x30] sm:$0xf]
    %v1519 = vld [vmem:[%s1505 + $0x34] sm:$0xf]
    %v1520 = vld [vmem:[%s1505 + $0x38] sm:$0xf]
    %v1521 = vld [vmem:[%s1505 + $0x3c] sm:$0xf]
    %s1522 = scalar_lea.vmem %s12, 1
    %v1523 = vld [vmem:[%s1522] sm:$0x1]
    %v1525 = vlaneseq
    %v1526 = vshrl.u32 %v1525, 7
    %v1527 = vsub.s32 0, %v1526
    %v1528 = vrot.slane %v1523, %v1527
    %v1546 = vunpack.c.l.b16 %v1506
    %v1547 = vunpack.c.l.b16 %v1507
    %v1548 = vunpack.c.l.b16 %v1508
    %v1549 = vunpack.c.l.b16 %v1509
    %v1550 = vunpack.c.l.b16 %v1510
    %v1551 = vunpack.c.l.b16 %v1511
    %v1552 = vunpack.c.l.b16 %v1512
    %v1553 = vunpack.c.l.b16 %v1513
    %v1554 = vunpack.c.l.b16 %v1514
    %v1555 = vunpack.c.l.b16 %v1515
    %v1556 = vunpack.c.l.b16 %v1516
    %v1557 = vunpack.c.l.b16 %v1517
    %v1558 = vunpack.c.l.b16 %v1518
    %v1559 = vunpack.c.l.b16 %v1519
    %v1560 = vunpack.c.l.b16 %v1520
    %v1561 = vunpack.c.l.b16 %v1521
    %v1562 = vpack.c.b16 %v1547, %v1546
    %v1563 = vpack.c.b16 %v1549, %v1548
    %v1564 = vpack.c.b16 %v1551, %v1550
    %v1565 = vpack.c.b16 %v1553, %v1552
    %v1566 = vpack.c.b16 %v1555, %v1554
    %v1567 = vpack.c.b16 %v1557, %v1556
    %v1568 = vpack.c.b16 %v1559, %v1558
    %v1569 = vpack.c.b16 %v1561, %v1560
    %1578 = vmatprep.subr.bf16.mxu0 0
    %1579 = vmatpush1.bf16.msra.mxu0 %v1569
    %1580 = vmatprep.subr.bf16.mxu0 0
    %1581 = vmatpush1.bf16.msra.mxu0 %v1568
    %1582 = vmatprep.subr.bf16.mxu0 0
    %1583 = vmatpush1.bf16.msra.mxu0 %v1567
    %1584 = vmatprep.subr.bf16.mxu0 0
    %1585 = vmatpush1.bf16.msra.mxu0 %v1566
    %1586 = vmatprep.subr.bf16.mxu0 0
    %1587 = vmatpush1.bf16.msra.mxu0 %v1565
    %1588 = vmatprep.subr.bf16.mxu0 0
    %1589 = vmatpush1.bf16.msra.mxu0 %v1564
    %1590 = vmatprep.subr.bf16.mxu0 0
    %1591 = vmatpush1.bf16.msra.mxu0 %v1563
    %1592 = vmatprep.subr.bf16.mxu0 0
    %1593 = vmatpush1.bf16.msra.mxu0 %v1562
    %1594 = vmatprep.subr.bf16.mxu0 0
    %1595 = vmatpush2.bf16.msra.mxu0 0
    %1596 = vmatprep.subr.bf16.mxu0 0
    %1597 = vmatpush2.bf16.msra.mxu0 0
    %1598 = vmatprep.subr.bf16.mxu0 0
    %1599 = vmatpush2.bf16.msra.mxu0 0
    %1600 = vmatprep.subr.bf16.mxu0 0
    %1601 = vmatpush2.bf16.msra.mxu0 0
    %1602 = vmatprep.subr.bf16.mxu0 0
    %1603 = vmatpush2.bf16.msra.mxu0 0
    %1604 = vmatprep.subr.bf16.mxu0 0
    %1605 = vmatpush2.bf16.msra.mxu0 0
    %1606 = vmatprep.subr.bf16.mxu0 0
    %1607 = vmatpush2.bf16.msra.mxu0 0
    %1608 = vmatprep.subr.bf16.mxu0 0
    %1609 = vmatpush2.bf16.msra.mxu0 0
    %1610 = vmatprep.mubr.bf16.mxu0 0
    %1611 = vmatmul.mubr.bf16.gmra.mxu0 %v1504
    %v1612 = vpop.f32.mrf.mxu0
    %v1613 = vadd.f32 %v1528, %v1612
    %v1614 = vpop.f32.mrf.mxu0
    %v1615 = vpop.f32.mrf.mxu0
    %v1616 = vadd.f32 %v1528, %v1615
    %v1617 = vpop.f32.mrf.mxu0
    %1618 = vdwg.mxu0
    %v1619 = vmax.f32 %v1613, 0.0
    %v1620 = vmax.f32 %v1616, 0.0
    %v1621 = vadd.f32 %v1329, %v1619
    %v1622 = vadd.f32 %v1330, %v1620
    %1623 = vst [vmem:[#allocation15] sm:$0xff] %v1621
    %1624 = vst [vmem:[#allocation15 + $0x8] sm:$0xff] %v1622
    %s1625 = scalar_lea.vmem %s5, 2
    %v1626 = vld [vmem:[%s1625] sm:$0x1]
    %s1627 = scalar_lea.vmem %s6, 2
    %v1628 = vld [vmem:[%s1627] sm:$0x1]
    %1629 = vst [vmem:[#allocation2] sm:$0xff] 0.0
    %1630 = vst [vmem:[#allocation2 + $0x8] sm:$0xff] 0.0
    %s1631 = sld [smem:[#allocation7]]
    %s1632 = sld [smem:[#allocation9]]
    %s1633 = scalar_lea.vmem [#allocation15], %s1631
    %v1634 = vld [vmem:[%s1633] sm:$0x1]
    %s1635 = sld [smem:[#allocation10]]
    %v1636 = vstv %s1635
    %v1637 = vmul.f32 %v1636, %v1626
    %v1638 = vadd.f32 %v1634, %v1637
    %v1639 = vadd.f32 %v1638, %v1628
    %v1640 = vmax.f32 %v1639, 0.0
    %s1641 = scalar_lea.vmem [#allocation2], %s1632
    %v1642 = vld [vmem:[%s1641] sm:$0x1]
    %v1643 = vadd.f32 %v1642, %v1640
    %1644 = vst [vmem:[%s1641] sm:$0x1] %v1643
    %s1645 = sld [smem:[#allocation7 + $0x1]]
    %s1646 = sld [smem:[#allocation9 + $0x1]]
    %s1647 = scalar_lea.vmem [#allocation15], %s1645
    %v1648 = vld [vmem:[%s1647] sm:$0x1]
    %s1649 = sld [smem:[#allocation10 + $0x1]]
    %v1650 = vstv %s1649
    %v1651 = vmul.f32 %v1650, %v1626
    %v1652 = vadd.f32 %v1648, %v1651
    %v1653 = vadd.f32 %v1652, %v1628
    %v1654 = vmax.f32 %v1653, 0.0
    %s1655 = scalar_lea.vmem [#allocation2], %s1646
    %v1656 = vld [vmem:[%s1655] sm:$0x1]
    %v1657 = vadd.f32 %v1656, %v1654
    %1658 = vst [vmem:[%s1655] sm:$0x1] %v1657
    %s1659 = sld [smem:[#allocation7 + $0x2]]
    %s1660 = sld [smem:[#allocation9 + $0x2]]
    %s1661 = scalar_lea.vmem [#allocation15], %s1659
    %v1662 = vld [vmem:[%s1661] sm:$0x1]
    %s1663 = sld [smem:[#allocation10 + $0x2]]
    %v1664 = vstv %s1663
    %v1665 = vmul.f32 %v1664, %v1626
    %v1666 = vadd.f32 %v1662, %v1665
    %v1667 = vadd.f32 %v1666, %v1628
    %v1668 = vmax.f32 %v1667, 0.0
    %s1669 = scalar_lea.vmem [#allocation2], %s1660
    %v1670 = vld [vmem:[%s1669] sm:$0x1]
    %v1671 = vadd.f32 %v1670, %v1668
    %1672 = vst [vmem:[%s1669] sm:$0x1] %v1671
    %s1673 = sld [smem:[#allocation7 + $0x3]]
    %s1674 = sld [smem:[#allocation9 + $0x3]]
    %s1675 = scalar_lea.vmem [#allocation15], %s1673
    %v1676 = vld [vmem:[%s1675] sm:$0x1]
    %s1677 = sld [smem:[#allocation10 + $0x3]]
    %v1678 = vstv %s1677
    %v1679 = vmul.f32 %v1678, %v1626
    %v1680 = vadd.f32 %v1676, %v1679
    %v1681 = vadd.f32 %v1680, %v1628
    %v1682 = vmax.f32 %v1681, 0.0
    %s1683 = scalar_lea.vmem [#allocation2], %s1674
    %v1684 = vld [vmem:[%s1683] sm:$0x1]
    %v1685 = vadd.f32 %v1684, %v1682
    %1686 = vst [vmem:[%s1683] sm:$0x1] %v1685
    %s1687 = sld [smem:[#allocation7 + $0x4]]
    %s1688 = sld [smem:[#allocation9 + $0x4]]
    %s1689 = scalar_lea.vmem [#allocation15], %s1687
    %v1690 = vld [vmem:[%s1689] sm:$0x1]
    %s1691 = sld [smem:[#allocation10 + $0x4]]
    %v1692 = vstv %s1691
    %v1693 = vmul.f32 %v1692, %v1626
    %v1694 = vadd.f32 %v1690, %v1693
    %v1695 = vadd.f32 %v1694, %v1628
    %v1696 = vmax.f32 %v1695, 0.0
    %s1697 = scalar_lea.vmem [#allocation2], %s1688
    %v1698 = vld [vmem:[%s1697] sm:$0x1]
    %v1699 = vadd.f32 %v1698, %v1696
    %1700 = vst [vmem:[%s1697] sm:$0x1] %v1699
    %s1701 = sld [smem:[#allocation7 + $0x5]]
    %s1702 = sld [smem:[#allocation9 + $0x5]]
    %s1703 = scalar_lea.vmem [#allocation15], %s1701
    %v1704 = vld [vmem:[%s1703] sm:$0x1]
    %s1705 = sld [smem:[#allocation10 + $0x5]]
    %v1706 = vstv %s1705
    %v1707 = vmul.f32 %v1706, %v1626
    %v1708 = vadd.f32 %v1704, %v1707
    %v1709 = vadd.f32 %v1708, %v1628
    %v1710 = vmax.f32 %v1709, 0.0
    %s1711 = scalar_lea.vmem [#allocation2], %s1702
    %v1712 = vld [vmem:[%s1711] sm:$0x1]
    %v1713 = vadd.f32 %v1712, %v1710
    %1714 = vst [vmem:[%s1711] sm:$0x1] %v1713
    %s1715 = sld [smem:[#allocation7 + $0x6]]
    %s1716 = sld [smem:[#allocation9 + $0x6]]
    %s1717 = scalar_lea.vmem [#allocation15], %s1715
    %v1718 = vld [vmem:[%s1717] sm:$0x1]
    %s1719 = sld [smem:[#allocation10 + $0x6]]
    %v1720 = vstv %s1719
    %v1721 = vmul.f32 %v1720, %v1626
    %v1722 = vadd.f32 %v1718, %v1721
    %v1723 = vadd.f32 %v1722, %v1628
    %v1724 = vmax.f32 %v1723, 0.0
    %s1725 = scalar_lea.vmem [#allocation2], %s1716
    %v1726 = vld [vmem:[%s1725] sm:$0x1]
    %v1727 = vadd.f32 %v1726, %v1724
    %1728 = vst [vmem:[%s1725] sm:$0x1] %v1727
    %s1729 = sld [smem:[#allocation7 + $0x7]]
    %s1730 = sld [smem:[#allocation9 + $0x7]]
    %s1731 = scalar_lea.vmem [#allocation15], %s1729
    %v1732 = vld [vmem:[%s1731] sm:$0x1]
    %s1733 = sld [smem:[#allocation10 + $0x7]]
    %v1734 = vstv %s1733
    %v1735 = vmul.f32 %v1734, %v1626
    %v1736 = vadd.f32 %v1732, %v1735
    %v1737 = vadd.f32 %v1736, %v1628
    %v1738 = vmax.f32 %v1737, 0.0
    %s1739 = scalar_lea.vmem [#allocation2], %s1730
    %v1740 = vld [vmem:[%s1739] sm:$0x1]
    %v1741 = vadd.f32 %v1740, %v1738
    %1742 = vst [vmem:[%s1739] sm:$0x1] %v1741
    %s1743 = sld [smem:[#allocation7 + $0x8]]
    %s1744 = sld [smem:[#allocation9 + $0x8]]
    %s1745 = scalar_lea.vmem [#allocation15], %s1743
    %v1746 = vld [vmem:[%s1745] sm:$0x1]
    %s1747 = sld [smem:[#allocation10 + $0x8]]
    %v1748 = vstv %s1747
    %v1749 = vmul.f32 %v1748, %v1626
    %v1750 = vadd.f32 %v1746, %v1749
    %v1751 = vadd.f32 %v1750, %v1628
    %v1752 = vmax.f32 %v1751, 0.0
    %s1753 = scalar_lea.vmem [#allocation2], %s1744
    %v1754 = vld [vmem:[%s1753] sm:$0x1]
    %v1755 = vadd.f32 %v1754, %v1752
    %1756 = vst [vmem:[%s1753] sm:$0x1] %v1755
    %s1757 = sld [smem:[#allocation7 + $0x9]]
    %s1758 = sld [smem:[#allocation9 + $0x9]]
    %s1759 = scalar_lea.vmem [#allocation15], %s1757
    %v1760 = vld [vmem:[%s1759] sm:$0x1]
    %s1761 = sld [smem:[#allocation10 + $0x9]]
    %v1762 = vstv %s1761
    %v1763 = vmul.f32 %v1762, %v1626
    %v1764 = vadd.f32 %v1760, %v1763
    %v1765 = vadd.f32 %v1764, %v1628
    %v1766 = vmax.f32 %v1765, 0.0
    %s1767 = scalar_lea.vmem [#allocation2], %s1758
    %v1768 = vld [vmem:[%s1767] sm:$0x1]
    %v1769 = vadd.f32 %v1768, %v1766
    %1770 = vst [vmem:[%s1767] sm:$0x1] %v1769
    %s1771 = sld [smem:[#allocation7 + $0xa]]
    %s1772 = sld [smem:[#allocation9 + $0xa]]
    %s1773 = scalar_lea.vmem [#allocation15], %s1771
    %v1774 = vld [vmem:[%s1773] sm:$0x1]
    %s1775 = sld [smem:[#allocation10 + $0xa]]
    %v1776 = vstv %s1775
    %v1777 = vmul.f32 %v1776, %v1626
    %v1778 = vadd.f32 %v1774, %v1777
    %v1779 = vadd.f32 %v1778, %v1628
    %v1780 = vmax.f32 %v1779, 0.0
    %s1781 = scalar_lea.vmem [#allocation2], %s1772
    %v1782 = vld [vmem:[%s1781] sm:$0x1]
    %v1783 = vadd.f32 %v1782, %v1780
    %1784 = vst [vmem:[%s1781] sm:$0x1] %v1783
    %s1785 = sld [smem:[#allocation7 + $0xb]]
    %s1786 = sld [smem:[#allocation9 + $0xb]]
    %s1787 = scalar_lea.vmem [#allocation15], %s1785
    %v1788 = vld [vmem:[%s1787] sm:$0x1]
    %s1789 = sld [smem:[#allocation10 + $0xb]]
    %v1790 = vstv %s1789
    %v1791 = vmul.f32 %v1790, %v1626
    %v1792 = vadd.f32 %v1788, %v1791
    %v1793 = vadd.f32 %v1792, %v1628
    %v1794 = vmax.f32 %v1793, 0.0
    %s1795 = scalar_lea.vmem [#allocation2], %s1786
    %v1796 = vld [vmem:[%s1795] sm:$0x1]
    %v1797 = vadd.f32 %v1796, %v1794
    %1798 = vst [vmem:[%s1795] sm:$0x1] %v1797
    %s1799 = sld [smem:[#allocation7 + $0xc]]
    %s1800 = sld [smem:[#allocation9 + $0xc]]
    %s1801 = scalar_lea.vmem [#allocation15], %s1799
    %v1802 = vld [vmem:[%s1801] sm:$0x1]
    %s1803 = sld [smem:[#allocation10 + $0xc]]
    %v1804 = vstv %s1803
    %v1805 = vmul.f32 %v1804, %v1626
    %v1806 = vadd.f32 %v1802, %v1805
    %v1807 = vadd.f32 %v1806, %v1628
    %v1808 = vmax.f32 %v1807, 0.0
    %s1809 = scalar_lea.vmem [#allocation2], %s1800
    %v1810 = vld [vmem:[%s1809] sm:$0x1]
    %v1811 = vadd.f32 %v1810, %v1808
    %1812 = vst [vmem:[%s1809] sm:$0x1] %v1811
    %s1813 = sld [smem:[#allocation7 + $0xd]]
    %s1814 = sld [smem:[#allocation9 + $0xd]]
    %s1815 = scalar_lea.vmem [#allocation15], %s1813
    %v1816 = vld [vmem:[%s1815] sm:$0x1]
    %s1817 = sld [smem:[#allocation10 + $0xd]]
    %v1818 = vstv %s1817
    %v1819 = vmul.f32 %v1818, %v1626
    %v1820 = vadd.f32 %v1816, %v1819
    %v1821 = vadd.f32 %v1820, %v1628
    %v1822 = vmax.f32 %v1821, 0.0
    %s1823 = scalar_lea.vmem [#allocation2], %s1814
    %v1824 = vld [vmem:[%s1823] sm:$0x1]
    %v1825 = vadd.f32 %v1824, %v1822
    %1826 = vst [vmem:[%s1823] sm:$0x1] %v1825
    %s1827 = sld [smem:[#allocation7 + $0xe]]
    %s1828 = sld [smem:[#allocation9 + $0xe]]
    %s1829 = scalar_lea.vmem [#allocation15], %s1827
    %v1830 = vld [vmem:[%s1829] sm:$0x1]
    %s1831 = sld [smem:[#allocation10 + $0xe]]
    %v1832 = vstv %s1831
    %v1833 = vmul.f32 %v1832, %v1626
    %v1834 = vadd.f32 %v1830, %v1833
    %v1835 = vadd.f32 %v1834, %v1628
    %v1836 = vmax.f32 %v1835, 0.0
    %s1837 = scalar_lea.vmem [#allocation2], %s1828
    %v1838 = vld [vmem:[%s1837] sm:$0x1]
    %v1839 = vadd.f32 %v1838, %v1836
    %1840 = vst [vmem:[%s1837] sm:$0x1] %v1839
    %s1841 = sld [smem:[#allocation7 + $0xf]]
    %s1842 = sld [smem:[#allocation9 + $0xf]]
    %s1843 = scalar_lea.vmem [#allocation15], %s1841
    %v1844 = vld [vmem:[%s1843] sm:$0x1]
    %s1845 = sld [smem:[#allocation10 + $0xf]]
    %v1846 = vstv %s1845
    %v1847 = vmul.f32 %v1846, %v1626
    %v1848 = vadd.f32 %v1844, %v1847
    %v1849 = vadd.f32 %v1848, %v1628
    %v1850 = vmax.f32 %v1849, 0.0
    %s1851 = scalar_lea.vmem [#allocation2], %s1842
    %v1852 = vld [vmem:[%s1851] sm:$0x1]
    %v1853 = vadd.f32 %v1852, %v1850
    %1854 = vst [vmem:[%s1851] sm:$0x1] %v1853
    %s1855 = sld [smem:[#allocation7 + $0x10]]
    %s1856 = sld [smem:[#allocation9 + $0x10]]
    %s1857 = scalar_lea.vmem [#allocation15], %s1855
    %v1858 = vld [vmem:[%s1857] sm:$0x1]
    %s1859 = sld [smem:[#allocation10 + $0x10]]
    %v1860 = vstv %s1859
    %v1861 = vmul.f32 %v1860, %v1626
    %v1862 = vadd.f32 %v1858, %v1861
    %v1863 = vadd.f32 %v1862, %v1628
    %v1864 = vmax.f32 %v1863, 0.0
    %s1865 = scalar_lea.vmem [#allocation2], %s1856
    %v1866 = vld [vmem:[%s1865] sm:$0x1]
    %v1867 = vadd.f32 %v1866, %v1864
    %1868 = vst [vmem:[%s1865] sm:$0x1] %v1867
    %s1869 = sld [smem:[#allocation7 + $0x11]]
    %s1870 = sld [smem:[#allocation9 + $0x11]]
    %s1871 = scalar_lea.vmem [#allocation15], %s1869
    %v1872 = vld [vmem:[%s1871] sm:$0x1]
    %s1873 = sld [smem:[#allocation10 + $0x11]]
    %v1874 = vstv %s1873
    %v1875 = vmul.f32 %v1874, %v1626
    %v1876 = vadd.f32 %v1872, %v1875
    %v1877 = vadd.f32 %v1876, %v1628
    %v1878 = vmax.f32 %v1877, 0.0
    %s1879 = scalar_lea.vmem [#allocation2], %s1870
    %v1880 = vld [vmem:[%s1879] sm:$0x1]
    %v1881 = vadd.f32 %v1880, %v1878
    %1882 = vst [vmem:[%s1879] sm:$0x1] %v1881
    %s1883 = sld [smem:[#allocation7 + $0x12]]
    %s1884 = sld [smem:[#allocation9 + $0x12]]
    %s1885 = scalar_lea.vmem [#allocation15], %s1883
    %v1886 = vld [vmem:[%s1885] sm:$0x1]
    %s1887 = sld [smem:[#allocation10 + $0x12]]
    %v1888 = vstv %s1887
    %v1889 = vmul.f32 %v1888, %v1626
    %v1890 = vadd.f32 %v1886, %v1889
    %v1891 = vadd.f32 %v1890, %v1628
    %v1892 = vmax.f32 %v1891, 0.0
    %s1893 = scalar_lea.vmem [#allocation2], %s1884
    %v1894 = vld [vmem:[%s1893] sm:$0x1]
    %v1895 = vadd.f32 %v1894, %v1892
    %1896 = vst [vmem:[%s1893] sm:$0x1] %v1895
    %s1897 = sld [smem:[#allocation7 + $0x13]]
    %s1898 = sld [smem:[#allocation9 + $0x13]]
    %s1899 = scalar_lea.vmem [#allocation15], %s1897
    %v1900 = vld [vmem:[%s1899] sm:$0x1]
    %s1901 = sld [smem:[#allocation10 + $0x13]]
    %v1902 = vstv %s1901
    %v1903 = vmul.f32 %v1902, %v1626
    %v1904 = vadd.f32 %v1900, %v1903
    %v1905 = vadd.f32 %v1904, %v1628
    %v1906 = vmax.f32 %v1905, 0.0
    %s1907 = scalar_lea.vmem [#allocation2], %s1898
    %v1908 = vld [vmem:[%s1907] sm:$0x1]
    %v1909 = vadd.f32 %v1908, %v1906
    %1910 = vst [vmem:[%s1907] sm:$0x1] %v1909
    %s1911 = sld [smem:[#allocation7 + $0x14]]
    %s1912 = sld [smem:[#allocation9 + $0x14]]
    %s1913 = scalar_lea.vmem [#allocation15], %s1911
    %v1914 = vld [vmem:[%s1913] sm:$0x1]
    %s1915 = sld [smem:[#allocation10 + $0x14]]
    %v1916 = vstv %s1915
    %v1917 = vmul.f32 %v1916, %v1626
    %v1918 = vadd.f32 %v1914, %v1917
    %v1919 = vadd.f32 %v1918, %v1628
    %v1920 = vmax.f32 %v1919, 0.0
    %s1921 = scalar_lea.vmem [#allocation2], %s1912
    %v1922 = vld [vmem:[%s1921] sm:$0x1]
    %v1923 = vadd.f32 %v1922, %v1920
    %1924 = vst [vmem:[%s1921] sm:$0x1] %v1923
    %s1925 = sld [smem:[#allocation7 + $0x15]]
    %s1926 = sld [smem:[#allocation9 + $0x15]]
    %s1927 = scalar_lea.vmem [#allocation15], %s1925
    %v1928 = vld [vmem:[%s1927] sm:$0x1]
    %s1929 = sld [smem:[#allocation10 + $0x15]]
    %v1930 = vstv %s1929
    %v1931 = vmul.f32 %v1930, %v1626
    %v1932 = vadd.f32 %v1928, %v1931
    %v1933 = vadd.f32 %v1932, %v1628
    %v1934 = vmax.f32 %v1933, 0.0
    %s1935 = scalar_lea.vmem [#allocation2], %s1926
    %v1936 = vld [vmem:[%s1935] sm:$0x1]
    %v1937 = vadd.f32 %v1936, %v1934
    %1938 = vst [vmem:[%s1935] sm:$0x1] %v1937
    %s1939 = sld [smem:[#allocation7 + $0x16]]
    %s1940 = sld [smem:[#allocation9 + $0x16]]
    %s1941 = scalar_lea.vmem [#allocation15], %s1939
    %v1942 = vld [vmem:[%s1941] sm:$0x1]
    %s1943 = sld [smem:[#allocation10 + $0x16]]
    %v1944 = vstv %s1943
    %v1945 = vmul.f32 %v1944, %v1626
    %v1946 = vadd.f32 %v1942, %v1945
    %v1947 = vadd.f32 %v1946, %v1628
    %v1948 = vmax.f32 %v1947, 0.0
    %s1949 = scalar_lea.vmem [#allocation2], %s1940
    %v1950 = vld [vmem:[%s1949] sm:$0x1]
    %v1951 = vadd.f32 %v1950, %v1948
    %1952 = vst [vmem:[%s1949] sm:$0x1] %v1951
    %s1953 = sld [smem:[#allocation7 + $0x17]]
    %s1954 = sld [smem:[#allocation9 + $0x17]]
    %s1955 = scalar_lea.vmem [#allocation15], %s1953
    %v1956 = vld [vmem:[%s1955] sm:$0x1]
    %s1957 = sld [smem:[#allocation10 + $0x17]]
    %v1958 = vstv %s1957
    %v1959 = vmul.f32 %v1958, %v1626
    %v1960 = vadd.f32 %v1956, %v1959
    %v1961 = vadd.f32 %v1960, %v1628
    %v1962 = vmax.f32 %v1961, 0.0
    %s1963 = scalar_lea.vmem [#allocation2], %s1954
    %v1964 = vld [vmem:[%s1963] sm:$0x1]
    %v1965 = vadd.f32 %v1964, %v1962
    %1966 = vst [vmem:[%s1963] sm:$0x1] %v1965
    %s1967 = sld [smem:[#allocation7 + $0x18]]
    %s1968 = sld [smem:[#allocation9 + $0x18]]
    %s1969 = scalar_lea.vmem [#allocation15], %s1967
    %v1970 = vld [vmem:[%s1969] sm:$0x1]
    %s1971 = sld [smem:[#allocation10 + $0x18]]
    %v1972 = vstv %s1971
    %v1973 = vmul.f32 %v1972, %v1626
    %v1974 = vadd.f32 %v1970, %v1973
    %v1975 = vadd.f32 %v1974, %v1628
    %v1976 = vmax.f32 %v1975, 0.0
    %s1977 = scalar_lea.vmem [#allocation2], %s1968
    %v1978 = vld [vmem:[%s1977] sm:$0x1]
    %v1979 = vadd.f32 %v1978, %v1976
    %1980 = vst [vmem:[%s1977] sm:$0x1] %v1979
    %s1981 = sld [smem:[#allocation7 + $0x19]]
    %s1982 = sld [smem:[#allocation9 + $0x19]]
    %s1983 = scalar_lea.vmem [#allocation15], %s1981
    %v1984 = vld [vmem:[%s1983] sm:$0x1]
    %s1985 = sld [smem:[#allocation10 + $0x19]]
    %v1986 = vstv %s1985
    %v1987 = vmul.f32 %v1986, %v1626
    %v1988 = vadd.f32 %v1984, %v1987
    %v1989 = vadd.f32 %v1988, %v1628
    %v1990 = vmax.f32 %v1989, 0.0
    %s1991 = scalar_lea.vmem [#allocation2], %s1982
    %v1992 = vld [vmem:[%s1991] sm:$0x1]
    %v1993 = vadd.f32 %v1992, %v1990
    %1994 = vst [vmem:[%s1991] sm:$0x1] %v1993
    %s1995 = sld [smem:[#allocation7 + $0x1a]]
    %s1996 = sld [smem:[#allocation9 + $0x1a]]
    %s1997 = scalar_lea.vmem [#allocation15], %s1995
    %v1998 = vld [vmem:[%s1997] sm:$0x1]
    %s1999 = sld [smem:[#allocation10 + $0x1a]]
    %v2000 = vstv %s1999
    %v2001 = vmul.f32 %v2000, %v1626
    %v2002 = vadd.f32 %v1998, %v2001
    %v2003 = vadd.f32 %v2002, %v1628
    %v2004 = vmax.f32 %v2003, 0.0
    %s2005 = scalar_lea.vmem [#allocation2], %s1996
    %v2006 = vld [vmem:[%s2005] sm:$0x1]
    %v2007 = vadd.f32 %v2006, %v2004
    %2008 = vst [vmem:[%s2005] sm:$0x1] %v2007
    %s2009 = sld [smem:[#allocation7 + $0x1b]]
    %s2010 = sld [smem:[#allocation9 + $0x1b]]
    %s2011 = scalar_lea.vmem [#allocation15], %s2009
    %v2012 = vld [vmem:[%s2011] sm:$0x1]
    %s2013 = sld [smem:[#allocation10 + $0x1b]]
    %v2014 = vstv %s2013
    %v2015 = vmul.f32 %v2014, %v1626
    %v2016 = vadd.f32 %v2012, %v2015
    %v2017 = vadd.f32 %v2016, %v1628
    %v2018 = vmax.f32 %v2017, 0.0
    %s2019 = scalar_lea.vmem [#allocation2], %s2010
    %v2020 = vld [vmem:[%s2019] sm:$0x1]
    %v2021 = vadd.f32 %v2020, %v2018
    %2022 = vst [vmem:[%s2019] sm:$0x1] %v2021
    %s2023 = sld [smem:[#allocation7 + $0x1c]]
    %s2024 = sld [smem:[#allocation9 + $0x1c]]
    %s2025 = scalar_lea.vmem [#allocation15], %s2023
    %v2026 = vld [vmem:[%s2025] sm:$0x1]
    %s2027 = sld [smem:[#allocation10 + $0x1c]]
    %v2028 = vstv %s2027
    %v2029 = vmul.f32 %v2028, %v1626
    %v2030 = vadd.f32 %v2026, %v2029
    %v2031 = vadd.f32 %v2030, %v1628
    %v2032 = vmax.f32 %v2031, 0.0
    %s2033 = scalar_lea.vmem [#allocation2], %s2024
    %v2034 = vld [vmem:[%s2033] sm:$0x1]
    %v2035 = vadd.f32 %v2034, %v2032
    %2036 = vst [vmem:[%s2033] sm:$0x1] %v2035
    %s2037 = sld [smem:[#allocation7 + $0x1d]]
    %s2038 = sld [smem:[#allocation9 + $0x1d]]
    %s2039 = scalar_lea.vmem [#allocation15], %s2037
    %v2040 = vld [vmem:[%s2039] sm:$0x1]
    %s2041 = sld [smem:[#allocation10 + $0x1d]]
    %v2042 = vstv %s2041
    %v2043 = vmul.f32 %v2042, %v1626
    %v2044 = vadd.f32 %v2040, %v2043
    %v2045 = vadd.f32 %v2044, %v1628
    %v2046 = vmax.f32 %v2045, 0.0
    %s2047 = scalar_lea.vmem [#allocation2], %s2038
    %v2048 = vld [vmem:[%s2047] sm:$0x1]
    %v2049 = vadd.f32 %v2048, %v2046
    %2050 = vst [vmem:[%s2047] sm:$0x1] %v2049
    %s2051 = sld [smem:[#allocation7 + $0x1e]]
    %s2052 = sld [smem:[#allocation9 + $0x1e]]
    %s2053 = scalar_lea.vmem [#allocation15], %s2051
    %v2054 = vld [vmem:[%s2053] sm:$0x1]
    %s2055 = sld [smem:[#allocation10 + $0x1e]]
    %v2056 = vstv %s2055
    %v2057 = vmul.f32 %v2056, %v1626
    %v2058 = vadd.f32 %v2054, %v2057
    %v2059 = vadd.f32 %v2058, %v1628
    %v2060 = vmax.f32 %v2059, 0.0
    %s2061 = scalar_lea.vmem [#allocation2], %s2052
    %v2062 = vld [vmem:[%s2061] sm:$0x1]
    %v2063 = vadd.f32 %v2062, %v2060
    %2064 = vst [vmem:[%s2061] sm:$0x1] %v2063
    %s2065 = sld [smem:[#allocation7 + $0x1f]]
    %s2066 = sld [smem:[#allocation9 + $0x1f]]
    %s2067 = scalar_lea.vmem [#allocation15], %s2065
    %v2068 = vld [vmem:[%s2067] sm:$0x1]
    %s2069 = sld [smem:[#allocation10 + $0x1f]]
    %v2070 = vstv %s2069
    %v2071 = vmul.f32 %v2070, %v1626
    %v2072 = vadd.f32 %v2068, %v2071
    %v2073 = vadd.f32 %v2072, %v1628
    %v2074 = vmax.f32 %v2073, 0.0
    %s2075 = scalar_lea.vmem [#allocation2], %s2066
    %v2076 = vld [vmem:[%s2075] sm:$0x1]
    %v2077 = vadd.f32 %v2076, %v2074
    %2078 = vst [vmem:[%s2075] sm:$0x1] %v2077
    %v2079 = vld [vmem:[#allocation15] sm:$0xff]
    %v2080 = vld [vmem:[#allocation15 + $0x8] sm:$0xff]
    %v2081 = vld [vmem:[#allocation2] sm:$0xff]
    %v2082 = vld [vmem:[#allocation2 + $0x8] sm:$0xff]
    %s2083 = sld [smem:[#allocation3 + $0x2]]
    %v2084 = vstv %s2083
    %v2085 = vmul.f32 %v2084, %v2079
    %v2086 = vmul.f32 %v2084, %v2080
    %v2087 = vadd.f32 %v2081, %v2085
    %v2088 = vadd.f32 %v2082, %v2086
    %v2089 = vpack.c.bf16 %v2088, %v2087
    %s2090 = scalar_lea.vmem [#allocation12], 128
    %v2091 = vld [vmem:[%s2090] sm:$0xf]
    %v2092 = vld [vmem:[%s2090 + $0x4] sm:$0xf]
    %v2093 = vld [vmem:[%s2090 + $0x8] sm:$0xf]
    %v2094 = vld [vmem:[%s2090 + $0xc] sm:$0xf]
    %v2095 = vld [vmem:[%s2090 + $0x10] sm:$0xf]
    %v2096 = vld [vmem:[%s2090 + $0x14] sm:$0xf]
    %v2097 = vld [vmem:[%s2090 + $0x18] sm:$0xf]
    %v2098 = vld [vmem:[%s2090 + $0x1c] sm:$0xf]
    %v2099 = vld [vmem:[%s2090 + $0x20] sm:$0xf]
    %v2100 = vld [vmem:[%s2090 + $0x24] sm:$0xf]
    %v2101 = vld [vmem:[%s2090 + $0x28] sm:$0xf]
    %v2102 = vld [vmem:[%s2090 + $0x2c] sm:$0xf]
    %v2103 = vld [vmem:[%s2090 + $0x30] sm:$0xf]
    %v2104 = vld [vmem:[%s2090 + $0x34] sm:$0xf]
    %v2105 = vld [vmem:[%s2090 + $0x38] sm:$0xf]
    %v2106 = vld [vmem:[%s2090 + $0x3c] sm:$0xf]
    %s2107 = scalar_lea.vmem %s8, 2
    %v2108 = vld [vmem:[%s2107] sm:$0x1]
    %v2110 = vlaneseq
    %v2111 = vshrl.u32 %v2110, 7
    %v2112 = vsub.s32 0, %v2111
    %v2113 = vrot.slane %v2108, %v2112
    %v2131 = vunpack.c.l.b16 %v2091
    %v2132 = vunpack.c.l.b16 %v2092
    %v2133 = vunpack.c.l.b16 %v2093
    %v2134 = vunpack.c.l.b16 %v2094
    %v2135 = vunpack.c.l.b16 %v2095
    %v2136 = vunpack.c.l.b16 %v2096
    %v2137 = vunpack.c.l.b16 %v2097
    %v2138 = vunpack.c.l.b16 %v2098
    %v2139 = vunpack.c.l.b16 %v2099
    %v2140 = vunpack.c.l.b16 %v2100
    %v2141 = vunpack.c.l.b16 %v2101
    %v2142 = vunpack.c.l.b16 %v2102
    %v2143 = vunpack.c.l.b16 %v2103
    %v2144 = vunpack.c.l.b16 %v2104
    %v2145 = vunpack.c.l.b16 %v2105
    %v2146 = vunpack.c.l.b16 %v2106
    %v2147 = vpack.c.b16 %v2132, %v2131
    %v2148 = vpack.c.b16 %v2134, %v2133
    %v2149 = vpack.c.b16 %v2136, %v2135
    %v2150 = vpack.c.b16 %v2138, %v2137
    %v2151 = vpack.c.b16 %v2140, %v2139
    %v2152 = vpack.c.b16 %v2142, %v2141
    %v2153 = vpack.c.b16 %v2144, %v2143
    %v2154 = vpack.c.b16 %v2146, %v2145
    %2163 = vmatprep.subr.bf16.mxu0 0
    %2164 = vmatpush1.bf16.msra.mxu0 %v2154
    %2165 = vmatprep.subr.bf16.mxu0 0
    %2166 = vmatpush1.bf16.msra.mxu0 %v2153
    %2167 = vmatprep.subr.bf16.mxu0 0
    %2168 = vmatpush1.bf16.msra.mxu0 %v2152
    %2169 = vmatprep.subr.bf16.mxu0 0
    %2170 = vmatpush1.bf16.msra.mxu0 %v2151
    %2171 = vmatprep.subr.bf16.mxu0 0
    %2172 = vmatpush1.bf16.msra.mxu0 %v2150
    %2173 = vmatprep.subr.bf16.mxu0 0
    %2174 = vmatpush1.bf16.msra.mxu0 %v2149
    %2175 = vmatprep.subr.bf16.mxu0 0
    %2176 = vmatpush1.bf16.msra.mxu0 %v2148
    %2177 = vmatprep.subr.bf16.mxu0 0
    %2178 = vmatpush1.bf16.msra.mxu0 %v2147
    %2179 = vmatprep.subr.bf16.mxu0 0
    %2180 = vmatpush2.bf16.msra.mxu0 0
    %2181 = vmatprep.subr.bf16.mxu0 0
    %2182 = vmatpush2.bf16.msra.mxu0 0
    %2183 = vmatprep.subr.bf16.mxu0 0
    %2184 = vmatpush2.bf16.msra.mxu0 0
    %2185 = vmatprep.subr.bf16.mxu0 0
    %2186 = vmatpush2.bf16.msra.mxu0 0
    %2187 = vmatprep.subr.bf16.mxu0 0
    %2188 = vmatpush2.bf16.msra.mxu0 0
    %2189 = vmatprep.subr.bf16.mxu0 0
    %2190 = vmatpush2.bf16.msra.mxu0 0
    %2191 = vmatprep.subr.bf16.mxu0 0
    %2192 = vmatpush2.bf16.msra.mxu0 0
    %2193 = vmatprep.subr.bf16.mxu0 0
    %2194 = vmatpush2.bf16.msra.mxu0 0
    %2195 = vmatprep.mubr.bf16.mxu0 0
    %2196 = vmatmul.mubr.bf16.gmra.mxu0 %v2089
    %v2197 = vpop.f32.mrf.mxu0
    %v2198 = vadd.f32 %v2113, %v2197
    %v2199 = vpop.f32.mrf.mxu0
    %v2200 = vpop.f32.mrf.mxu0
    %v2201 = vadd.f32 %v2113, %v2200
    %v2202 = vpop.f32.mrf.mxu0
    %2203 = vdwg.mxu0
    %v2204 = vmul.f32 %v2198, %v129
    %v2205 = vmul.f32 %v2201, %v130
    %v2206 = vadd.f32 %v2204, %v2205
    %v2207 = vrot.slane %v2206, 4
    %v2208 = vadd.f32 %v2206, %v2207
    %v2209 = vrot.slane %v2208, 2
    %v2210 = vadd.f32 %v2208, %v2209
    %v2211 = vrot.slane %v2210, 1
    %v2212 = vadd.f32 %v2210, %v2211
    %v2213 = vmul.f32 %v2212, 0.0625
    %v2214 = vsub.f32 %v2198, %v2213
    %v2215 = vsub.f32 %v2201, %v2213
    %v2216 = vmul.f32 %v2214, %v129
    %v2217 = vmul.f32 %v2215, %v130
    %v2218 = vmul.f32 %v2216, %v2216
    %v2219 = vmul.f32 %v2217, %v2217
    %v2220 = vadd.f32 %v2218, %v2219
    %v2221 = vrot.slane %v2220, 4
    %v2222 = vadd.f32 %v2220, %v2221
    %v2223 = vrot.slane %v2222, 2
    %v2224 = vadd.f32 %v2222, %v2223
    %v2225 = vrot.slane %v2224, 1
    %v2226 = vadd.f32 %v2224, %v2225
    %v2227 = vmul.f32 %v2226, 0.0625
    %v2228 = vadd.f32 %v2227, 1e-05
    %v2229 = vrsqrt.pop %v2228
    %v2230 = vmul.f32 %v2214, %v2229
    %v2231 = vmul.f32 %v2215, %v2229
    %s2232 = scalar_lea.vmem %s9, 2
    %v2233 = vld [vmem:[%s2232] sm:$0x1]
    %v2235 = vlaneseq
    %v2236 = vshrl.u32 %v2235, 7
    %v2237 = vsub.s32 0, %v2236
    %v2238 = vrot.slane %v2233, %v2237
    %v2240 = vmul.f32 %v2230, %v2238
    %v2241 = vmul.f32 %v2231, %v2238
    %s2242 = scalar_lea.vmem %s10, 2
    %v2243 = vld [vmem:[%s2242] sm:$0x1]
    %v2245 = vlaneseq
    %v2246 = vshrl.u32 %v2245, 7
    %v2247 = vsub.s32 0, %v2246
    %v2248 = vrot.slane %v2243, %v2247
    %v2250 = vadd.f32 %v2240, %v2248
    %v2251 = vadd.f32 %v2241, %v2248
    %v2252 = vmax.f32 %v2250, 0.0
    %v2253 = vmax.f32 %v2251, 0.0
    %v2254 = vpack.c.bf16 %v2253, %v2252
    %s2255 = scalar_lea.vmem [#allocation13], 128
    %v2256 = vld [vmem:[%s2255] sm:$0xf]
    %v2257 = vld [vmem:[%s2255 + $0x4] sm:$0xf]
    %v2258 = vld [vmem:[%s2255 + $0x8] sm:$0xf]
    %v2259 = vld [vmem:[%s2255 + $0xc] sm:$0xf]
    %v2260 = vld [vmem:[%s2255 + $0x10] sm:$0xf]
    %v2261 = vld [vmem:[%s2255 + $0x14] sm:$0xf]
    %v2262 = vld [vmem:[%s2255 + $0x18] sm:$0xf]
    %v2263 = vld [vmem:[%s2255 + $0x1c] sm:$0xf]
    %v2264 = vld [vmem:[%s2255 + $0x20] sm:$0xf]
    %v2265 = vld [vmem:[%s2255 + $0x24] sm:$0xf]
    %v2266 = vld [vmem:[%s2255 + $0x28] sm:$0xf]
    %v2267 = vld [vmem:[%s2255 + $0x2c] sm:$0xf]
    %v2268 = vld [vmem:[%s2255 + $0x30] sm:$0xf]
    %v2269 = vld [vmem:[%s2255 + $0x34] sm:$0xf]
    %v2270 = vld [vmem:[%s2255 + $0x38] sm:$0xf]
    %v2271 = vld [vmem:[%s2255 + $0x3c] sm:$0xf]
    %s2272 = scalar_lea.vmem %s12, 2
    %v2273 = vld [vmem:[%s2272] sm:$0x1]
    %v2275 = vlaneseq
    %v2276 = vshrl.u32 %v2275, 7
    %v2277 = vsub.s32 0, %v2276
    %v2278 = vrot.slane %v2273, %v2277
    %v2296 = vunpack.c.l.b16 %v2256
    %v2297 = vunpack.c.l.b16 %v2257
    %v2298 = vunpack.c.l.b16 %v2258
    %v2299 = vunpack.c.l.b16 %v2259
    %v2300 = vunpack.c.l.b16 %v2260
    %v2301 = vunpack.c.l.b16 %v2261
    %v2302 = vunpack.c.l.b16 %v2262
    %v2303 = vunpack.c.l.b16 %v2263
    %v2304 = vunpack.c.l.b16 %v2264
    %v2305 = vunpack.c.l.b16 %v2265
    %v2306 = vunpack.c.l.b16 %v2266
    %v2307 = vunpack.c.l.b16 %v2267
    %v2308 = vunpack.c.l.b16 %v2268
    %v2309 = vunpack.c.l.b16 %v2269
    %v2310 = vunpack.c.l.b16 %v2270
    %v2311 = vunpack.c.l.b16 %v2271
    %v2312 = vpack.c.b16 %v2297, %v2296
    %v2313 = vpack.c.b16 %v2299, %v2298
    %v2314 = vpack.c.b16 %v2301, %v2300
    %v2315 = vpack.c.b16 %v2303, %v2302
    %v2316 = vpack.c.b16 %v2305, %v2304
    %v2317 = vpack.c.b16 %v2307, %v2306
    %v2318 = vpack.c.b16 %v2309, %v2308
    %v2319 = vpack.c.b16 %v2311, %v2310
    %2328 = vmatprep.subr.bf16.mxu0 0
    %2329 = vmatpush1.bf16.msra.mxu0 %v2319
    %2330 = vmatprep.subr.bf16.mxu0 0
    %2331 = vmatpush1.bf16.msra.mxu0 %v2318
    %2332 = vmatprep.subr.bf16.mxu0 0
    %2333 = vmatpush1.bf16.msra.mxu0 %v2317
    %2334 = vmatprep.subr.bf16.mxu0 0
    %2335 = vmatpush1.bf16.msra.mxu0 %v2316
    %2336 = vmatprep.subr.bf16.mxu0 0
    %2337 = vmatpush1.bf16.msra.mxu0 %v2315
    %2338 = vmatprep.subr.bf16.mxu0 0
    %2339 = vmatpush1.bf16.msra.mxu0 %v2314
    %2340 = vmatprep.subr.bf16.mxu0 0
    %2341 = vmatpush1.bf16.msra.mxu0 %v2313
    %2342 = vmatprep.subr.bf16.mxu0 0
    %2343 = vmatpush1.bf16.msra.mxu0 %v2312
    %2344 = vmatprep.subr.bf16.mxu0 0
    %2345 = vmatpush2.bf16.msra.mxu0 0
    %2346 = vmatprep.subr.bf16.mxu0 0
    %2347 = vmatpush2.bf16.msra.mxu0 0
    %2348 = vmatprep.subr.bf16.mxu0 0
    %2349 = vmatpush2.bf16.msra.mxu0 0
    %2350 = vmatprep.subr.bf16.mxu0 0
    %2351 = vmatpush2.bf16.msra.mxu0 0
    %2352 = vmatprep.subr.bf16.mxu0 0
    %2353 = vmatpush2.bf16.msra.mxu0 0
    %2354 = vmatprep.subr.bf16.mxu0 0
    %2355 = vmatpush2.bf16.msra.mxu0 0
    %2356 = vmatprep.subr.bf16.mxu0 0
    %2357 = vmatpush2.bf16.msra.mxu0 0
    %2358 = vmatprep.subr.bf16.mxu0 0
    %2359 = vmatpush2.bf16.msra.mxu0 0
    %2360 = vmatprep.mubr.bf16.mxu0 0
    %2361 = vmatmul.mubr.bf16.gmra.mxu0 %v2254
    %v2362 = vpop.f32.mrf.mxu0
    %v2363 = vadd.f32 %v2278, %v2362
    %v2364 = vpop.f32.mrf.mxu0
    %v2365 = vpop.f32.mrf.mxu0
    %v2366 = vadd.f32 %v2278, %v2365
    %v2367 = vpop.f32.mrf.mxu0
    %2368 = vdwg.mxu0
    %v2369 = vmax.f32 %v2363, 0.0
    %v2370 = vmax.f32 %v2366, 0.0
    %v2371 = vadd.f32 %v2079, %v2369
    %v2372 = vadd.f32 %v2080, %v2370
    %2373 = vst [vmem:[#allocation15] sm:$0xff] %v2371
    %2374 = vst [vmem:[#allocation15 + $0x8] sm:$0xff] %v2372
    // Predicated region
    $region78: #{res_gnn_forward.1} parent=1 // pred_check
      _
    $region79: #{res_gnn_forward.1} parent=1 // pred_check_branch
      %2376 = sbr.rel (0) target = $region81
    $region80: #{res_gnn_forward.1} parent=1 // pred_region
      %s2378 = ssub.s32 256, 256
      %2379 = vsyncadd [#allocation5], %s2378
      %s2380 = sshll.u32 [#allocation15], 4
      %s2381 = int_to_ptr.vmem [resolvable:$true] %s2380
      %2386 = dma.vmem_to_hbm [thread:$0]  %s2381, 256, %s13, [#allocation5], 128, 128, 8
    $region81: #{res_gnn_forward.1} parent=1 // pred_fallthru
      _
    // Predicated region
    $region82: #{res_gnn_forward.1} parent=1 // pred_check
      _
    $region83: #{res_gnn_forward.1} parent=1 // pred_check_branch
      %2388 = sbr.rel (0) target = $region85
    $region84: #{res_gnn_forward.1} parent=1 // pred_region
      %2389 = dma.done [#allocation5], 256
    $region85: #{res_gnn_forward.1} parent=1 // pred_fallthru
      _
    %2390 = vsyncpa [#allocation4], 1
    %2391 = vsyncpa [#allocation14], 1
    %2392 = vsyncpa [#allocation5], 1
    %2393 = vsyncpa [#allocation6], 1
    %2394 = vsyncpa [#allocation8], 1
    %2395 = vsyncpa [#allocation11], 1

</llo_original>
